<compile_context>
chip_gen: v5e
topology: v5e:2x2
jax: 0.10.0
libtpu: 0.0.40
codegen_flags: <defaults>
</compile_context>

<pallas_src>
import numpy as np
import jax
import jax.numpy as jnp
from jax.experimental import pallas as pl
from jax.experimental.pallas import tpu as pltpu

LANES = 128
C1, C2 = 6, 16            # conv1 / conv2 output channels (fixed by LeNet)
KS = 5                    # conv kernel size
IN_W = 32                 # supported input spatial size (see lenet_forward)
HW1 = 14                  # pooled conv1 spatial size (28 / 2)
H1L = HW1 * C1            # 84: (w, ch) packed on lanes for pooled conv1
I2P = 8                   # padded ceil(HW1 / 2) = 7 -> 8 (h-parity-split rows)
N1P = 2 * LANES           # conv1 matmul N: (d1j, w, ch) = 168 real -> 256
K2 = KS * KS * C1         # 150 real contraction lanes for conv2
K2P = 160                 # padded conv2 K
Q = 5                     # conv2 pooled output spatial size (AdaptiveMaxPool2d((5,5)))
NB = 8                    # batch block per grid step (raise for throughput)


# ------------------------------ Pallas kernel -------------------------------

def _make_lenet_kernel(nb, k1p):
    rows1 = nb * 4 * I2P

    def kernel(p1_ref, w1_ref, b1_ref, w2_ref, b2_ref,
               wf1_ref, bf1_ref, wf2_ref, bf2_ref, wf3_ref, bf3_ref,
               o_ref, h1_scr):
        # ---- conv1: banded matmul along the input width ---------------------
        # rows (n, d1i, a, i2) with oh1 = 4*i2 + 2*a + d1i; cols (d1j, w, ch).
        y1 = jnp.dot(p1_ref[...].reshape(rows1, k1p), w1_ref[...],
                     preferred_element_type=jnp.float32)            # (rows1, N1P)
        y1 = y1.reshape(nb, 2, 2, I2P, N1P)
        y1 = jnp.maximum(y1[:, 0], y1[:, 1])                        # pool over d1i
        h1 = jnp.maximum(y1[..., :H1L], y1[..., H1L:2 * H1L])       # pool over d1j
        h1 = jnp.maximum(h1 + b1_ref[...], 0.0)                     # bias + ReLU
        h1_scr[...] = h1.astype(jnp.bfloat16)                       # (nb,2,I2P,84)
        # h1_scr[n, a, i2, w*6 + c] = pooled conv1 at (n, h=2*i2+a, w, c);
        # i2 == 7 rows are padding and are never read below (i2 <= qi + 2 <= 6).

        # ---- conv2: dense-K im2col (K = 150 -> 160), one small matmul per ----
        # output column qj and 2x2 pool offset (di, dj); pooled via jnp.maximum.
        zpad = jnp.zeros((nb, Q, K2P - K2), jnp.bfloat16)
        feats_by_qj = []
        for qj in range(Q):
            y2 = None
            for di in range(2):
                for dj in range(2):
                    w0 = (2 * qj + dj) * C1                          # lane offset
                    groups = []
                    for kh in range(KS):
                        t = di + kh
                        a, e = t % 2, t // 2
                        src = h1_scr[:, a, e:e + Q, :]               # (nb, 5, 84)
                        groups.append(src[:, :, w0:w0 + KS * C1])    # (nb, 5, 30)
                    blk = jnp.concatenate(groups + [zpad], axis=-1)  # (nb, 5, 160)
                    part = jnp.dot(blk.reshape(nb * Q, K2P), w2_ref[...],
                                   preferred_element_type=jnp.float32)
                    y2 = part if y2 is None else jnp.maximum(y2, part)
            h2 = jnp.maximum(y2 + b2_ref[...], 0.0)                  # (nb*Q, 128)
            feats_by_qj.append(h2.reshape(nb, Q, LANES).astype(jnp.bfloat16))

        # ---- flatten (PyTorch NCHW order folded into wf1 rows) + 3 FC layers -
        xf = jnp.concatenate([feats_by_qj[qj][:, qi, :]
                              for qi in range(Q) for qj in range(Q)], axis=-1)
        h = jnp.dot(xf, wf1_ref[...], preferred_element_type=jnp.float32)
        h = jnp.maximum(h + bf1_ref[...], 0.0).astype(jnp.bfloat16)
        h = jnp.dot(h, wf2_ref[...], preferred_element_type=jnp.float32)
        h = jnp.maximum(h + bf2_ref[...], 0.0).astype(jnp.bfloat16)
        o_ref[...] = jnp.dot(h, wf3_ref[...],
                             preferred_element_type=jnp.float32) + bf3_ref[...]

    return kernel


# ------------------------------- glue (JAX) ---------------------------------

def _build_p1(x_nhwc, k1p):
    """conv1 LHS: rows (n, d1i, a, i2), lanes (kh, ic, iw).  bf16, tiny."""
    n, _, _, cin = x_nhwc.shape
    xb = x_nhwc.astype(jnp.bfloat16)
    k1 = KS * cin * IN_W
    grps = []
    for d1i in range(2):
        for a in range(2):
            kh_parts = []
            for kh in range(KS):
                s = 2 * a + d1i + kh                    # input row for i2 = 0
                rows = xb[:, s:s + 4 * (HW1 // 2 - 1) + 1:4, :, :]   # (n,7,32,cin)
                kh_parts.append(jnp.transpose(rows, (0, 1, 3, 2)))   # (n,7,cin,32)
            grps.append(jnp.stack(kh_parts, axis=2).reshape(n, HW1 // 2, k1))
    p1 = jnp.stack(grps, axis=1)                        # (n, 4, 7, k1)
    # TODO(synk): build these patches in-kernel from the raw image to cut the
    # remaining ~8x HBM input inflation (matters most on v5e at large batch).
    return jnp.pad(p1, ((0, 0), (0, 0), (0, I2P - HW1 // 2), (0, k1p - k1)))


def init_params(in_channel=1, out_channel=10, seed=0):
    """Deterministic synthetic parameters (PyTorch-default-style uniform)."""
    ks = jax.random.split(jax.random.PRNGKey(seed), 10)

    def u(key, shape, fan_in):
        bound = 1.0 / np.sqrt(fan_in)
        return jax.random.uniform(key, shape, jnp.float32, -bound, bound)

    return {
        "w1": u(ks[0], (5, 5, in_channel, 6), 25 * in_channel),
        "b1": u(ks[1], (6,), 25 * in_channel),
        "w2": u(ks[2], (5, 5, 6, 16), 25 * 6),
        "b2": u(ks[3], (16,), 25 * 6),
        "wf1": u(ks[4], (16 * 5 * 5, 120), 400),   # row index = c*25 + h*5 + w
        "bf1": u(ks[5], (120,), 400),
        "wf2": u(ks[6], (120, 84), 120),
        "bf2": u(ks[7], (84,), 120),
        "wf3": u(ks[8], (84, out_channel), 84),
        "bf3": u(ks[9], (out_channel,), 84),
    }


def prepare_params(params):
    """Pack / pad weights for the fused kernel (dense K, zero padding, bf16)."""
    bf16 = jnp.bfloat16
    g = lambda k: np.asarray(jax.device_get(params[k]), np.float32)

    w1 = g("w1")                                        # (5,5,cin,6)
    cin = w1.shape[2]
    k1 = KS * cin * IN_W
    k1p = -(-k1 // LANES) * LANES
    # Banded conv1 weights: row (kh, ic, iw), col (d1j, w, c), iw = 2*w+d1j+kw.
    w1m = np.zeros((k1p, N1P), np.float32)
    for kh in range(KS):
        for ic in range(cin):
            for kw in range(KS):
                for w in range(HW1):
                    for dj in range(2):
                        iw = 2 * w + dj + kw
                        row = (kh * cin + ic) * IN_W + iw
                        col = dj * H1L + w * C1
                        w1m[row, col:col + C1] = w1[kh, kw, ic, :]
    b1 = np.tile(g("b1"), HW1).reshape(1, H1L)          # bias per (w, c) lane

    w2 = g("w2")                                        # (5,5,6,16)
    w2m = np.zeros((K2P, LANES), np.float32)
    w2m[:K2, :C2] = w2.reshape(K2, C2)                  # row = kh*30 + kw*6 + c
    b2 = np.zeros((1, LANES), np.float32)
    b2[0, :C2] = g("b2")

    wf1 = g("wf1")                                      # (400,120), row = c*25+p
    f1 = wf1.shape[1]
    wf1r = wf1.reshape(C2, Q * Q, f1).transpose(1, 0, 2)  # (25, 16, 120)
    wf1m = np.zeros((Q * Q, LANES, LANES), np.float32)
    wf1m[:, :C2, :f1] = wf1r                            # row = p*128 + c
    wf1m = wf1m.reshape(Q * Q * LANES, LANES)
    bf1 = np.zeros((1, LANES), np.float32)
    bf1[0, :f1] = g("bf1")

    wf2 = g("wf2")
    f2 = wf2.shape[1]
    wf2m = np.zeros((LANES, LANES), np.float32)
    wf2m[:f1, :f2] = wf2
    bf2 = np.zeros((1, LANES), np.float32)
    bf2[0, :f2] = g("bf2")

    wf3 = g("wf3")
    f3 = wf3.shape[1]
    wf3m = np.zeros((LANES, LANES), np.float32)
    wf3m[:f2, :f3] = wf3
    bf3 = np.zeros((1, LANES), np.float32)
    bf3[0, :f3] = g("bf3")

    return {
        "w1": jnp.asarray(w1m, bf16), "b1": jnp.asarray(b1),
        "w2": jnp.asarray(w2m, bf16), "b2": jnp.asarray(b2),
        "wf1": jnp.asarray(wf1m, bf16), "bf1": jnp.asarray(bf1),
        "wf2": jnp.asarray(wf2m, bf16), "bf2": jnp.asarray(bf2),
        "wf3": jnp.asarray(wf3m, bf16), "bf3": jnp.asarray(bf3),
        "k1p": int(k1p), "cin": int(cin), "out_dim": int(f3),
    }


def lenet_forward(prepped, x_nchw, nb=NB):
    n, cin, hh, ww = x_nchw.shape
    if hh != IN_W or ww != IN_W:
        # TODO(synk): AdaptiveMaxPool2d((5,5)) == MaxPool2d(2,2) only for 32x32
        # inputs; other sizes would need a true adaptive-pool implementation.
        raise ValueError("fused LeNet kernel supports 32x32 inputs only")
    if cin != prepped["cin"]:
        raise ValueError("channel count mismatch with prepared parameters")
    k1p = prepped["k1p"]

    n_pad = -(-n // nb) * nb
    x = jnp.transpose(x_nchw, (0, 2, 3, 1)).astype(jnp.float32)     # NHWC
    if n_pad != n:
        x = jnp.pad(x, ((0, n_pad - n), (0, 0), (0, 0), (0, 0)))
    p1 = _build_p1(x, k1p)                                          # (n_pad,4,8,k1p)

    weights = (prepped["w1"], prepped["b1"], prepped["w2"], prepped["b2"],
               prepped["wf1"], prepped["bf1"], prepped["wf2"], prepped["bf2"],
               prepped["wf3"], prepped["bf3"])

    in_specs = [pl.BlockSpec((nb, 4, I2P, k1p), lambda b: (b, 0, 0, 0))]
    for arr in weights:                                  # weights stay resident
        in_specs.append(pl.BlockSpec(arr.shape, lambda b: (0, 0)))

    flops = 2 * n_pad * (4 * I2P * k1p * N1P            # conv1
                         + 4 * Q * Q * K2P * LANES      # conv2 (4 pool offsets)
                         + Q * Q * LANES * LANES        # fc1
                         + 2 * LANES * LANES)           # fc2 + fc3
    bytes_accessed = int(sum(int(np.prod(a.shape)) * a.dtype.itemsize
                             for a in (p1,) + weights) + n_pad * LANES * 4)

    out = pl.pallas_call(
        _make_lenet_kernel(nb, k1p),
        out_shape=jax.ShapeDtypeStruct((n_pad, LANES), jnp.float32),
        grid=(n_pad // nb,),
        in_specs=in_specs,
        out_specs=pl.BlockSpec((nb, LANES), lambda b: (b, 0)),
        scratch_shapes=[pltpu.VMEM((nb, 2, I2P, H1L), jnp.bfloat16)],
        compiler_params=pltpu.CompilerParams(
            dimension_semantics=("parallel",),
            vmem_limit_bytes=32 * 1024 * 1024),
        cost_estimate=pl.CostEstimate(flops=int(flops), transcendentals=0,
                                      bytes_accessed=bytes_accessed),
    )(p1, *weights)
    return out[:n, :prepped["out_dim"]]


# ------------------------ pure-JAX reference (checks) ------------------------

def lenet_reference(params, x_nchw):
    x = jnp.transpose(x_nchw, (0, 2, 3, 1)).astype(jnp.float32)

    def conv(x, w, b):
        y = jax.lax.conv_general_dilated(
            x, w, window_strides=(1, 1), padding="VALID",
            dimension_numbers=("NHWC", "HWIO", "NHWC"))
        return y + b

    def pool2(x):
        nn_, h, w, c = x.shape
        return x.reshape(nn_, h // 2, 2, w // 2, 2, c).max(axis=(2, 4))

    x = pool2(jax.nn.relu(conv(x, params["w1"], params["b1"])))      # (N,14,14,6)
    x = pool2(jax.nn.relu(conv(x, params["w2"], params["b2"])))      # (N,5,5,16)
    n = x.shape[0]
    xf = jnp.transpose(x, (0, 3, 1, 2)).reshape(n, -1)               # NCHW flatten
    h = jax.nn.relu(xf @ params["wf1"] + params["bf1"])
    h = jax.nn.relu(h @ params["wf2"] + params["bf2"])
    return h @ params["wf3"] + params["bf3"]


if __name__ == "__main__":
    # Classic LeNet geometry: batch=2, 1 channel, 32x32 spatial (NCHW).
    x = jax.random.normal(jax.random.PRNGKey(0), (2, 1, 32, 32), jnp.float32)
    params = init_params(in_channel=1, out_channel=10)
    prepped = prepare_params(params)

    fwd = jax.jit(lambda inp: lenet_forward(prepped, inp))
    y = fwd(x)
    jax.block_until_ready(y)

    y_ref = lenet_reference(params, x)
    np.testing.assert_allclose(np.asarray(y), np.asarray(y_ref),
                               rtol=5e-2, atol=5e-2)

    assert y.shape == (2, 10) and y.dtype == jnp.float32
    print("KERNEL_OK")
</pallas_src>

<mosaic_0001>
module attributes {stable_mosaic.version = 11 : i64} {
  func.func @kernel(%arg0: i32, %arg1: memref<8x4x8x256xbf16, #tpu.memory_space<vmem>>, %arg2: memref<256x256xbf16, #tpu.memory_space<vmem>>, %arg3: memref<1x84xf32, #tpu.memory_space<vmem>>, %arg4: memref<160x128xbf16, #tpu.memory_space<vmem>>, %arg5: memref<1x128xf32, #tpu.memory_space<vmem>>, %arg6: memref<3200x128xbf16, #tpu.memory_space<vmem>>, %arg7: memref<1x128xf32, #tpu.memory_space<vmem>>, %arg8: memref<128x128xbf16, #tpu.memory_space<vmem>>, %arg9: memref<1x128xf32, #tpu.memory_space<vmem>>, %arg10: memref<128x128xbf16, #tpu.memory_space<vmem>>, %arg11: memref<1x128xf32, #tpu.memory_space<vmem>>, %arg12: memref<8x128xf32, #tpu.memory_space<vmem>>, %arg13: memref<8x2x8x84xbf16, #tpu.memory_space<vmem>>) attributes {dimension_semantics = [#tpu.dimension_semantics<parallel>], iteration_bounds = array<i64: 1>, scalar_prefetch = 0 : i64, scratch_operands = 1 : i64, tpu.core_type = #tpu.core_type<tc>, window_params = [{transform_indices = @transform_0, window_bounds = array<i64: 8, 4, 8, 256>}, {pipeline_mode = #tpu.pipeline_mode<synchronous>, transform_indices = @transform_1, window_bounds = array<i64: 256, 256>}, {pipeline_mode = #tpu.pipeline_mode<synchronous>, transform_indices = @transform_2, window_bounds = array<i64: 1, 84>}, {pipeline_mode = #tpu.pipeline_mode<synchronous>, transform_indices = @transform_3, window_bounds = array<i64: 160, 128>}, {pipeline_mode = #tpu.pipeline_mode<synchronous>, transform_indices = @transform_4, window_bounds = array<i64: 1, 128>}, {pipeline_mode = #tpu.pipeline_mode<synchronous>, transform_indices = @transform_5, window_bounds = array<i64: 3200, 128>}, {pipeline_mode = #tpu.pipeline_mode<synchronous>, transform_indices = @transform_6, window_bounds = array<i64: 1, 128>}, {pipeline_mode = #tpu.pipeline_mode<synchronous>, transform_indices = @transform_7, window_bounds = array<i64: 128, 128>}, {pipeline_mode = #tpu.pipeline_mode<synchronous>, transform_indices = @transform_8, window_bounds = array<i64: 1, 128>}, {pipeline_mode = #tpu.pipeline_mode<synchronous>, transform_indices = @transform_9, window_bounds = array<i64: 128, 128>}, {pipeline_mode = #tpu.pipeline_mode<synchronous>, transform_indices = @transform_10, window_bounds = array<i64: 1, 128>}, {transform_indices = @transform_11, window_bounds = array<i64: 8, 128>}]} {
    %c0 = arith.constant 0 : index
    %c0_0 = arith.constant 0 : index
    %c0_1 = arith.constant 0 : index
    %c0_2 = arith.constant 0 : index
    %0 = vector.load %arg1[%c0, %c0_0, %c0_1, %c0_2] : memref<8x4x8x256xbf16, #tpu.memory_space<vmem>>, vector<8x4x8x256xbf16>
    %1 = vector.shape_cast %0 : vector<8x4x8x256xbf16> to vector<256x256xbf16>
    %c0_3 = arith.constant 0 : index
    %c0_4 = arith.constant 0 : index
    %2 = vector.load %arg2[%c0_3, %c0_4] : memref<256x256xbf16, #tpu.memory_space<vmem>>, vector<256x256xbf16>
    %cst = arith.constant dense<0.000000e+00> : vector<256x256xf32>
    %3 = tpu.matmul %1, %2, %cst {dimension_numbers = #tpu.dot_dimension_numbers<[1], [0], [0], [1], [0, 0, 1, 1], [], []>} : vector<256x256xbf16>, vector<256x256xbf16>, vector<256x256xf32> -> vector<256x256xf32>
    %4 = vector.shape_cast %3 : vector<256x256xf32> to vector<8x2x2x8x256xf32>
    %5 = vector.extract_strided_slice %4 {offsets = [0, 0, 0, 0, 0], sizes = [8, 1, 2, 8, 256], strides = [1, 1, 1, 1, 1]} : vector<8x2x2x8x256xf32> to vector<8x1x2x8x256xf32>
    %6 = vector.shape_cast %5 : vector<8x1x2x8x256xf32> to vector<8x2x8x256xf32>
    %7 = vector.extract_strided_slice %4 {offsets = [0, 1, 0, 0, 0], sizes = [8, 1, 2, 8, 256], strides = [1, 1, 1, 1, 1]} : vector<8x2x2x8x256xf32> to vector<8x1x2x8x256xf32>
    %8 = vector.shape_cast %7 : vector<8x1x2x8x256xf32> to vector<8x2x8x256xf32>
    %9 = arith.maximumf %6, %8 : vector<8x2x8x256xf32>
    %10 = vector.extract_strided_slice %9 {offsets = [0, 0, 0, 0], sizes = [8, 2, 8, 84], strides = [1, 1, 1, 1]} : vector<8x2x8x256xf32> to vector<8x2x8x84xf32>
    %11 = vector.extract_strided_slice %9 {offsets = [0, 0, 0, 84], sizes = [8, 2, 8, 84], strides = [1, 1, 1, 1]} : vector<8x2x8x256xf32> to vector<8x2x8x84xf32>
    %12 = arith.maximumf %10, %11 : vector<8x2x8x84xf32>
    %c0_5 = arith.constant 0 : index
    %c0_6 = arith.constant 0 : index
    %13 = vector.load %arg3[%c0_5, %c0_6] : memref<1x84xf32, #tpu.memory_space<vmem>>, vector<1x84xf32>
    %14 = vector.shape_cast %13 : vector<1x84xf32> to vector<1x1x1x84xf32>
    %15 = vector.broadcast %14 : vector<1x1x1x84xf32> to vector<8x2x8x84xf32>
    %16 = arith.addf %12, %15 : vector<8x2x8x84xf32>
    %cst_7 = arith.constant 0.000000e+00 : f32
    %17 = vector.broadcast %cst_7 : f32 to vector<8x2x8x84xf32>
    %18 = arith.maximumf %16, %17 : vector<8x2x8x84xf32>
    %19 = arith.truncf %18 : vector<8x2x8x84xf32> to vector<8x2x8x84xbf16>
    %c0_8 = arith.constant 0 : index
    %c0_9 = arith.constant 0 : index
    %c0_10 = arith.constant 0 : index
    %c0_11 = arith.constant 0 : index
    %20 = vector.load %arg13[%c0_8, %c0_9, %c0_10, %c0_11] : memref<8x2x8x84xbf16, #tpu.memory_space<vmem>>, vector<8x2x8x84xbf16>
    tpu.vector_store %arg13[%c0_8, %c0_9, %c0_10, %c0_11], %19 {strides = array<i32>} : memref<8x2x8x84xbf16, #tpu.memory_space<vmem>>, vector<8x2x8x84xbf16>,
    %cst_12 = arith.constant 0.000000e+00 : bf16
    %21 = vector.broadcast %cst_12 : bf16 to vector<8x5x10xbf16>
    %c0_13 = arith.constant 0 : index
    %c0_14 = arith.constant 0 : index
    %c0_15 = arith.constant 0 : index
    %c0_16 = arith.constant 0 : index
    %22 = vector.load %arg13[%c0_13, %c0_14, %c0_15, %c0_16] : memref<8x2x8x84xbf16, #tpu.memory_space<vmem>>, vector<8x1x5x84xbf16>
    %23 = vector.shape_cast %22 : vector<8x1x5x84xbf16> to vector<8x5x84xbf16>
    %24 = vector.extract_strided_slice %23 {offsets = [0, 0, 0], sizes = [8, 5, 30], strides = [1, 1, 1]} : vector<8x5x84xbf16> to vector<8x5x30xbf16>
    %c0_17 = arith.constant 0 : index
    %c1 = arith.constant 1 : index
    %c0_18 = arith.constant 0 : index
    %c0_19 = arith.constant 0 : index
    %25 = vector.load %arg13[%c0_17, %c1, %c0_18, %c0_19] : memref<8x2x8x84xbf16, #tpu.memory_space<vmem>>, vector<8x1x5x84xbf16>
    %26 = vector.shape_cast %25 : vector<8x1x5x84xbf16> to vector<8x5x84xbf16>
    %27 = vector.extract_strided_slice %26 {offsets = [0, 0, 0], sizes = [8, 5, 30], strides = [1, 1, 1]} : vector<8x5x84xbf16> to vector<8x5x30xbf16>
    %c0_20 = arith.constant 0 : index
    %c0_21 = arith.constant 0 : index
    %c1_22 = arith.constant 1 : index
    %c0_23 = arith.constant 0 : index
    %28 = vector.load %arg13[%c0_20, %c0_21, %c1_22, %c0_23] : memref<8x2x8x84xbf16, #tpu.memory_space<vmem>>, vector<8x1x5x84xbf16>
    %29 = vector.shape_cast %28 : vector<8x1x5x84xbf16> to vector<8x5x84xbf16>
    %30 = vector.extract_strided_slice %29 {offsets = [0, 0, 0], sizes = [8, 5, 30], strides = [1, 1, 1]} : vector<8x5x84xbf16> to vector<8x5x30xbf16>
    %c0_24 = arith.constant 0 : index
    %c1_25 = arith.constant 1 : index
    %c1_26 = arith.constant 1 : index
    %c0_27 = arith.constant 0 : index
    %31 = vector.load %arg13[%c0_24, %c1_25, %c1_26, %c0_27] : memref<8x2x8x84xbf16, #tpu.memory_space<vmem>>, vector<8x1x5x84xbf16>
    %32 = vector.shape_cast %31 : vector<8x1x5x84xbf16> to vector<8x5x84xbf16>
    %33 = vector.extract_strided_slice %32 {offsets = [0, 0, 0], sizes = [8, 5, 30], strides = [1, 1, 1]} : vector<8x5x84xbf16> to vector<8x5x30xbf16>
    %c0_28 = arith.constant 0 : index
    %c0_29 = arith.constant 0 : index
    %c2 = arith.constant 2 : index
    %c0_30 = arith.constant 0 : index
    %34 = vector.load %arg13[%c0_28, %c0_29, %c2, %c0_30] : memref<8x2x8x84xbf16, #tpu.memory_space<vmem>>, vector<8x1x5x84xbf16>
    %35 = vector.shape_cast %34 : vector<8x1x5x84xbf16> to vector<8x5x84xbf16>
    %36 = vector.extract_strided_slice %35 {offsets = [0, 0, 0], sizes = [8, 5, 30], strides = [1, 1, 1]} : vector<8x5x84xbf16> to vector<8x5x30xbf16>
    %37 = tpu.concatenate %24, %27, %30, %33, %36, %21 in 2 : vector<8x5x30xbf16>, vector<8x5x30xbf16>, vector<8x5x30xbf16>, vector<8x5x30xbf16>, vector<8x5x30xbf16>, vector<8x5x10xbf16> -> vector<8x5x160xbf16>
    %38 = vector.shape_cast %37 : vector<8x5x160xbf16> to vector<40x160xbf16>
    %c0_31 = arith.constant 0 : index
    %c0_32 = arith.constant 0 : index
    %39 = vector.load %arg4[%c0_31, %c0_32] : memref<160x128xbf16, #tpu.memory_space<vmem>>, vector<160x128xbf16>
    %cst_33 = arith.constant dense<0.000000e+00> : vector<40x128xf32>
    %40 = tpu.matmul %38, %39, %cst_33 {dimension_numbers = #tpu.dot_dimension_numbers<[1], [0], [0], [1], [0, 0, 1, 1], [], []>} : vector<40x160xbf16>, vector<160x128xbf16>, vector<40x128xf32> -> vector<40x128xf32>
    %c0_34 = arith.constant 0 : index
    %c0_35 = arith.constant 0 : index
    %c0_36 = arith.constant 0 : index
    %c0_37 = arith.constant 0 : index
    %41 = vector.load %arg13[%c0_34, %c0_35, %c0_36, %c0_37] : memref<8x2x8x84xbf16, #tpu.memory_space<vmem>>, vector<8x1x5x84xbf16>
    %42 = vector.shape_cast %41 : vector<8x1x5x84xbf16> to vector<8x5x84xbf16>
    %43 = vector.extract_strided_slice %42 {offsets = [0, 0, 6], sizes = [8, 5, 30], strides = [1, 1, 1]} : vector<8x5x84xbf16> to vector<8x5x30xbf16>
    %c0_38 = arith.constant 0 : index
    %c1_39 = arith.constant 1 : index
    %c0_40 = arith.constant 0 : index
    %c0_41 = arith.constant 0 : index
    %44 = vector.load %arg13[%c0_38, %c1_39, %c0_40, %c0_41] : memref<8x2x8x84xbf16, #tpu.memory_space<vmem>>, vector<8x1x5x84xbf16>
    %45 = vector.shape_cast %44 : vector<8x1x5x84xbf16> to vector<8x5x84xbf16>
    %46 = vector.extract_strided_slice %45 {offsets = [0, 0, 6], sizes = [8, 5, 30], strides = [1, 1, 1]} : vector<8x5x84xbf16> to vector<8x5x30xbf16>
    %c0_42 = arith.constant 0 : index
    %c0_43 = arith.constant 0 : index
    %c1_44 = arith.constant 1 : index
    %c0_45 = arith.constant 0 : index
    %47 = vector.load %arg13[%c0_42, %c0_43, %c1_44, %c0_45] : memref<8x2x8x84xbf16, #tpu.memory_space<vmem>>, vector<8x1x5x84xbf16>
    %48 = vector.shape_cast %47 : vector<8x1x5x84xbf16> to vector<8x5x84xbf16>
    %49 = vector.extract_strided_slice %48 {offsets = [0, 0, 6], sizes = [8, 5, 30], strides = [1, 1, 1]} : vector<8x5x84xbf16> to vector<8x5x30xbf16>
    %c0_46 = arith.constant 0 : index
    %c1_47 = arith.constant 1 : index
    %c1_48 = arith.constant 1 : index
    %c0_49 = arith.constant 0 : index
    %50 = vector.load %arg13[%c0_46, %c1_47, %c1_48, %c0_49] : memref<8x2x8x84xbf16, #tpu.memory_space<vmem>>, vector<8x1x5x84xbf16>
    %51 = vector.shape_cast %50 : vector<8x1x5x84xbf16> to vector<8x5x84xbf16>
    %52 = vector.extract_strided_slice %51 {offsets = [0, 0, 6], sizes = [8, 5, 30], strides = [1, 1, 1]} : vector<8x5x84xbf16> to vector<8x5x30xbf16>
    %c0_50 = arith.constant 0 : index
    %c0_51 = arith.constant 0 : index
    %c2_52 = arith.constant 2 : index
    %c0_53 = arith.constant 0 : index
    %53 = vector.load %arg13[%c0_50, %c0_51, %c2_52, %c0_53] : memref<8x2x8x84xbf16, #tpu.memory_space<vmem>>, vector<8x1x5x84xbf16>
    %54 = vector.shape_cast %53 : vector<8x1x5x84xbf16> to vector<8x5x84xbf16>
    %55 = vector.extract_strided_slice %54 {offsets = [0, 0, 6], sizes = [8, 5, 30], strides = [1, 1, 1]} : vector<8x5x84xbf16> to vector<8x5x30xbf16>
    %56 = tpu.concatenate %43, %46, %49, %52, %55, %21 in 2 : vector<8x5x30xbf16>, vector<8x5x30xbf16>, vector<8x5x30xbf16>, vector<8x5x30xbf16>, vector<8x5x30xbf16>, vector<8x5x10xbf16> -> vector<8x5x160xbf16>
    %57 = vector.shape_cast %56 : vector<8x5x160xbf16> to vector<40x160xbf16>
    %c0_54 = arith.constant 0 : index
    %c0_55 = arith.constant 0 : index
    %58 = vector.load %arg4[%c0_54, %c0_55] : memref<160x128xbf16, #tpu.memory_space<vmem>>, vector<160x128xbf16>
    %cst_56 = arith.constant dense<0.000000e+00> : vector<40x128xf32>
    %59 = tpu.matmul %57, %58, %cst_56 {dimension_numbers = #tpu.dot_dimension_numbers<[1], [0], [0], [1], [0, 0, 1, 1], [], []>} : vector<40x160xbf16>, vector<160x128xbf16>, vector<40x128xf32> -> vector<40x128xf32>
    %60 = arith.maximumf %40, %59 : vector<40x128xf32>
    %c0_57 = arith.constant 0 : index
    %c1_58 = arith.constant 1 : index
    %c0_59 = arith.constant 0 : index
    %c0_60 = arith.constant 0 : index
    %61 = vector.load %arg13[%c0_57, %c1_58, %c0_59, %c0_60] : memref<8x2x8x84xbf16, #tpu.memory_space<vmem>>, vector<8x1x5x84xbf16>
    %62 = vector.shape_cast %61 : vector<8x1x5x84xbf16> to vector<8x5x84xbf16>
    %63 = vector.extract_strided_slice %62 {offsets = [0, 0, 0], sizes = [8, 5, 30], strides = [1, 1, 1]} : vector<8x5x84xbf16> to vector<8x5x30xbf16>
    %c0_61 = arith.constant 0 : index
    %c0_62 = arith.constant 0 : index
    %c1_63 = arith.constant 1 : index
    %c0_64 = arith.constant 0 : index
    %64 = vector.load %arg13[%c0_61, %c0_62, %c1_63, %c0_64] : memref<8x2x8x84xbf16, #tpu.memory_space<vmem>>, vector<8x1x5x84xbf16>
    %65 = vector.shape_cast %64 : vector<8x1x5x84xbf16> to vector<8x5x84xbf16>
    %66 = vector.extract_strided_slice %65 {offsets = [0, 0, 0], sizes = [8, 5, 30], strides = [1, 1, 1]} : vector<8x5x84xbf16> to vector<8x5x30xbf16>
    %c0_65 = arith.constant 0 : index
    %c1_66 = arith.constant 1 : index
    %c1_67 = arith.constant 1 : index
    %c0_68 = arith.constant 0 : index
    %67 = vector.load %arg13[%c0_65, %c1_66, %c1_67, %c0_68] : memref<8x2x8x84xbf16, #tpu.memory_space<vmem>>, vector<8x1x5x84xbf16>
    %68 = vector.shape_cast %67 : vector<8x1x5x84xbf16> to vector<8x5x84xbf16>
    %69 = vector.extract_strided_slice %68 {offsets = [0, 0, 0], sizes = [8, 5, 30], strides = [1, 1, 1]} : vector<8x5x84xbf16> to vector<8x5x30xbf16>
    %c0_69 = arith.constant 0 : index
    %c0_70 = arith.constant 0 : index
    %c2_71 = arith.constant 2 : index
    %c0_72 = arith.constant 0 : index
    %70 = vector.load %arg13[%c0_69, %c0_70, %c2_71, %c0_72] : memref<8x2x8x84xbf16, #tpu.memory_space<vmem>>, vector<8x1x5x84xbf16>
    %71 = vector.shape_cast %70 : vector<8x1x5x84xbf16> to vector<8x5x84xbf16>
    %72 = vector.extract_strided_slice %71 {offsets = [0, 0, 0], sizes = [8, 5, 30], strides = [1, 1, 1]} : vector<8x5x84xbf16> to vector<8x5x30xbf16>
    %c0_73 = arith.constant 0 : index
    %c1_74 = arith.constant 1 : index
    %c2_75 = arith.constant 2 : index
    %c0_76 = arith.constant 0 : index
    %73 = vector.load %arg13[%c0_73, %c1_74, %c2_75, %c0_76] : memref<8x2x8x84xbf16, #tpu.memory_space<vmem>>, vector<8x1x5x84xbf16>
    %74 = vector.shape_cast %73 : vector<8x1x5x84xbf16> to vector<8x5x84xbf16>
    %75 = vector.extract_strided_slice %74 {offsets = [0, 0, 0], sizes = [8, 5, 30], strides = [1, 1, 1]} : vector<8x5x84xbf16> to vector<8x5x30xbf16>
    %76 = tpu.concatenate %63, %66, %69, %72, %75, %21 in 2 : vector<8x5x30xbf16>, vector<8x5x30xbf16>, vector<8x5x30xbf16>, vector<8x5x30xbf16>, vector<8x5x30xbf16>, vector<8x5x10xbf16> -> vector<8x5x160xbf16>
    %77 = vector.shape_cast %76 : vector<8x5x160xbf16> to vector<40x160xbf16>
    %c0_77 = arith.constant 0 : index
    %c0_78 = arith.constant 0 : index
    %78 = vector.load %arg4[%c0_77, %c0_78] : memref<160x128xbf16, #tpu.memory_space<vmem>>, vector<160x128xbf16>
    %cst_79 = arith.constant dense<0.000000e+00> : vector<40x128xf32>
    %79 = tpu.matmul %77, %78, %cst_79 {dimension_numbers = #tpu.dot_dimension_numbers<[1], [0], [0], [1], [0, 0, 1, 1], [], []>} : vector<40x160xbf16>, vector<160x128xbf16>, vector<40x128xf32> -> vector<40x128xf32>
    %80 = arith.maximumf %60, %79 : vector<40x128xf32>
    %c0_80 = arith.constant 0 : index
    %c1_81 = arith.constant 1 : index
    %c0_82 = arith.constant 0 : index
    %c0_83 = arith.constant 0 : index
    %81 = vector.load %arg13[%c0_80, %c1_81, %c0_82, %c0_83] : memref<8x2x8x84xbf16, #tpu.memory_space<vmem>>, vector<8x1x5x84xbf16>
    %82 = vector.shape_cast %81 : vector<8x1x5x84xbf16> to vector<8x5x84xbf16>
    %83 = vector.extract_strided_slice %82 {offsets = [0, 0, 6], sizes = [8, 5, 30], strides = [1, 1, 1]} : vector<8x5x84xbf16> to vector<8x5x30xbf16>
    %c0_84 = arith.constant 0 : index
    %c0_85 = arith.constant 0 : index
    %c1_86 = arith.constant 1 : index
    %c0_87 = arith.constant 0 : index
    %84 = vector.load %arg13[%c0_84, %c0_85, %c1_86, %c0_87] : memref<8x2x8x84xbf16, #tpu.memory_space<vmem>>, vector<8x1x5x84xbf16>
    %85 = vector.shape_cast %84 : vector<8x1x5x84xbf16> to vector<8x5x84xbf16>
    %86 = vector.extract_strided_slice %85 {offsets = [0, 0, 6], sizes = [8, 5, 30], strides = [1, 1, 1]} : vector<8x5x84xbf16> to vector<8x5x30xbf16>
    %c0_88 = arith.constant 0 : index
    %c1_89 = arith.constant 1 : index
    %c1_90 = arith.constant 1 : index
    %c0_91 = arith.constant 0 : index
    %87 = vector.load %arg13[%c0_88, %c1_89, %c1_90, %c0_91] : memref<8x2x8x84xbf16, #tpu.memory_space<vmem>>, vector<8x1x5x84xbf16>
    %88 = vector.shape_cast %87 : vector<8x1x5x84xbf16> to vector<8x5x84xbf16>
    %89 = vector.extract_strided_slice %88 {offsets = [0, 0, 6], sizes = [8, 5, 30], strides = [1, 1, 1]} : vector<8x5x84xbf16> to vector<8x5x30xbf16>
    %c0_92 = arith.constant 0 : index
    %c0_93 = arith.constant 0 : index
    %c2_94 = arith.constant 2 : index
    %c0_95 = arith.constant 0 : index
    %90 = vector.load %arg13[%c0_92, %c0_93, %c2_94, %c0_95] : memref<8x2x8x84xbf16, #tpu.memory_space<vmem>>, vector<8x1x5x84xbf16>
    %91 = vector.shape_cast %90 : vector<8x1x5x84xbf16> to vector<8x5x84xbf16>
    %92 = vector.extract_strided_slice %91 {offsets = [0, 0, 6], sizes = [8, 5, 30], strides = [1, 1, 1]} : vector<8x5x84xbf16> to vector<8x5x30xbf16>
    %c0_96 = arith.constant 0 : index
    %c1_97 = arith.constant 1 : index
    %c2_98 = arith.constant 2 : index
    %c0_99 = arith.constant 0 : index
    %93 = vector.load %arg13[%c0_96, %c1_97, %c2_98, %c0_99] : memref<8x2x8x84xbf16, #tpu.memory_space<vmem>>, vector<8x1x5x84xbf16>
    %94 = vector.shape_cast %93 : vector<8x1x5x84xbf16> to vector<8x5x84xbf16>
    %95 = vector.extract_strided_slice %94 {offsets = [0, 0, 6], sizes = [8, 5, 30], strides = [1, 1, 1]} : vector<8x5x84xbf16> to vector<8x5x30xbf16>
    %96 = tpu.concatenate %83, %86, %89, %92, %95, %21 in 2 : vector<8x5x30xbf16>, vector<8x5x30xbf16>, vector<8x5x30xbf16>, vector<8x5x30xbf16>, vector<8x5x30xbf16>, vector<8x5x10xbf16> -> vector<8x5x160xbf16>
    %97 = vector.shape_cast %96 : vector<8x5x160xbf16> to vector<40x160xbf16>
    %c0_100 = arith.constant 0 : index
    %c0_101 = arith.constant 0 : index
    %98 = vector.load %arg4[%c0_100, %c0_101] : memref<160x128xbf16, #tpu.memory_space<vmem>>, vector<160x128xbf16>
    %cst_102 = arith.constant dense<0.000000e+00> : vector<40x128xf32>
    %99 = tpu.matmul %97, %98, %cst_102 {dimension_numbers = #tpu.dot_dimension_numbers<[1], [0], [0], [1], [0, 0, 1, 1], [], []>} : vector<40x160xbf16>, vector<160x128xbf16>, vector<40x128xf32> -> vector<40x128xf32>
    %100 = arith.maximumf %80, %99 : vector<40x128xf32>
    %c0_103 = arith.constant 0 : index
    %c0_104 = arith.constant 0 : index
    %101 = vector.load %arg5[%c0_103, %c0_104] : memref<1x128xf32, #tpu.memory_space<vmem>>, vector<1x128xf32>
    %102 = vector.broadcast %101 : vector<1x128xf32> to vector<40x128xf32>
    %103 = arith.addf %100, %102 : vector<40x128xf32>
    %cst_105 = arith.constant 0.000000e+00 : f32
    %104 = vector.broadcast %cst_105 : f32 to vector<40x128xf32>
    %105 = arith.maximumf %103, %104 : vector<40x128xf32>
    %106 = vector.shape_cast %105 : vector<40x128xf32> to vector<8x5x128xf32>
    %107 = arith.truncf %106 : vector<8x5x128xf32> to vector<8x5x128xbf16>
    %c0_106 = arith.constant 0 : index
    %c0_107 = arith.constant 0 : index
    %c0_108 = arith.constant 0 : index
    %c0_109 = arith.constant 0 : index
    %108 = vector.load %arg13[%c0_106, %c0_107, %c0_108, %c0_109] : memref<8x2x8x84xbf16, #tpu.memory_space<vmem>>, vector<8x1x5x84xbf16>
    %109 = vector.shape_cast %108 : vector<8x1x5x84xbf16> to vector<8x5x84xbf16>
    %110 = vector.extract_strided_slice %109 {offsets = [0, 0, 12], sizes = [8, 5, 30], strides = [1, 1, 1]} : vector<8x5x84xbf16> to vector<8x5x30xbf16>
    %c0_110 = arith.constant 0 : index
    %c1_111 = arith.constant 1 : index
    %c0_112 = arith.constant 0 : index
    %c0_113 = arith.constant 0 : index
    %111 = vector.load %arg13[%c0_110, %c1_111, %c0_112, %c0_113] : memref<8x2x8x84xbf16, #tpu.memory_space<vmem>>, vector<8x1x5x84xbf16>
    %112 = vector.shape_cast %111 : vector<8x1x5x84xbf16> to vector<8x5x84xbf16>
    %113 = vector.extract_strided_slice %112 {offsets = [0, 0, 12], sizes = [8, 5, 30], strides = [1, 1, 1]} : vector<8x5x84xbf16> to vector<8x5x30xbf16>
    %c0_114 = arith.constant 0 : index
    %c0_115 = arith.constant 0 : index
    %c1_116 = arith.constant 1 : index
    %c0_117 = arith.constant 0 : index
    %114 = vector.load %arg13[%c0_114, %c0_115, %c1_116, %c0_117] : memref<8x2x8x84xbf16, #tpu.memory_space<vmem>>, vector<8x1x5x84xbf16>
    %115 = vector.shape_cast %114 : vector<8x1x5x84xbf16> to vector<8x5x84xbf16>
    %116 = vector.extract_strided_slice %115 {offsets = [0, 0, 12], sizes = [8, 5, 30], strides = [1, 1, 1]} : vector<8x5x84xbf16> to vector<8x5x30xbf16>
    %c0_118 = arith.constant 0 : index
    %c1_119 = arith.constant 1 : index
    %c1_120 = arith.constant 1 : index
    %c0_121 = arith.constant 0 : index
    %117 = vector.load %arg13[%c0_118, %c1_119, %c1_120, %c0_121] : memref<8x2x8x84xbf16, #tpu.memory_space<vmem>>, vector<8x1x5x84xbf16>
    %118 = vector.shape_cast %117 : vector<8x1x5x84xbf16> to vector<8x5x84xbf16>
    %119 = vector.extract_strided_slice %118 {offsets = [0, 0, 12], sizes = [8, 5, 30], strides = [1, 1, 1]} : vector<8x5x84xbf16> to vector<8x5x30xbf16>
    %c0_122 = arith.constant 0 : index
    %c0_123 = arith.constant 0 : index
    %c2_124 = arith.constant 2 : index
    %c0_125 = arith.constant 0 : index
    %120 = vector.load %arg13[%c0_122, %c0_123, %c2_124, %c0_125] : memref<8x2x8x84xbf16, #tpu.memory_space<vmem>>, vector<8x1x5x84xbf16>
    %121 = vector.shape_cast %120 : vector<8x1x5x84xbf16> to vector<8x5x84xbf16>
    %122 = vector.extract_strided_slice %121 {offsets = [0, 0, 12], sizes = [8, 5, 30], strides = [1, 1, 1]} : vector<8x5x84xbf16> to vector<8x5x30xbf16>
    %123 = tpu.concatenate %110, %113, %116, %119, %122, %21 in 2 : vector<8x5x30xbf16>, vector<8x5x30xbf16>, vector<8x5x30xbf16>, vector<8x5x30xbf16>, vector<8x5x30xbf16>, vector<8x5x10xbf16> -> vector<8x5x160xbf16>
    %124 = vector.shape_cast %123 : vector<8x5x160xbf16> to vector<40x160xbf16>
    %c0_126 = arith.constant 0 : index
    %c0_127 = arith.constant 0 : index
    %125 = vector.load %arg4[%c0_126, %c0_127] : memref<160x128xbf16, #tpu.memory_space<vmem>>, vector<160x128xbf16>
    %cst_128 = arith.constant dense<0.000000e+00> : vector<40x128xf32>
    %126 = tpu.matmul %124, %125, %cst_128 {dimension_numbers = #tpu.dot_dimension_numbers<[1], [0], [0], [1], [0, 0, 1, 1], [], []>} : vector<40x160xbf16>, vector<160x128xbf16>, vector<40x128xf32> -> vector<40x128xf32>
    %c0_129 = arith.constant 0 : index
    %c0_130 = arith.constant 0 : index
    %c0_131 = arith.constant 0 : index
    %c0_132 = arith.constant 0 : index
    %127 = vector.load %arg13[%c0_129, %c0_130, %c0_131, %c0_132] : memref<8x2x8x84xbf16, #tpu.memory_space<vmem>>, vector<8x1x5x84xbf16>
    %128 = vector.shape_cast %127 : vector<8x1x5x84xbf16> to vector<8x5x84xbf16>
    %129 = vector.extract_strided_slice %128 {offsets = [0, 0, 18], sizes = [8, 5, 30], strides = [1, 1, 1]} : vector<8x5x84xbf16> to vector<8x5x30xbf16>
    %c0_133 = arith.constant 0 : index
    %c1_134 = arith.constant 1 : index
    %c0_135 = arith.constant 0 : index
    %c0_136 = arith.constant 0 : index
    %130 = vector.load %arg13[%c0_133, %c1_134, %c0_135, %c0_136] : memref<8x2x8x84xbf16, #tpu.memory_space<vmem>>, vector<8x1x5x84xbf16>
    %131 = vector.shape_cast %130 : vector<8x1x5x84xbf16> to vector<8x5x84xbf16>
    %132 = vector.extract_strided_slice %131 {offsets = [0, 0, 18], sizes = [8, 5, 30], strides = [1, 1, 1]} : vector<8x5x84xbf16> to vector<8x5x30xbf16>
    %c0_137 = arith.constant 0 : index
    %c0_138 = arith.constant 0 : index
    %c1_139 = arith.constant 1 : index
    %c0_140 = arith.constant 0 : index
    %133 = vector.load %arg13[%c0_137, %c0_138, %c1_139, %c0_140] : memref<8x2x8x84xbf16, #tpu.memory_space<vmem>>, vector<8x1x5x84xbf16>
    %134 = vector.shape_cast %133 : vector<8x1x5x84xbf16> to vector<8x5x84xbf16>
    %135 = vector.extract_strided_slice %134 {offsets = [0, 0, 18], sizes = [8, 5, 30], strides = [1, 1, 1]} : vector<8x5x84xbf16> to vector<8x5x30xbf16>
    %c0_141 = arith.constant 0 : index
    %c1_142 = arith.constant 1 : index
    %c1_143 = arith.constant 1 : index
    %c0_144 = arith.constant 0 : index
    %136 = vector.load %arg13[%c0_141, %c1_142, %c1_143, %c0_144] : memref<8x2x8x84xbf16, #tpu.memory_space<vmem>>, vector<8x1x5x84xbf16>
    %137 = vector.shape_cast %136 : vector<8x1x5x84xbf16> to vector<8x5x84xbf16>
    %138 = vector.extract_strided_slice %137 {offsets = [0, 0, 18], sizes = [8, 5, 30], strides = [1, 1, 1]} : vector<8x5x84xbf16> to vector<8x5x30xbf16>
    %c0_145 = arith.constant 0 : index
    %c0_146 = arith.constant 0 : index
    %c2_147 = arith.constant 2 : index
    %c0_148 = arith.constant 0 : index
    %139 = vector.load %arg13[%c0_145, %c0_146, %c2_147, %c0_148] : memref<8x2x8x84xbf16, #tpu.memory_space<vmem>>, vector<8x1x5x84xbf16>
    %140 = vector.shape_cast %139 : vector<8x1x5x84xbf16> to vector<8x5x84xbf16>
    %141 = vector.extract_strided_slice %140 {offsets = [0, 0, 18], sizes = [8, 5, 30], strides = [1, 1, 1]} : vector<8x5x84xbf16> to vector<8x5x30xbf16>
    %142 = tpu.concatenate %129, %132, %135, %138, %141, %21 in 2 : vector<8x5x30xbf16>, vector<8x5x30xbf16>, vector<8x5x30xbf16>, vector<8x5x30xbf16>, vector<8x5x30xbf16>, vector<8x5x10xbf16> -> vector<8x5x160xbf16>
    %143 = vector.shape_cast %142 : vector<8x5x160xbf16> to vector<40x160xbf16>
    %c0_149 = arith.constant 0 : index
    %c0_150 = arith.constant 0 : index
    %144 = vector.load %arg4[%c0_149, %c0_150] : memref<160x128xbf16, #tpu.memory_space<vmem>>, vector<160x128xbf16>
    %cst_151 = arith.constant dense<0.000000e+00> : vector<40x128xf32>
    %145 = tpu.matmul %143, %144, %cst_151 {dimension_numbers = #tpu.dot_dimension_numbers<[1], [0], [0], [1], [0, 0, 1, 1], [], []>} : vector<40x160xbf16>, vector<160x128xbf16>, vector<40x128xf32> -> vector<40x128xf32>
    %146 = arith.maximumf %126, %145 : vector<40x128xf32>
    %c0_152 = arith.constant 0 : index
    %c1_153 = arith.constant 1 : index
    %c0_154 = arith.constant 0 : index
    %c0_155 = arith.constant 0 : index
    %147 = vector.load %arg13[%c0_152, %c1_153, %c0_154, %c0_155] : memref<8x2x8x84xbf16, #tpu.memory_space<vmem>>, vector<8x1x5x84xbf16>
    %148 = vector.shape_cast %147 : vector<8x1x5x84xbf16> to vector<8x5x84xbf16>
    %149 = vector.extract_strided_slice %148 {offsets = [0, 0, 12], sizes = [8, 5, 30], strides = [1, 1, 1]} : vector<8x5x84xbf16> to vector<8x5x30xbf16>
    %c0_156 = arith.constant 0 : index
    %c0_157 = arith.constant 0 : index
    %c1_158 = arith.constant 1 : index
    %c0_159 = arith.constant 0 : index
    %150 = vector.load %arg13[%c0_156, %c0_157, %c1_158, %c0_159] : memref<8x2x8x84xbf16, #tpu.memory_space<vmem>>, vector<8x1x5x84xbf16>
    %151 = vector.shape_cast %150 : vector<8x1x5x84xbf16> to vector<8x5x84xbf16>
    %152 = vector.extract_strided_slice %151 {offsets = [0, 0, 12], sizes = [8, 5, 30], strides = [1, 1, 1]} : vector<8x5x84xbf16> to vector<8x5x30xbf16>
    %c0_160 = arith.constant 0 : index
    %c1_161 = arith.constant 1 : index
    %c1_162 = arith.constant 1 : index
    %c0_163 = arith.constant 0 : index
    %153 = vector.load %arg13[%c0_160, %c1_161, %c1_162, %c0_163] : memref<8x2x8x84xbf16, #tpu.memory_space<vmem>>, vector<8x1x5x84xbf16>
    %154 = vector.shape_cast %153 : vector<8x1x5x84xbf16> to vector<8x5x84xbf16>
    %155 = vector.extract_strided_slice %154 {offsets = [0, 0, 12], sizes = [8, 5, 30], strides = [1, 1, 1]} : vector<8x5x84xbf16> to vector<8x5x30xbf16>
    %c0_164 = arith.constant 0 : index
    %c0_165 = arith.constant 0 : index
    %c2_166 = arith.constant 2 : index
    %c0_167 = arith.constant 0 : index
    %156 = vector.load %arg13[%c0_164, %c0_165, %c2_166, %c0_167] : memref<8x2x8x84xbf16, #tpu.memory_space<vmem>>, vector<8x1x5x84xbf16>
    %157 = vector.shape_cast %156 : vector<8x1x5x84xbf16> to vector<8x5x84xbf16>
    %158 = vector.extract_strided_slice %157 {offsets = [0, 0, 12], sizes = [8, 5, 30], strides = [1, 1, 1]} : vector<8x5x84xbf16> to vector<8x5x30xbf16>
    %c0_168 = arith.constant 0 : index
    %c1_169 = arith.constant 1 : index
    %c2_170 = arith.constant 2 : index
    %c0_171 = arith.constant 0 : index
    %159 = vector.load %arg13[%c0_168, %c1_169, %c2_170, %c0_171] : memref<8x2x8x84xbf16, #tpu.memory_space<vmem>>, vector<8x1x5x84xbf16>
    %160 = vector.shape_cast %159 : vector<8x1x5x84xbf16> to vector<8x5x84xbf16>
    %161 = vector.extract_strided_slice %160 {offsets = [0, 0, 12], sizes = [8, 5, 30], strides = [1, 1, 1]} : vector<8x5x84xbf16> to vector<8x5x30xbf16>
    %162 = tpu.concatenate %149, %152, %155, %158, %161, %21 in 2 : vector<8x5x30xbf16>, vector<8x5x30xbf16>, vector<8x5x30xbf16>, vector<8x5x30xbf16>, vector<8x5x30xbf16>, vector<8x5x10xbf16> -> vector<8x5x160xbf16>
    %163 = vector.shape_cast %162 : vector<8x5x160xbf16> to vector<40x160xbf16>
    %c0_172 = arith.constant 0 : index
    %c0_173 = arith.constant 0 : index
    %164 = vector.load %arg4[%c0_172, %c0_173] : memref<160x128xbf16, #tpu.memory_space<vmem>>, vector<160x128xbf16>
    %cst_174 = arith.constant dense<0.000000e+00> : vector<40x128xf32>
    %165 = tpu.matmul %163, %164, %cst_174 {dimension_numbers = #tpu.dot_dimension_numbers<[1], [0], [0], [1], [0, 0, 1, 1], [], []>} : vector<40x160xbf16>, vector<160x128xbf16>, vector<40x128xf32> -> vector<40x128xf32>
    %166 = arith.maximumf %146, %165 : vector<40x128xf32>
    %c0_175 = arith.constant 0 : index
    %c1_176 = arith.constant 1 : index
    %c0_177 = arith.constant 0 : index
    %c0_178 = arith.constant 0 : index
    %167 = vector.load %arg13[%c0_175, %c1_176, %c0_177, %c0_178] : memref<8x2x8x84xbf16, #tpu.memory_space<vmem>>, vector<8x1x5x84xbf16>
    %168 = vector.shape_cast %167 : vector<8x1x5x84xbf16> to vector<8x5x84xbf16>
    %169 = vector.extract_strided_slice %168 {offsets = [0, 0, 18], sizes = [8, 5, 30], strides = [1, 1, 1]} : vector<8x5x84xbf16> to vector<8x5x30xbf16>
    %c0_179 = arith.constant 0 : index
    %c0_180 = arith.constant 0 : index
    %c1_181 = arith.constant 1 : index
    %c0_182 = arith.constant 0 : index
    %170 = vector.load %arg13[%c0_179, %c0_180, %c1_181, %c0_182] : memref<8x2x8x84xbf16, #tpu.memory_space<vmem>>, vector<8x1x5x84xbf16>
    %171 = vector.shape_cast %170 : vector<8x1x5x84xbf16> to vector<8x5x84xbf16>
    %172 = vector.extract_strided_slice %171 {offsets = [0, 0, 18], sizes = [8, 5, 30], strides = [1, 1, 1]} : vector<8x5x84xbf16> to vector<8x5x30xbf16>
    %c0_183 = arith.constant 0 : index
    %c1_184 = arith.constant 1 : index
    %c1_185 = arith.constant 1 : index
    %c0_186 = arith.constant 0 : index
    %173 = vector.load %arg13[%c0_183, %c1_184, %c1_185, %c0_186] : memref<8x2x8x84xbf16, #tpu.memory_space<vmem>>, vector<8x1x5x84xbf16>
    %174 = vector.shape_cast %173 : vector<8x1x5x84xbf16> to vector<8x5x84xbf16>
    %175 = vector.extract_strided_slice %174 {offsets = [0, 0, 18], sizes = [8, 5, 30], strides = [1, 1, 1]} : vector<8x5x84xbf16> to vector<8x5x30xbf16>
    %c0_187 = arith.constant 0 : index
    %c0_188 = arith.constant 0 : index
    %c2_189 = arith.constant 2 : index
    %c0_190 = arith.constant 0 : index
    %176 = vector.load %arg13[%c0_187, %c0_188, %c2_189, %c0_190] : memref<8x2x8x84xbf16, #tpu.memory_space<vmem>>, vector<8x1x5x84xbf16>
    %177 = vector.shape_cast %176 : vector<8x1x5x84xbf16> to vector<8x5x84xbf16>
    %178 = vector.extract_strided_slice %177 {offsets = [0, 0, 18], sizes = [8, 5, 30], strides = [1, 1, 1]} : vector<8x5x84xbf16> to vector<8x5x30xbf16>
    %c0_191 = arith.constant 0 : index
    %c1_192 = arith.constant 1 : index
    %c2_193 = arith.constant 2 : index
    %c0_194 = arith.constant 0 : index
    %179 = vector.load %arg13[%c0_191, %c1_192, %c2_193, %c0_194] : memref<8x2x8x84xbf16, #tpu.memory_space<vmem>>, vector<8x1x5x84xbf16>
    %180 = vector.shape_cast %179 : vector<8x1x5x84xbf16> to vector<8x5x84xbf16>
    %181 = vector.extract_strided_slice %180 {offsets = [0, 0, 18], sizes = [8, 5, 30], strides = [1, 1, 1]} : vector<8x5x84xbf16> to vector<8x5x30xbf16>
    %182 = tpu.concatenate %169, %172, %175, %178, %181, %21 in 2 : vector<8x5x30xbf16>, vector<8x5x30xbf16>, vector<8x5x30xbf16>, vector<8x5x30xbf16>, vector<8x5x30xbf16>, vector<8x5x10xbf16> -> vector<8x5x160xbf16>
    %183 = vector.shape_cast %182 : vector<8x5x160xbf16> to vector<40x160xbf16>
    %c0_195 = arith.constant 0 : index
    %c0_196 = arith.constant 0 : index
    %184 = vector.load %arg4[%c0_195, %c0_196] : memref<160x128xbf16, #tpu.memory_space<vmem>>, vector<160x128xbf16>
    %cst_197 = arith.constant dense<0.000000e+00> : vector<40x128xf32>
    %185 = tpu.matmul %183, %184, %cst_197 {dimension_numbers = #tpu.dot_dimension_numbers<[1], [0], [0], [1], [0, 0, 1, 1], [], []>} : vector<40x160xbf16>, vector<160x128xbf16>, vector<40x128xf32> -> vector<40x128xf32>
    %186 = arith.maximumf %166, %185 : vector<40x128xf32>
    %c0_198 = arith.constant 0 : index
    %c0_199 = arith.constant 0 : index
    %187 = vector.load %arg5[%c0_198, %c0_199] : memref<1x128xf32, #tpu.memory_space<vmem>>, vector<1x128xf32>
    %188 = vector.broadcast %187 : vector<1x128xf32> to vector<40x128xf32>
    %189 = arith.addf %186, %188 : vector<40x128xf32>
    %cst_200 = arith.constant 0.000000e+00 : f32
    %190 = vector.broadcast %cst_200 : f32 to vector<40x128xf32>
    %191 = arith.maximumf %189, %190 : vector<40x128xf32>
    %192 = vector.shape_cast %191 : vector<40x128xf32> to vector<8x5x128xf32>
    %193 = arith.truncf %192 : vector<8x5x128xf32> to vector<8x5x128xbf16>
    %c0_201 = arith.constant 0 : index
    %c0_202 = arith.constant 0 : index
    %c0_203 = arith.constant 0 : index
    %c0_204 = arith.constant 0 : index
    %194 = vector.load %arg13[%c0_201, %c0_202, %c0_203, %c0_204] : memref<8x2x8x84xbf16, #tpu.memory_space<vmem>>, vector<8x1x5x84xbf16>
    %195 = vector.shape_cast %194 : vector<8x1x5x84xbf16> to vector<8x5x84xbf16>
    %196 = vector.extract_strided_slice %195 {offsets = [0, 0, 24], sizes = [8, 5, 30], strides = [1, 1, 1]} : vector<8x5x84xbf16> to vector<8x5x30xbf16>
    %c0_205 = arith.constant 0 : index
    %c1_206 = arith.constant 1 : index
    %c0_207 = arith.constant 0 : index
    %c0_208 = arith.constant 0 : index
    %197 = vector.load %arg13[%c0_205, %c1_206, %c0_207, %c0_208] : memref<8x2x8x84xbf16, #tpu.memory_space<vmem>>, vector<8x1x5x84xbf16>
    %198 = vector.shape_cast %197 : vector<8x1x5x84xbf16> to vector<8x5x84xbf16>
    %199 = vector.extract_strided_slice %198 {offsets = [0, 0, 24], sizes = [8, 5, 30], strides = [1, 1, 1]} : vector<8x5x84xbf16> to vector<8x5x30xbf16>
    %c0_209 = arith.constant 0 : index
    %c0_210 = arith.constant 0 : index
    %c1_211 = arith.constant 1 : index
    %c0_212 = arith.constant 0 : index
    %200 = vector.load %arg13[%c0_209, %c0_210, %c1_211, %c0_212] : memref<8x2x8x84xbf16, #tpu.memory_space<vmem>>, vector<8x1x5x84xbf16>
    %201 = vector.shape_cast %200 : vector<8x1x5x84xbf16> to vector<8x5x84xbf16>
    %202 = vector.extract_strided_slice %201 {offsets = [0, 0, 24], sizes = [8, 5, 30], strides = [1, 1, 1]} : vector<8x5x84xbf16> to vector<8x5x30xbf16>
    %c0_213 = arith.constant 0 : index
    %c1_214 = arith.constant 1 : index
    %c1_215 = arith.constant 1 : index
    %c0_216 = arith.constant 0 : index
    %203 = vector.load %arg13[%c0_213, %c1_214, %c1_215, %c0_216] : memref<8x2x8x84xbf16, #tpu.memory_space<vmem>>, vector<8x1x5x84xbf16>
    %204 = vector.shape_cast %203 : vector<8x1x5x84xbf16> to vector<8x5x84xbf16>
    %205 = vector.extract_strided_slice %204 {offsets = [0, 0, 24], sizes = [8, 5, 30], strides = [1, 1, 1]} : vector<8x5x84xbf16> to vector<8x5x30xbf16>
    %c0_217 = arith.constant 0 : index
    %c0_218 = arith.constant 0 : index
    %c2_219 = arith.constant 2 : index
    %c0_220 = arith.constant 0 : index
    %206 = vector.load %arg13[%c0_217, %c0_218, %c2_219, %c0_220] : memref<8x2x8x84xbf16, #tpu.memory_space<vmem>>, vector<8x1x5x84xbf16>
    %207 = vector.shape_cast %206 : vector<8x1x5x84xbf16> to vector<8x5x84xbf16>
    %208 = vector.extract_strided_slice %207 {offsets = [0, 0, 24], sizes = [8, 5, 30], strides = [1, 1, 1]} : vector<8x5x84xbf16> to vector<8x5x30xbf16>
    %209 = tpu.concatenate %196, %199, %202, %205, %208, %21 in 2 : vector<8x5x30xbf16>, vector<8x5x30xbf16>, vector<8x5x30xbf16>, vector<8x5x30xbf16>, vector<8x5x30xbf16>, vector<8x5x10xbf16> -> vector<8x5x160xbf16>
    %210 = vector.shape_cast %209 : vector<8x5x160xbf16> to vector<40x160xbf16>
    %c0_221 = arith.constant 0 : index
    %c0_222 = arith.constant 0 : index
    %211 = vector.load %arg4[%c0_221, %c0_222] : memref<160x128xbf16, #tpu.memory_space<vmem>>, vector<160x128xbf16>
    %cst_223 = arith.constant dense<0.000000e+00> : vector<40x128xf32>
    %212 = tpu.matmul %210, %211, %cst_223 {dimension_numbers = #tpu.dot_dimension_numbers<[1], [0], [0], [1], [0, 0, 1, 1], [], []>} : vector<40x160xbf16>, vector<160x128xbf16>, vector<40x128xf32> -> vector<40x128xf32>
    %c0_224 = arith.constant 0 : index
    %c0_225 = arith.constant 0 : index
    %c0_226 = arith.constant 0 : index
    %c0_227 = arith.constant 0 : index
    %213 = vector.load %arg13[%c0_224, %c0_225, %c0_226, %c0_227] : memref<8x2x8x84xbf16, #tpu.memory_space<vmem>>, vector<8x1x5x84xbf16>
    %214 = vector.shape_cast %213 : vector<8x1x5x84xbf16> to vector<8x5x84xbf16>
    %215 = vector.extract_strided_slice %214 {offsets = [0, 0, 30], sizes = [8, 5, 30], strides = [1, 1, 1]} : vector<8x5x84xbf16> to vector<8x5x30xbf16>
    %c0_228 = arith.constant 0 : index
    %c1_229 = arith.constant 1 : index
    %c0_230 = arith.constant 0 : index
    %c0_231 = arith.constant 0 : index
    %216 = vector.load %arg13[%c0_228, %c1_229, %c0_230, %c0_231] : memref<8x2x8x84xbf16, #tpu.memory_space<vmem>>, vector<8x1x5x84xbf16>
    %217 = vector.shape_cast %216 : vector<8x1x5x84xbf16> to vector<8x5x84xbf16>
    %218 = vector.extract_strided_slice %217 {offsets = [0, 0, 30], sizes = [8, 5, 30], strides = [1, 1, 1]} : vector<8x5x84xbf16> to vector<8x5x30xbf16>
    %c0_232 = arith.constant 0 : index
    %c0_233 = arith.constant 0 : index
    %c1_234 = arith.constant 1 : index
    %c0_235 = arith.constant 0 : index
    %219 = vector.load %arg13[%c0_232, %c0_233, %c1_234, %c0_235] : memref<8x2x8x84xbf16, #tpu.memory_space<vmem>>, vector<8x1x5x84xbf16>
    %220 = vector.shape_cast %219 : vector<8x1x5x84xbf16> to vector<8x5x84xbf16>
    %221 = vector.extract_strided_slice %220 {offsets = [0, 0, 30], sizes = [8, 5, 30], strides = [1, 1, 1]} : vector<8x5x84xbf16> to vector<8x5x30xbf16>
    %c0_236 = arith.constant 0 : index
    %c1_237 = arith.constant 1 : index
    %c1_238 = arith.constant 1 : index
    %c0_239 = arith.constant 0 : index
    %222 = vector.load %arg13[%c0_236, %c1_237, %c1_238, %c0_239] : memref<8x2x8x84xbf16, #tpu.memory_space<vmem>>, vector<8x1x5x84xbf16>
    %223 = vector.shape_cast %222 : vector<8x1x5x84xbf16> to vector<8x5x84xbf16>
    %224 = vector.extract_strided_slice %223 {offsets = [0, 0, 30], sizes = [8, 5, 30], strides = [1, 1, 1]} : vector<8x5x84xbf16> to vector<8x5x30xbf16>
    %c0_240 = arith.constant 0 : index
    %c0_241 = arith.constant 0 : index
    %c2_242 = arith.constant 2 : index
    %c0_243 = arith.constant 0 : index
    %225 = vector.load %arg13[%c0_240, %c0_241, %c2_242, %c0_243] : memref<8x2x8x84xbf16, #tpu.memory_space<vmem>>, vector<8x1x5x84xbf16>
    %226 = vector.shape_cast %225 : vector<8x1x5x84xbf16> to vector<8x5x84xbf16>
    %227 = vector.extract_strided_slice %226 {offsets = [0, 0, 30], sizes = [8, 5, 30], strides = [1, 1, 1]} : vector<8x5x84xbf16> to vector<8x5x30xbf16>
    %228 = tpu.concatenate %215, %218, %221, %224, %227, %21 in 2 : vector<8x5x30xbf16>, vector<8x5x30xbf16>, vector<8x5x30xbf16>, vector<8x5x30xbf16>, vector<8x5x30xbf16>, vector<8x5x10xbf16> -> vector<8x5x160xbf16>
    %229 = vector.shape_cast %228 : vector<8x5x160xbf16> to vector<40x160xbf16>
    %c0_244 = arith.constant 0 : index
    %c0_245 = arith.constant 0 : index
    %230 = vector.load %arg4[%c0_244, %c0_245] : memref<160x128xbf16, #tpu.memory_space<vmem>>, vector<160x128xbf16>
    %cst_246 = arith.constant dense<0.000000e+00> : vector<40x128xf32>
    %231 = tpu.matmul %229, %230, %cst_246 {dimension_numbers = #tpu.dot_dimension_numbers<[1], [0], [0], [1], [0, 0, 1, 1], [], []>} : vector<40x160xbf16>, vector<160x128xbf16>, vector<40x128xf32> -> vector<40x128xf32>
    %232 = arith.maximumf %212, %231 : vector<40x128xf32>
    %c0_247 = arith.constant 0 : index
    %c1_248 = arith.constant 1 : index
    %c0_249 = arith.constant 0 : index
    %c0_250 = arith.constant 0 : index
    %233 = vector.load %arg13[%c0_247, %c1_248, %c0_249, %c0_250] : memref<8x2x8x84xbf16, #tpu.memory_space<vmem>>, vector<8x1x5x84xbf16>
    %234 = vector.shape_cast %233 : vector<8x1x5x84xbf16> to vector<8x5x84xbf16>
    %235 = vector.extract_strided_slice %234 {offsets = [0, 0, 24], sizes = [8, 5, 30], strides = [1, 1, 1]} : vector<8x5x84xbf16> to vector<8x5x30xbf16>
    %c0_251 = arith.constant 0 : index
    %c0_252 = arith.constant 0 : index
    %c1_253 = arith.constant 1 : index
    %c0_254 = arith.constant 0 : index
    %236 = vector.load %arg13[%c0_251, %c0_252, %c1_253, %c0_254] : memref<8x2x8x84xbf16, #tpu.memory_space<vmem>>, vector<8x1x5x84xbf16>
    %237 = vector.shape_cast %236 : vector<8x1x5x84xbf16> to vector<8x5x84xbf16>
    %238 = vector.extract_strided_slice %237 {offsets = [0, 0, 24], sizes = [8, 5, 30], strides = [1, 1, 1]} : vector<8x5x84xbf16> to vector<8x5x30xbf16>
    %c0_255 = arith.constant 0 : index
    %c1_256 = arith.constant 1 : index
    %c1_257 = arith.constant 1 : index
    %c0_258 = arith.constant 0 : index
    %239 = vector.load %arg13[%c0_255, %c1_256, %c1_257, %c0_258] : memref<8x2x8x84xbf16, #tpu.memory_space<vmem>>, vector<8x1x5x84xbf16>
    %240 = vector.shape_cast %239 : vector<8x1x5x84xbf16> to vector<8x5x84xbf16>
    %241 = vector.extract_strided_slice %240 {offsets = [0, 0, 24], sizes = [8, 5, 30], strides = [1, 1, 1]} : vector<8x5x84xbf16> to vector<8x5x30xbf16>
    %c0_259 = arith.constant 0 : index
    %c0_260 = arith.constant 0 : index
    %c2_261 = arith.constant 2 : index
    %c0_262 = arith.constant 0 : index
    %242 = vector.load %arg13[%c0_259, %c0_260, %c2_261, %c0_262] : memref<8x2x8x84xbf16, #tpu.memory_space<vmem>>, vector<8x1x5x84xbf16>
    %243 = vector.shape_cast %242 : vector<8x1x5x84xbf16> to vector<8x5x84xbf16>
    %244 = vector.extract_strided_slice %243 {offsets = [0, 0, 24], sizes = [8, 5, 30], strides = [1, 1, 1]} : vector<8x5x84xbf16> to vector<8x5x30xbf16>
    %c0_263 = arith.constant 0 : index
    %c1_264 = arith.constant 1 : index
    %c2_265 = arith.constant 2 : index
    %c0_266 = arith.constant 0 : index
    %245 = vector.load %arg13[%c0_263, %c1_264, %c2_265, %c0_266] : memref<8x2x8x84xbf16, #tpu.memory_space<vmem>>, vector<8x1x5x84xbf16>
    %246 = vector.shape_cast %245 : vector<8x1x5x84xbf16> to vector<8x5x84xbf16>
    %247 = vector.extract_strided_slice %246 {offsets = [0, 0, 24], sizes = [8, 5, 30], strides = [1, 1, 1]} : vector<8x5x84xbf16> to vector<8x5x30xbf16>
    %248 = tpu.concatenate %235, %238, %241, %244, %247, %21 in 2 : vector<8x5x30xbf16>, vector<8x5x30xbf16>, vector<8x5x30xbf16>, vector<8x5x30xbf16>, vector<8x5x30xbf16>, vector<8x5x10xbf16> -> vector<8x5x160xbf16>
    %249 = vector.shape_cast %248 : vector<8x5x160xbf16> to vector<40x160xbf16>
    %c0_267 = arith.constant 0 : index
    %c0_268 = arith.constant 0 : index
    %250 = vector.load %arg4[%c0_267, %c0_268] : memref<160x128xbf16, #tpu.memory_space<vmem>>, vector<160x128xbf16>
    %cst_269 = arith.constant dense<0.000000e+00> : vector<40x128xf32>
    %251 = tpu.matmul %249, %250, %cst_269 {dimension_numbers = #tpu.dot_dimension_numbers<[1], [0], [0], [1], [0, 0, 1, 1], [], []>} : vector<40x160xbf16>, vector<160x128xbf16>, vector<40x128xf32> -> vector<40x128xf32>
    %252 = arith.maximumf %232, %251 : vector<40x128xf32>
    %c0_270 = arith.constant 0 : index
    %c1_271 = arith.constant 1 : index
    %c0_272 = arith.constant 0 : index
    %c0_273 = arith.constant 0 : index
    %253 = vector.load %arg13[%c0_270, %c1_271, %c0_272, %c0_273] : memref<8x2x8x84xbf16, #tpu.memory_space<vmem>>, vector<8x1x5x84xbf16>
    %254 = vector.shape_cast %253 : vector<8x1x5x84xbf16> to vector<8x5x84xbf16>
    %255 = vector.extract_strided_slice %254 {offsets = [0, 0, 30], sizes = [8, 5, 30], strides = [1, 1, 1]} : vector<8x5x84xbf16> to vector<8x5x30xbf16>
    %c0_274 = arith.constant 0 : index
    %c0_275 = arith.constant 0 : index
    %c1_276 = arith.constant 1 : index
    %c0_277 = arith.constant 0 : index
    %256 = vector.load %arg13[%c0_274, %c0_275, %c1_276, %c0_277] : memref<8x2x8x84xbf16, #tpu.memory_space<vmem>>, vector<8x1x5x84xbf16>
    %257 = vector.shape_cast %256 : vector<8x1x5x84xbf16> to vector<8x5x84xbf16>
    %258 = vector.extract_strided_slice %257 {offsets = [0, 0, 30], sizes = [8, 5, 30], strides = [1, 1, 1]} : vector<8x5x84xbf16> to vector<8x5x30xbf16>
    %c0_278 = arith.constant 0 : index
    %c1_279 = arith.constant 1 : index
    %c1_280 = arith.constant 1 : index
    %c0_281 = arith.constant 0 : index
    %259 = vector.load %arg13[%c0_278, %c1_279, %c1_280, %c0_281] : memref<8x2x8x84xbf16, #tpu.memory_space<vmem>>, vector<8x1x5x84xbf16>
    %260 = vector.shape_cast %259 : vector<8x1x5x84xbf16> to vector<8x5x84xbf16>
    %261 = vector.extract_strided_slice %260 {offsets = [0, 0, 30], sizes = [8, 5, 30], strides = [1, 1, 1]} : vector<8x5x84xbf16> to vector<8x5x30xbf16>
    %c0_282 = arith.constant 0 : index
    %c0_283 = arith.constant 0 : index
    %c2_284 = arith.constant 2 : index
    %c0_285 = arith.constant 0 : index
    %262 = vector.load %arg13[%c0_282, %c0_283, %c2_284, %c0_285] : memref<8x2x8x84xbf16, #tpu.memory_space<vmem>>, vector<8x1x5x84xbf16>
    %263 = vector.shape_cast %262 : vector<8x1x5x84xbf16> to vector<8x5x84xbf16>
    %264 = vector.extract_strided_slice %263 {offsets = [0, 0, 30], sizes = [8, 5, 30], strides = [1, 1, 1]} : vector<8x5x84xbf16> to vector<8x5x30xbf16>
    %c0_286 = arith.constant 0 : index
    %c1_287 = arith.constant 1 : index
    %c2_288 = arith.constant 2 : index
    %c0_289 = arith.constant 0 : index
    %265 = vector.load %arg13[%c0_286, %c1_287, %c2_288, %c0_289] : memref<8x2x8x84xbf16, #tpu.memory_space<vmem>>, vector<8x1x5x84xbf16>
    %266 = vector.shape_cast %265 : vector<8x1x5x84xbf16> to vector<8x5x84xbf16>
    %267 = vector.extract_strided_slice %266 {offsets = [0, 0, 30], sizes = [8, 5, 30], strides = [1, 1, 1]} : vector<8x5x84xbf16> to vector<8x5x30xbf16>
    %268 = tpu.concatenate %255, %258, %261, %264, %267, %21 in 2 : vector<8x5x30xbf16>, vector<8x5x30xbf16>, vector<8x5x30xbf16>, vector<8x5x30xbf16>, vector<8x5x30xbf16>, vector<8x5x10xbf16> -> vector<8x5x160xbf16>
    %269 = vector.shape_cast %268 : vector<8x5x160xbf16> to vector<40x160xbf16>
    %c0_290 = arith.constant 0 : index
    %c0_291 = arith.constant 0 : index
    %270 = vector.load %arg4[%c0_290, %c0_291] : memref<160x128xbf16, #tpu.memory_space<vmem>>, vector<160x128xbf16>
    %cst_292 = arith.constant dense<0.000000e+00> : vector<40x128xf32>
    %271 = tpu.matmul %269, %270, %cst_292 {dimension_numbers = #tpu.dot_dimension_numbers<[1], [0], [0], [1], [0, 0, 1, 1], [], []>} : vector<40x160xbf16>, vector<160x128xbf16>, vector<40x128xf32> -> vector<40x128xf32>
    %272 = arith.maximumf %252, %271 : vector<40x128xf32>
    %c0_293 = arith.constant 0 : index
    %c0_294 = arith.constant 0 : index
    %273 = vector.load %arg5[%c0_293, %c0_294] : memref<1x128xf32, #tpu.memory_space<vmem>>, vector<1x128xf32>
    %274 = vector.broadcast %273 : vector<1x128xf32> to vector<40x128xf32>
    %275 = arith.addf %272, %274 : vector<40x128xf32>
    %cst_295 = arith.constant 0.000000e+00 : f32
    %276 = vector.broadcast %cst_295 : f32 to vector<40x128xf32>
    %277 = arith.maximumf %275, %276 : vector<40x128xf32>
    %278 = vector.shape_cast %277 : vector<40x128xf32> to vector<8x5x128xf32>
    %279 = arith.truncf %278 : vector<8x5x128xf32> to vector<8x5x128xbf16>
    %c0_296 = arith.constant 0 : index
    %c0_297 = arith.constant 0 : index
    %c0_298 = arith.constant 0 : index
    %c0_299 = arith.constant 0 : index
    %280 = vector.load %arg13[%c0_296, %c0_297, %c0_298, %c0_299] : memref<8x2x8x84xbf16, #tpu.memory_space<vmem>>, vector<8x1x5x84xbf16>
    %281 = vector.shape_cast %280 : vector<8x1x5x84xbf16> to vector<8x5x84xbf16>
    %282 = vector.extract_strided_slice %281 {offsets = [0, 0, 36], sizes = [8, 5, 30], strides = [1, 1, 1]} : vector<8x5x84xbf16> to vector<8x5x30xbf16>
    %c0_300 = arith.constant 0 : index
    %c1_301 = arith.constant 1 : index
    %c0_302 = arith.constant 0 : index
    %c0_303 = arith.constant 0 : index
    %283 = vector.load %arg13[%c0_300, %c1_301, %c0_302, %c0_303] : memref<8x2x8x84xbf16, #tpu.memory_space<vmem>>, vector<8x1x5x84xbf16>
    %284 = vector.shape_cast %283 : vector<8x1x5x84xbf16> to vector<8x5x84xbf16>
    %285 = vector.extract_strided_slice %284 {offsets = [0, 0, 36], sizes = [8, 5, 30], strides = [1, 1, 1]} : vector<8x5x84xbf16> to vector<8x5x30xbf16>
    %c0_304 = arith.constant 0 : index
    %c0_305 = arith.constant 0 : index
    %c1_306 = arith.constant 1 : index
    %c0_307 = arith.constant 0 : index
    %286 = vector.load %arg13[%c0_304, %c0_305, %c1_306, %c0_307] : memref<8x2x8x84xbf16, #tpu.memory_space<vmem>>, vector<8x1x5x84xbf16>
    %287 = vector.shape_cast %286 : vector<8x1x5x84xbf16> to vector<8x5x84xbf16>
    %288 = vector.extract_strided_slice %287 {offsets = [0, 0, 36], sizes = [8, 5, 30], strides = [1, 1, 1]} : vector<8x5x84xbf16> to vector<8x5x30xbf16>
    %c0_308 = arith.constant 0 : index
    %c1_309 = arith.constant 1 : index
    %c1_310 = arith.constant 1 : index
    %c0_311 = arith.constant 0 : index
    %289 = vector.load %arg13[%c0_308, %c1_309, %c1_310, %c0_311] : memref<8x2x8x84xbf16, #tpu.memory_space<vmem>>, vector<8x1x5x84xbf16>
    %290 = vector.shape_cast %289 : vector<8x1x5x84xbf16> to vector<8x5x84xbf16>
    %291 = vector.extract_strided_slice %290 {offsets = [0, 0, 36], sizes = [8, 5, 30], strides = [1, 1, 1]} : vector<8x5x84xbf16> to vector<8x5x30xbf16>
    %c0_312 = arith.constant 0 : index
    %c0_313 = arith.constant 0 : index
    %c2_314 = arith.constant 2 : index
    %c0_315 = arith.constant 0 : index
    %292 = vector.load %arg13[%c0_312, %c0_313, %c2_314, %c0_315] : memref<8x2x8x84xbf16, #tpu.memory_space<vmem>>, vector<8x1x5x84xbf16>
    %293 = vector.shape_cast %292 : vector<8x1x5x84xbf16> to vector<8x5x84xbf16>
    %294 = vector.extract_strided_slice %293 {offsets = [0, 0, 36], sizes = [8, 5, 30], strides = [1, 1, 1]} : vector<8x5x84xbf16> to vector<8x5x30xbf16>
    %295 = tpu.concatenate %282, %285, %288, %291, %294, %21 in 2 : vector<8x5x30xbf16>, vector<8x5x30xbf16>, vector<8x5x30xbf16>, vector<8x5x30xbf16>, vector<8x5x30xbf16>, vector<8x5x10xbf16> -> vector<8x5x160xbf16>
    %296 = vector.shape_cast %295 : vector<8x5x160xbf16> to vector<40x160xbf16>
    %c0_316 = arith.constant 0 : index
    %c0_317 = arith.constant 0 : index
    %297 = vector.load %arg4[%c0_316, %c0_317] : memref<160x128xbf16, #tpu.memory_space<vmem>>, vector<160x128xbf16>
    %cst_318 = arith.constant dense<0.000000e+00> : vector<40x128xf32>
    %298 = tpu.matmul %296, %297, %cst_318 {dimension_numbers = #tpu.dot_dimension_numbers<[1], [0], [0], [1], [0, 0, 1, 1], [], []>} : vector<40x160xbf16>, vector<160x128xbf16>, vector<40x128xf32> -> vector<40x128xf32>
    %c0_319 = arith.constant 0 : index
    %c0_320 = arith.constant 0 : index
    %c0_321 = arith.constant 0 : index
    %c0_322 = arith.constant 0 : index
    %299 = vector.load %arg13[%c0_319, %c0_320, %c0_321, %c0_322] : memref<8x2x8x84xbf16, #tpu.memory_space<vmem>>, vector<8x1x5x84xbf16>
    %300 = vector.shape_cast %299 : vector<8x1x5x84xbf16> to vector<8x5x84xbf16>
    %301 = vector.extract_strided_slice %300 {offsets = [0, 0, 42], sizes = [8, 5, 30], strides = [1, 1, 1]} : vector<8x5x84xbf16> to vector<8x5x30xbf16>
    %c0_323 = arith.constant 0 : index
    %c1_324 = arith.constant 1 : index
    %c0_325 = arith.constant 0 : index
    %c0_326 = arith.constant 0 : index
    %302 = vector.load %arg13[%c0_323, %c1_324, %c0_325, %c0_326] : memref<8x2x8x84xbf16, #tpu.memory_space<vmem>>, vector<8x1x5x84xbf16>
    %303 = vector.shape_cast %302 : vector<8x1x5x84xbf16> to vector<8x5x84xbf16>
    %304 = vector.extract_strided_slice %303 {offsets = [0, 0, 42], sizes = [8, 5, 30], strides = [1, 1, 1]} : vector<8x5x84xbf16> to vector<8x5x30xbf16>
    %c0_327 = arith.constant 0 : index
    %c0_328 = arith.constant 0 : index
    %c1_329 = arith.constant 1 : index
    %c0_330 = arith.constant 0 : index
    %305 = vector.load %arg13[%c0_327, %c0_328, %c1_329, %c0_330] : memref<8x2x8x84xbf16, #tpu.memory_space<vmem>>, vector<8x1x5x84xbf16>
    %306 = vector.shape_cast %305 : vector<8x1x5x84xbf16> to vector<8x5x84xbf16>
    %307 = vector.extract_strided_slice %306 {offsets = [0, 0, 42], sizes = [8, 5, 30], strides = [1, 1, 1]} : vector<8x5x84xbf16> to vector<8x5x30xbf16>
    %c0_331 = arith.constant 0 : index
    %c1_332 = arith.constant 1 : index
    %c1_333 = arith.constant 1 : index
    %c0_334 = arith.constant 0 : index
    %308 = vector.load %arg13[%c0_331, %c1_332, %c1_333, %c0_334] : memref<8x2x8x84xbf16, #tpu.memory_space<vmem>>, vector<8x1x5x84xbf16>
    %309 = vector.shape_cast %308 : vector<8x1x5x84xbf16> to vector<8x5x84xbf16>
    %310 = vector.extract_strided_slice %309 {offsets = [0, 0, 42], sizes = [8, 5, 30], strides = [1, 1, 1]} : vector<8x5x84xbf16> to vector<8x5x30xbf16>
    %c0_335 = arith.constant 0 : index
    %c0_336 = arith.constant 0 : index
    %c2_337 = arith.constant 2 : index
    %c0_338 = arith.constant 0 : index
    %311 = vector.load %arg13[%c0_335, %c0_336, %c2_337, %c0_338] : memref<8x2x8x84xbf16, #tpu.memory_space<vmem>>, vector<8x1x5x84xbf16>
    %312 = vector.shape_cast %311 : vector<8x1x5x84xbf16> to vector<8x5x84xbf16>
    %313 = vector.extract_strided_slice %312 {offsets = [0, 0, 42], sizes = [8, 5, 30], strides = [1, 1, 1]} : vector<8x5x84xbf16> to vector<8x5x30xbf16>
    %314 = tpu.concatenate %301, %304, %307, %310, %313, %21 in 2 : vector<8x5x30xbf16>, vector<8x5x30xbf16>, vector<8x5x30xbf16>, vector<8x5x30xbf16>, vector<8x5x30xbf16>, vector<8x5x10xbf16> -> vector<8x5x160xbf16>
    %315 = vector.shape_cast %314 : vector<8x5x160xbf16> to vector<40x160xbf16>
    %c0_339 = arith.constant 0 : index
    %c0_340 = arith.constant 0 : index
    %316 = vector.load %arg4[%c0_339, %c0_340] : memref<160x128xbf16, #tpu.memory_space<vmem>>, vector<160x128xbf16>
    %cst_341 = arith.constant dense<0.000000e+00> : vector<40x128xf32>
    %317 = tpu.matmul %315, %316, %cst_341 {dimension_numbers = #tpu.dot_dimension_numbers<[1], [0], [0], [1], [0, 0, 1, 1], [], []>} : vector<40x160xbf16>, vector<160x128xbf16>, vector<40x128xf32> -> vector<40x128xf32>
    %318 = arith.maximumf %298, %317 : vector<40x128xf32>
    %c0_342 = arith.constant 0 : index
    %c1_343 = arith.constant 1 : index
    %c0_344 = arith.constant 0 : index
    %c0_345 = arith.constant 0 : index
    %319 = vector.load %arg13[%c0_342, %c1_343, %c0_344, %c0_345] : memref<8x2x8x84xbf16, #tpu.memory_space<vmem>>, vector<8x1x5x84xbf16>
    %320 = vector.shape_cast %319 : vector<8x1x5x84xbf16> to vector<8x5x84xbf16>
    %321 = vector.extract_strided_slice %320 {offsets = [0, 0, 36], sizes = [8, 5, 30], strides = [1, 1, 1]} : vector<8x5x84xbf16> to vector<8x5x30xbf16>
    %c0_346 = arith.constant 0 : index
    %c0_347 = arith.constant 0 : index
    %c1_348 = arith.constant 1 : index
    %c0_349 = arith.constant 0 : index
    %322 = vector.load %arg13[%c0_346, %c0_347, %c1_348, %c0_349] : memref<8x2x8x84xbf16, #tpu.memory_space<vmem>>, vector<8x1x5x84xbf16>
    %323 = vector.shape_cast %322 : vector<8x1x5x84xbf16> to vector<8x5x84xbf16>
    %324 = vector.extract_strided_slice %323 {offsets = [0, 0, 36], sizes = [8, 5, 30], strides = [1, 1, 1]} : vector<8x5x84xbf16> to vector<8x5x30xbf16>
    %c0_350 = arith.constant 0 : index
    %c1_351 = arith.constant 1 : index
    %c1_352 = arith.constant 1 : index
    %c0_353 = arith.constant 0 : index
    %325 = vector.load %arg13[%c0_350, %c1_351, %c1_352, %c0_353] : memref<8x2x8x84xbf16, #tpu.memory_space<vmem>>, vector<8x1x5x84xbf16>
    %326 = vector.shape_cast %325 : vector<8x1x5x84xbf16> to vector<8x5x84xbf16>
    %327 = vector.extract_strided_slice %326 {offsets = [0, 0, 36], sizes = [8, 5, 30], strides = [1, 1, 1]} : vector<8x5x84xbf16> to vector<8x5x30xbf16>
    %c0_354 = arith.constant 0 : index
    %c0_355 = arith.constant 0 : index
    %c2_356 = arith.constant 2 : index
    %c0_357 = arith.constant 0 : index
    %328 = vector.load %arg13[%c0_354, %c0_355, %c2_356, %c0_357] : memref<8x2x8x84xbf16, #tpu.memory_space<vmem>>, vector<8x1x5x84xbf16>
    %329 = vector.shape_cast %328 : vector<8x1x5x84xbf16> to vector<8x5x84xbf16>
    %330 = vector.extract_strided_slice %329 {offsets = [0, 0, 36], sizes = [8, 5, 30], strides = [1, 1, 1]} : vector<8x5x84xbf16> to vector<8x5x30xbf16>
    %c0_358 = arith.constant 0 : index
    %c1_359 = arith.constant 1 : index
    %c2_360 = arith.constant 2 : index
    %c0_361 = arith.constant 0 : index
    %331 = vector.load %arg13[%c0_358, %c1_359, %c2_360, %c0_361] : memref<8x2x8x84xbf16, #tpu.memory_space<vmem>>, vector<8x1x5x84xbf16>
    %332 = vector.shape_cast %331 : vector<8x1x5x84xbf16> to vector<8x5x84xbf16>
    %333 = vector.extract_strided_slice %332 {offsets = [0, 0, 36], sizes = [8, 5, 30], strides = [1, 1, 1]} : vector<8x5x84xbf16> to vector<8x5x30xbf16>
    %334 = tpu.concatenate %321, %324, %327, %330, %333, %21 in 2 : vector<8x5x30xbf16>, vector<8x5x30xbf16>, vector<8x5x30xbf16>, vector<8x5x30xbf16>, vector<8x5x30xbf16>, vector<8x5x10xbf16> -> vector<8x5x160xbf16>
    %335 = vector.shape_cast %334 : vector<8x5x160xbf16> to vector<40x160xbf16>
    %c0_362 = arith.constant 0 : index
    %c0_363 = arith.constant 0 : index
    %336 = vector.load %arg4[%c0_362, %c0_363] : memref<160x128xbf16, #tpu.memory_space<vmem>>, vector<160x128xbf16>
    %cst_364 = arith.constant dense<0.000000e+00> : vector<40x128xf32>
    %337 = tpu.matmul %335, %336, %cst_364 {dimension_numbers = #tpu.dot_dimension_numbers<[1], [0], [0], [1], [0, 0, 1, 1], [], []>} : vector<40x160xbf16>, vector<160x128xbf16>, vector<40x128xf32> -> vector<40x128xf32>
    %338 = arith.maximumf %318, %337 : vector<40x128xf32>
    %c0_365 = arith.constant 0 : index
    %c1_366 = arith.constant 1 : index
    %c0_367 = arith.constant 0 : index
    %c0_368 = arith.constant 0 : index
    %339 = vector.load %arg13[%c0_365, %c1_366, %c0_367, %c0_368] : memref<8x2x8x84xbf16, #tpu.memory_space<vmem>>, vector<8x1x5x84xbf16>
    %340 = vector.shape_cast %339 : vector<8x1x5x84xbf16> to vector<8x5x84xbf16>
    %341 = vector.extract_strided_slice %340 {offsets = [0, 0, 42], sizes = [8, 5, 30], strides = [1, 1, 1]} : vector<8x5x84xbf16> to vector<8x5x30xbf16>
    %c0_369 = arith.constant 0 : index
    %c0_370 = arith.constant 0 : index
    %c1_371 = arith.constant 1 : index
    %c0_372 = arith.constant 0 : index
    %342 = vector.load %arg13[%c0_369, %c0_370, %c1_371, %c0_372] : memref<8x2x8x84xbf16, #tpu.memory_space<vmem>>, vector<8x1x5x84xbf16>
    %343 = vector.shape_cast %342 : vector<8x1x5x84xbf16> to vector<8x5x84xbf16>
    %344 = vector.extract_strided_slice %343 {offsets = [0, 0, 42], sizes = [8, 5, 30], strides = [1, 1, 1]} : vector<8x5x84xbf16> to vector<8x5x30xbf16>
    %c0_373 = arith.constant 0 : index
    %c1_374 = arith.constant 1 : index
    %c1_375 = arith.constant 1 : index
    %c0_376 = arith.constant 0 : index
    %345 = vector.load %arg13[%c0_373, %c1_374, %c1_375, %c0_376] : memref<8x2x8x84xbf16, #tpu.memory_space<vmem>>, vector<8x1x5x84xbf16>
    %346 = vector.shape_cast %345 : vector<8x1x5x84xbf16> to vector<8x5x84xbf16>
    %347 = vector.extract_strided_slice %346 {offsets = [0, 0, 42], sizes = [8, 5, 30], strides = [1, 1, 1]} : vector<8x5x84xbf16> to vector<8x5x30xbf16>
    %c0_377 = arith.constant 0 : index
    %c0_378 = arith.constant 0 : index
    %c2_379 = arith.constant 2 : index
    %c0_380 = arith.constant 0 : index
    %348 = vector.load %arg13[%c0_377, %c0_378, %c2_379, %c0_380] : memref<8x2x8x84xbf16, #tpu.memory_space<vmem>>, vector<8x1x5x84xbf16>
    %349 = vector.shape_cast %348 : vector<8x1x5x84xbf16> to vector<8x5x84xbf16>
    %350 = vector.extract_strided_slice %349 {offsets = [0, 0, 42], sizes = [8, 5, 30], strides = [1, 1, 1]} : vector<8x5x84xbf16> to vector<8x5x30xbf16>
    %c0_381 = arith.constant 0 : index
    %c1_382 = arith.constant 1 : index
    %c2_383 = arith.constant 2 : index
    %c0_384 = arith.constant 0 : index
    %351 = vector.load %arg13[%c0_381, %c1_382, %c2_383, %c0_384] : memref<8x2x8x84xbf16, #tpu.memory_space<vmem>>, vector<8x1x5x84xbf16>
    %352 = vector.shape_cast %351 : vector<8x1x5x84xbf16> to vector<8x5x84xbf16>
    %353 = vector.extract_strided_slice %352 {offsets = [0, 0, 42], sizes = [8, 5, 30], strides = [1, 1, 1]} : vector<8x5x84xbf16> to vector<8x5x30xbf16>
    %354 = tpu.concatenate %341, %344, %347, %350, %353, %21 in 2 : vector<8x5x30xbf16>, vector<8x5x30xbf16>, vector<8x5x30xbf16>, vector<8x5x30xbf16>, vector<8x5x30xbf16>, vector<8x5x10xbf16> -> vector<8x5x160xbf16>
    %355 = vector.shape_cast %354 : vector<8x5x160xbf16> to vector<40x160xbf16>
    %c0_385 = arith.constant 0 : index
    %c0_386 = arith.constant 0 : index
    %356 = vector.load %arg4[%c0_385, %c0_386] : memref<160x128xbf16, #tpu.memory_space<vmem>>, vector<160x128xbf16>
    %cst_387 = arith.constant dense<0.000000e+00> : vector<40x128xf32>
    %357 = tpu.matmul %355, %356, %cst_387 {dimension_numbers = #tpu.dot_dimension_numbers<[1], [0], [0], [1], [0, 0, 1, 1], [], []>} : vector<40x160xbf16>, vector<160x128xbf16>, vector<40x128xf32> -> vector<40x128xf32>
    %358 = arith.maximumf %338, %357 : vector<40x128xf32>
    %c0_388 = arith.constant 0 : index
    %c0_389 = arith.constant 0 : index
    %359 = vector.load %arg5[%c0_388, %c0_389] : memref<1x128xf32, #tpu.memory_space<vmem>>, vector<1x128xf32>
    %360 = vector.broadcast %359 : vector<1x128xf32> to vector<40x128xf32>
    %361 = arith.addf %358, %360 : vector<40x128xf32>
    %cst_390 = arith.constant 0.000000e+00 : f32
    %362 = vector.broadcast %cst_390 : f32 to vector<40x128xf32>
    %363 = arith.maximumf %361, %362 : vector<40x128xf32>
    %364 = vector.shape_cast %363 : vector<40x128xf32> to vector<8x5x128xf32>
    %365 = arith.truncf %364 : vector<8x5x128xf32> to vector<8x5x128xbf16>
    %c0_391 = arith.constant 0 : index
    %c0_392 = arith.constant 0 : index
    %c0_393 = arith.constant 0 : index
    %c0_394 = arith.constant 0 : index
    %366 = vector.load %arg13[%c0_391, %c0_392, %c0_393, %c0_394] : memref<8x2x8x84xbf16, #tpu.memory_space<vmem>>, vector<8x1x5x84xbf16>
    %367 = vector.shape_cast %366 : vector<8x1x5x84xbf16> to vector<8x5x84xbf16>
    %368 = vector.extract_strided_slice %367 {offsets = [0, 0, 48], sizes = [8, 5, 30], strides = [1, 1, 1]} : vector<8x5x84xbf16> to vector<8x5x30xbf16>
    %c0_395 = arith.constant 0 : index
    %c1_396 = arith.constant 1 : index
    %c0_397 = arith.constant 0 : index
    %c0_398 = arith.constant 0 : index
    %369 = vector.load %arg13[%c0_395, %c1_396, %c0_397, %c0_398] : memref<8x2x8x84xbf16, #tpu.memory_space<vmem>>, vector<8x1x5x84xbf16>
    %370 = vector.shape_cast %369 : vector<8x1x5x84xbf16> to vector<8x5x84xbf16>
    %371 = vector.extract_strided_slice %370 {offsets = [0, 0, 48], sizes = [8, 5, 30], strides = [1, 1, 1]} : vector<8x5x84xbf16> to vector<8x5x30xbf16>
    %c0_399 = arith.constant 0 : index
    %c0_400 = arith.constant 0 : index
    %c1_401 = arith.constant 1 : index
    %c0_402 = arith.constant 0 : index
    %372 = vector.load %arg13[%c0_399, %c0_400, %c1_401, %c0_402] : memref<8x2x8x84xbf16, #tpu.memory_space<vmem>>, vector<8x1x5x84xbf16>
    %373 = vector.shape_cast %372 : vector<8x1x5x84xbf16> to vector<8x5x84xbf16>
    %374 = vector.extract_strided_slice %373 {offsets = [0, 0, 48], sizes = [8, 5, 30], strides = [1, 1, 1]} : vector<8x5x84xbf16> to vector<8x5x30xbf16>
    %c0_403 = arith.constant 0 : index
    %c1_404 = arith.constant 1 : index
    %c1_405 = arith.constant 1 : index
    %c0_406 = arith.constant 0 : index
    %375 = vector.load %arg13[%c0_403, %c1_404, %c1_405, %c0_406] : memref<8x2x8x84xbf16, #tpu.memory_space<vmem>>, vector<8x1x5x84xbf16>
    %376 = vector.shape_cast %375 : vector<8x1x5x84xbf16> to vector<8x5x84xbf16>
    %377 = vector.extract_strided_slice %376 {offsets = [0, 0, 48], sizes = [8, 5, 30], strides = [1, 1, 1]} : vector<8x5x84xbf16> to vector<8x5x30xbf16>
    %c0_407 = arith.constant 0 : index
    %c0_408 = arith.constant 0 : index
    %c2_409 = arith.constant 2 : index
    %c0_410 = arith.constant 0 : index
    %378 = vector.load %arg13[%c0_407, %c0_408, %c2_409, %c0_410] : memref<8x2x8x84xbf16, #tpu.memory_space<vmem>>, vector<8x1x5x84xbf16>
    %379 = vector.shape_cast %378 : vector<8x1x5x84xbf16> to vector<8x5x84xbf16>
    %380 = vector.extract_strided_slice %379 {offsets = [0, 0, 48], sizes = [8, 5, 30], strides = [1, 1, 1]} : vector<8x5x84xbf16> to vector<8x5x30xbf16>
    %381 = tpu.concatenate %368, %371, %374, %377, %380, %21 in 2 : vector<8x5x30xbf16>, vector<8x5x30xbf16>, vector<8x5x30xbf16>, vector<8x5x30xbf16>, vector<8x5x30xbf16>, vector<8x5x10xbf16> -> vector<8x5x160xbf16>
    %382 = vector.shape_cast %381 : vector<8x5x160xbf16> to vector<40x160xbf16>
    %c0_411 = arith.constant 0 : index
    %c0_412 = arith.constant 0 : index
    %383 = vector.load %arg4[%c0_411, %c0_412] : memref<160x128xbf16, #tpu.memory_space<vmem>>, vector<160x128xbf16>
    %cst_413 = arith.constant dense<0.000000e+00> : vector<40x128xf32>
    %384 = tpu.matmul %382, %383, %cst_413 {dimension_numbers = #tpu.dot_dimension_numbers<[1], [0], [0], [1], [0, 0, 1, 1], [], []>} : vector<40x160xbf16>, vector<160x128xbf16>, vector<40x128xf32> -> vector<40x128xf32>
    %c0_414 = arith.constant 0 : index
    %c0_415 = arith.constant 0 : index
    %c0_416 = arith.constant 0 : index
    %c0_417 = arith.constant 0 : index
    %385 = vector.load %arg13[%c0_414, %c0_415, %c0_416, %c0_417] : memref<8x2x8x84xbf16, #tpu.memory_space<vmem>>, vector<8x1x5x84xbf16>
    %386 = vector.shape_cast %385 : vector<8x1x5x84xbf16> to vector<8x5x84xbf16>
    %387 = vector.extract_strided_slice %386 {offsets = [0, 0, 54], sizes = [8, 5, 30], strides = [1, 1, 1]} : vector<8x5x84xbf16> to vector<8x5x30xbf16>
    %c0_418 = arith.constant 0 : index
    %c1_419 = arith.constant 1 : index
    %c0_420 = arith.constant 0 : index
    %c0_421 = arith.constant 0 : index
    %388 = vector.load %arg13[%c0_418, %c1_419, %c0_420, %c0_421] : memref<8x2x8x84xbf16, #tpu.memory_space<vmem>>, vector<8x1x5x84xbf16>
    %389 = vector.shape_cast %388 : vector<8x1x5x84xbf16> to vector<8x5x84xbf16>
    %390 = vector.extract_strided_slice %389 {offsets = [0, 0, 54], sizes = [8, 5, 30], strides = [1, 1, 1]} : vector<8x5x84xbf16> to vector<8x5x30xbf16>
    %c0_422 = arith.constant 0 : index
    %c0_423 = arith.constant 0 : index
    %c1_424 = arith.constant 1 : index
    %c0_425 = arith.constant 0 : index
    %391 = vector.load %arg13[%c0_422, %c0_423, %c1_424, %c0_425] : memref<8x2x8x84xbf16, #tpu.memory_space<vmem>>, vector<8x1x5x84xbf16>
    %392 = vector.shape_cast %391 : vector<8x1x5x84xbf16> to vector<8x5x84xbf16>
    %393 = vector.extract_strided_slice %392 {offsets = [0, 0, 54], sizes = [8, 5, 30], strides = [1, 1, 1]} : vector<8x5x84xbf16> to vector<8x5x30xbf16>
    %c0_426 = arith.constant 0 : index
    %c1_427 = arith.constant 1 : index
    %c1_428 = arith.constant 1 : index
    %c0_429 = arith.constant 0 : index
    %394 = vector.load %arg13[%c0_426, %c1_427, %c1_428, %c0_429] : memref<8x2x8x84xbf16, #tpu.memory_space<vmem>>, vector<8x1x5x84xbf16>
    %395 = vector.shape_cast %394 : vector<8x1x5x84xbf16> to vector<8x5x84xbf16>
    %396 = vector.extract_strided_slice %395 {offsets = [0, 0, 54], sizes = [8, 5, 30], strides = [1, 1, 1]} : vector<8x5x84xbf16> to vector<8x5x30xbf16>
    %c0_430 = arith.constant 0 : index
    %c0_431 = arith.constant 0 : index
    %c2_432 = arith.constant 2 : index
    %c0_433 = arith.constant 0 : index
    %397 = vector.load %arg13[%c0_430, %c0_431, %c2_432, %c0_433] : memref<8x2x8x84xbf16, #tpu.memory_space<vmem>>, vector<8x1x5x84xbf16>
    %398 = vector.shape_cast %397 : vector<8x1x5x84xbf16> to vector<8x5x84xbf16>
    %399 = vector.extract_strided_slice %398 {offsets = [0, 0, 54], sizes = [8, 5, 30], strides = [1, 1, 1]} : vector<8x5x84xbf16> to vector<8x5x30xbf16>
    %400 = tpu.concatenate %387, %390, %393, %396, %399, %21 in 2 : vector<8x5x30xbf16>, vector<8x5x30xbf16>, vector<8x5x30xbf16>, vector<8x5x30xbf16>, vector<8x5x30xbf16>, vector<8x5x10xbf16> -> vector<8x5x160xbf16>
    %401 = vector.shape_cast %400 : vector<8x5x160xbf16> to vector<40x160xbf16>
    %c0_434 = arith.constant 0 : index
    %c0_435 = arith.constant 0 : index
    %402 = vector.load %arg4[%c0_434, %c0_435] : memref<160x128xbf16, #tpu.memory_space<vmem>>, vector<160x128xbf16>
    %cst_436 = arith.constant dense<0.000000e+00> : vector<40x128xf32>
    %403 = tpu.matmul %401, %402, %cst_436 {dimension_numbers = #tpu.dot_dimension_numbers<[1], [0], [0], [1], [0, 0, 1, 1], [], []>} : vector<40x160xbf16>, vector<160x128xbf16>, vector<40x128xf32> -> vector<40x128xf32>
    %404 = arith.maximumf %384, %403 : vector<40x128xf32>
    %c0_437 = arith.constant 0 : index
    %c1_438 = arith.constant 1 : index
    %c0_439 = arith.constant 0 : index
    %c0_440 = arith.constant 0 : index
    %405 = vector.load %arg13[%c0_437, %c1_438, %c0_439, %c0_440] : memref<8x2x8x84xbf16, #tpu.memory_space<vmem>>, vector<8x1x5x84xbf16>
    %406 = vector.shape_cast %405 : vector<8x1x5x84xbf16> to vector<8x5x84xbf16>
    %407 = vector.extract_strided_slice %406 {offsets = [0, 0, 48], sizes = [8, 5, 30], strides = [1, 1, 1]} : vector<8x5x84xbf16> to vector<8x5x30xbf16>
    %c0_441 = arith.constant 0 : index
    %c0_442 = arith.constant 0 : index
    %c1_443 = arith.constant 1 : index
    %c0_444 = arith.constant 0 : index
    %408 = vector.load %arg13[%c0_441, %c0_442, %c1_443, %c0_444] : memref<8x2x8x84xbf16, #tpu.memory_space<vmem>>, vector<8x1x5x84xbf16>
    %409 = vector.shape_cast %408 : vector<8x1x5x84xbf16> to vector<8x5x84xbf16>
    %410 = vector.extract_strided_slice %409 {offsets = [0, 0, 48], sizes = [8, 5, 30], strides = [1, 1, 1]} : vector<8x5x84xbf16> to vector<8x5x30xbf16>
    %c0_445 = arith.constant 0 : index
    %c1_446 = arith.constant 1 : index
    %c1_447 = arith.constant 1 : index
    %c0_448 = arith.constant 0 : index
    %411 = vector.load %arg13[%c0_445, %c1_446, %c1_447, %c0_448] : memref<8x2x8x84xbf16, #tpu.memory_space<vmem>>, vector<8x1x5x84xbf16>
    %412 = vector.shape_cast %411 : vector<8x1x5x84xbf16> to vector<8x5x84xbf16>
    %413 = vector.extract_strided_slice %412 {offsets = [0, 0, 48], sizes = [8, 5, 30], strides = [1, 1, 1]} : vector<8x5x84xbf16> to vector<8x5x30xbf16>
    %c0_449 = arith.constant 0 : index
    %c0_450 = arith.constant 0 : index
    %c2_451 = arith.constant 2 : index
    %c0_452 = arith.constant 0 : index
    %414 = vector.load %arg13[%c0_449, %c0_450, %c2_451, %c0_452] : memref<8x2x8x84xbf16, #tpu.memory_space<vmem>>, vector<8x1x5x84xbf16>
    %415 = vector.shape_cast %414 : vector<8x1x5x84xbf16> to vector<8x5x84xbf16>
    %416 = vector.extract_strided_slice %415 {offsets = [0, 0, 48], sizes = [8, 5, 30], strides = [1, 1, 1]} : vector<8x5x84xbf16> to vector<8x5x30xbf16>
    %c0_453 = arith.constant 0 : index
    %c1_454 = arith.constant 1 : index
    %c2_455 = arith.constant 2 : index
    %c0_456 = arith.constant 0 : index
    %417 = vector.load %arg13[%c0_453, %c1_454, %c2_455, %c0_456] : memref<8x2x8x84xbf16, #tpu.memory_space<vmem>>, vector<8x1x5x84xbf16>
    %418 = vector.shape_cast %417 : vector<8x1x5x84xbf16> to vector<8x5x84xbf16>
    %419 = vector.extract_strided_slice %418 {offsets = [0, 0, 48], sizes = [8, 5, 30], strides = [1, 1, 1]} : vector<8x5x84xbf16> to vector<8x5x30xbf16>
    %420 = tpu.concatenate %407, %410, %413, %416, %419, %21 in 2 : vector<8x5x30xbf16>, vector<8x5x30xbf16>, vector<8x5x30xbf16>, vector<8x5x30xbf16>, vector<8x5x30xbf16>, vector<8x5x10xbf16> -> vector<8x5x160xbf16>
    %421 = vector.shape_cast %420 : vector<8x5x160xbf16> to vector<40x160xbf16>
    %c0_457 = arith.constant 0 : index
    %c0_458 = arith.constant 0 : index
    %422 = vector.load %arg4[%c0_457, %c0_458] : memref<160x128xbf16, #tpu.memory_space<vmem>>, vector<160x128xbf16>
    %cst_459 = arith.constant dense<0.000000e+00> : vector<40x128xf32>
    %423 = tpu.matmul %421, %422, %cst_459 {dimension_numbers = #tpu.dot_dimension_numbers<[1], [0], [0], [1], [0, 0, 1, 1], [], []>} : vector<40x160xbf16>, vector<160x128xbf16>, vector<40x128xf32> -> vector<40x128xf32>
    %424 = arith.maximumf %404, %423 : vector<40x128xf32>
    %c0_460 = arith.constant 0 : index
    %c1_461 = arith.constant 1 : index
    %c0_462 = arith.constant 0 : index
    %c0_463 = arith.constant 0 : index
    %425 = vector.load %arg13[%c0_460, %c1_461, %c0_462, %c0_463] : memref<8x2x8x84xbf16, #tpu.memory_space<vmem>>, vector<8x1x5x84xbf16>
    %426 = vector.shape_cast %425 : vector<8x1x5x84xbf16> to vector<8x5x84xbf16>
    %427 = vector.extract_strided_slice %426 {offsets = [0, 0, 54], sizes = [8, 5, 30], strides = [1, 1, 1]} : vector<8x5x84xbf16> to vector<8x5x30xbf16>
    %c0_464 = arith.constant 0 : index
    %c0_465 = arith.constant 0 : index
    %c1_466 = arith.constant 1 : index
    %c0_467 = arith.constant 0 : index
    %428 = vector.load %arg13[%c0_464, %c0_465, %c1_466, %c0_467] : memref<8x2x8x84xbf16, #tpu.memory_space<vmem>>, vector<8x1x5x84xbf16>
    %429 = vector.shape_cast %428 : vector<8x1x5x84xbf16> to vector<8x5x84xbf16>
    %430 = vector.extract_strided_slice %429 {offsets = [0, 0, 54], sizes = [8, 5, 30], strides = [1, 1, 1]} : vector<8x5x84xbf16> to vector<8x5x30xbf16>
    %c0_468 = arith.constant 0 : index
    %c1_469 = arith.constant 1 : index
    %c1_470 = arith.constant 1 : index
    %c0_471 = arith.constant 0 : index
    %431 = vector.load %arg13[%c0_468, %c1_469, %c1_470, %c0_471] : memref<8x2x8x84xbf16, #tpu.memory_space<vmem>>, vector<8x1x5x84xbf16>
    %432 = vector.shape_cast %431 : vector<8x1x5x84xbf16> to vector<8x5x84xbf16>
    %433 = vector.extract_strided_slice %432 {offsets = [0, 0, 54], sizes = [8, 5, 30], strides = [1, 1, 1]} : vector<8x5x84xbf16> to vector<8x5x30xbf16>
    %c0_472 = arith.constant 0 : index
    %c0_473 = arith.constant 0 : index
    %c2_474 = arith.constant 2 : index
    %c0_475 = arith.constant 0 : index
    %434 = vector.load %arg13[%c0_472, %c0_473, %c2_474, %c0_475] : memref<8x2x8x84xbf16, #tpu.memory_space<vmem>>, vector<8x1x5x84xbf16>
    %435 = vector.shape_cast %434 : vector<8x1x5x84xbf16> to vector<8x5x84xbf16>
    %436 = vector.extract_strided_slice %435 {offsets = [0, 0, 54], sizes = [8, 5, 30], strides = [1, 1, 1]} : vector<8x5x84xbf16> to vector<8x5x30xbf16>
    %c0_476 = arith.constant 0 : index
    %c1_477 = arith.constant 1 : index
    %c2_478 = arith.constant 2 : index
    %c0_479 = arith.constant 0 : index
    %437 = vector.load %arg13[%c0_476, %c1_477, %c2_478, %c0_479] : memref<8x2x8x84xbf16, #tpu.memory_space<vmem>>, vector<8x1x5x84xbf16>
    %438 = vector.shape_cast %437 : vector<8x1x5x84xbf16> to vector<8x5x84xbf16>
    %439 = vector.extract_strided_slice %438 {offsets = [0, 0, 54], sizes = [8, 5, 30], strides = [1, 1, 1]} : vector<8x5x84xbf16> to vector<8x5x30xbf16>
    %440 = tpu.concatenate %427, %430, %433, %436, %439, %21 in 2 : vector<8x5x30xbf16>, vector<8x5x30xbf16>, vector<8x5x30xbf16>, vector<8x5x30xbf16>, vector<8x5x30xbf16>, vector<8x5x10xbf16> -> vector<8x5x160xbf16>
    %441 = vector.shape_cast %440 : vector<8x5x160xbf16> to vector<40x160xbf16>
    %c0_480 = arith.constant 0 : index
    %c0_481 = arith.constant 0 : index
    %442 = vector.load %arg4[%c0_480, %c0_481] : memref<160x128xbf16, #tpu.memory_space<vmem>>, vector<160x128xbf16>
    %cst_482 = arith.constant dense<0.000000e+00> : vector<40x128xf32>
    %443 = tpu.matmul %441, %442, %cst_482 {dimension_numbers = #tpu.dot_dimension_numbers<[1], [0], [0], [1], [0, 0, 1, 1], [], []>} : vector<40x160xbf16>, vector<160x128xbf16>, vector<40x128xf32> -> vector<40x128xf32>
    %444 = arith.maximumf %424, %443 : vector<40x128xf32>
    %c0_483 = arith.constant 0 : index
    %c0_484 = arith.constant 0 : index
    %445 = vector.load %arg5[%c0_483, %c0_484] : memref<1x128xf32, #tpu.memory_space<vmem>>, vector<1x128xf32>
    %446 = vector.broadcast %445 : vector<1x128xf32> to vector<40x128xf32>
    %447 = arith.addf %444, %446 : vector<40x128xf32>
    %cst_485 = arith.constant 0.000000e+00 : f32
    %448 = vector.broadcast %cst_485 : f32 to vector<40x128xf32>
    %449 = arith.maximumf %447, %448 : vector<40x128xf32>
    %450 = vector.shape_cast %449 : vector<40x128xf32> to vector<8x5x128xf32>
    %451 = arith.truncf %450 : vector<8x5x128xf32> to vector<8x5x128xbf16>
    %452 = vector.extract_strided_slice %107 {offsets = [0, 0, 0], sizes = [8, 1, 128], strides = [1, 1, 1]} : vector<8x5x128xbf16> to vector<8x1x128xbf16>
    %453 = vector.shape_cast %452 : vector<8x1x128xbf16> to vector<8x128xbf16>
    %454 = vector.extract_strided_slice %193 {offsets = [0, 0, 0], sizes = [8, 1, 128], strides = [1, 1, 1]} : vector<8x5x128xbf16> to vector<8x1x128xbf16>
    %455 = vector.shape_cast %454 : vector<8x1x128xbf16> to vector<8x128xbf16>
    %456 = vector.extract_strided_slice %279 {offsets = [0, 0, 0], sizes = [8, 1, 128], strides = [1, 1, 1]} : vector<8x5x128xbf16> to vector<8x1x128xbf16>
    %457 = vector.shape_cast %456 : vector<8x1x128xbf16> to vector<8x128xbf16>
    %458 = vector.extract_strided_slice %365 {offsets = [0, 0, 0], sizes = [8, 1, 128], strides = [1, 1, 1]} : vector<8x5x128xbf16> to vector<8x1x128xbf16>
    %459 = vector.shape_cast %458 : vector<8x1x128xbf16> to vector<8x128xbf16>
    %460 = vector.extract_strided_slice %451 {offsets = [0, 0, 0], sizes = [8, 1, 128], strides = [1, 1, 1]} : vector<8x5x128xbf16> to vector<8x1x128xbf16>
    %461 = vector.shape_cast %460 : vector<8x1x128xbf16> to vector<8x128xbf16>
    %462 = vector.extract_strided_slice %107 {offsets = [0, 1, 0], sizes = [8, 1, 128], strides = [1, 1, 1]} : vector<8x5x128xbf16> to vector<8x1x128xbf16>
    %463 = vector.shape_cast %462 : vector<8x1x128xbf16> to vector<8x128xbf16>
    %464 = vector.extract_strided_slice %193 {offsets = [0, 1, 0], sizes = [8, 1, 128], strides = [1, 1, 1]} : vector<8x5x128xbf16> to vector<8x1x128xbf16>
    %465 = vector.shape_cast %464 : vector<8x1x128xbf16> to vector<8x128xbf16>
    %466 = vector.extract_strided_slice %279 {offsets = [0, 1, 0], sizes = [8, 1, 128], strides = [1, 1, 1]} : vector<8x5x128xbf16> to vector<8x1x128xbf16>
    %467 = vector.shape_cast %466 : vector<8x1x128xbf16> to vector<8x128xbf16>
    %468 = vector.extract_strided_slice %365 {offsets = [0, 1, 0], sizes = [8, 1, 128], strides = [1, 1, 1]} : vector<8x5x128xbf16> to vector<8x1x128xbf16>
    %469 = vector.shape_cast %468 : vector<8x1x128xbf16> to vector<8x128xbf16>
    %470 = vector.extract_strided_slice %451 {offsets = [0, 1, 0], sizes = [8, 1, 128], strides = [1, 1, 1]} : vector<8x5x128xbf16> to vector<8x1x128xbf16>
    %471 = vector.shape_cast %470 : vector<8x1x128xbf16> to vector<8x128xbf16>
    %472 = vector.extract_strided_slice %107 {offsets = [0, 2, 0], sizes = [8, 1, 128], strides = [1, 1, 1]} : vector<8x5x128xbf16> to vector<8x1x128xbf16>
    %473 = vector.shape_cast %472 : vector<8x1x128xbf16> to vector<8x128xbf16>
    %474 = vector.extract_strided_slice %193 {offsets = [0, 2, 0], sizes = [8, 1, 128], strides = [1, 1, 1]} : vector<8x5x128xbf16> to vector<8x1x128xbf16>
    %475 = vector.shape_cast %474 : vector<8x1x128xbf16> to vector<8x128xbf16>
    %476 = vector.extract_strided_slice %279 {offsets = [0, 2, 0], sizes = [8, 1, 128], strides = [1, 1, 1]} : vector<8x5x128xbf16> to vector<8x1x128xbf16>
    %477 = vector.shape_cast %476 : vector<8x1x128xbf16> to vector<8x128xbf16>
    %478 = vector.extract_strided_slice %365 {offsets = [0, 2, 0], sizes = [8, 1, 128], strides = [1, 1, 1]} : vector<8x5x128xbf16> to vector<8x1x128xbf16>
    %479 = vector.shape_cast %478 : vector<8x1x128xbf16> to vector<8x128xbf16>
    %480 = vector.extract_strided_slice %451 {offsets = [0, 2, 0], sizes = [8, 1, 128], strides = [1, 1, 1]} : vector<8x5x128xbf16> to vector<8x1x128xbf16>
    %481 = vector.shape_cast %480 : vector<8x1x128xbf16> to vector<8x128xbf16>
    %482 = vector.extract_strided_slice %107 {offsets = [0, 3, 0], sizes = [8, 1, 128], strides = [1, 1, 1]} : vector<8x5x128xbf16> to vector<8x1x128xbf16>
    %483 = vector.shape_cast %482 : vector<8x1x128xbf16> to vector<8x128xbf16>
    %484 = vector.extract_strided_slice %193 {offsets = [0, 3, 0], sizes = [8, 1, 128], strides = [1, 1, 1]} : vector<8x5x128xbf16> to vector<8x1x128xbf16>
    %485 = vector.shape_cast %484 : vector<8x1x128xbf16> to vector<8x128xbf16>
    %486 = vector.extract_strided_slice %279 {offsets = [0, 3, 0], sizes = [8, 1, 128], strides = [1, 1, 1]} : vector<8x5x128xbf16> to vector<8x1x128xbf16>
    %487 = vector.shape_cast %486 : vector<8x1x128xbf16> to vector<8x128xbf16>
    %488 = vector.extract_strided_slice %365 {offsets = [0, 3, 0], sizes = [8, 1, 128], strides = [1, 1, 1]} : vector<8x5x128xbf16> to vector<8x1x128xbf16>
    %489 = vector.shape_cast %488 : vector<8x1x128xbf16> to vector<8x128xbf16>
    %490 = vector.extract_strided_slice %451 {offsets = [0, 3, 0], sizes = [8, 1, 128], strides = [1, 1, 1]} : vector<8x5x128xbf16> to vector<8x1x128xbf16>
    %491 = vector.shape_cast %490 : vector<8x1x128xbf16> to vector<8x128xbf16>
    %492 = vector.extract_strided_slice %107 {offsets = [0, 4, 0], sizes = [8, 1, 128], strides = [1, 1, 1]} : vector<8x5x128xbf16> to vector<8x1x128xbf16>
    %493 = vector.shape_cast %492 : vector<8x1x128xbf16> to vector<8x128xbf16>
    %494 = vector.extract_strided_slice %193 {offsets = [0, 4, 0], sizes = [8, 1, 128], strides = [1, 1, 1]} : vector<8x5x128xbf16> to vector<8x1x128xbf16>
    %495 = vector.shape_cast %494 : vector<8x1x128xbf16> to vector<8x128xbf16>
    %496 = vector.extract_strided_slice %279 {offsets = [0, 4, 0], sizes = [8, 1, 128], strides = [1, 1, 1]} : vector<8x5x128xbf16> to vector<8x1x128xbf16>
    %497 = vector.shape_cast %496 : vector<8x1x128xbf16> to vector<8x128xbf16>
    %498 = vector.extract_strided_slice %365 {offsets = [0, 4, 0], sizes = [8, 1, 128], strides = [1, 1, 1]} : vector<8x5x128xbf16> to vector<8x1x128xbf16>
    %499 = vector.shape_cast %498 : vector<8x1x128xbf16> to vector<8x128xbf16>
    %500 = vector.extract_strided_slice %451 {offsets = [0, 4, 0], sizes = [8, 1, 128], strides = [1, 1, 1]} : vector<8x5x128xbf16> to vector<8x1x128xbf16>
    %501 = vector.shape_cast %500 : vector<8x1x128xbf16> to vector<8x128xbf16>
    %502 = tpu.concatenate %453, %455, %457, %459, %461, %463, %465, %467, %469, %471, %473, %475, %477, %479, %481, %483 in 1 : vector<8x128xbf16>, vector<8x128xbf16>, vector<8x128xbf16>, vector<8x128xbf16>, vector<8x128xbf16>, vector<8x128xbf16>, vector<8x128xbf16>, vector<8x128xbf16>, vector<8x128xbf16>, vector<8x128xbf16>, vector<8x128xbf16>, vector<8x128xbf16>, vector<8x128xbf16>, vector<8x128xbf16>, vector<8x128xbf16>, vector<8x128xbf16> -> vector<8x2048xbf16>
    %503 = tpu.concatenate %485, %487, %489, %491, %493, %495, %497, %499, %501 in 1 : vector<8x128xbf16>, vector<8x128xbf16>, vector<8x128xbf16>, vector<8x128xbf16>, vector<8x128xbf16>, vector<8x128xbf16>, vector<8x128xbf16>, vector<8x128xbf16>, vector<8x128xbf16> -> vector<8x1152xbf16>
    %504 = tpu.concatenate %502, %503 in 1 : vector<8x2048xbf16>, vector<8x1152xbf16> -> vector<8x3200xbf16>
    %c0_486 = arith.constant 0 : index
    %c0_487 = arith.constant 0 : index
    %505 = vector.load %arg6[%c0_486, %c0_487] : memref<3200x128xbf16, #tpu.memory_space<vmem>>, vector<3200x128xbf16>
    %cst_488 = arith.constant dense<0.000000e+00> : vector<8x128xf32>
    %506 = tpu.matmul %504, %505, %cst_488 {dimension_numbers = #tpu.dot_dimension_numbers<[1], [0], [0], [1], [0, 0, 1, 1], [], []>} : vector<8x3200xbf16>, vector<3200x128xbf16>, vector<8x128xf32> -> vector<8x128xf32>
    %c0_489 = arith.constant 0 : index
    %c0_490 = arith.constant 0 : index
    %507 = vector.load %arg7[%c0_489, %c0_490] : memref<1x128xf32, #tpu.memory_space<vmem>>, vector<1x128xf32>
    %508 = vector.broadcast %507 : vector<1x128xf32> to vector<8x128xf32>
    %509 = arith.addf %506, %508 : vector<8x128xf32>
    %cst_491 = arith.constant 0.000000e+00 : f32
    %510 = vector.broadcast %cst_491 : f32 to vector<8x128xf32>
    %511 = arith.maximumf %509, %510 : vector<8x128xf32>
    %512 = arith.truncf %511 : vector<8x128xf32> to vector<8x128xbf16>
    %c0_492 = arith.constant 0 : index
    %c0_493 = arith.constant 0 : index
    %513 = vector.load %arg8[%c0_492, %c0_493] : memref<128x128xbf16, #tpu.memory_space<vmem>>, vector<128x128xbf16>
    %cst_494 = arith.constant dense<0.000000e+00> : vector<8x128xf32>
    %514 = tpu.matmul %512, %513, %cst_494 {dimension_numbers = #tpu.dot_dimension_numbers<[1], [0], [0], [1], [0, 0, 1, 1], [], []>} : vector<8x128xbf16>, vector<128x128xbf16>, vector<8x128xf32> -> vector<8x128xf32>
    %c0_495 = arith.constant 0 : index
    %c0_496 = arith.constant 0 : index
    %515 = vector.load %arg9[%c0_495, %c0_496] : memref<1x128xf32, #tpu.memory_space<vmem>>, vector<1x128xf32>
    %516 = vector.broadcast %515 : vector<1x128xf32> to vector<8x128xf32>
    %517 = arith.addf %514, %516 : vector<8x128xf32>
    %cst_497 = arith.constant 0.000000e+00 : f32
    %518 = vector.broadcast %cst_497 : f32 to vector<8x128xf32>
    %519 = arith.maximumf %517, %518 : vector<8x128xf32>
    %520 = arith.truncf %519 : vector<8x128xf32> to vector<8x128xbf16>
    %c0_498 = arith.constant 0 : index
    %c0_499 = arith.constant 0 : index
    %521 = vector.load %arg10[%c0_498, %c0_499] : memref<128x128xbf16, #tpu.memory_space<vmem>>, vector<128x128xbf16>
    %cst_500 = arith.constant dense<0.000000e+00> : vector<8x128xf32>
    %522 = tpu.matmul %520, %521, %cst_500 {dimension_numbers = #tpu.dot_dimension_numbers<[1], [0], [0], [1], [0, 0, 1, 1], [], []>} : vector<8x128xbf16>, vector<128x128xbf16>, vector<8x128xf32> -> vector<8x128xf32>
    %c0_501 = arith.constant 0 : index
    %c0_502 = arith.constant 0 : index
    %523 = vector.load %arg11[%c0_501, %c0_502] : memref<1x128xf32, #tpu.memory_space<vmem>>, vector<1x128xf32>
    %524 = vector.broadcast %523 : vector<1x128xf32> to vector<8x128xf32>
    %525 = arith.addf %522, %524 : vector<8x128xf32>
    %c0_503 = arith.constant 0 : index
    %c0_504 = arith.constant 0 : index
    %526 = vector.load %arg12[%c0_503, %c0_504] : memref<8x128xf32, #tpu.memory_space<vmem>>, vector<8x128xf32>
    tpu.vector_store %arg12[%c0_503, %c0_504], %525 {strides = array<i32>} : memref<8x128xf32, #tpu.memory_space<vmem>>, vector<8x128xf32>,
    return
  }
  func.func @transform_0(%arg0: i32) -> (i32, i32, i32, i32) {
    %c0_i32 = arith.constant 0 : i32
    %c0_i32_0 = arith.constant 0 : i32
    %c0_i32_1 = arith.constant 0 : i32
    %c0_i32_2 = arith.constant 0 : i32
    return %arg0, %c0_i32, %c0_i32_0, %c0_i32_1 : i32, i32, i32, i32
  }
  func.func @transform_1(%arg0: i32) -> (i32, i32) {
    %c0_i32 = arith.constant 0 : i32
    %c0_i32_0 = arith.constant 0 : i32
    %c0_i32_1 = arith.constant 0 : i32
    return %c0_i32, %c0_i32_0 : i32, i32
  }
  func.func @transform_2(%arg0: i32) -> (i32, i32) {
    %c0_i32 = arith.constant 0 : i32
    %c0_i32_0 = arith.constant 0 : i32
    %c0_i32_1 = arith.constant 0 : i32
    return %c0_i32, %c0_i32_0 : i32, i32
  }
  func.func @transform_3(%arg0: i32) -> (i32, i32) {
    %c0_i32 = arith.constant 0 : i32
    %c0_i32_0 = arith.constant 0 : i32
    %c0_i32_1 = arith.constant 0 : i32
    return %c0_i32, %c0_i32_0 : i32, i32
  }
  func.func @transform_4(%arg0: i32) -> (i32, i32) {
    %c0_i32 = arith.constant 0 : i32
    %c0_i32_0 = arith.constant 0 : i32
    %c0_i32_1 = arith.constant 0 : i32
    return %c0_i32, %c0_i32_0 : i32, i32
  }
  func.func @transform_5(%arg0: i32) -> (i32, i32) {
    %c0_i32 = arith.constant 0 : i32
    %c0_i32_0 = arith.constant 0 : i32
    %c0_i32_1 = arith.constant 0 : i32
    return %c0_i32, %c0_i32_0 : i32, i32
  }
  func.func @transform_6(%arg0: i32) -> (i32, i32) {
    %c0_i32 = arith.constant 0 : i32
    %c0_i32_0 = arith.constant 0 : i32
    %c0_i32_1 = arith.constant 0 : i32
    return %c0_i32, %c0_i32_0 : i32, i32
  }
  func.func @transform_7(%arg0: i32) -> (i32, i32) {
    %c0_i32 = arith.constant 0 : i32
    %c0_i32_0 = arith.constant 0 : i32
    %c0_i32_1 = arith.constant 0 : i32
    return %c0_i32, %c0_i32_0 : i32, i32
  }
  func.func @transform_8(%arg0: i32) -> (i32, i32) {
    %c0_i32 = arith.constant 0 : i32
    %c0_i32_0 = arith.constant 0 : i32
    %c0_i32_1 = arith.constant 0 : i32
    return %c0_i32, %c0_i32_0 : i32, i32
  }
  func.func @transform_9(%arg0: i32) -> (i32, i32) {
    %c0_i32 = arith.constant 0 : i32
    %c0_i32_0 = arith.constant 0 : i32
    %c0_i32_1 = arith.constant 0 : i32
    return %c0_i32, %c0_i32_0 : i32, i32
  }
  func.func @transform_10(%arg0: i32) -> (i32, i32) {
    %c0_i32 = arith.constant 0 : i32
    %c0_i32_0 = arith.constant 0 : i32
    %c0_i32_1 = arith.constant 0 : i32
    return %c0_i32, %c0_i32_0 : i32, i32
  }
  func.func @transform_11(%arg0: i32) -> (i32, i32) {
    %c0_i32 = arith.constant 0 : i32
    %c0_i32_0 = arith.constant 0 : i32
    return %arg0, %c0_i32 : i32, i32
  }
}

</mosaic_0001>

<llo_original>
// kernel: _lambda_.1
$region0: #{_lambda_.1}
  #allocation0 [shape = 'u32[]', space=smem, size = 0x4, offset = 0x4, fixed_abs, tag = 'smem constant byte address 0x4 - core index']
  #allocation1 [shape = 'u32[72,128]{1,0:T(1,128)}', space=vmem, size = 0x9000, scoped, tag = 'internal scratch']
  #allocation2 [shape = 'bf16[8,2,8,84]{3,2,1,0:T(8,128)(2,1)}', space=vmem, size = 0x8000, scoped, tag = 'scratch operand']
  %s0 = inlined_call_operand.vmem [shape: bf16[8,4,8,256], index: 0, kind: input, shape index: {}]
  %s1 = inlined_call_operand.vmem [shape: bf16[256,256], index: 1, kind: input, shape index: {}]
  %s2 = inlined_call_operand.vmem [shape: f32[1,84], index: 2, kind: input, shape index: {}]
  %s3 = inlined_call_operand.vmem [shape: bf16[160,128], index: 3, kind: input, shape index: {}]
  %s4 = inlined_call_operand.vmem [shape: f32[1,128], index: 4, kind: input, shape index: {}]
  %s5 = inlined_call_operand.vmem [shape: bf16[3200,128], index: 5, kind: input, shape index: {}]
  %s6 = inlined_call_operand.vmem [shape: f32[1,128], index: 6, kind: input, shape index: {}]
  %s7 = inlined_call_operand.vmem [shape: bf16[128,128], index: 7, kind: input, shape index: {}]
  %s8 = inlined_call_operand.vmem [shape: f32[1,128], index: 8, kind: input, shape index: {}]
  %s9 = inlined_call_operand.vmem [shape: bf16[128,128], index: 9, kind: input, shape index: {}]
  %s10 = inlined_call_operand.vmem [shape: f32[1,128], index: 10, kind: input, shape index: {}]
  %s11 = inlined_call_operand.vmem [shape: f32[8,128], index: 11, kind: output, shape index: {}]
  %s12 = sld [smem:[#allocation0]]
  $region54: #{_lambda_.1} parent=0
    _
  %s14 = ssub.s32 1, %s12
  %s15 = scalar_select 0, %s14, %s12
  // Predicated region
  $region2: #{_lambda_.1} parent=0 // pred_check
    _
  $region3: #{_lambda_.1} parent=0 // pred_check_branch
    %17 = sbr.rel (0) target = $region5
  $region4: #{_lambda_.1} parent=0 // pred_region
    _
  $region5: #{_lambda_.1} parent=0 // pred_fallthru
    _
  // Predicated region
  $region6: #{_lambda_.1} parent=0 // pred_check
    _
  $region7: #{_lambda_.1} parent=0 // pred_check_branch
    %19 = sbr.rel (0) target = $region9
  $region8: #{_lambda_.1} parent=0 // pred_region
    _
  $region9: #{_lambda_.1} parent=0 // pred_fallthru
    _
  // Predicated region
  $region10: #{_lambda_.1} parent=0 // pred_check
    _
  $region11: #{_lambda_.1} parent=0 // pred_check_branch
    %21 = sbr.rel (0) target = $region13
  $region12: #{_lambda_.1} parent=0 // pred_region
    _
  $region13: #{_lambda_.1} parent=0 // pred_fallthru
    _
  // Predicated region
  $region14: #{_lambda_.1} parent=0 // pred_check
    _
  $region15: #{_lambda_.1} parent=0 // pred_check_branch
    %23 = sbr.rel (0) target = $region17
  $region16: #{_lambda_.1} parent=0 // pred_region
    _
  $region17: #{_lambda_.1} parent=0 // pred_fallthru
    _
  // Predicated region
  $region18: #{_lambda_.1} parent=0 // pred_check
    _
  $region19: #{_lambda_.1} parent=0 // pred_check_branch
    %25 = sbr.rel (0) target = $region21
  $region20: #{_lambda_.1} parent=0 // pred_region
    _
  $region21: #{_lambda_.1} parent=0 // pred_fallthru
    _
  // Predicated region
  $region22: #{_lambda_.1} parent=0 // pred_check
    _
  $region23: #{_lambda_.1} parent=0 // pred_check_branch
    %27 = sbr.rel (0) target = $region25
  $region24: #{_lambda_.1} parent=0 // pred_region
    _
  $region25: #{_lambda_.1} parent=0 // pred_fallthru
    _
  // Predicated region
  $region26: #{_lambda_.1} parent=0 // pred_check
    _
  $region27: #{_lambda_.1} parent=0 // pred_check_branch
    %29 = sbr.rel (0) target = $region29
  $region28: #{_lambda_.1} parent=0 // pred_region
    _
  $region29: #{_lambda_.1} parent=0 // pred_fallthru
    _
  // Predicated region
  $region30: #{_lambda_.1} parent=0 // pred_check
    _
  $region31: #{_lambda_.1} parent=0 // pred_check_branch
    %31 = sbr.rel (0) target = $region33
  $region32: #{_lambda_.1} parent=0 // pred_region
    _
  $region33: #{_lambda_.1} parent=0 // pred_fallthru
    _
  // Predicated region
  $region34: #{_lambda_.1} parent=0 // pred_check
    _
  $region35: #{_lambda_.1} parent=0 // pred_check_branch
    %33 = sbr.rel (0) target = $region37
  $region36: #{_lambda_.1} parent=0 // pred_region
    _
  $region37: #{_lambda_.1} parent=0 // pred_fallthru
    _
  // Predicated region
  $region38: #{_lambda_.1} parent=0 // pred_check
    _
  $region39: #{_lambda_.1} parent=0 // pred_check_branch
    %35 = sbr.rel (0) target = $region41
  $region40: #{_lambda_.1} parent=0 // pred_region
    _
  $region41: #{_lambda_.1} parent=0 // pred_fallthru
    _
  // Predicated region
  $region42: #{_lambda_.1} parent=0 // pred_check
    _
  $region43: #{_lambda_.1} parent=0 // pred_check_branch
    %37 = sbr.rel (0) target = $region45
  $region44: #{_lambda_.1} parent=0 // pred_region
    _
  $region45: #{_lambda_.1} parent=0 // pred_fallthru
    _
  %v39 = vld [vmem:[%s0] sm:$0xff]
  %v40 = vld [vmem:[%s0 + $0x8] sm:$0xff]
  %v41 = vld [vmem:[%s0 + $0x10] sm:$0xff]
  %v42 = vld [vmem:[%s0 + $0x18] sm:$0xff]
  %v43 = vld [vmem:[%s0 + $0x20] sm:$0xff]
  %v44 = vld [vmem:[%s0 + $0x28] sm:$0xff]
  %v45 = vld [vmem:[%s0 + $0x30] sm:$0xff]
  %v46 = vld [vmem:[%s0 + $0x38] sm:$0xff]
  %v47 = vld [vmem:[%s0 + $0x40] sm:$0xff]
  %v48 = vld [vmem:[%s0 + $0x48] sm:$0xff]
  %v49 = vld [vmem:[%s0 + $0x50] sm:$0xff]
  %v50 = vld [vmem:[%s0 + $0x58] sm:$0xff]
  %v51 = vld [vmem:[%s0 + $0x60] sm:$0xff]
  %v52 = vld [vmem:[%s0 + $0x68] sm:$0xff]
  %v53 = vld [vmem:[%s0 + $0x70] sm:$0xff]
  %v54 = vld [vmem:[%s0 + $0x78] sm:$0xff]
  %v55 = vld [vmem:[%s0 + $0x80] sm:$0xff]
  %v56 = vld [vmem:[%s0 + $0x88] sm:$0xff]
  %v57 = vld [vmem:[%s0 + $0x90] sm:$0xff]
  %v58 = vld [vmem:[%s0 + $0x98] sm:$0xff]
  %v59 = vld [vmem:[%s0 + $0xa0] sm:$0xff]
  %v60 = vld [vmem:[%s0 + $0xa8] sm:$0xff]
  %v61 = vld [vmem:[%s0 + $0xb0] sm:$0xff]
  %v62 = vld [vmem:[%s0 + $0xb8] sm:$0xff]
  %v63 = vld [vmem:[%s0 + $0xc0] sm:$0xff]
  %v64 = vld [vmem:[%s0 + $0xc8] sm:$0xff]
  %v65 = vld [vmem:[%s0 + $0xd0] sm:$0xff]
  %v66 = vld [vmem:[%s0 + $0xd8] sm:$0xff]
  %v67 = vld [vmem:[%s0 + $0xe0] sm:$0xff]
  %v68 = vld [vmem:[%s0 + $0xe8] sm:$0xff]
  %v69 = vld [vmem:[%s0 + $0xf0] sm:$0xff]
  %v70 = vld [vmem:[%s0 + $0xf8] sm:$0xff]
  %v71 = vld [vmem:[%s1] sm:$0xff]
  %v72 = vld [vmem:[%s1 + $0x8] sm:$0xff]
  %v73 = vld [vmem:[%s1 + $0x10] sm:$0xff]
  %v74 = vld [vmem:[%s1 + $0x18] sm:$0xff]
  %v75 = vld [vmem:[%s1 + $0x20] sm:$0xff]
  %v76 = vld [vmem:[%s1 + $0x28] sm:$0xff]
  %v77 = vld [vmem:[%s1 + $0x30] sm:$0xff]
  %v78 = vld [vmem:[%s1 + $0x38] sm:$0xff]
  %v79 = vld [vmem:[%s1 + $0x40] sm:$0xff]
  %v80 = vld [vmem:[%s1 + $0x48] sm:$0xff]
  %v81 = vld [vmem:[%s1 + $0x50] sm:$0xff]
  %v82 = vld [vmem:[%s1 + $0x58] sm:$0xff]
  %v83 = vld [vmem:[%s1 + $0x60] sm:$0xff]
  %v84 = vld [vmem:[%s1 + $0x68] sm:$0xff]
  %v85 = vld [vmem:[%s1 + $0x70] sm:$0xff]
  %v86 = vld [vmem:[%s1 + $0x78] sm:$0xff]
  %v87 = vld [vmem:[%s1 + $0x80] sm:$0xff]
  %v88 = vld [vmem:[%s1 + $0x88] sm:$0xff]
  %v89 = vld [vmem:[%s1 + $0x90] sm:$0xff]
  %v90 = vld [vmem:[%s1 + $0x98] sm:$0xff]
  %v91 = vld [vmem:[%s1 + $0xa0] sm:$0xff]
  %v92 = vld [vmem:[%s1 + $0xa8] sm:$0xff]
  %v93 = vld [vmem:[%s1 + $0xb0] sm:$0xff]
  %v94 = vld [vmem:[%s1 + $0xb8] sm:$0xff]
  %v95 = vld [vmem:[%s1 + $0xc0] sm:$0xff]
  %v96 = vld [vmem:[%s1 + $0xc8] sm:$0xff]
  %v97 = vld [vmem:[%s1 + $0xd0] sm:$0xff]
  %v98 = vld [vmem:[%s1 + $0xd8] sm:$0xff]
  %v99 = vld [vmem:[%s1 + $0xe0] sm:$0xff]
  %v100 = vld [vmem:[%s1 + $0xe8] sm:$0xff]
  %v101 = vld [vmem:[%s1 + $0xf0] sm:$0xff]
  %v102 = vld [vmem:[%s1 + $0xf8] sm:$0xff]
  %v135 = vunpack.c.l.b16 %v39
  %v136 = vunpack.c.h.b16 %v39
  %v137 = vunpack.c.l.b16 %v40
  %v138 = vunpack.c.h.b16 %v40
  %v139 = vunpack.c.l.b16 %v41
  %v140 = vunpack.c.h.b16 %v41
  %v141 = vunpack.c.l.b16 %v42
  %v142 = vunpack.c.h.b16 %v42
  %v143 = vunpack.c.l.b16 %v43
  %v144 = vunpack.c.h.b16 %v43
  %v145 = vunpack.c.l.b16 %v44
  %v146 = vunpack.c.h.b16 %v44
  %v147 = vunpack.c.l.b16 %v45
  %v148 = vunpack.c.h.b16 %v45
  %v149 = vunpack.c.l.b16 %v46
  %v150 = vunpack.c.h.b16 %v46
  %v151 = vunpack.c.l.b16 %v47
  %v152 = vunpack.c.h.b16 %v47
  %v153 = vunpack.c.l.b16 %v48
  %v154 = vunpack.c.h.b16 %v48
  %v155 = vunpack.c.l.b16 %v49
  %v156 = vunpack.c.h.b16 %v49
  %v157 = vunpack.c.l.b16 %v50
  %v158 = vunpack.c.h.b16 %v50
  %v159 = vunpack.c.l.b16 %v51
  %v160 = vunpack.c.h.b16 %v51
  %v161 = vunpack.c.l.b16 %v52
  %v162 = vunpack.c.h.b16 %v52
  %v163 = vunpack.c.l.b16 %v53
  %v164 = vunpack.c.h.b16 %v53
  %v165 = vunpack.c.l.b16 %v54
  %v166 = vunpack.c.h.b16 %v54
  %v167 = vunpack.c.l.b16 %v55
  %v168 = vunpack.c.h.b16 %v55
  %v169 = vunpack.c.l.b16 %v56
  %v170 = vunpack.c.h.b16 %v56
  %v171 = vunpack.c.l.b16 %v57
  %v172 = vunpack.c.h.b16 %v57
  %v173 = vunpack.c.l.b16 %v58
  %v174 = vunpack.c.h.b16 %v58
  %v175 = vunpack.c.l.b16 %v59
  %v176 = vunpack.c.h.b16 %v59
  %v177 = vunpack.c.l.b16 %v60
  %v178 = vunpack.c.h.b16 %v60
  %v179 = vunpack.c.l.b16 %v61
  %v180 = vunpack.c.h.b16 %v61
  %v181 = vunpack.c.l.b16 %v62
  %v182 = vunpack.c.h.b16 %v62
  %v183 = vunpack.c.l.b16 %v63
  %v184 = vunpack.c.h.b16 %v63
  %v185 = vunpack.c.l.b16 %v64
  %v186 = vunpack.c.h.b16 %v64
  %v187 = vunpack.c.l.b16 %v65
  %v188 = vunpack.c.h.b16 %v65
  %v189 = vunpack.c.l.b16 %v66
  %v190 = vunpack.c.h.b16 %v66
  %v191 = vunpack.c.l.b16 %v67
  %v192 = vunpack.c.h.b16 %v67
  %v193 = vunpack.c.l.b16 %v68
  %v194 = vunpack.c.h.b16 %v68
  %v195 = vunpack.c.l.b16 %v69
  %v196 = vunpack.c.h.b16 %v69
  %v197 = vunpack.c.l.b16 %v70
  %v198 = vunpack.c.h.b16 %v70
  %v199 = vpack.c.b16 %v137, %v135
  %v200 = vpack.c.b16 %v138, %v136
  %v201 = vpack.c.b16 %v141, %v139
  %v202 = vpack.c.b16 %v142, %v140
  %v203 = vpack.c.b16 %v145, %v143
  %v204 = vpack.c.b16 %v146, %v144
  %v205 = vpack.c.b16 %v149, %v147
  %v206 = vpack.c.b16 %v150, %v148
  %v207 = vpack.c.b16 %v153, %v151
  %v208 = vpack.c.b16 %v154, %v152
  %v209 = vpack.c.b16 %v157, %v155
  %v210 = vpack.c.b16 %v158, %v156
  %v211 = vpack.c.b16 %v161, %v159
  %v212 = vpack.c.b16 %v162, %v160
  %v213 = vpack.c.b16 %v165, %v163
  %v214 = vpack.c.b16 %v166, %v164
  %v215 = vpack.c.b16 %v169, %v167
  %v216 = vpack.c.b16 %v170, %v168
  %v217 = vpack.c.b16 %v173, %v171
  %v218 = vpack.c.b16 %v174, %v172
  %v219 = vpack.c.b16 %v177, %v175
  %v220 = vpack.c.b16 %v178, %v176
  %v221 = vpack.c.b16 %v181, %v179
  %v222 = vpack.c.b16 %v182, %v180
  %v223 = vpack.c.b16 %v185, %v183
  %v224 = vpack.c.b16 %v186, %v184
  %v225 = vpack.c.b16 %v189, %v187
  %v226 = vpack.c.b16 %v190, %v188
  %v227 = vpack.c.b16 %v193, %v191
  %v228 = vpack.c.b16 %v194, %v192
  %v229 = vpack.c.b16 %v197, %v195
  %v230 = vpack.c.b16 %v198, %v196
  %v295 = vunpack.c.l.b16 %v71
  %v296 = vunpack.c.h.b16 %v71
  %v297 = vunpack.c.l.b16 %v72
  %v298 = vunpack.c.h.b16 %v72
  %v299 = vunpack.c.l.b16 %v73
  %v300 = vunpack.c.h.b16 %v73
  %v301 = vunpack.c.l.b16 %v74
  %v302 = vunpack.c.h.b16 %v74
  %v303 = vunpack.c.l.b16 %v75
  %v304 = vunpack.c.h.b16 %v75
  %v305 = vunpack.c.l.b16 %v76
  %v306 = vunpack.c.h.b16 %v76
  %v307 = vunpack.c.l.b16 %v77
  %v308 = vunpack.c.h.b16 %v77
  %v309 = vunpack.c.l.b16 %v78
  %v310 = vunpack.c.h.b16 %v78
  %v311 = vunpack.c.l.b16 %v79
  %v312 = vunpack.c.h.b16 %v79
  %v313 = vunpack.c.l.b16 %v80
  %v314 = vunpack.c.h.b16 %v80
  %v315 = vunpack.c.l.b16 %v81
  %v316 = vunpack.c.h.b16 %v81
  %v317 = vunpack.c.l.b16 %v82
  %v318 = vunpack.c.h.b16 %v82
  %v319 = vunpack.c.l.b16 %v83
  %v320 = vunpack.c.h.b16 %v83
  %v321 = vunpack.c.l.b16 %v84
  %v322 = vunpack.c.h.b16 %v84
  %v323 = vunpack.c.l.b16 %v85
  %v324 = vunpack.c.h.b16 %v85
  %v325 = vunpack.c.l.b16 %v86
  %v326 = vunpack.c.h.b16 %v86
  %v327 = vunpack.c.l.b16 %v87
  %v328 = vunpack.c.h.b16 %v87
  %v329 = vunpack.c.l.b16 %v88
  %v330 = vunpack.c.h.b16 %v88
  %v331 = vunpack.c.l.b16 %v89
  %v332 = vunpack.c.h.b16 %v89
  %v333 = vunpack.c.l.b16 %v90
  %v334 = vunpack.c.h.b16 %v90
  %v335 = vunpack.c.l.b16 %v91
  %v336 = vunpack.c.h.b16 %v91
  %v337 = vunpack.c.l.b16 %v92
  %v338 = vunpack.c.h.b16 %v92
  %v339 = vunpack.c.l.b16 %v93
  %v340 = vunpack.c.h.b16 %v93
  %v341 = vunpack.c.l.b16 %v94
  %v342 = vunpack.c.h.b16 %v94
  %v343 = vunpack.c.l.b16 %v95
  %v344 = vunpack.c.h.b16 %v95
  %v345 = vunpack.c.l.b16 %v96
  %v346 = vunpack.c.h.b16 %v96
  %v347 = vunpack.c.l.b16 %v97
  %v348 = vunpack.c.h.b16 %v97
  %v349 = vunpack.c.l.b16 %v98
  %v350 = vunpack.c.h.b16 %v98
  %v351 = vunpack.c.l.b16 %v99
  %v352 = vunpack.c.h.b16 %v99
  %v353 = vunpack.c.l.b16 %v100
  %v354 = vunpack.c.h.b16 %v100
  %v355 = vunpack.c.l.b16 %v101
  %v356 = vunpack.c.h.b16 %v101
  %v357 = vunpack.c.l.b16 %v102
  %v358 = vunpack.c.h.b16 %v102
  %v359 = vpack.c.b16 %v297, %v295
  %v360 = vpack.c.b16 %v298, %v296
  %v361 = vpack.c.b16 %v301, %v299
  %v362 = vpack.c.b16 %v302, %v300
  %v363 = vpack.c.b16 %v305, %v303
  %v364 = vpack.c.b16 %v306, %v304
  %v365 = vpack.c.b16 %v309, %v307
  %v366 = vpack.c.b16 %v310, %v308
  %v367 = vpack.c.b16 %v313, %v311
  %v368 = vpack.c.b16 %v314, %v312
  %v369 = vpack.c.b16 %v317, %v315
  %v370 = vpack.c.b16 %v318, %v316
  %v371 = vpack.c.b16 %v321, %v319
  %v372 = vpack.c.b16 %v322, %v320
  %v373 = vpack.c.b16 %v325, %v323
  %v374 = vpack.c.b16 %v326, %v324
  %v375 = vpack.c.b16 %v329, %v327
  %v376 = vpack.c.b16 %v330, %v328
  %v377 = vpack.c.b16 %v333, %v331
  %v378 = vpack.c.b16 %v334, %v332
  %v379 = vpack.c.b16 %v337, %v335
  %v380 = vpack.c.b16 %v338, %v336
  %v381 = vpack.c.b16 %v341, %v339
  %v382 = vpack.c.b16 %v342, %v340
  %v383 = vpack.c.b16 %v345, %v343
  %v384 = vpack.c.b16 %v346, %v344
  %v385 = vpack.c.b16 %v349, %v347
  %v386 = vpack.c.b16 %v350, %v348
  %v387 = vpack.c.b16 %v353, %v351
  %v388 = vpack.c.b16 %v354, %v352
  %v389 = vpack.c.b16 %v357, %v355
  %v390 = vpack.c.b16 %v358, %v356
  %423 = vmatpush.bf16.msra.mxu0 %v373
  %424 = vmatpush.bf16.msra.mxu0 %v371
  %425 = vmatpush.bf16.msra.mxu0 %v369
  %426 = vmatpush.bf16.msra.mxu0 %v367
  %427 = vmatpush.bf16.msra.mxu0 %v365
  %428 = vmatpush.bf16.msra.mxu0 %v363
  %429 = vmatpush.bf16.msra.mxu0 %v361
  %430 = vmatpush.bf16.msra.mxu0 %v359
  %431 = vmatmul.bf16.gmra.mxu0 %v199
  %v432 = vpop.f32.mrf.mxu0
  %v433 = vadd.f32 0.0, %v432
  %v434 = vpop.f32.mrf.mxu0
  %v435 = vadd.f32 0.0, %v434
  %436 = vmatmul.bf16.gmra.mxu0 %v201
  %v437 = vpop.f32.mrf.mxu0
  %v438 = vadd.f32 0.0, %v437
  %v439 = vpop.f32.mrf.mxu0
  %v440 = vadd.f32 0.0, %v439
  %441 = vmatmul.bf16.gmra.mxu0 %v203
  %v442 = vpop.f32.mrf.mxu0
  %v443 = vadd.f32 0.0, %v442
  %v444 = vpop.f32.mrf.mxu0
  %v445 = vadd.f32 0.0, %v444
  %446 = vmatmul.bf16.gmra.mxu0 %v205
  %v447 = vpop.f32.mrf.mxu0
  %v448 = vadd.f32 0.0, %v447
  %v449 = vpop.f32.mrf.mxu0
  %v450 = vadd.f32 0.0, %v449
  %451 = vmatmul.bf16.gmra.mxu0 %v207
  %v452 = vpop.f32.mrf.mxu0
  %v453 = vadd.f32 0.0, %v452
  %v454 = vpop.f32.mrf.mxu0
  %v455 = vadd.f32 0.0, %v454
  %456 = vmatmul.bf16.gmra.mxu0 %v209
  %v457 = vpop.f32.mrf.mxu0
  %v458 = vadd.f32 0.0, %v457
  %v459 = vpop.f32.mrf.mxu0
  %v460 = vadd.f32 0.0, %v459
  %461 = vmatmul.bf16.gmra.mxu0 %v211
  %v462 = vpop.f32.mrf.mxu0
  %v463 = vadd.f32 0.0, %v462
  %v464 = vpop.f32.mrf.mxu0
  %v465 = vadd.f32 0.0, %v464
  %466 = vmatmul.bf16.gmra.mxu0 %v213
  %v467 = vpop.f32.mrf.mxu0
  %v468 = vadd.f32 0.0, %v467
  %v469 = vpop.f32.mrf.mxu0
  %v470 = vadd.f32 0.0, %v469
  %471 = vmatmul.bf16.gmra.mxu0 %v215
  %v472 = vpop.f32.mrf.mxu0
  %v473 = vadd.f32 0.0, %v472
  %v474 = vpop.f32.mrf.mxu0
  %v475 = vadd.f32 0.0, %v474
  %476 = vmatmul.bf16.gmra.mxu0 %v217
  %v477 = vpop.f32.mrf.mxu0
  %v478 = vadd.f32 0.0, %v477
  %v479 = vpop.f32.mrf.mxu0
  %v480 = vadd.f32 0.0, %v479
  %481 = vmatmul.bf16.gmra.mxu0 %v219
  %v482 = vpop.f32.mrf.mxu0
  %v483 = vadd.f32 0.0, %v482
  %v484 = vpop.f32.mrf.mxu0
  %v485 = vadd.f32 0.0, %v484
  %486 = vmatmul.bf16.gmra.mxu0 %v221
  %v487 = vpop.f32.mrf.mxu0
  %v488 = vadd.f32 0.0, %v487
  %v489 = vpop.f32.mrf.mxu0
  %v490 = vadd.f32 0.0, %v489
  %491 = vmatmul.bf16.gmra.mxu0 %v223
  %v492 = vpop.f32.mrf.mxu0
  %v493 = vadd.f32 0.0, %v492
  %v494 = vpop.f32.mrf.mxu0
  %v495 = vadd.f32 0.0, %v494
  %496 = vmatmul.bf16.gmra.mxu0 %v225
  %v497 = vpop.f32.mrf.mxu0
  %v498 = vadd.f32 0.0, %v497
  %v499 = vpop.f32.mrf.mxu0
  %v500 = vadd.f32 0.0, %v499
  %501 = vmatmul.bf16.gmra.mxu0 %v227
  %v502 = vpop.f32.mrf.mxu0
  %v503 = vadd.f32 0.0, %v502
  %v504 = vpop.f32.mrf.mxu0
  %v505 = vadd.f32 0.0, %v504
  %506 = vmatmul.bf16.gmra.mxu0 %v229
  %v507 = vpop.f32.mrf.mxu0
  %v508 = vadd.f32 0.0, %v507
  %v509 = vpop.f32.mrf.mxu0
  %v510 = vadd.f32 0.0, %v509
  %511 = vdwg.mxu0
  %512 = vmatpush.bf16.msra.mxu0 %v389
  %513 = vmatpush.bf16.msra.mxu0 %v387
  %514 = vmatpush.bf16.msra.mxu0 %v385
  %515 = vmatpush.bf16.msra.mxu0 %v383
  %516 = vmatpush.bf16.msra.mxu0 %v381
  %517 = vmatpush.bf16.msra.mxu0 %v379
  %518 = vmatpush.bf16.msra.mxu0 %v377
  %519 = vmatpush.bf16.msra.mxu0 %v375
  %520 = vmatmul.bf16.gmra.mxu0 %v200
  %v521 = vpop.f32.mrf.mxu0
  %v522 = vadd.f32 %v433, %v521
  %v523 = vpop.f32.mrf.mxu0
  %v524 = vadd.f32 %v435, %v523
  %525 = vmatmul.bf16.gmra.mxu0 %v202
  %v526 = vpop.f32.mrf.mxu0
  %v527 = vadd.f32 %v438, %v526
  %v528 = vpop.f32.mrf.mxu0
  %v529 = vadd.f32 %v440, %v528
  %530 = vmatmul.bf16.gmra.mxu0 %v204
  %v531 = vpop.f32.mrf.mxu0
  %v532 = vadd.f32 %v443, %v531
  %v533 = vpop.f32.mrf.mxu0
  %v534 = vadd.f32 %v445, %v533
  %535 = vmatmul.bf16.gmra.mxu0 %v206
  %v536 = vpop.f32.mrf.mxu0
  %v537 = vadd.f32 %v448, %v536
  %v538 = vpop.f32.mrf.mxu0
  %v539 = vadd.f32 %v450, %v538
  %540 = vmatmul.bf16.gmra.mxu0 %v208
  %v541 = vpop.f32.mrf.mxu0
  %v542 = vadd.f32 %v453, %v541
  %v543 = vpop.f32.mrf.mxu0
  %v544 = vadd.f32 %v455, %v543
  %545 = vmatmul.bf16.gmra.mxu0 %v210
  %v546 = vpop.f32.mrf.mxu0
  %v547 = vadd.f32 %v458, %v546
  %v548 = vpop.f32.mrf.mxu0
  %v549 = vadd.f32 %v460, %v548
  %550 = vmatmul.bf16.gmra.mxu0 %v212
  %v551 = vpop.f32.mrf.mxu0
  %v552 = vadd.f32 %v463, %v551
  %v553 = vpop.f32.mrf.mxu0
  %v554 = vadd.f32 %v465, %v553
  %555 = vmatmul.bf16.gmra.mxu0 %v214
  %v556 = vpop.f32.mrf.mxu0
  %v557 = vadd.f32 %v468, %v556
  %v558 = vpop.f32.mrf.mxu0
  %v559 = vadd.f32 %v470, %v558
  %560 = vmatmul.bf16.gmra.mxu0 %v216
  %v561 = vpop.f32.mrf.mxu0
  %v562 = vadd.f32 %v473, %v561
  %v563 = vpop.f32.mrf.mxu0
  %v564 = vadd.f32 %v475, %v563
  %565 = vmatmul.bf16.gmra.mxu0 %v218
  %v566 = vpop.f32.mrf.mxu0
  %v567 = vadd.f32 %v478, %v566
  %v568 = vpop.f32.mrf.mxu0
  %v569 = vadd.f32 %v480, %v568
  %570 = vmatmul.bf16.gmra.mxu0 %v220
  %v571 = vpop.f32.mrf.mxu0
  %v572 = vadd.f32 %v483, %v571
  %v573 = vpop.f32.mrf.mxu0
  %v574 = vadd.f32 %v485, %v573
  %575 = vmatmul.bf16.gmra.mxu0 %v222
  %v576 = vpop.f32.mrf.mxu0
  %v577 = vadd.f32 %v488, %v576
  %v578 = vpop.f32.mrf.mxu0
  %v579 = vadd.f32 %v490, %v578
  %580 = vmatmul.bf16.gmra.mxu0 %v224
  %v581 = vpop.f32.mrf.mxu0
  %v582 = vadd.f32 %v493, %v581
  %v583 = vpop.f32.mrf.mxu0
  %v584 = vadd.f32 %v495, %v583
  %585 = vmatmul.bf16.gmra.mxu0 %v226
  %v586 = vpop.f32.mrf.mxu0
  %v587 = vadd.f32 %v498, %v586
  %v588 = vpop.f32.mrf.mxu0
  %v589 = vadd.f32 %v500, %v588
  %590 = vmatmul.bf16.gmra.mxu0 %v228
  %v591 = vpop.f32.mrf.mxu0
  %v592 = vadd.f32 %v503, %v591
  %v593 = vpop.f32.mrf.mxu0
  %v594 = vadd.f32 %v505, %v593
  %595 = vmatmul.bf16.gmra.mxu0 %v230
  %v596 = vpop.f32.mrf.mxu0
  %v597 = vadd.f32 %v508, %v596
  %v598 = vpop.f32.mrf.mxu0
  %v599 = vadd.f32 %v510, %v598
  %600 = vdwg.mxu0
  %601 = vmatpush.bf16.msra.mxu0 %v374
  %602 = vmatpush.bf16.msra.mxu0 %v372
  %603 = vmatpush.bf16.msra.mxu0 %v370
  %604 = vmatpush.bf16.msra.mxu0 %v368
  %605 = vmatpush.bf16.msra.mxu0 %v366
  %606 = vmatpush.bf16.msra.mxu0 %v364
  %607 = vmatpush.bf16.msra.mxu0 %v362
  %608 = vmatpush.bf16.msra.mxu0 %v360
  %609 = vmatmul.bf16.gmra.mxu0 %v199
  %v610 = vpop.f32.mrf.mxu0
  %v611 = vadd.f32 0.0, %v610
  %v612 = vpop.f32.mrf.mxu0
  %v613 = vadd.f32 0.0, %v612
  %614 = vmatmul.bf16.gmra.mxu0 %v201
  %v615 = vpop.f32.mrf.mxu0
  %v616 = vadd.f32 0.0, %v615
  %v617 = vpop.f32.mrf.mxu0
  %v618 = vadd.f32 0.0, %v617
  %619 = vmatmul.bf16.gmra.mxu0 %v203
  %v620 = vpop.f32.mrf.mxu0
  %v621 = vadd.f32 0.0, %v620
  %v622 = vpop.f32.mrf.mxu0
  %v623 = vadd.f32 0.0, %v622
  %624 = vmatmul.bf16.gmra.mxu0 %v205
  %v625 = vpop.f32.mrf.mxu0
  %v626 = vadd.f32 0.0, %v625
  %v627 = vpop.f32.mrf.mxu0
  %v628 = vadd.f32 0.0, %v627
  %629 = vmatmul.bf16.gmra.mxu0 %v207
  %v630 = vpop.f32.mrf.mxu0
  %v631 = vadd.f32 0.0, %v630
  %v632 = vpop.f32.mrf.mxu0
  %v633 = vadd.f32 0.0, %v632
  %634 = vmatmul.bf16.gmra.mxu0 %v209
  %v635 = vpop.f32.mrf.mxu0
  %v636 = vadd.f32 0.0, %v635
  %v637 = vpop.f32.mrf.mxu0
  %v638 = vadd.f32 0.0, %v637
  %639 = vmatmul.bf16.gmra.mxu0 %v211
  %v640 = vpop.f32.mrf.mxu0
  %v641 = vadd.f32 0.0, %v640
  %v642 = vpop.f32.mrf.mxu0
  %v643 = vadd.f32 0.0, %v642
  %644 = vmatmul.bf16.gmra.mxu0 %v213
  %v645 = vpop.f32.mrf.mxu0
  %v646 = vadd.f32 0.0, %v645
  %v647 = vpop.f32.mrf.mxu0
  %v648 = vadd.f32 0.0, %v647
  %649 = vmatmul.bf16.gmra.mxu0 %v215
  %v650 = vpop.f32.mrf.mxu0
  %v651 = vadd.f32 0.0, %v650
  %v652 = vpop.f32.mrf.mxu0
  %v653 = vadd.f32 0.0, %v652
  %654 = vmatmul.bf16.gmra.mxu0 %v217
  %v655 = vpop.f32.mrf.mxu0
  %v656 = vadd.f32 0.0, %v655
  %v657 = vpop.f32.mrf.mxu0
  %v658 = vadd.f32 0.0, %v657
  %659 = vmatmul.bf16.gmra.mxu0 %v219
  %v660 = vpop.f32.mrf.mxu0
  %v661 = vadd.f32 0.0, %v660
  %v662 = vpop.f32.mrf.mxu0
  %v663 = vadd.f32 0.0, %v662
  %664 = vmatmul.bf16.gmra.mxu0 %v221
  %v665 = vpop.f32.mrf.mxu0
  %v666 = vadd.f32 0.0, %v665
  %v667 = vpop.f32.mrf.mxu0
  %v668 = vadd.f32 0.0, %v667
  %669 = vmatmul.bf16.gmra.mxu0 %v223
  %v670 = vpop.f32.mrf.mxu0
  %v671 = vadd.f32 0.0, %v670
  %v672 = vpop.f32.mrf.mxu0
  %v673 = vadd.f32 0.0, %v672
  %674 = vmatmul.bf16.gmra.mxu0 %v225
  %v675 = vpop.f32.mrf.mxu0
  %v676 = vadd.f32 0.0, %v675
  %v677 = vpop.f32.mrf.mxu0
  %v678 = vadd.f32 0.0, %v677
  %679 = vmatmul.bf16.gmra.mxu0 %v227
  %v680 = vpop.f32.mrf.mxu0
  %v681 = vadd.f32 0.0, %v680
  %v682 = vpop.f32.mrf.mxu0
  %v683 = vadd.f32 0.0, %v682
  %684 = vmatmul.bf16.gmra.mxu0 %v229
  %v685 = vpop.f32.mrf.mxu0
  %v686 = vadd.f32 0.0, %v685
  %v687 = vpop.f32.mrf.mxu0
  %v688 = vadd.f32 0.0, %v687
  %689 = vdwg.mxu0
  %690 = vmatpush.bf16.msra.mxu0 %v390
  %691 = vmatpush.bf16.msra.mxu0 %v388
  %692 = vmatpush.bf16.msra.mxu0 %v386
  %693 = vmatpush.bf16.msra.mxu0 %v384
  %694 = vmatpush.bf16.msra.mxu0 %v382
  %695 = vmatpush.bf16.msra.mxu0 %v380
  %696 = vmatpush.bf16.msra.mxu0 %v378
  %697 = vmatpush.bf16.msra.mxu0 %v376
  %698 = vmatmul.bf16.gmra.mxu0 %v200
  %v699 = vpop.f32.mrf.mxu0
  %v700 = vadd.f32 %v611, %v699
  %v701 = vpop.f32.mrf.mxu0
  %v702 = vadd.f32 %v613, %v701
  %703 = vmatmul.bf16.gmra.mxu0 %v202
  %v704 = vpop.f32.mrf.mxu0
  %v705 = vadd.f32 %v616, %v704
  %v706 = vpop.f32.mrf.mxu0
  %v707 = vadd.f32 %v618, %v706
  %708 = vmatmul.bf16.gmra.mxu0 %v204
  %v709 = vpop.f32.mrf.mxu0
  %v710 = vadd.f32 %v621, %v709
  %v711 = vpop.f32.mrf.mxu0
  %v712 = vadd.f32 %v623, %v711
  %713 = vmatmul.bf16.gmra.mxu0 %v206
  %v714 = vpop.f32.mrf.mxu0
  %v715 = vadd.f32 %v626, %v714
  %v716 = vpop.f32.mrf.mxu0
  %v717 = vadd.f32 %v628, %v716
  %718 = vmatmul.bf16.gmra.mxu0 %v208
  %v719 = vpop.f32.mrf.mxu0
  %v720 = vadd.f32 %v631, %v719
  %v721 = vpop.f32.mrf.mxu0
  %v722 = vadd.f32 %v633, %v721
  %723 = vmatmul.bf16.gmra.mxu0 %v210
  %v724 = vpop.f32.mrf.mxu0
  %v725 = vadd.f32 %v636, %v724
  %v726 = vpop.f32.mrf.mxu0
  %v727 = vadd.f32 %v638, %v726
  %728 = vmatmul.bf16.gmra.mxu0 %v212
  %v729 = vpop.f32.mrf.mxu0
  %v730 = vadd.f32 %v641, %v729
  %v731 = vpop.f32.mrf.mxu0
  %v732 = vadd.f32 %v643, %v731
  %733 = vmatmul.bf16.gmra.mxu0 %v214
  %v734 = vpop.f32.mrf.mxu0
  %v735 = vadd.f32 %v646, %v734
  %v736 = vpop.f32.mrf.mxu0
  %v737 = vadd.f32 %v648, %v736
  %738 = vmatmul.bf16.gmra.mxu0 %v216
  %v739 = vpop.f32.mrf.mxu0
  %v740 = vadd.f32 %v651, %v739
  %v741 = vpop.f32.mrf.mxu0
  %v742 = vadd.f32 %v653, %v741
  %743 = vmatmul.bf16.gmra.mxu0 %v218
  %v744 = vpop.f32.mrf.mxu0
  %v745 = vadd.f32 %v656, %v744
  %v746 = vpop.f32.mrf.mxu0
  %v747 = vadd.f32 %v658, %v746
  %748 = vmatmul.bf16.gmra.mxu0 %v220
  %v749 = vpop.f32.mrf.mxu0
  %v750 = vadd.f32 %v661, %v749
  %v751 = vpop.f32.mrf.mxu0
  %v752 = vadd.f32 %v663, %v751
  %753 = vmatmul.bf16.gmra.mxu0 %v222
  %v754 = vpop.f32.mrf.mxu0
  %v755 = vadd.f32 %v666, %v754
  %v756 = vpop.f32.mrf.mxu0
  %v757 = vadd.f32 %v668, %v756
  %758 = vmatmul.bf16.gmra.mxu0 %v224
  %v759 = vpop.f32.mrf.mxu0
  %v760 = vadd.f32 %v671, %v759
  %v761 = vpop.f32.mrf.mxu0
  %v762 = vadd.f32 %v673, %v761
  %763 = vmatmul.bf16.gmra.mxu0 %v226
  %v764 = vpop.f32.mrf.mxu0
  %v765 = vadd.f32 %v676, %v764
  %v766 = vpop.f32.mrf.mxu0
  %v767 = vadd.f32 %v678, %v766
  %768 = vmatmul.bf16.gmra.mxu0 %v228
  %v769 = vpop.f32.mrf.mxu0
  %v770 = vadd.f32 %v681, %v769
  %v771 = vpop.f32.mrf.mxu0
  %v772 = vadd.f32 %v683, %v771
  %773 = vmatmul.bf16.gmra.mxu0 %v230
  %v774 = vpop.f32.mrf.mxu0
  %v775 = vadd.f32 %v686, %v774
  %v776 = vpop.f32.mrf.mxu0
  %v777 = vadd.f32 %v688, %v776
  %778 = vdwg.mxu0
  %v779 = vmax.f32 %v522, %v527
  %v780 = vmax.f32 %v700, %v705
  %v781 = vmax.f32 %v524, %v529
  %v782 = vmax.f32 %v702, %v707
  %v783 = vmax.f32 %v532, %v537
  %v784 = vmax.f32 %v710, %v715
  %v785 = vmax.f32 %v534, %v539
  %v786 = vmax.f32 %v712, %v717
  %v787 = vmax.f32 %v542, %v547
  %v788 = vmax.f32 %v720, %v725
  %v789 = vmax.f32 %v544, %v549
  %v790 = vmax.f32 %v722, %v727
  %v791 = vmax.f32 %v552, %v557
  %v792 = vmax.f32 %v730, %v735
  %v793 = vmax.f32 %v554, %v559
  %v794 = vmax.f32 %v732, %v737
  %v795 = vmax.f32 %v562, %v567
  %v796 = vmax.f32 %v740, %v745
  %v797 = vmax.f32 %v564, %v569
  %v798 = vmax.f32 %v742, %v747
  %v799 = vmax.f32 %v572, %v577
  %v800 = vmax.f32 %v750, %v755
  %v801 = vmax.f32 %v574, %v579
  %v802 = vmax.f32 %v752, %v757
  %v803 = vmax.f32 %v582, %v587
  %v804 = vmax.f32 %v760, %v765
  %v805 = vmax.f32 %v584, %v589
  %v806 = vmax.f32 %v762, %v767
  %v807 = vmax.f32 %v592, %v597
  %v808 = vmax.f32 %v770, %v775
  %v809 = vmax.f32 %v594, %v599
  %v810 = vmax.f32 %v772, %v777
  %843 = vrot.lane.b32.xlu0 %v779, 44
  %v844 = vpop.permute.xlu0 %843
  %845 = vrot.lane.b32.xlu0 %v780, 44
  %v846 = vpop.permute.xlu0 %845
  %847 = vrot.lane.b32.xlu0 %v781, 44
  %v848 = vpop.permute.xlu0 %847
  %849 = vrot.lane.b32.xlu0 %v782, 44
  %v850 = vpop.permute.xlu0 %849
  %851 = vrot.lane.b32.xlu0 %v783, 44
  %v852 = vpop.permute.xlu0 %851
  %853 = vrot.lane.b32.xlu0 %v784, 44
  %v854 = vpop.permute.xlu0 %853
  %855 = vrot.lane.b32.xlu0 %v785, 44
  %v856 = vpop.permute.xlu0 %855
  %857 = vrot.lane.b32.xlu0 %v786, 44
  %v858 = vpop.permute.xlu0 %857
  %859 = vrot.lane.b32.xlu0 %v787, 44
  %v860 = vpop.permute.xlu0 %859
  %861 = vrot.lane.b32.xlu0 %v788, 44
  %v862 = vpop.permute.xlu0 %861
  %863 = vrot.lane.b32.xlu0 %v789, 44
  %v864 = vpop.permute.xlu0 %863
  %865 = vrot.lane.b32.xlu0 %v790, 44
  %v866 = vpop.permute.xlu0 %865
  %867 = vrot.lane.b32.xlu0 %v791, 44
  %v868 = vpop.permute.xlu0 %867
  %869 = vrot.lane.b32.xlu0 %v792, 44
  %v870 = vpop.permute.xlu0 %869
  %871 = vrot.lane.b32.xlu0 %v793, 44
  %v872 = vpop.permute.xlu0 %871
  %873 = vrot.lane.b32.xlu0 %v794, 44
  %v874 = vpop.permute.xlu0 %873
  %875 = vrot.lane.b32.xlu0 %v795, 44
  %v876 = vpop.permute.xlu0 %875
  %877 = vrot.lane.b32.xlu0 %v796, 44
  %v878 = vpop.permute.xlu0 %877
  %879 = vrot.lane.b32.xlu0 %v797, 44
  %v880 = vpop.permute.xlu0 %879
  %881 = vrot.lane.b32.xlu0 %v798, 44
  %v882 = vpop.permute.xlu0 %881
  %883 = vrot.lane.b32.xlu0 %v799, 44
  %v884 = vpop.permute.xlu0 %883
  %885 = vrot.lane.b32.xlu0 %v800, 44
  %v886 = vpop.permute.xlu0 %885
  %887 = vrot.lane.b32.xlu0 %v801, 44
  %v888 = vpop.permute.xlu0 %887
  %889 = vrot.lane.b32.xlu0 %v802, 44
  %v890 = vpop.permute.xlu0 %889
  %891 = vrot.lane.b32.xlu0 %v803, 44
  %v892 = vpop.permute.xlu0 %891
  %893 = vrot.lane.b32.xlu0 %v804, 44
  %v894 = vpop.permute.xlu0 %893
  %895 = vrot.lane.b32.xlu0 %v805, 44
  %v896 = vpop.permute.xlu0 %895
  %897 = vrot.lane.b32.xlu0 %v806, 44
  %v898 = vpop.permute.xlu0 %897
  %899 = vrot.lane.b32.xlu0 %v807, 44
  %v900 = vpop.permute.xlu0 %899
  %901 = vrot.lane.b32.xlu0 %v808, 44
  %v902 = vpop.permute.xlu0 %901
  %903 = vrot.lane.b32.xlu0 %v809, 44
  %v904 = vpop.permute.xlu0 %903
  %905 = vrot.lane.b32.xlu0 %v810, 44
  %v906 = vpop.permute.xlu0 %905
  %vm907 = vcmask 359424
  %v908 = vsel %vm907, %v844, %v846
  %v909 = vsel %vm907, %v848, %v850
  %v910 = vsel %vm907, %v852, %v854
  %v911 = vsel %vm907, %v856, %v858
  %v912 = vsel %vm907, %v860, %v862
  %v913 = vsel %vm907, %v864, %v866
  %v914 = vsel %vm907, %v868, %v870
  %v915 = vsel %vm907, %v872, %v874
  %v916 = vsel %vm907, %v876, %v878
  %v917 = vsel %vm907, %v880, %v882
  %v918 = vsel %vm907, %v884, %v886
  %v919 = vsel %vm907, %v888, %v890
  %v920 = vsel %vm907, %v892, %v894
  %v921 = vsel %vm907, %v896, %v898
  %v922 = vsel %vm907, %v900, %v902
  %v923 = vsel %vm907, %v904, %v906
  %v940 = vmax.f32 %v779, %v908
  %v941 = vmax.f32 %v781, %v909
  %v942 = vmax.f32 %v783, %v910
  %v943 = vmax.f32 %v785, %v911
  %v944 = vmax.f32 %v787, %v912
  %v945 = vmax.f32 %v789, %v913
  %v946 = vmax.f32 %v791, %v914
  %v947 = vmax.f32 %v793, %v915
  %v948 = vmax.f32 %v795, %v916
  %v949 = vmax.f32 %v797, %v917
  %v950 = vmax.f32 %v799, %v918
  %v951 = vmax.f32 %v801, %v919
  %v952 = vmax.f32 %v803, %v920
  %v953 = vmax.f32 %v805, %v921
  %v954 = vmax.f32 %v807, %v922
  %v955 = vmax.f32 %v809, %v923
  %v956 = vld [vmem:[%s2] sm:$0x1]
  %v958 = vperm.slane %v956, 0
  %v960 = vadd.f32 %v940, %v958
  %v961 = vadd.f32 %v941, %v958
  %v962 = vadd.f32 %v942, %v958
  %v963 = vadd.f32 %v943, %v958
  %v964 = vadd.f32 %v944, %v958
  %v965 = vadd.f32 %v945, %v958
  %v966 = vadd.f32 %v946, %v958
  %v967 = vadd.f32 %v947, %v958
  %v968 = vadd.f32 %v948, %v958
  %v969 = vadd.f32 %v949, %v958
  %v970 = vadd.f32 %v950, %v958
  %v971 = vadd.f32 %v951, %v958
  %v972 = vadd.f32 %v952, %v958
  %v973 = vadd.f32 %v953, %v958
  %v974 = vadd.f32 %v954, %v958
  %v975 = vadd.f32 %v955, %v958
  %v976 = vmax.f32 %v960, 0.0
  %v977 = vmax.f32 %v961, 0.0
  %v978 = vmax.f32 %v962, 0.0
  %v979 = vmax.f32 %v963, 0.0
  %v980 = vmax.f32 %v964, 0.0
  %v981 = vmax.f32 %v965, 0.0
  %v982 = vmax.f32 %v966, 0.0
  %v983 = vmax.f32 %v967, 0.0
  %v984 = vmax.f32 %v968, 0.0
  %v985 = vmax.f32 %v969, 0.0
  %v986 = vmax.f32 %v970, 0.0
  %v987 = vmax.f32 %v971, 0.0
  %v988 = vmax.f32 %v972, 0.0
  %v989 = vmax.f32 %v973, 0.0
  %v990 = vmax.f32 %v974, 0.0
  %v991 = vmax.f32 %v975, 0.0
  %v992 = vpack.c.bf16 %v976, %v976
  %v993 = vpack.c.bf16 %v977, %v977
  %v994 = vpack.c.bf16 %v978, %v978
  %v995 = vpack.c.bf16 %v979, %v979
  %v996 = vpack.c.bf16 %v980, %v980
  %v997 = vpack.c.bf16 %v981, %v981
  %v998 = vpack.c.bf16 %v982, %v982
  %v999 = vpack.c.bf16 %v983, %v983
  %v1000 = vpack.c.bf16 %v984, %v984
  %v1001 = vpack.c.bf16 %v985, %v985
  %v1002 = vpack.c.bf16 %v986, %v986
  %v1003 = vpack.c.bf16 %v987, %v987
  %v1004 = vpack.c.bf16 %v988, %v988
  %v1005 = vpack.c.bf16 %v989, %v989
  %v1006 = vpack.c.bf16 %v990, %v990
  %v1007 = vpack.c.bf16 %v991, %v991
  %vm1008 = vcmask 683008
  %1009 = vst.msk [vmem:[#allocation2] sm:$0xf] %vm1008, %v992
  %1010 = vst.msk [vmem:[#allocation2 + $0x4] sm:$0xf] %vm1008, %v993
  %1011 = vst.msk [vmem:[#allocation2 + $0x8] sm:$0xf] %vm1008, %v994
  %1012 = vst.msk [vmem:[#allocation2 + $0xc] sm:$0xf] %vm1008, %v995
  %1013 = vst.msk [vmem:[#allocation2 + $0x10] sm:$0xf] %vm1008, %v996
  %1014 = vst.msk [vmem:[#allocation2 + $0x14] sm:$0xf] %vm1008, %v997
  %1015 = vst.msk [vmem:[#allocation2 + $0x18] sm:$0xf] %vm1008, %v998
  %1016 = vst.msk [vmem:[#allocation2 + $0x1c] sm:$0xf] %vm1008, %v999
  %1017 = vst.msk [vmem:[#allocation2 + $0x20] sm:$0xf] %vm1008, %v1000
  %1018 = vst.msk [vmem:[#allocation2 + $0x24] sm:$0xf] %vm1008, %v1001
  %1019 = vst.msk [vmem:[#allocation2 + $0x28] sm:$0xf] %vm1008, %v1002
  %1020 = vst.msk [vmem:[#allocation2 + $0x2c] sm:$0xf] %vm1008, %v1003
  %1021 = vst.msk [vmem:[#allocation2 + $0x30] sm:$0xf] %vm1008, %v1004
  %1022 = vst.msk [vmem:[#allocation2 + $0x34] sm:$0xf] %vm1008, %v1005
  %1023 = vst.msk [vmem:[#allocation2 + $0x38] sm:$0xf] %vm1008, %v1006
  %1024 = vst.msk [vmem:[#allocation2 + $0x3c] sm:$0xf] %vm1008, %v1007
  %v1025 = vld [vmem:[#allocation2] sm:$0x7]
  %v1026 = vld [vmem:[#allocation2 + $0x8] sm:$0x7]
  %v1027 = vld [vmem:[#allocation2 + $0x10] sm:$0x7]
  %v1028 = vld [vmem:[#allocation2 + $0x18] sm:$0x7]
  %v1029 = vld [vmem:[#allocation2 + $0x20] sm:$0x7]
  %v1030 = vld [vmem:[#allocation2 + $0x28] sm:$0x7]
  %v1031 = vld [vmem:[#allocation2 + $0x30] sm:$0x7]
  %v1032 = vld [vmem:[#allocation2 + $0x38] sm:$0x7]
  %s1033 = scalar_lea.vmem [#allocation2], 4
  %v1034 = vld [vmem:[%s1033] sm:$0x7]
  %v1035 = vld [vmem:[%s1033 + $0x8] sm:$0x7]
  %v1036 = vld [vmem:[%s1033 + $0x10] sm:$0x7]
  %v1037 = vld [vmem:[%s1033 + $0x18] sm:$0x7]
  %v1038 = vld [vmem:[%s1033 + $0x20] sm:$0x7]
  %v1039 = vld [vmem:[%s1033 + $0x28] sm:$0x7]
  %v1040 = vld [vmem:[%s1033 + $0x30] sm:$0x7]
  %v1041 = vld [vmem:[%s1033 + $0x38] sm:$0x7]
  %v1042 = vld [vmem:[#allocation2] sm:$0xe]
  %v1043 = vld [vmem:[#allocation2 + $0x8] sm:$0xe]
  %v1044 = vld [vmem:[#allocation2 + $0x10] sm:$0xe]
  %v1045 = vld [vmem:[#allocation2 + $0x18] sm:$0xe]
  %v1046 = vld [vmem:[#allocation2 + $0x20] sm:$0xe]
  %v1047 = vld [vmem:[#allocation2 + $0x28] sm:$0xe]
  %v1048 = vld [vmem:[#allocation2 + $0x30] sm:$0xe]
  %v1049 = vld [vmem:[#allocation2 + $0x38] sm:$0xe]
  %v1058 = vunpack.c.l.b16 %v1034
  %v1059 = vunpack.c.l.b16 %v1035
  %v1060 = vunpack.c.l.b16 %v1036
  %v1061 = vunpack.c.l.b16 %v1037
  %v1062 = vunpack.c.l.b16 %v1038
  %v1063 = vunpack.c.l.b16 %v1039
  %v1064 = vunpack.c.l.b16 %v1040
  %v1065 = vunpack.c.l.b16 %v1041
  %v1066 = vpack.c.b16 %v1058, %v1058
  %v1067 = vpack.c.b16 %v1059, %v1059
  %v1068 = vpack.c.b16 %v1060, %v1060
  %v1069 = vpack.c.b16 %v1061, %v1061
  %v1070 = vpack.c.b16 %v1062, %v1062
  %v1071 = vpack.c.b16 %v1063, %v1063
  %v1072 = vpack.c.b16 %v1064, %v1064
  %v1073 = vpack.c.b16 %v1065, %v1065
  %1074 = vrot.lane.b32.xlu0 %v1066, 30
  %v1075 = vpop.permute.xlu0 %1074
  %1076 = vrot.lane.b32.xlu0 %v1067, 30
  %v1077 = vpop.permute.xlu0 %1076
  %1078 = vrot.lane.b32.xlu0 %v1068, 30
  %v1079 = vpop.permute.xlu0 %1078
  %1080 = vrot.lane.b32.xlu0 %v1069, 30
  %v1081 = vpop.permute.xlu0 %1080
  %1082 = vrot.lane.b32.xlu0 %v1070, 30
  %v1083 = vpop.permute.xlu0 %1082
  %1084 = vrot.lane.b32.xlu0 %v1071, 30
  %v1085 = vpop.permute.xlu0 %1084
  %1086 = vrot.lane.b32.xlu0 %v1072, 30
  %v1087 = vpop.permute.xlu0 %1086
  %1088 = vrot.lane.b32.xlu0 %v1073, 30
  %v1089 = vpop.permute.xlu0 %1088
  %v1098 = vunpack.c.l.b16 %v1025
  %v1099 = vunpack.c.l.b16 %v1026
  %v1100 = vunpack.c.l.b16 %v1027
  %v1101 = vunpack.c.l.b16 %v1028
  %v1102 = vunpack.c.l.b16 %v1029
  %v1103 = vunpack.c.l.b16 %v1030
  %v1104 = vunpack.c.l.b16 %v1031
  %v1105 = vunpack.c.l.b16 %v1032
  %v1106 = vpack.c.b16 %v1098, %v1098
  %v1107 = vpack.c.b16 %v1099, %v1099
  %v1108 = vpack.c.b16 %v1100, %v1100
  %v1109 = vpack.c.b16 %v1101, %v1101
  %v1110 = vpack.c.b16 %v1102, %v1102
  %v1111 = vpack.c.b16 %v1103, %v1103
  %v1112 = vpack.c.b16 %v1104, %v1104
  %v1113 = vpack.c.b16 %v1105, %v1105
  %v1115 = vshrl.u32 %v1106, 16
  %v1117 = vshll.u32 %v1106, 16
  %v1119 = vrot.slane %v1117, 1
  %v1120 = vor.u32 %v1115, %v1119
  %v1122 = vshrl.u32 %v1107, 16
  %v1124 = vshll.u32 %v1107, 16
  %v1126 = vrot.slane %v1124, 1
  %v1127 = vor.u32 %v1122, %v1126
  %v1129 = vshrl.u32 %v1108, 16
  %v1131 = vshll.u32 %v1108, 16
  %v1133 = vrot.slane %v1131, 1
  %v1134 = vor.u32 %v1129, %v1133
  %v1136 = vshrl.u32 %v1109, 16
  %v1138 = vshll.u32 %v1109, 16
  %v1140 = vrot.slane %v1138, 1
  %v1141 = vor.u32 %v1136, %v1140
  %v1143 = vshrl.u32 %v1110, 16
  %v1145 = vshll.u32 %v1110, 16
  %v1147 = vrot.slane %v1145, 1
  %v1148 = vor.u32 %v1143, %v1147
  %v1150 = vshrl.u32 %v1111, 16
  %v1152 = vshll.u32 %v1111, 16
  %v1154 = vrot.slane %v1152, 1
  %v1155 = vor.u32 %v1150, %v1154
  %v1157 = vshrl.u32 %v1112, 16
  %v1159 = vshll.u32 %v1112, 16
  %v1161 = vrot.slane %v1159, 1
  %v1162 = vor.u32 %v1157, %v1161
  %v1164 = vshrl.u32 %v1113, 16
  %v1166 = vshll.u32 %v1113, 16
  %v1168 = vrot.slane %v1166, 1
  %v1169 = vor.u32 %v1164, %v1168
  %1170 = vrot.lane.b32.xlu0 %v1120, 60
  %v1171 = vpop.permute.xlu0 %1170
  %1172 = vrot.lane.b32.xlu0 %v1127, 60
  %v1173 = vpop.permute.xlu0 %1172
  %1174 = vrot.lane.b32.xlu0 %v1134, 60
  %v1175 = vpop.permute.xlu0 %1174
  %1176 = vrot.lane.b32.xlu0 %v1141, 60
  %v1177 = vpop.permute.xlu0 %1176
  %1178 = vrot.lane.b32.xlu0 %v1148, 60
  %v1179 = vpop.permute.xlu0 %1178
  %1180 = vrot.lane.b32.xlu0 %v1155, 60
  %v1181 = vpop.permute.xlu0 %1180
  %1182 = vrot.lane.b32.xlu0 %v1162, 60
  %v1183 = vpop.permute.xlu0 %1182
  %1184 = vrot.lane.b32.xlu0 %v1169, 60
  %v1185 = vpop.permute.xlu0 %1184
  %v1187 = vshrl.u32 %v1066, 16
  %v1189 = vshll.u32 %v1066, 16
  %v1191 = vrot.slane %v1189, 1
  %v1192 = vor.u32 %v1187, %v1191
  %v1194 = vshrl.u32 %v1067, 16
  %v1196 = vshll.u32 %v1067, 16
  %v1198 = vrot.slane %v1196, 1
  %v1199 = vor.u32 %v1194, %v1198
  %v1201 = vshrl.u32 %v1068, 16
  %v1203 = vshll.u32 %v1068, 16
  %v1205 = vrot.slane %v1203, 1
  %v1206 = vor.u32 %v1201, %v1205
  %v1208 = vshrl.u32 %v1069, 16
  %v1210 = vshll.u32 %v1069, 16
  %v1212 = vrot.slane %v1210, 1
  %v1213 = vor.u32 %v1208, %v1212
  %v1215 = vshrl.u32 %v1070, 16
  %v1217 = vshll.u32 %v1070, 16
  %v1219 = vrot.slane %v1217, 1
  %v1220 = vor.u32 %v1215, %v1219
  %v1222 = vshrl.u32 %v1071, 16
  %v1224 = vshll.u32 %v1071, 16
  %v1226 = vrot.slane %v1224, 1
  %v1227 = vor.u32 %v1222, %v1226
  %v1229 = vshrl.u32 %v1072, 16
  %v1231 = vshll.u32 %v1072, 16
  %v1233 = vrot.slane %v1231, 1
  %v1234 = vor.u32 %v1229, %v1233
  %v1236 = vshrl.u32 %v1073, 16
  %v1238 = vshll.u32 %v1073, 16
  %v1240 = vrot.slane %v1238, 1
  %v1241 = vor.u32 %v1236, %v1240
  %1242 = vrot.lane.b32.xlu0 %v1192, 90
  %v1243 = vpop.permute.xlu0 %1242
  %1244 = vrot.lane.b32.xlu0 %v1199, 90
  %v1245 = vpop.permute.xlu0 %1244
  %1246 = vrot.lane.b32.xlu0 %v1206, 90
  %v1247 = vpop.permute.xlu0 %1246
  %1248 = vrot.lane.b32.xlu0 %v1213, 90
  %v1249 = vpop.permute.xlu0 %1248
  %1250 = vrot.lane.b32.xlu0 %v1220, 90
  %v1251 = vpop.permute.xlu0 %1250
  %1252 = vrot.lane.b32.xlu0 %v1227, 90
  %v1253 = vpop.permute.xlu0 %1252
  %1254 = vrot.lane.b32.xlu0 %v1234, 90
  %v1255 = vpop.permute.xlu0 %1254
  %1256 = vrot.lane.b32.xlu0 %v1241, 90
  %v1257 = vpop.permute.xlu0 %1256
  %v1266 = vunpack.c.l.b16 %v1042
  %v1267 = vunpack.c.l.b16 %v1043
  %v1268 = vunpack.c.l.b16 %v1044
  %v1269 = vunpack.c.l.b16 %v1045
  %v1270 = vunpack.c.l.b16 %v1046
  %v1271 = vunpack.c.l.b16 %v1047
  %v1272 = vunpack.c.l.b16 %v1048
  %v1273 = vunpack.c.l.b16 %v1049
  %v1274 = vpack.c.b16 %v1266, %v1266
  %v1275 = vpack.c.b16 %v1267, %v1267
  %v1276 = vpack.c.b16 %v1268, %v1268
  %v1277 = vpack.c.b16 %v1269, %v1269
  %v1278 = vpack.c.b16 %v1270, %v1270
  %v1279 = vpack.c.b16 %v1271, %v1271
  %v1280 = vpack.c.b16 %v1272, %v1272
  %v1281 = vpack.c.b16 %v1273, %v1273
  %v1282 = vrot.slane %v1274, 1
  %v1283 = vrot.slane %v1275, 1
  %v1284 = vrot.slane %v1276, 1
  %v1285 = vrot.slane %v1277, 1
  %v1286 = vrot.slane %v1278, 1
  %v1287 = vrot.slane %v1279, 1
  %v1288 = vrot.slane %v1280, 1
  %v1289 = vrot.slane %v1281, 1
  %1290 = vrot.lane.b32.xlu0 %v1282, 120
  %v1291 = vpop.permute.xlu0 %1290
  %1292 = vrot.lane.b32.xlu0 %v1283, 120
  %v1293 = vpop.permute.xlu0 %1292
  %1294 = vrot.lane.b32.xlu0 %v1284, 120
  %v1295 = vpop.permute.xlu0 %1294
  %1296 = vrot.lane.b32.xlu0 %v1285, 120
  %v1297 = vpop.permute.xlu0 %1296
  %1298 = vrot.lane.b32.xlu0 %v1286, 120
  %v1299 = vpop.permute.xlu0 %1298
  %1300 = vrot.lane.b32.xlu0 %v1287, 120
  %v1301 = vpop.permute.xlu0 %1300
  %1302 = vrot.lane.b32.xlu0 %v1288, 120
  %v1303 = vpop.permute.xlu0 %1302
  %1304 = vrot.lane.b32.xlu0 %v1289, 120
  %v1305 = vpop.permute.xlu0 %1304
  %vm1306 = vcmask 244736
  %v1309 = vsel %vm1306, %v1025, %v1075
  %v1312 = vsel %vm1306, %v1026, %v1077
  %v1315 = vsel %vm1306, %v1027, %v1079
  %v1318 = vsel %vm1306, %v1028, %v1081
  %v1321 = vsel %vm1306, %v1029, %v1083
  %v1324 = vsel %vm1306, %v1030, %v1085
  %v1327 = vsel %vm1306, %v1031, %v1087
  %v1330 = vsel %vm1306, %v1032, %v1089
  %vm1331 = vcmask 490496
  %v1333 = vsel %vm1331, %v1309, %v1171
  %v1335 = vsel %vm1331, %v1312, %v1173
  %v1337 = vsel %vm1331, %v1315, %v1175
  %v1339 = vsel %vm1331, %v1318, %v1177
  %v1341 = vsel %vm1331, %v1321, %v1179
  %v1343 = vsel %vm1331, %v1324, %v1181
  %v1345 = vsel %vm1331, %v1327, %v1183
  %v1347 = vsel %vm1331, %v1330, %v1185
  %vm1348 = vcmask 736256
  %v1350 = vsel %vm1348, %v1333, %v1243
  %v1352 = vsel %vm1348, %v1335, %v1245
  %v1354 = vsel %vm1348, %v1337, %v1247
  %v1356 = vsel %vm1348, %v1339, %v1249
  %v1358 = vsel %vm1348, %v1341, %v1251
  %v1360 = vsel %vm1348, %v1343, %v1253
  %v1362 = vsel %vm1348, %v1345, %v1255
  %v1364 = vsel %vm1348, %v1347, %v1257
  %vm1365 = vcmask 982016
  %v1367 = vsel %vm1365, %v1350, %v1291
  %v1369 = vsel %vm1365, %v1352, %v1293
  %v1371 = vsel %vm1365, %v1354, %v1295
  %v1373 = vsel %vm1365, %v1356, %v1297
  %v1375 = vsel %vm1365, %v1358, %v1299
  %v1377 = vsel %vm1365, %v1360, %v1301
  %v1379 = vsel %vm1365, %v1362, %v1303
  %v1381 = vsel %vm1365, %v1364, %v1305
  %vm1382 = vcmask 179200
  %v1384 = vsel %vm1382, %v1291, 0
  %v1385 = vsel %vm1382, %v1293, 0
  %v1386 = vsel %vm1382, %v1295, 0
  %v1387 = vsel %vm1382, %v1297, 0
  %v1388 = vsel %vm1382, %v1299, 0
  %v1389 = vsel %vm1382, %v1301, 0
  %v1390 = vsel %vm1382, %v1303, 0
  %v1391 = vsel %vm1382, %v1305, 0
  %v1400 = vrot.slane %v1384, 7
  %v1401 = vrot.slane %v1385, 7
  %v1402 = vrot.slane %v1386, 7
  %v1403 = vrot.slane %v1387, 7
  %v1404 = vrot.slane %v1388, 7
  %v1405 = vrot.slane %v1389, 7
  %v1406 = vrot.slane %v1390, 7
  %v1407 = vrot.slane %v1391, 7
  %vm1408 = vcmask 1040384
  %v1410 = vsel %vm1408, %v1367, %v1400
  %vm1412 = vcmask 1041409
  %v1413 = vsel %vm1412, %v1367, %v1400
  %v1415 = vrot.slane %v1413, 1
  %vm1416 = vcmask 1042434
  %v1417 = vsel %vm1416, %v1367, %v1400
  %v1419 = vrot.slane %v1417, 2
  %v1421 = vsel %vm1408, %v1369, %v1401
  %v1423 = vsel %vm1412, %v1369, %v1401
  %v1425 = vrot.slane %v1423, 1
  %v1426 = vsel %vm1416, %v1369, %v1401
  %v1428 = vrot.slane %v1426, 2
  %v1430 = vsel %vm1408, %v1371, %v1402
  %v1432 = vsel %vm1412, %v1371, %v1402
  %v1434 = vrot.slane %v1432, 1
  %v1435 = vsel %vm1416, %v1371, %v1402
  %v1437 = vrot.slane %v1435, 2
  %v1439 = vsel %vm1408, %v1373, %v1403
  %v1441 = vsel %vm1412, %v1373, %v1403
  %v1443 = vrot.slane %v1441, 1
  %v1444 = vsel %vm1416, %v1373, %v1403
  %v1446 = vrot.slane %v1444, 2
  %v1448 = vsel %vm1408, %v1375, %v1404
  %v1450 = vsel %vm1412, %v1375, %v1404
  %v1452 = vrot.slane %v1450, 1
  %v1453 = vsel %vm1416, %v1375, %v1404
  %v1455 = vrot.slane %v1453, 2
  %v1457 = vsel %vm1408, %v1377, %v1405
  %v1459 = vsel %vm1412, %v1377, %v1405
  %v1461 = vrot.slane %v1459, 1
  %v1462 = vsel %vm1416, %v1377, %v1405
  %v1464 = vrot.slane %v1462, 2
  %v1466 = vsel %vm1408, %v1379, %v1406
  %v1468 = vsel %vm1412, %v1379, %v1406
  %v1470 = vrot.slane %v1468, 1
  %v1471 = vsel %vm1416, %v1379, %v1406
  %v1473 = vrot.slane %v1471, 2
  %v1475 = vsel %vm1408, %v1381, %v1407
  %v1477 = vsel %vm1412, %v1381, %v1407
  %v1479 = vrot.slane %v1477, 1
  %v1480 = vsel %vm1416, %v1381, %v1407
  %v1482 = vrot.slane %v1480, 2
  %v1483 = vunpack.i.l.s16 %v1410
  %v1484 = vunpack.i.h.s16 %v1410
  %v1485 = vunpack.i.l.s16 %v1415
  %v1486 = vunpack.i.h.s16 %v1415
  %v1487 = vunpack.i.l.s16 %v1419
  %v1488 = vunpack.i.l.s16 %v1421
  %v1489 = vunpack.i.h.s16 %v1421
  %v1490 = vunpack.i.l.s16 %v1425
  %v1491 = vunpack.i.h.s16 %v1425
  %v1492 = vunpack.i.l.s16 %v1428
  %v1493 = vunpack.i.l.s16 %v1430
  %v1494 = vunpack.i.h.s16 %v1430
  %v1495 = vunpack.i.l.s16 %v1434
  %v1496 = vunpack.i.h.s16 %v1434
  %v1497 = vunpack.i.l.s16 %v1437
  %v1498 = vunpack.i.l.s16 %v1439
  %v1499 = vunpack.i.h.s16 %v1439
  %v1500 = vunpack.i.l.s16 %v1443
  %v1501 = vunpack.i.h.s16 %v1443
  %v1502 = vunpack.i.l.s16 %v1446
  %v1503 = vunpack.i.l.s16 %v1448
  %v1504 = vunpack.i.h.s16 %v1448
  %v1505 = vunpack.i.l.s16 %v1452
  %v1506 = vunpack.i.h.s16 %v1452
  %v1507 = vunpack.i.l.s16 %v1455
  %v1508 = vunpack.i.l.s16 %v1457
  %v1509 = vunpack.i.h.s16 %v1457
  %v1510 = vunpack.i.l.s16 %v1461
  %v1511 = vunpack.i.h.s16 %v1461
  %v1512 = vunpack.i.l.s16 %v1464
  %v1513 = vunpack.i.l.s16 %v1466
  %v1514 = vunpack.i.h.s16 %v1466
  %v1515 = vunpack.i.l.s16 %v1470
  %v1516 = vunpack.i.h.s16 %v1470
  %v1517 = vunpack.i.l.s16 %v1473
  %v1518 = vunpack.i.l.s16 %v1475
  %v1519 = vunpack.i.h.s16 %v1475
  %v1520 = vunpack.i.l.s16 %v1479
  %v1521 = vunpack.i.h.s16 %v1479
  %v1522 = vunpack.i.l.s16 %v1482
  %v1523 = vld [vmem:[%s3] sm:$0xf]
  %v1524 = vld [vmem:[%s3 + $0x4] sm:$0xf]
  %v1525 = vld [vmem:[%s3 + $0x8] sm:$0xf]
  %v1526 = vld [vmem:[%s3 + $0xc] sm:$0xf]
  %v1527 = vld [vmem:[%s3 + $0x10] sm:$0xf]
  %v1528 = vld [vmem:[%s3 + $0x14] sm:$0xf]
  %v1529 = vld [vmem:[%s3 + $0x18] sm:$0xf]
  %v1530 = vld [vmem:[%s3 + $0x1c] sm:$0xf]
  %v1531 = vld [vmem:[%s3 + $0x20] sm:$0xf]
  %v1532 = vld [vmem:[%s3 + $0x24] sm:$0xf]
  %v1533 = vld [vmem:[%s3 + $0x28] sm:$0xf]
  %v1534 = vld [vmem:[%s3 + $0x2c] sm:$0xf]
  %v1535 = vld [vmem:[%s3 + $0x30] sm:$0xf]
  %v1536 = vld [vmem:[%s3 + $0x34] sm:$0xf]
  %v1537 = vld [vmem:[%s3 + $0x38] sm:$0xf]
  %v1538 = vld [vmem:[%s3 + $0x3c] sm:$0xf]
  %v1539 = vld [vmem:[%s3 + $0x40] sm:$0xf]
  %v1540 = vld [vmem:[%s3 + $0x44] sm:$0xf]
  %v1541 = vld [vmem:[%s3 + $0x48] sm:$0xf]
  %v1542 = vld [vmem:[%s3 + $0x4c] sm:$0xf]
  %v1543 = vpack.i.b16 %v1484, %v1483
  %v1544 = vpack.i.b16 %v1486, %v1485
  %v1545 = vpack.i.b16 %v1488, %v1487
  %v1546 = vpack.i.b16 %v1490, %v1489
  %v1547 = vpack.i.b16 %v1492, %v1491
  %v1548 = vpack.i.b16 %v1494, %v1493
  %v1549 = vpack.i.b16 %v1496, %v1495
  %v1550 = vpack.i.b16 %v1498, %v1497
  %v1551 = vpack.i.b16 %v1500, %v1499
  %v1552 = vpack.i.b16 %v1502, %v1501
  %v1553 = vpack.i.b16 %v1504, %v1503
  %v1554 = vpack.i.b16 %v1506, %v1505
  %v1555 = vpack.i.b16 %v1508, %v1507
  %v1556 = vpack.i.b16 %v1510, %v1509
  %v1557 = vpack.i.b16 %v1512, %v1511
  %v1558 = vpack.i.b16 %v1514, %v1513
  %v1559 = vpack.i.b16 %v1516, %v1515
  %v1560 = vpack.i.b16 %v1518, %v1517
  %v1561 = vpack.i.b16 %v1520, %v1519
  %v1562 = vpack.i.b16 %v1522, %v1521
  %1564 = vst [vmem:[#allocation1] ss:$9 sm:$0xff] %v1543
  %s1566 = scalar_lea.vmem [#allocation1], 1
  %1567 = vst [vmem:[%s1566] ss:$9 sm:$0xff] %v1544
  %s1569 = scalar_lea.vmem [#allocation1], 2
  %1570 = vst [vmem:[%s1569] ss:$9 sm:$0xff] %v1545
  %s1572 = scalar_lea.vmem [#allocation1], 3
  %1573 = vst [vmem:[%s1572] ss:$9 sm:$0xff] %v1546
  %s1575 = scalar_lea.vmem [#allocation1], 4
  %1576 = vst [vmem:[%s1575] ss:$9 sm:$0xff] %v1547
  %s1578 = scalar_lea.vmem [#allocation1], 5
  %1579 = vst [vmem:[%s1578] ss:$9 sm:$0xff] %v1548
  %s1581 = scalar_lea.vmem [#allocation1], 6
  %1582 = vst [vmem:[%s1581] ss:$9 sm:$0xff] %v1549
  %s1584 = scalar_lea.vmem [#allocation1], 7
  %1585 = vst [vmem:[%s1584] ss:$9 sm:$0xff] %v1550
  %v1586 = vld [vmem:[#allocation1] sm:$0xff]
  %v1587 = vld [vmem:[#allocation1 + $0x9] sm:$0xff]
  %1589 = vst [vmem:[#allocation1] ss:$9 sm:$0xff] %v1551
  %1591 = vst [vmem:[%s1566] ss:$9 sm:$0xff] %v1552
  %1593 = vst [vmem:[%s1569] ss:$9 sm:$0xff] %v1553
  %1595 = vst [vmem:[%s1572] ss:$9 sm:$0xff] %v1554
  %1597 = vst [vmem:[%s1575] ss:$9 sm:$0xff] %v1555
  %1599 = vst [vmem:[%s1578] ss:$9 sm:$0xff] %v1556
  %1601 = vst [vmem:[%s1581] ss:$9 sm:$0xff] %v1557
  %1603 = vst [vmem:[%s1584] ss:$9 sm:$0xff] %v1558
  %v1604 = vld [vmem:[#allocation1] sm:$0xff]
  %v1605 = vld [vmem:[#allocation1 + $0x9] sm:$0xff]
  %1607 = vst [vmem:[#allocation1] ss:$9 sm:$0xff] %v1559
  %1609 = vst [vmem:[%s1566] ss:$9 sm:$0xff] %v1560
  %1611 = vst [vmem:[%s1569] ss:$9 sm:$0xff] %v1561
  %1613 = vst [vmem:[%s1572] ss:$9 sm:$0xff] %v1562
  %v1614 = vld [vmem:[#allocation1] sm:$0xff]
  %v1615 = vld [vmem:[#allocation1 + $0x9] sm:$0xff]
  %v1639 = vunpack.c.l.b16 %v1523
  %v1640 = vunpack.c.l.b16 %v1524
  %v1641 = vunpack.c.l.b16 %v1525
  %v1642 = vunpack.c.l.b16 %v1526
  %v1643 = vunpack.c.l.b16 %v1527
  %v1644 = vunpack.c.l.b16 %v1528
  %v1645 = vunpack.c.l.b16 %v1529
  %v1646 = vunpack.c.l.b16 %v1530
  %v1647 = vunpack.c.l.b16 %v1531
  %v1648 = vunpack.c.l.b16 %v1532
  %v1649 = vunpack.c.l.b16 %v1533
  %v1650 = vunpack.c.l.b16 %v1534
  %v1651 = vunpack.c.l.b16 %v1535
  %v1652 = vunpack.c.l.b16 %v1536
  %v1653 = vunpack.c.l.b16 %v1537
  %v1654 = vunpack.c.l.b16 %v1538
  %v1655 = vunpack.c.l.b16 %v1539
  %v1656 = vunpack.c.l.b16 %v1540
  %v1657 = vunpack.c.l.b16 %v1541
  %v1658 = vunpack.c.l.b16 %v1542
  %v1659 = vpack.c.b16 %v1640, %v1639
  %v1660 = vpack.c.b16 %v1642, %v1641
  %v1661 = vpack.c.b16 %v1644, %v1643
  %v1662 = vpack.c.b16 %v1646, %v1645
  %v1663 = vpack.c.b16 %v1648, %v1647
  %v1664 = vpack.c.b16 %v1650, %v1649
  %v1665 = vpack.c.b16 %v1652, %v1651
  %v1666 = vpack.c.b16 %v1654, %v1653
  %v1667 = vpack.c.b16 %v1656, %v1655
  %v1668 = vpack.c.b16 %v1658, %v1657
  %vm1679 = vcmask 261120
  %v1680 = vsel %vm1679, %v1587, 0
  %v1682 = vsel %vm1679, %v1605, 0
  %v1684 = vsel %vm1679, %v1615, 0
  %1686 = vmatpush.bf16.msra.mxu0 %v1666
  %1687 = vmatpush.bf16.msra.mxu0 %v1665
  %1688 = vmatpush.bf16.msra.mxu0 %v1664
  %1689 = vmatpush.bf16.msra.mxu0 %v1663
  %1690 = vmatpush.bf16.msra.mxu0 %v1662
  %1691 = vmatpush.bf16.msra.mxu0 %v1661
  %1692 = vmatpush.bf16.msra.mxu0 %v1660
  %1693 = vmatpush.bf16.msra.mxu0 %v1659
  %1694 = vmatmul.bf16.gmra.mxu0 %v1586
  %v1695 = vpop.f32.mrf.mxu0
  %v1696 = vadd.f32 0.0, %v1695
  %v1697 = vpop.f32.mrf.mxu0
  %v1698 = vadd.f32 0.0, %v1697
  %1699 = vmatmul.bf16.gmra.mxu0 %v1604
  %v1700 = vpop.f32.mrf.mxu0
  %v1701 = vadd.f32 0.0, %v1700
  %v1702 = vpop.f32.mrf.mxu0
  %v1703 = vadd.f32 0.0, %v1702
  %1704 = vmatmul.bf16.gmra.mxu0 %v1614
  %v1705 = vpop.f32.mrf.mxu0
  %v1706 = vadd.f32 0.0, %v1705
  %v1707 = vpop.f32.mrf.mxu0
  %1708 = vdwg.mxu0
  %1709 = vmatpush.bf16.msra.mxu0 0
  %1710 = vmatpush.bf16.msra.mxu0 0
  %1711 = vmatpush.bf16.msra.mxu0 0
  %1712 = vmatpush.bf16.msra.mxu0 0
  %1713 = vmatpush.bf16.msra.mxu0 0
  %1714 = vmatpush.bf16.msra.mxu0 0
  %1715 = vmatpush.bf16.msra.mxu0 %v1668
  %1716 = vmatpush.bf16.msra.mxu0 %v1667
  %1717 = vmatmul.bf16.gmra.mxu0 %v1680
  %v1718 = vpop.f32.mrf.mxu0
  %v1719 = vadd.f32 %v1696, %v1718
  %v1720 = vpop.f32.mrf.mxu0
  %v1721 = vadd.f32 %v1698, %v1720
  %1722 = vmatmul.bf16.gmra.mxu0 %v1682
  %v1723 = vpop.f32.mrf.mxu0
  %v1724 = vadd.f32 %v1701, %v1723
  %v1725 = vpop.f32.mrf.mxu0
  %v1726 = vadd.f32 %v1703, %v1725
  %1727 = vmatmul.bf16.gmra.mxu0 %v1684
  %v1728 = vpop.f32.mrf.mxu0
  %v1729 = vadd.f32 %v1706, %v1728
  %v1730 = vpop.f32.mrf.mxu0
  %1731 = vdwg.mxu0
  %1732 = vrot.lane.b32.xlu0 %v1106, 122
  %v1733 = vpop.permute.xlu0 %1732
  %1734 = vrot.lane.b32.xlu0 %v1107, 122
  %v1735 = vpop.permute.xlu0 %1734
  %1736 = vrot.lane.b32.xlu0 %v1108, 122
  %v1737 = vpop.permute.xlu0 %1736
  %1738 = vrot.lane.b32.xlu0 %v1109, 122
  %v1739 = vpop.permute.xlu0 %1738
  %1740 = vrot.lane.b32.xlu0 %v1110, 122
  %v1741 = vpop.permute.xlu0 %1740
  %1742 = vrot.lane.b32.xlu0 %v1111, 122
  %v1743 = vpop.permute.xlu0 %1742
  %1744 = vrot.lane.b32.xlu0 %v1112, 122
  %v1745 = vpop.permute.xlu0 %1744
  %1746 = vrot.lane.b32.xlu0 %v1113, 122
  %v1747 = vpop.permute.xlu0 %1746
  %1748 = vrot.lane.b32.xlu0 %v1066, 24
  %v1749 = vpop.permute.xlu0 %1748
  %1750 = vrot.lane.b32.xlu0 %v1067, 24
  %v1751 = vpop.permute.xlu0 %1750
  %1752 = vrot.lane.b32.xlu0 %v1068, 24
  %v1753 = vpop.permute.xlu0 %1752
  %1754 = vrot.lane.b32.xlu0 %v1069, 24
  %v1755 = vpop.permute.xlu0 %1754
  %1756 = vrot.lane.b32.xlu0 %v1070, 24
  %v1757 = vpop.permute.xlu0 %1756
  %1758 = vrot.lane.b32.xlu0 %v1071, 24
  %v1759 = vpop.permute.xlu0 %1758
  %1760 = vrot.lane.b32.xlu0 %v1072, 24
  %v1761 = vpop.permute.xlu0 %1760
  %1762 = vrot.lane.b32.xlu0 %v1073, 24
  %v1763 = vpop.permute.xlu0 %1762
  %1764 = vrot.lane.b32.xlu0 %v1120, 54
  %v1765 = vpop.permute.xlu0 %1764
  %1766 = vrot.lane.b32.xlu0 %v1127, 54
  %v1767 = vpop.permute.xlu0 %1766
  %1768 = vrot.lane.b32.xlu0 %v1134, 54
  %v1769 = vpop.permute.xlu0 %1768
  %1770 = vrot.lane.b32.xlu0 %v1141, 54
  %v1771 = vpop.permute.xlu0 %1770
  %1772 = vrot.lane.b32.xlu0 %v1148, 54
  %v1773 = vpop.permute.xlu0 %1772
  %1774 = vrot.lane.b32.xlu0 %v1155, 54
  %v1775 = vpop.permute.xlu0 %1774
  %1776 = vrot.lane.b32.xlu0 %v1162, 54
  %v1777 = vpop.permute.xlu0 %1776
  %1778 = vrot.lane.b32.xlu0 %v1169, 54
  %v1779 = vpop.permute.xlu0 %1778
  %1780 = vrot.lane.b32.xlu0 %v1192, 84
  %v1781 = vpop.permute.xlu0 %1780
  %1782 = vrot.lane.b32.xlu0 %v1199, 84
  %v1783 = vpop.permute.xlu0 %1782
  %1784 = vrot.lane.b32.xlu0 %v1206, 84
  %v1785 = vpop.permute.xlu0 %1784
  %1786 = vrot.lane.b32.xlu0 %v1213, 84
  %v1787 = vpop.permute.xlu0 %1786
  %1788 = vrot.lane.b32.xlu0 %v1220, 84
  %v1789 = vpop.permute.xlu0 %1788
  %1790 = vrot.lane.b32.xlu0 %v1227, 84
  %v1791 = vpop.permute.xlu0 %1790
  %1792 = vrot.lane.b32.xlu0 %v1234, 84
  %v1793 = vpop.permute.xlu0 %1792
  %1794 = vrot.lane.b32.xlu0 %v1241, 84
  %v1795 = vpop.permute.xlu0 %1794
  %1796 = vrot.lane.b32.xlu0 %v1282, 114
  %v1797 = vpop.permute.xlu0 %1796
  %1798 = vrot.lane.b32.xlu0 %v1283, 114
  %v1799 = vpop.permute.xlu0 %1798
  %1800 = vrot.lane.b32.xlu0 %v1284, 114
  %v1801 = vpop.permute.xlu0 %1800
  %1802 = vrot.lane.b32.xlu0 %v1285, 114
  %v1803 = vpop.permute.xlu0 %1802
  %1804 = vrot.lane.b32.xlu0 %v1286, 114
  %v1805 = vpop.permute.xlu0 %1804
  %1806 = vrot.lane.b32.xlu0 %v1287, 114
  %v1807 = vpop.permute.xlu0 %1806
  %1808 = vrot.lane.b32.xlu0 %v1288, 114
  %v1809 = vpop.permute.xlu0 %1808
  %1810 = vrot.lane.b32.xlu0 %v1289, 114
  %v1811 = vpop.permute.xlu0 %1810
  %v1814 = vsel %vm1306, %v1733, %v1749
  %v1817 = vsel %vm1306, %v1735, %v1751
  %v1820 = vsel %vm1306, %v1737, %v1753
  %v1823 = vsel %vm1306, %v1739, %v1755
  %v1826 = vsel %vm1306, %v1741, %v1757
  %v1829 = vsel %vm1306, %v1743, %v1759
  %v1832 = vsel %vm1306, %v1745, %v1761
  %v1835 = vsel %vm1306, %v1747, %v1763
  %v1837 = vsel %vm1331, %v1814, %v1765
  %v1839 = vsel %vm1331, %v1817, %v1767
  %v1841 = vsel %vm1331, %v1820, %v1769
  %v1843 = vsel %vm1331, %v1823, %v1771
  %v1845 = vsel %vm1331, %v1826, %v1773
  %v1847 = vsel %vm1331, %v1829, %v1775
  %v1849 = vsel %vm1331, %v1832, %v1777
  %v1851 = vsel %vm1331, %v1835, %v1779
  %v1853 = vsel %vm1348, %v1837, %v1781
  %v1855 = vsel %vm1348, %v1839, %v1783
  %v1857 = vsel %vm1348, %v1841, %v1785
  %v1859 = vsel %vm1348, %v1843, %v1787
  %v1861 = vsel %vm1348, %v1845, %v1789
  %v1863 = vsel %vm1348, %v1847, %v1791
  %v1865 = vsel %vm1348, %v1849, %v1793
  %v1867 = vsel %vm1348, %v1851, %v1795
  %v1869 = vsel %vm1365, %v1853, %v1797
  %v1871 = vsel %vm1365, %v1855, %v1799
  %v1873 = vsel %vm1365, %v1857, %v1801
  %v1875 = vsel %vm1365, %v1859, %v1803
  %v1877 = vsel %vm1365, %v1861, %v1805
  %v1879 = vsel %vm1365, %v1863, %v1807
  %v1881 = vsel %vm1365, %v1865, %v1809
  %v1883 = vsel %vm1365, %v1867, %v1811
  %v1884 = vsel %vm1382, %v1797, 0
  %v1885 = vsel %vm1382, %v1799, 0
  %v1886 = vsel %vm1382, %v1801, 0
  %v1887 = vsel %vm1382, %v1803, 0
  %v1888 = vsel %vm1382, %v1805, 0
  %v1889 = vsel %vm1382, %v1807, 0
  %v1890 = vsel %vm1382, %v1809, 0
  %v1891 = vsel %vm1382, %v1811, 0
  %v1900 = vrot.slane %v1884, 7
  %v1901 = vrot.slane %v1885, 7
  %v1902 = vrot.slane %v1886, 7
  %v1903 = vrot.slane %v1887, 7
  %v1904 = vrot.slane %v1888, 7
  %v1905 = vrot.slane %v1889, 7
  %v1906 = vrot.slane %v1890, 7
  %v1907 = vrot.slane %v1891, 7
  %v1909 = vsel %vm1408, %v1869, %v1900
  %v1911 = vsel %vm1412, %v1869, %v1900
  %v1913 = vrot.slane %v1911, 1
  %v1914 = vsel %vm1416, %v1869, %v1900
  %v1916 = vrot.slane %v1914, 2
  %v1918 = vsel %vm1408, %v1871, %v1901
  %v1920 = vsel %vm1412, %v1871, %v1901
  %v1922 = vrot.slane %v1920, 1
  %v1923 = vsel %vm1416, %v1871, %v1901
  %v1925 = vrot.slane %v1923, 2
  %v1927 = vsel %vm1408, %v1873, %v1902
  %v1929 = vsel %vm1412, %v1873, %v1902
  %v1931 = vrot.slane %v1929, 1
  %v1932 = vsel %vm1416, %v1873, %v1902
  %v1934 = vrot.slane %v1932, 2
  %v1936 = vsel %vm1408, %v1875, %v1903
  %v1938 = vsel %vm1412, %v1875, %v1903
  %v1940 = vrot.slane %v1938, 1
  %v1941 = vsel %vm1416, %v1875, %v1903
  %v1943 = vrot.slane %v1941, 2
  %v1945 = vsel %vm1408, %v1877, %v1904
  %v1947 = vsel %vm1412, %v1877, %v1904
  %v1949 = vrot.slane %v1947, 1
  %v1950 = vsel %vm1416, %v1877, %v1904
  %v1952 = vrot.slane %v1950, 2
  %v1954 = vsel %vm1408, %v1879, %v1905
  %v1956 = vsel %vm1412, %v1879, %v1905
  %v1958 = vrot.slane %v1956, 1
  %v1959 = vsel %vm1416, %v1879, %v1905
  %v1961 = vrot.slane %v1959, 2
  %v1963 = vsel %vm1408, %v1881, %v1906
  %v1965 = vsel %vm1412, %v1881, %v1906
  %v1967 = vrot.slane %v1965, 1
  %v1968 = vsel %vm1416, %v1881, %v1906
  %v1970 = vrot.slane %v1968, 2
  %v1972 = vsel %vm1408, %v1883, %v1907
  %v1974 = vsel %vm1412, %v1883, %v1907
  %v1976 = vrot.slane %v1974, 1
  %v1977 = vsel %vm1416, %v1883, %v1907
  %v1979 = vrot.slane %v1977, 2
  %v1980 = vunpack.i.l.s16 %v1909
  %v1981 = vunpack.i.h.s16 %v1909
  %v1982 = vunpack.i.l.s16 %v1913
  %v1983 = vunpack.i.h.s16 %v1913
  %v1984 = vunpack.i.l.s16 %v1916
  %v1985 = vunpack.i.l.s16 %v1918
  %v1986 = vunpack.i.h.s16 %v1918
  %v1987 = vunpack.i.l.s16 %v1922
  %v1988 = vunpack.i.h.s16 %v1922
  %v1989 = vunpack.i.l.s16 %v1925
  %v1990 = vunpack.i.l.s16 %v1927
  %v1991 = vunpack.i.h.s16 %v1927
  %v1992 = vunpack.i.l.s16 %v1931
  %v1993 = vunpack.i.h.s16 %v1931
  %v1994 = vunpack.i.l.s16 %v1934
  %v1995 = vunpack.i.l.s16 %v1936
  %v1996 = vunpack.i.h.s16 %v1936
  %v1997 = vunpack.i.l.s16 %v1940
  %v1998 = vunpack.i.h.s16 %v1940
  %v1999 = vunpack.i.l.s16 %v1943
  %v2000 = vunpack.i.l.s16 %v1945
  %v2001 = vunpack.i.h.s16 %v1945
  %v2002 = vunpack.i.l.s16 %v1949
  %v2003 = vunpack.i.h.s16 %v1949
  %v2004 = vunpack.i.l.s16 %v1952
  %v2005 = vunpack.i.l.s16 %v1954
  %v2006 = vunpack.i.h.s16 %v1954
  %v2007 = vunpack.i.l.s16 %v1958
  %v2008 = vunpack.i.h.s16 %v1958
  %v2009 = vunpack.i.l.s16 %v1961
  %v2010 = vunpack.i.l.s16 %v1963
  %v2011 = vunpack.i.h.s16 %v1963
  %v2012 = vunpack.i.l.s16 %v1967
  %v2013 = vunpack.i.h.s16 %v1967
  %v2014 = vunpack.i.l.s16 %v1970
  %v2015 = vunpack.i.l.s16 %v1972
  %v2016 = vunpack.i.h.s16 %v1972
  %v2017 = vunpack.i.l.s16 %v1976
  %v2018 = vunpack.i.h.s16 %v1976
  %v2019 = vunpack.i.l.s16 %v1979
  %v2020 = vpack.i.b16 %v1981, %v1980
  %v2021 = vpack.i.b16 %v1983, %v1982
  %v2022 = vpack.i.b16 %v1985, %v1984
  %v2023 = vpack.i.b16 %v1987, %v1986
  %v2024 = vpack.i.b16 %v1989, %v1988
  %v2025 = vpack.i.b16 %v1991, %v1990
  %v2026 = vpack.i.b16 %v1993, %v1992
  %v2027 = vpack.i.b16 %v1995, %v1994
  %v2028 = vpack.i.b16 %v1997, %v1996
  %v2029 = vpack.i.b16 %v1999, %v1998
  %v2030 = vpack.i.b16 %v2001, %v2000
  %v2031 = vpack.i.b16 %v2003, %v2002
  %v2032 = vpack.i.b16 %v2005, %v2004
  %v2033 = vpack.i.b16 %v2007, %v2006
  %v2034 = vpack.i.b16 %v2009, %v2008
  %v2035 = vpack.i.b16 %v2011, %v2010
  %v2036 = vpack.i.b16 %v2013, %v2012
  %v2037 = vpack.i.b16 %v2015, %v2014
  %v2038 = vpack.i.b16 %v2017, %v2016
  %v2039 = vpack.i.b16 %v2019, %v2018
  %2041 = vst [vmem:[#allocation1] ss:$9 sm:$0xff] %v2020
  %s2043 = scalar_lea.vmem [#allocation1], 1
  %2044 = vst [vmem:[%s2043] ss:$9 sm:$0xff] %v2021
  %s2046 = scalar_lea.vmem [#allocation1], 2
  %2047 = vst [vmem:[%s2046] ss:$9 sm:$0xff] %v2022
  %s2049 = scalar_lea.vmem [#allocation1], 3
  %2050 = vst [vmem:[%s2049] ss:$9 sm:$0xff] %v2023
  %s2052 = scalar_lea.vmem [#allocation1], 4
  %2053 = vst [vmem:[%s2052] ss:$9 sm:$0xff] %v2024
  %s2055 = scalar_lea.vmem [#allocation1], 5
  %2056 = vst [vmem:[%s2055] ss:$9 sm:$0xff] %v2025
  %s2058 = scalar_lea.vmem [#allocation1], 6
  %2059 = vst [vmem:[%s2058] ss:$9 sm:$0xff] %v2026
  %s2061 = scalar_lea.vmem [#allocation1], 7
  %2062 = vst [vmem:[%s2061] ss:$9 sm:$0xff] %v2027
  %v2063 = vld [vmem:[#allocation1] sm:$0xff]
  %v2064 = vld [vmem:[#allocation1 + $0x9] sm:$0xff]
  %2066 = vst [vmem:[#allocation1] ss:$9 sm:$0xff] %v2028
  %2068 = vst [vmem:[%s2043] ss:$9 sm:$0xff] %v2029
  %2070 = vst [vmem:[%s2046] ss:$9 sm:$0xff] %v2030
  %2072 = vst [vmem:[%s2049] ss:$9 sm:$0xff] %v2031
  %2074 = vst [vmem:[%s2052] ss:$9 sm:$0xff] %v2032
  %2076 = vst [vmem:[%s2055] ss:$9 sm:$0xff] %v2033
  %2078 = vst [vmem:[%s2058] ss:$9 sm:$0xff] %v2034
  %2080 = vst [vmem:[%s2061] ss:$9 sm:$0xff] %v2035
  %v2081 = vld [vmem:[#allocation1] sm:$0xff]
  %v2082 = vld [vmem:[#allocation1 + $0x9] sm:$0xff]
  %2084 = vst [vmem:[#allocation1] ss:$9 sm:$0xff] %v2036
  %2086 = vst [vmem:[%s2043] ss:$9 sm:$0xff] %v2037
  %2088 = vst [vmem:[%s2046] ss:$9 sm:$0xff] %v2038
  %2090 = vst [vmem:[%s2049] ss:$9 sm:$0xff] %v2039
  %v2091 = vld [vmem:[#allocation1] sm:$0xff]
  %v2092 = vld [vmem:[#allocation1 + $0x9] sm:$0xff]
  %v2096 = vsel %vm1679, %v2064, 0
  %v2098 = vsel %vm1679, %v2082, 0
  %v2100 = vsel %vm1679, %v2092, 0
  %2102 = vmatpush.bf16.msra.mxu0 %v1666
  %2103 = vmatpush.bf16.msra.mxu0 %v1665
  %2104 = vmatpush.bf16.msra.mxu0 %v1664
  %2105 = vmatpush.bf16.msra.mxu0 %v1663
  %2106 = vmatpush.bf16.msra.mxu0 %v1662
  %2107 = vmatpush.bf16.msra.mxu0 %v1661
  %2108 = vmatpush.bf16.msra.mxu0 %v1660
  %2109 = vmatpush.bf16.msra.mxu0 %v1659
  %2110 = vmatmul.bf16.gmra.mxu0 %v2063
  %v2111 = vpop.f32.mrf.mxu0
  %v2112 = vadd.f32 0.0, %v2111
  %v2113 = vpop.f32.mrf.mxu0
  %v2114 = vadd.f32 0.0, %v2113
  %2115 = vmatmul.bf16.gmra.mxu0 %v2081
  %v2116 = vpop.f32.mrf.mxu0
  %v2117 = vadd.f32 0.0, %v2116
  %v2118 = vpop.f32.mrf.mxu0
  %v2119 = vadd.f32 0.0, %v2118
  %2120 = vmatmul.bf16.gmra.mxu0 %v2091
  %v2121 = vpop.f32.mrf.mxu0
  %v2122 = vadd.f32 0.0, %v2121
  %v2123 = vpop.f32.mrf.mxu0
  %2124 = vdwg.mxu0
  %2125 = vmatpush.bf16.msra.mxu0 0
  %2126 = vmatpush.bf16.msra.mxu0 0
  %2127 = vmatpush.bf16.msra.mxu0 0
  %2128 = vmatpush.bf16.msra.mxu0 0
  %2129 = vmatpush.bf16.msra.mxu0 0
  %2130 = vmatpush.bf16.msra.mxu0 0
  %2131 = vmatpush.bf16.msra.mxu0 %v1668
  %2132 = vmatpush.bf16.msra.mxu0 %v1667
  %2133 = vmatmul.bf16.gmra.mxu0 %v2096
  %v2134 = vpop.f32.mrf.mxu0
  %v2135 = vadd.f32 %v2112, %v2134
  %v2136 = vpop.f32.mrf.mxu0
  %v2137 = vadd.f32 %v2114, %v2136
  %2138 = vmatmul.bf16.gmra.mxu0 %v2098
  %v2139 = vpop.f32.mrf.mxu0
  %v2140 = vadd.f32 %v2117, %v2139
  %v2141 = vpop.f32.mrf.mxu0
  %v2142 = vadd.f32 %v2119, %v2141
  %2143 = vmatmul.bf16.gmra.mxu0 %v2100
  %v2144 = vpop.f32.mrf.mxu0
  %v2145 = vadd.f32 %v2122, %v2144
  %v2146 = vpop.f32.mrf.mxu0
  %2147 = vdwg.mxu0
  %v2148 = vmax.f32 %v1719, %v2135
  %v2149 = vmax.f32 %v1721, %v2137
  %v2150 = vmax.f32 %v1724, %v2140
  %v2151 = vmax.f32 %v1726, %v2142
  %v2152 = vmax.f32 %v1729, %v2145
  %v2153 = vld [vmem:[%s1033] sm:$0xe]
  %v2154 = vld [vmem:[%s1033 + $0x8] sm:$0xe]
  %v2155 = vld [vmem:[%s1033 + $0x10] sm:$0xe]
  %v2156 = vld [vmem:[%s1033 + $0x18] sm:$0xe]
  %v2157 = vld [vmem:[%s1033 + $0x20] sm:$0xe]
  %v2158 = vld [vmem:[%s1033 + $0x28] sm:$0xe]
  %v2159 = vld [vmem:[%s1033 + $0x30] sm:$0xe]
  %v2160 = vld [vmem:[%s1033 + $0x38] sm:$0xe]
  %2161 = vrot.lane.b32.xlu0 %v1120, 30
  %v2162 = vpop.permute.xlu0 %2161
  %2163 = vrot.lane.b32.xlu0 %v1127, 30
  %v2164 = vpop.permute.xlu0 %2163
  %2165 = vrot.lane.b32.xlu0 %v1134, 30
  %v2166 = vpop.permute.xlu0 %2165
  %2167 = vrot.lane.b32.xlu0 %v1141, 30
  %v2168 = vpop.permute.xlu0 %2167
  %2169 = vrot.lane.b32.xlu0 %v1148, 30
  %v2170 = vpop.permute.xlu0 %2169
  %2171 = vrot.lane.b32.xlu0 %v1155, 30
  %v2172 = vpop.permute.xlu0 %2171
  %2173 = vrot.lane.b32.xlu0 %v1162, 30
  %v2174 = vpop.permute.xlu0 %2173
  %2175 = vrot.lane.b32.xlu0 %v1169, 30
  %v2176 = vpop.permute.xlu0 %2175
  %2177 = vrot.lane.b32.xlu0 %v1192, 60
  %v2178 = vpop.permute.xlu0 %2177
  %2179 = vrot.lane.b32.xlu0 %v1199, 60
  %v2180 = vpop.permute.xlu0 %2179
  %2181 = vrot.lane.b32.xlu0 %v1206, 60
  %v2182 = vpop.permute.xlu0 %2181
  %2183 = vrot.lane.b32.xlu0 %v1213, 60
  %v2184 = vpop.permute.xlu0 %2183
  %2185 = vrot.lane.b32.xlu0 %v1220, 60
  %v2186 = vpop.permute.xlu0 %2185
  %2187 = vrot.lane.b32.xlu0 %v1227, 60
  %v2188 = vpop.permute.xlu0 %2187
  %2189 = vrot.lane.b32.xlu0 %v1234, 60
  %v2190 = vpop.permute.xlu0 %2189
  %2191 = vrot.lane.b32.xlu0 %v1241, 60
  %v2192 = vpop.permute.xlu0 %2191
  %2193 = vrot.lane.b32.xlu0 %v1282, 90
  %v2194 = vpop.permute.xlu0 %2193
  %2195 = vrot.lane.b32.xlu0 %v1283, 90
  %v2196 = vpop.permute.xlu0 %2195
  %2197 = vrot.lane.b32.xlu0 %v1284, 90
  %v2198 = vpop.permute.xlu0 %2197
  %2199 = vrot.lane.b32.xlu0 %v1285, 90
  %v2200 = vpop.permute.xlu0 %2199
  %2201 = vrot.lane.b32.xlu0 %v1286, 90
  %v2202 = vpop.permute.xlu0 %2201
  %2203 = vrot.lane.b32.xlu0 %v1287, 90
  %v2204 = vpop.permute.xlu0 %2203
  %2205 = vrot.lane.b32.xlu0 %v1288, 90
  %v2206 = vpop.permute.xlu0 %2205
  %2207 = vrot.lane.b32.xlu0 %v1289, 90
  %v2208 = vpop.permute.xlu0 %2207
  %v2217 = vunpack.c.l.b16 %v2153
  %v2218 = vunpack.c.l.b16 %v2154
  %v2219 = vunpack.c.l.b16 %v2155
  %v2220 = vunpack.c.l.b16 %v2156
  %v2221 = vunpack.c.l.b16 %v2157
  %v2222 = vunpack.c.l.b16 %v2158
  %v2223 = vunpack.c.l.b16 %v2159
  %v2224 = vunpack.c.l.b16 %v2160
  %v2225 = vpack.c.b16 %v2217, %v2217
  %v2226 = vpack.c.b16 %v2218, %v2218
  %v2227 = vpack.c.b16 %v2219, %v2219
  %v2228 = vpack.c.b16 %v2220, %v2220
  %v2229 = vpack.c.b16 %v2221, %v2221
  %v2230 = vpack.c.b16 %v2222, %v2222
  %v2231 = vpack.c.b16 %v2223, %v2223
  %v2232 = vpack.c.b16 %v2224, %v2224
  %v2233 = vrot.slane %v2225, 1
  %v2234 = vrot.slane %v2226, 1
  %v2235 = vrot.slane %v2227, 1
  %v2236 = vrot.slane %v2228, 1
  %v2237 = vrot.slane %v2229, 1
  %v2238 = vrot.slane %v2230, 1
  %v2239 = vrot.slane %v2231, 1
  %v2240 = vrot.slane %v2232, 1
  %2241 = vrot.lane.b32.xlu0 %v2233, 120
  %v2242 = vpop.permute.xlu0 %2241
  %2243 = vrot.lane.b32.xlu0 %v2234, 120
  %v2244 = vpop.permute.xlu0 %2243
  %2245 = vrot.lane.b32.xlu0 %v2235, 120
  %v2246 = vpop.permute.xlu0 %2245
  %2247 = vrot.lane.b32.xlu0 %v2236, 120
  %v2248 = vpop.permute.xlu0 %2247
  %2249 = vrot.lane.b32.xlu0 %v2237, 120
  %v2250 = vpop.permute.xlu0 %2249
  %2251 = vrot.lane.b32.xlu0 %v2238, 120
  %v2252 = vpop.permute.xlu0 %2251
  %2253 = vrot.lane.b32.xlu0 %v2239, 120
  %v2254 = vpop.permute.xlu0 %2253
  %2255 = vrot.lane.b32.xlu0 %v2240, 120
  %v2256 = vpop.permute.xlu0 %2255
  %v2259 = vsel %vm1306, %v1034, %v2162
  %v2262 = vsel %vm1306, %v1035, %v2164
  %v2265 = vsel %vm1306, %v1036, %v2166
  %v2268 = vsel %vm1306, %v1037, %v2168
  %v2271 = vsel %vm1306, %v1038, %v2170
  %v2274 = vsel %vm1306, %v1039, %v2172
  %v2277 = vsel %vm1306, %v1040, %v2174
  %v2280 = vsel %vm1306, %v1041, %v2176
  %v2282 = vsel %vm1331, %v2259, %v2178
  %v2284 = vsel %vm1331, %v2262, %v2180
  %v2286 = vsel %vm1331, %v2265, %v2182
  %v2288 = vsel %vm1331, %v2268, %v2184
  %v2290 = vsel %vm1331, %v2271, %v2186
  %v2292 = vsel %vm1331, %v2274, %v2188
  %v2294 = vsel %vm1331, %v2277, %v2190
  %v2296 = vsel %vm1331, %v2280, %v2192
  %v2298 = vsel %vm1348, %v2282, %v2194
  %v2300 = vsel %vm1348, %v2284, %v2196
  %v2302 = vsel %vm1348, %v2286, %v2198
  %v2304 = vsel %vm1348, %v2288, %v2200
  %v2306 = vsel %vm1348, %v2290, %v2202
  %v2308 = vsel %vm1348, %v2292, %v2204
  %v2310 = vsel %vm1348, %v2294, %v2206
  %v2312 = vsel %vm1348, %v2296, %v2208
  %v2314 = vsel %vm1365, %v2298, %v2242
  %v2316 = vsel %vm1365, %v2300, %v2244
  %v2318 = vsel %vm1365, %v2302, %v2246
  %v2320 = vsel %vm1365, %v2304, %v2248
  %v2322 = vsel %vm1365, %v2306, %v2250
  %v2324 = vsel %vm1365, %v2308, %v2252
  %v2326 = vsel %vm1365, %v2310, %v2254
  %v2328 = vsel %vm1365, %v2312, %v2256
  %v2329 = vsel %vm1382, %v2242, 0
  %v2330 = vsel %vm1382, %v2244, 0
  %v2331 = vsel %vm1382, %v2246, 0
  %v2332 = vsel %vm1382, %v2248, 0
  %v2333 = vsel %vm1382, %v2250, 0
  %v2334 = vsel %vm1382, %v2252, 0
  %v2335 = vsel %vm1382, %v2254, 0
  %v2336 = vsel %vm1382, %v2256, 0
  %v2345 = vrot.slane %v2329, 7
  %v2346 = vrot.slane %v2330, 7
  %v2347 = vrot.slane %v2331, 7
  %v2348 = vrot.slane %v2332, 7
  %v2349 = vrot.slane %v2333, 7
  %v2350 = vrot.slane %v2334, 7
  %v2351 = vrot.slane %v2335, 7
  %v2352 = vrot.slane %v2336, 7
  %v2354 = vsel %vm1408, %v2314, %v2345
  %v2356 = vsel %vm1412, %v2314, %v2345
  %v2358 = vrot.slane %v2356, 1
  %v2359 = vsel %vm1416, %v2314, %v2345
  %v2361 = vrot.slane %v2359, 2
  %v2363 = vsel %vm1408, %v2316, %v2346
  %v2365 = vsel %vm1412, %v2316, %v2346
  %v2367 = vrot.slane %v2365, 1
  %v2368 = vsel %vm1416, %v2316, %v2346
  %v2370 = vrot.slane %v2368, 2
  %v2372 = vsel %vm1408, %v2318, %v2347
  %v2374 = vsel %vm1412, %v2318, %v2347
  %v2376 = vrot.slane %v2374, 1
  %v2377 = vsel %vm1416, %v2318, %v2347
  %v2379 = vrot.slane %v2377, 2
  %v2381 = vsel %vm1408, %v2320, %v2348
  %v2383 = vsel %vm1412, %v2320, %v2348
  %v2385 = vrot.slane %v2383, 1
  %v2386 = vsel %vm1416, %v2320, %v2348
  %v2388 = vrot.slane %v2386, 2
  %v2390 = vsel %vm1408, %v2322, %v2349
  %v2392 = vsel %vm1412, %v2322, %v2349
  %v2394 = vrot.slane %v2392, 1
  %v2395 = vsel %vm1416, %v2322, %v2349
  %v2397 = vrot.slane %v2395, 2
  %v2399 = vsel %vm1408, %v2324, %v2350
  %v2401 = vsel %vm1412, %v2324, %v2350
  %v2403 = vrot.slane %v2401, 1
  %v2404 = vsel %vm1416, %v2324, %v2350
  %v2406 = vrot.slane %v2404, 2
  %v2408 = vsel %vm1408, %v2326, %v2351
  %v2410 = vsel %vm1412, %v2326, %v2351
  %v2412 = vrot.slane %v2410, 1
  %v2413 = vsel %vm1416, %v2326, %v2351
  %v2415 = vrot.slane %v2413, 2
  %v2417 = vsel %vm1408, %v2328, %v2352
  %v2419 = vsel %vm1412, %v2328, %v2352
  %v2421 = vrot.slane %v2419, 1
  %v2422 = vsel %vm1416, %v2328, %v2352
  %v2424 = vrot.slane %v2422, 2
  %v2425 = vunpack.i.l.s16 %v2354
  %v2426 = vunpack.i.h.s16 %v2354
  %v2427 = vunpack.i.l.s16 %v2358
  %v2428 = vunpack.i.h.s16 %v2358
  %v2429 = vunpack.i.l.s16 %v2361
  %v2430 = vunpack.i.l.s16 %v2363
  %v2431 = vunpack.i.h.s16 %v2363
  %v2432 = vunpack.i.l.s16 %v2367
  %v2433 = vunpack.i.h.s16 %v2367
  %v2434 = vunpack.i.l.s16 %v2370
  %v2435 = vunpack.i.l.s16 %v2372
  %v2436 = vunpack.i.h.s16 %v2372
  %v2437 = vunpack.i.l.s16 %v2376
  %v2438 = vunpack.i.h.s16 %v2376
  %v2439 = vunpack.i.l.s16 %v2379
  %v2440 = vunpack.i.l.s16 %v2381
  %v2441 = vunpack.i.h.s16 %v2381
  %v2442 = vunpack.i.l.s16 %v2385
  %v2443 = vunpack.i.h.s16 %v2385
  %v2444 = vunpack.i.l.s16 %v2388
  %v2445 = vunpack.i.l.s16 %v2390
  %v2446 = vunpack.i.h.s16 %v2390
  %v2447 = vunpack.i.l.s16 %v2394
  %v2448 = vunpack.i.h.s16 %v2394
  %v2449 = vunpack.i.l.s16 %v2397
  %v2450 = vunpack.i.l.s16 %v2399
  %v2451 = vunpack.i.h.s16 %v2399
  %v2452 = vunpack.i.l.s16 %v2403
  %v2453 = vunpack.i.h.s16 %v2403
  %v2454 = vunpack.i.l.s16 %v2406
  %v2455 = vunpack.i.l.s16 %v2408
  %v2456 = vunpack.i.h.s16 %v2408
  %v2457 = vunpack.i.l.s16 %v2412
  %v2458 = vunpack.i.h.s16 %v2412
  %v2459 = vunpack.i.l.s16 %v2415
  %v2460 = vunpack.i.l.s16 %v2417
  %v2461 = vunpack.i.h.s16 %v2417
  %v2462 = vunpack.i.l.s16 %v2421
  %v2463 = vunpack.i.h.s16 %v2421
  %v2464 = vunpack.i.l.s16 %v2424
  %v2465 = vpack.i.b16 %v2426, %v2425
  %v2466 = vpack.i.b16 %v2428, %v2427
  %v2467 = vpack.i.b16 %v2430, %v2429
  %v2468 = vpack.i.b16 %v2432, %v2431
  %v2469 = vpack.i.b16 %v2434, %v2433
  %v2470 = vpack.i.b16 %v2436, %v2435
  %v2471 = vpack.i.b16 %v2438, %v2437
  %v2472 = vpack.i.b16 %v2440, %v2439
  %v2473 = vpack.i.b16 %v2442, %v2441
  %v2474 = vpack.i.b16 %v2444, %v2443
  %v2475 = vpack.i.b16 %v2446, %v2445
  %v2476 = vpack.i.b16 %v2448, %v2447
  %v2477 = vpack.i.b16 %v2450, %v2449
  %v2478 = vpack.i.b16 %v2452, %v2451
  %v2479 = vpack.i.b16 %v2454, %v2453
  %v2480 = vpack.i.b16 %v2456, %v2455
  %v2481 = vpack.i.b16 %v2458, %v2457
  %v2482 = vpack.i.b16 %v2460, %v2459
  %v2483 = vpack.i.b16 %v2462, %v2461
  %v2484 = vpack.i.b16 %v2464, %v2463
  %2486 = vst [vmem:[#allocation1] ss:$9 sm:$0xff] %v2465
  %s2488 = scalar_lea.vmem [#allocation1], 1
  %2489 = vst [vmem:[%s2488] ss:$9 sm:$0xff] %v2466
  %s2491 = scalar_lea.vmem [#allocation1], 2
  %2492 = vst [vmem:[%s2491] ss:$9 sm:$0xff] %v2467
  %s2494 = scalar_lea.vmem [#allocation1], 3
  %2495 = vst [vmem:[%s2494] ss:$9 sm:$0xff] %v2468
  %s2497 = scalar_lea.vmem [#allocation1], 4
  %2498 = vst [vmem:[%s2497] ss:$9 sm:$0xff] %v2469
  %s2500 = scalar_lea.vmem [#allocation1], 5
  %2501 = vst [vmem:[%s2500] ss:$9 sm:$0xff] %v2470
  %s2503 = scalar_lea.vmem [#allocation1], 6
  %2504 = vst [vmem:[%s2503] ss:$9 sm:$0xff] %v2471
  %s2506 = scalar_lea.vmem [#allocation1], 7
  %2507 = vst [vmem:[%s2506] ss:$9 sm:$0xff] %v2472
  %v2508 = vld [vmem:[#allocation1] sm:$0xff]
  %v2509 = vld [vmem:[#allocation1 + $0x9] sm:$0xff]
  %2511 = vst [vmem:[#allocation1] ss:$9 sm:$0xff] %v2473
  %2513 = vst [vmem:[%s2488] ss:$9 sm:$0xff] %v2474
  %2515 = vst [vmem:[%s2491] ss:$9 sm:$0xff] %v2475
  %2517 = vst [vmem:[%s2494] ss:$9 sm:$0xff] %v2476
  %2519 = vst [vmem:[%s2497] ss:$9 sm:$0xff] %v2477
  %2521 = vst [vmem:[%s2500] ss:$9 sm:$0xff] %v2478
  %2523 = vst [vmem:[%s2503] ss:$9 sm:$0xff] %v2479
  %2525 = vst [vmem:[%s2506] ss:$9 sm:$0xff] %v2480
  %v2526 = vld [vmem:[#allocation1] sm:$0xff]
  %v2527 = vld [vmem:[#allocation1 + $0x9] sm:$0xff]
  %2529 = vst [vmem:[#allocation1] ss:$9 sm:$0xff] %v2481
  %2531 = vst [vmem:[%s2488] ss:$9 sm:$0xff] %v2482
  %2533 = vst [vmem:[%s2491] ss:$9 sm:$0xff] %v2483
  %2535 = vst [vmem:[%s2494] ss:$9 sm:$0xff] %v2484
  %v2536 = vld [vmem:[#allocation1] sm:$0xff]
  %v2537 = vld [vmem:[#allocation1 + $0x9] sm:$0xff]
  %v2541 = vsel %vm1679, %v2509, 0
  %v2543 = vsel %vm1679, %v2527, 0
  %v2545 = vsel %vm1679, %v2537, 0
  %2547 = vmatpush.bf16.msra.mxu0 %v1666
  %2548 = vmatpush.bf16.msra.mxu0 %v1665
  %2549 = vmatpush.bf16.msra.mxu0 %v1664
  %2550 = vmatpush.bf16.msra.mxu0 %v1663
  %2551 = vmatpush.bf16.msra.mxu0 %v1662
  %2552 = vmatpush.bf16.msra.mxu0 %v1661
  %2553 = vmatpush.bf16.msra.mxu0 %v1660
  %2554 = vmatpush.bf16.msra.mxu0 %v1659
  %2555 = vmatmul.bf16.gmra.mxu0 %v2508
  %v2556 = vpop.f32.mrf.mxu0
  %v2557 = vadd.f32 0.0, %v2556
  %v2558 = vpop.f32.mrf.mxu0
  %v2559 = vadd.f32 0.0, %v2558
  %2560 = vmatmul.bf16.gmra.mxu0 %v2526
  %v2561 = vpop.f32.mrf.mxu0
  %v2562 = vadd.f32 0.0, %v2561
  %v2563 = vpop.f32.mrf.mxu0
  %v2564 = vadd.f32 0.0, %v2563
  %2565 = vmatmul.bf16.gmra.mxu0 %v2536
  %v2566 = vpop.f32.mrf.mxu0
  %v2567 = vadd.f32 0.0, %v2566
  %v2568 = vpop.f32.mrf.mxu0
  %2569 = vdwg.mxu0
  %2570 = vmatpush.bf16.msra.mxu0 0
  %2571 = vmatpush.bf16.msra.mxu0 0
  %2572 = vmatpush.bf16.msra.mxu0 0
  %2573 = vmatpush.bf16.msra.mxu0 0
  %2574 = vmatpush.bf16.msra.mxu0 0
  %2575 = vmatpush.bf16.msra.mxu0 0
  %2576 = vmatpush.bf16.msra.mxu0 %v1668
  %2577 = vmatpush.bf16.msra.mxu0 %v1667
  %2578 = vmatmul.bf16.gmra.mxu0 %v2541
  %v2579 = vpop.f32.mrf.mxu0
  %v2580 = vadd.f32 %v2557, %v2579
  %v2581 = vpop.f32.mrf.mxu0
  %v2582 = vadd.f32 %v2559, %v2581
  %2583 = vmatmul.bf16.gmra.mxu0 %v2543
  %v2584 = vpop.f32.mrf.mxu0
  %v2585 = vadd.f32 %v2562, %v2584
  %v2586 = vpop.f32.mrf.mxu0
  %v2587 = vadd.f32 %v2564, %v2586
  %2588 = vmatmul.bf16.gmra.mxu0 %v2545
  %v2589 = vpop.f32.mrf.mxu0
  %v2590 = vadd.f32 %v2567, %v2589
  %v2591 = vpop.f32.mrf.mxu0
  %2592 = vdwg.mxu0
  %v2593 = vmax.f32 %v2148, %v2580
  %v2594 = vmax.f32 %v2149, %v2582
  %v2595 = vmax.f32 %v2150, %v2585
  %v2596 = vmax.f32 %v2151, %v2587
  %v2597 = vmax.f32 %v2152, %v2590
  %2598 = vrot.lane.b32.xlu0 %v1066, 122
  %v2599 = vpop.permute.xlu0 %2598
  %2600 = vrot.lane.b32.xlu0 %v1067, 122
  %v2601 = vpop.permute.xlu0 %2600
  %2602 = vrot.lane.b32.xlu0 %v1068, 122
  %v2603 = vpop.permute.xlu0 %2602
  %2604 = vrot.lane.b32.xlu0 %v1069, 122
  %v2605 = vpop.permute.xlu0 %2604
  %2606 = vrot.lane.b32.xlu0 %v1070, 122
  %v2607 = vpop.permute.xlu0 %2606
  %2608 = vrot.lane.b32.xlu0 %v1071, 122
  %v2609 = vpop.permute.xlu0 %2608
  %2610 = vrot.lane.b32.xlu0 %v1072, 122
  %v2611 = vpop.permute.xlu0 %2610
  %2612 = vrot.lane.b32.xlu0 %v1073, 122
  %v2613 = vpop.permute.xlu0 %2612
  %2614 = vrot.lane.b32.xlu0 %v1120, 24
  %v2615 = vpop.permute.xlu0 %2614
  %2616 = vrot.lane.b32.xlu0 %v1127, 24
  %v2617 = vpop.permute.xlu0 %2616
  %2618 = vrot.lane.b32.xlu0 %v1134, 24
  %v2619 = vpop.permute.xlu0 %2618
  %2620 = vrot.lane.b32.xlu0 %v1141, 24
  %v2621 = vpop.permute.xlu0 %2620
  %2622 = vrot.lane.b32.xlu0 %v1148, 24
  %v2623 = vpop.permute.xlu0 %2622
  %2624 = vrot.lane.b32.xlu0 %v1155, 24
  %v2625 = vpop.permute.xlu0 %2624
  %2626 = vrot.lane.b32.xlu0 %v1162, 24
  %v2627 = vpop.permute.xlu0 %2626
  %2628 = vrot.lane.b32.xlu0 %v1169, 24
  %v2629 = vpop.permute.xlu0 %2628
  %2630 = vrot.lane.b32.xlu0 %v1192, 54
  %v2631 = vpop.permute.xlu0 %2630
  %2632 = vrot.lane.b32.xlu0 %v1199, 54
  %v2633 = vpop.permute.xlu0 %2632
  %2634 = vrot.lane.b32.xlu0 %v1206, 54
  %v2635 = vpop.permute.xlu0 %2634
  %2636 = vrot.lane.b32.xlu0 %v1213, 54
  %v2637 = vpop.permute.xlu0 %2636
  %2638 = vrot.lane.b32.xlu0 %v1220, 54
  %v2639 = vpop.permute.xlu0 %2638
  %2640 = vrot.lane.b32.xlu0 %v1227, 54
  %v2641 = vpop.permute.xlu0 %2640
  %2642 = vrot.lane.b32.xlu0 %v1234, 54
  %v2643 = vpop.permute.xlu0 %2642
  %2644 = vrot.lane.b32.xlu0 %v1241, 54
  %v2645 = vpop.permute.xlu0 %2644
  %2646 = vrot.lane.b32.xlu0 %v1282, 84
  %v2647 = vpop.permute.xlu0 %2646
  %2648 = vrot.lane.b32.xlu0 %v1283, 84
  %v2649 = vpop.permute.xlu0 %2648
  %2650 = vrot.lane.b32.xlu0 %v1284, 84
  %v2651 = vpop.permute.xlu0 %2650
  %2652 = vrot.lane.b32.xlu0 %v1285, 84
  %v2653 = vpop.permute.xlu0 %2652
  %2654 = vrot.lane.b32.xlu0 %v1286, 84
  %v2655 = vpop.permute.xlu0 %2654
  %2656 = vrot.lane.b32.xlu0 %v1287, 84
  %v2657 = vpop.permute.xlu0 %2656
  %2658 = vrot.lane.b32.xlu0 %v1288, 84
  %v2659 = vpop.permute.xlu0 %2658
  %2660 = vrot.lane.b32.xlu0 %v1289, 84
  %v2661 = vpop.permute.xlu0 %2660
  %2662 = vrot.lane.b32.xlu0 %v2233, 114
  %v2663 = vpop.permute.xlu0 %2662
  %2664 = vrot.lane.b32.xlu0 %v2234, 114
  %v2665 = vpop.permute.xlu0 %2664
  %2666 = vrot.lane.b32.xlu0 %v2235, 114
  %v2667 = vpop.permute.xlu0 %2666
  %2668 = vrot.lane.b32.xlu0 %v2236, 114
  %v2669 = vpop.permute.xlu0 %2668
  %2670 = vrot.lane.b32.xlu0 %v2237, 114
  %v2671 = vpop.permute.xlu0 %2670
  %2672 = vrot.lane.b32.xlu0 %v2238, 114
  %v2673 = vpop.permute.xlu0 %2672
  %2674 = vrot.lane.b32.xlu0 %v2239, 114
  %v2675 = vpop.permute.xlu0 %2674
  %2676 = vrot.lane.b32.xlu0 %v2240, 114
  %v2677 = vpop.permute.xlu0 %2676
  %v2680 = vsel %vm1306, %v2599, %v2615
  %v2683 = vsel %vm1306, %v2601, %v2617
  %v2686 = vsel %vm1306, %v2603, %v2619
  %v2689 = vsel %vm1306, %v2605, %v2621
  %v2692 = vsel %vm1306, %v2607, %v2623
  %v2695 = vsel %vm1306, %v2609, %v2625
  %v2698 = vsel %vm1306, %v2611, %v2627
  %v2701 = vsel %vm1306, %v2613, %v2629
  %v2703 = vsel %vm1331, %v2680, %v2631
  %v2705 = vsel %vm1331, %v2683, %v2633
  %v2707 = vsel %vm1331, %v2686, %v2635
  %v2709 = vsel %vm1331, %v2689, %v2637
  %v2711 = vsel %vm1331, %v2692, %v2639
  %v2713 = vsel %vm1331, %v2695, %v2641
  %v2715 = vsel %vm1331, %v2698, %v2643
  %v2717 = vsel %vm1331, %v2701, %v2645
  %v2719 = vsel %vm1348, %v2703, %v2647
  %v2721 = vsel %vm1348, %v2705, %v2649
  %v2723 = vsel %vm1348, %v2707, %v2651
  %v2725 = vsel %vm1348, %v2709, %v2653
  %v2727 = vsel %vm1348, %v2711, %v2655
  %v2729 = vsel %vm1348, %v2713, %v2657
  %v2731 = vsel %vm1348, %v2715, %v2659
  %v2733 = vsel %vm1348, %v2717, %v2661
  %v2735 = vsel %vm1365, %v2719, %v2663
  %v2737 = vsel %vm1365, %v2721, %v2665
  %v2739 = vsel %vm1365, %v2723, %v2667
  %v2741 = vsel %vm1365, %v2725, %v2669
  %v2743 = vsel %vm1365, %v2727, %v2671
  %v2745 = vsel %vm1365, %v2729, %v2673
  %v2747 = vsel %vm1365, %v2731, %v2675
  %v2749 = vsel %vm1365, %v2733, %v2677
  %v2750 = vsel %vm1382, %v2663, 0
  %v2751 = vsel %vm1382, %v2665, 0
  %v2752 = vsel %vm1382, %v2667, 0
  %v2753 = vsel %vm1382, %v2669, 0
  %v2754 = vsel %vm1382, %v2671, 0
  %v2755 = vsel %vm1382, %v2673, 0
  %v2756 = vsel %vm1382, %v2675, 0
  %v2757 = vsel %vm1382, %v2677, 0
  %v2766 = vrot.slane %v2750, 7
  %v2767 = vrot.slane %v2751, 7
  %v2768 = vrot.slane %v2752, 7
  %v2769 = vrot.slane %v2753, 7
  %v2770 = vrot.slane %v2754, 7
  %v2771 = vrot.slane %v2755, 7
  %v2772 = vrot.slane %v2756, 7
  %v2773 = vrot.slane %v2757, 7
  %v2775 = vsel %vm1408, %v2735, %v2766
  %v2777 = vsel %vm1412, %v2735, %v2766
  %v2779 = vrot.slane %v2777, 1
  %v2780 = vsel %vm1416, %v2735, %v2766
  %v2782 = vrot.slane %v2780, 2
  %v2784 = vsel %vm1408, %v2737, %v2767
  %v2786 = vsel %vm1412, %v2737, %v2767
  %v2788 = vrot.slane %v2786, 1
  %v2789 = vsel %vm1416, %v2737, %v2767
  %v2791 = vrot.slane %v2789, 2
  %v2793 = vsel %vm1408, %v2739, %v2768
  %v2795 = vsel %vm1412, %v2739, %v2768
  %v2797 = vrot.slane %v2795, 1
  %v2798 = vsel %vm1416, %v2739, %v2768
  %v2800 = vrot.slane %v2798, 2
  %v2802 = vsel %vm1408, %v2741, %v2769
  %v2804 = vsel %vm1412, %v2741, %v2769
  %v2806 = vrot.slane %v2804, 1
  %v2807 = vsel %vm1416, %v2741, %v2769
  %v2809 = vrot.slane %v2807, 2
  %v2811 = vsel %vm1408, %v2743, %v2770
  %v2813 = vsel %vm1412, %v2743, %v2770
  %v2815 = vrot.slane %v2813, 1
  %v2816 = vsel %vm1416, %v2743, %v2770
  %v2818 = vrot.slane %v2816, 2
  %v2820 = vsel %vm1408, %v2745, %v2771
  %v2822 = vsel %vm1412, %v2745, %v2771
  %v2824 = vrot.slane %v2822, 1
  %v2825 = vsel %vm1416, %v2745, %v2771
  %v2827 = vrot.slane %v2825, 2
  %v2829 = vsel %vm1408, %v2747, %v2772
  %v2831 = vsel %vm1412, %v2747, %v2772
  %v2833 = vrot.slane %v2831, 1
  %v2834 = vsel %vm1416, %v2747, %v2772
  %v2836 = vrot.slane %v2834, 2
  %v2838 = vsel %vm1408, %v2749, %v2773
  %v2840 = vsel %vm1412, %v2749, %v2773
  %v2842 = vrot.slane %v2840, 1
  %v2843 = vsel %vm1416, %v2749, %v2773
  %v2845 = vrot.slane %v2843, 2
  %v2846 = vunpack.i.l.s16 %v2775
  %v2847 = vunpack.i.h.s16 %v2775
  %v2848 = vunpack.i.l.s16 %v2779
  %v2849 = vunpack.i.h.s16 %v2779
  %v2850 = vunpack.i.l.s16 %v2782
  %v2851 = vunpack.i.l.s16 %v2784
  %v2852 = vunpack.i.h.s16 %v2784
  %v2853 = vunpack.i.l.s16 %v2788
  %v2854 = vunpack.i.h.s16 %v2788
  %v2855 = vunpack.i.l.s16 %v2791
  %v2856 = vunpack.i.l.s16 %v2793
  %v2857 = vunpack.i.h.s16 %v2793
  %v2858 = vunpack.i.l.s16 %v2797
  %v2859 = vunpack.i.h.s16 %v2797
  %v2860 = vunpack.i.l.s16 %v2800
  %v2861 = vunpack.i.l.s16 %v2802
  %v2862 = vunpack.i.h.s16 %v2802
  %v2863 = vunpack.i.l.s16 %v2806
  %v2864 = vunpack.i.h.s16 %v2806
  %v2865 = vunpack.i.l.s16 %v2809
  %v2866 = vunpack.i.l.s16 %v2811
  %v2867 = vunpack.i.h.s16 %v2811
  %v2868 = vunpack.i.l.s16 %v2815
  %v2869 = vunpack.i.h.s16 %v2815
  %v2870 = vunpack.i.l.s16 %v2818
  %v2871 = vunpack.i.l.s16 %v2820
  %v2872 = vunpack.i.h.s16 %v2820
  %v2873 = vunpack.i.l.s16 %v2824
  %v2874 = vunpack.i.h.s16 %v2824
  %v2875 = vunpack.i.l.s16 %v2827
  %v2876 = vunpack.i.l.s16 %v2829
  %v2877 = vunpack.i.h.s16 %v2829
  %v2878 = vunpack.i.l.s16 %v2833
  %v2879 = vunpack.i.h.s16 %v2833
  %v2880 = vunpack.i.l.s16 %v2836
  %v2881 = vunpack.i.l.s16 %v2838
  %v2882 = vunpack.i.h.s16 %v2838
  %v2883 = vunpack.i.l.s16 %v2842
  %v2884 = vunpack.i.h.s16 %v2842
  %v2885 = vunpack.i.l.s16 %v2845
  %v2886 = vpack.i.b16 %v2847, %v2846
  %v2887 = vpack.i.b16 %v2849, %v2848
  %v2888 = vpack.i.b16 %v2851, %v2850
  %v2889 = vpack.i.b16 %v2853, %v2852
  %v2890 = vpack.i.b16 %v2855, %v2854
  %v2891 = vpack.i.b16 %v2857, %v2856
  %v2892 = vpack.i.b16 %v2859, %v2858
  %v2893 = vpack.i.b16 %v2861, %v2860
  %v2894 = vpack.i.b16 %v2863, %v2862
  %v2895 = vpack.i.b16 %v2865, %v2864
  %v2896 = vpack.i.b16 %v2867, %v2866
  %v2897 = vpack.i.b16 %v2869, %v2868
  %v2898 = vpack.i.b16 %v2871, %v2870
  %v2899 = vpack.i.b16 %v2873, %v2872
  %v2900 = vpack.i.b16 %v2875, %v2874
  %v2901 = vpack.i.b16 %v2877, %v2876
  %v2902 = vpack.i.b16 %v2879, %v2878
  %v2903 = vpack.i.b16 %v2881, %v2880
  %v2904 = vpack.i.b16 %v2883, %v2882
  %v2905 = vpack.i.b16 %v2885, %v2884
  %2907 = vst [vmem:[#allocation1] ss:$9 sm:$0xff] %v2886
  %s2909 = scalar_lea.vmem [#allocation1], 1
  %2910 = vst [vmem:[%s2909] ss:$9 sm:$0xff] %v2887
  %s2912 = scalar_lea.vmem [#allocation1], 2
  %2913 = vst [vmem:[%s2912] ss:$9 sm:$0xff] %v2888
  %s2915 = scalar_lea.vmem [#allocation1], 3
  %2916 = vst [vmem:[%s2915] ss:$9 sm:$0xff] %v2889
  %s2918 = scalar_lea.vmem [#allocation1], 4
  %2919 = vst [vmem:[%s2918] ss:$9 sm:$0xff] %v2890
  %s2921 = scalar_lea.vmem [#allocation1], 5
  %2922 = vst [vmem:[%s2921] ss:$9 sm:$0xff] %v2891
  %s2924 = scalar_lea.vmem [#allocation1], 6
  %2925 = vst [vmem:[%s2924] ss:$9 sm:$0xff] %v2892
  %s2927 = scalar_lea.vmem [#allocation1], 7
  %2928 = vst [vmem:[%s2927] ss:$9 sm:$0xff] %v2893
  %v2929 = vld [vmem:[#allocation1] sm:$0xff]
  %v2930 = vld [vmem:[#allocation1 + $0x9] sm:$0xff]
  %2932 = vst [vmem:[#allocation1] ss:$9 sm:$0xff] %v2894
  %2934 = vst [vmem:[%s2909] ss:$9 sm:$0xff] %v2895
  %2936 = vst [vmem:[%s2912] ss:$9 sm:$0xff] %v2896
  %2938 = vst [vmem:[%s2915] ss:$9 sm:$0xff] %v2897
  %2940 = vst [vmem:[%s2918] ss:$9 sm:$0xff] %v2898
  %2942 = vst [vmem:[%s2921] ss:$9 sm:$0xff] %v2899
  %2944 = vst [vmem:[%s2924] ss:$9 sm:$0xff] %v2900
  %2946 = vst [vmem:[%s2927] ss:$9 sm:$0xff] %v2901
  %v2947 = vld [vmem:[#allocation1] sm:$0xff]
  %v2948 = vld [vmem:[#allocation1 + $0x9] sm:$0xff]
  %2950 = vst [vmem:[#allocation1] ss:$9 sm:$0xff] %v2902
  %2952 = vst [vmem:[%s2909] ss:$9 sm:$0xff] %v2903
  %2954 = vst [vmem:[%s2912] ss:$9 sm:$0xff] %v2904
  %2956 = vst [vmem:[%s2915] ss:$9 sm:$0xff] %v2905
  %v2957 = vld [vmem:[#allocation1] sm:$0xff]
  %v2958 = vld [vmem:[#allocation1 + $0x9] sm:$0xff]
  %v2962 = vsel %vm1679, %v2930, 0
  %v2964 = vsel %vm1679, %v2948, 0
  %v2966 = vsel %vm1679, %v2958, 0
  %2968 = vmatpush.bf16.msra.mxu0 %v1666
  %2969 = vmatpush.bf16.msra.mxu0 %v1665
  %2970 = vmatpush.bf16.msra.mxu0 %v1664
  %2971 = vmatpush.bf16.msra.mxu0 %v1663
  %2972 = vmatpush.bf16.msra.mxu0 %v1662
  %2973 = vmatpush.bf16.msra.mxu0 %v1661
  %2974 = vmatpush.bf16.msra.mxu0 %v1660
  %2975 = vmatpush.bf16.msra.mxu0 %v1659
  %2976 = vmatmul.bf16.gmra.mxu0 %v2929
  %v2977 = vpop.f32.mrf.mxu0
  %v2978 = vadd.f32 0.0, %v2977
  %v2979 = vpop.f32.mrf.mxu0
  %v2980 = vadd.f32 0.0, %v2979
  %2981 = vmatmul.bf16.gmra.mxu0 %v2947
  %v2982 = vpop.f32.mrf.mxu0
  %v2983 = vadd.f32 0.0, %v2982
  %v2984 = vpop.f32.mrf.mxu0
  %v2985 = vadd.f32 0.0, %v2984
  %2986 = vmatmul.bf16.gmra.mxu0 %v2957
  %v2987 = vpop.f32.mrf.mxu0
  %v2988 = vadd.f32 0.0, %v2987
  %v2989 = vpop.f32.mrf.mxu0
  %2990 = vdwg.mxu0
  %2991 = vmatpush.bf16.msra.mxu0 0
  %2992 = vmatpush.bf16.msra.mxu0 0
  %2993 = vmatpush.bf16.msra.mxu0 0
  %2994 = vmatpush.bf16.msra.mxu0 0
  %2995 = vmatpush.bf16.msra.mxu0 0
  %2996 = vmatpush.bf16.msra.mxu0 0
  %2997 = vmatpush.bf16.msra.mxu0 %v1668
  %2998 = vmatpush.bf16.msra.mxu0 %v1667
  %2999 = vmatmul.bf16.gmra.mxu0 %v2962
  %v3000 = vpop.f32.mrf.mxu0
  %v3001 = vadd.f32 %v2978, %v3000
  %v3002 = vpop.f32.mrf.mxu0
  %v3003 = vadd.f32 %v2980, %v3002
  %3004 = vmatmul.bf16.gmra.mxu0 %v2964
  %v3005 = vpop.f32.mrf.mxu0
  %v3006 = vadd.f32 %v2983, %v3005
  %v3007 = vpop.f32.mrf.mxu0
  %v3008 = vadd.f32 %v2985, %v3007
  %3009 = vmatmul.bf16.gmra.mxu0 %v2966
  %v3010 = vpop.f32.mrf.mxu0
  %v3011 = vadd.f32 %v2988, %v3010
  %v3012 = vpop.f32.mrf.mxu0
  %3013 = vdwg.mxu0
  %v3014 = vmax.f32 %v2593, %v3001
  %v3015 = vmax.f32 %v2594, %v3003
  %v3016 = vmax.f32 %v2595, %v3006
  %v3017 = vmax.f32 %v2596, %v3008
  %v3018 = vmax.f32 %v2597, %v3011
  %v3019 = vld [vmem:[%s4] sm:$0x1]
  %v3021 = vperm.slane %v3019, 0
  %v3023 = vadd.f32 %v3014, %v3021
  %v3024 = vadd.f32 %v3015, %v3021
  %v3025 = vadd.f32 %v3016, %v3021
  %v3026 = vadd.f32 %v3017, %v3021
  %v3027 = vadd.f32 %v3018, %v3021
  %v3028 = vmax.f32 %v3023, 0.0
  %v3029 = vmax.f32 %v3024, 0.0
  %v3030 = vmax.f32 %v3025, 0.0
  %v3031 = vmax.f32 %v3026, 0.0
  %v3032 = vmax.f32 %v3027, 0.0
  %v3038 = vrot.slane %v3028, 1
  %v3039 = vrot.slane %v3028, 2
  %v3040 = vrot.slane %v3028, 3
  %v3041 = vrot.slane %v3028, 4
  %v3042 = vrot.slane %v3028, 5
  %v3043 = vrot.slane %v3028, 6
  %v3044 = vrot.slane %v3028, 7
  %v3045 = vrot.slane %v3029, 1
  %v3046 = vrot.slane %v3029, 2
  %v3047 = vrot.slane %v3029, 3
  %v3048 = vrot.slane %v3029, 4
  %v3049 = vrot.slane %v3029, 5
  %v3050 = vrot.slane %v3029, 6
  %v3051 = vrot.slane %v3029, 7
  %v3052 = vrot.slane %v3030, 1
  %v3053 = vrot.slane %v3030, 2
  %v3054 = vrot.slane %v3030, 3
  %v3055 = vrot.slane %v3030, 4
  %v3056 = vrot.slane %v3030, 5
  %v3057 = vrot.slane %v3030, 6
  %v3058 = vrot.slane %v3030, 7
  %v3059 = vrot.slane %v3031, 1
  %v3060 = vrot.slane %v3031, 2
  %v3061 = vrot.slane %v3031, 3
  %v3062 = vrot.slane %v3031, 4
  %v3063 = vrot.slane %v3031, 5
  %v3064 = vrot.slane %v3031, 6
  %v3065 = vrot.slane %v3031, 7
  %v3066 = vrot.slane %v3032, 1
  %v3067 = vrot.slane %v3032, 2
  %v3068 = vrot.slane %v3032, 3
  %v3069 = vrot.slane %v3032, 4
  %v3070 = vrot.slane %v3032, 5
  %v3071 = vrot.slane %v3032, 6
  %v3072 = vrot.slane %v3032, 7
  %3073 = vst [vmem:[#allocation1] ss:$9 sm:$0xff] %v3028
  %s3074 = scalar_lea.vmem [#allocation1], 1
  %3075 = vst [vmem:[%s3074] ss:$9 sm:$0xff] %v3038
  %s3076 = scalar_lea.vmem [#allocation1], 2
  %3077 = vst [vmem:[%s3076] ss:$9 sm:$0xff] %v3039
  %s3078 = scalar_lea.vmem [#allocation1], 3
  %3079 = vst [vmem:[%s3078] ss:$9 sm:$0xff] %v3040
  %s3080 = scalar_lea.vmem [#allocation1], 4
  %3081 = vst [vmem:[%s3080] ss:$9 sm:$0xff] %v3041
  %v3082 = vld [vmem:[#allocation1] sm:$0xff]
  %3083 = vst [vmem:[#allocation1] ss:$9 sm:$0xff] %v3042
  %3084 = vst [vmem:[%s3074] ss:$9 sm:$0xff] %v3043
  %3085 = vst [vmem:[%s3076] ss:$9 sm:$0xff] %v3044
  %3086 = vst [vmem:[%s3078] ss:$9 sm:$0xff] %v3029
  %3087 = vst [vmem:[%s3080] ss:$9 sm:$0xff] %v3045
  %v3088 = vld [vmem:[#allocation1] sm:$0xff]
  %3089 = vst [vmem:[#allocation1] ss:$9 sm:$0xff] %v3046
  %3090 = vst [vmem:[%s3074] ss:$9 sm:$0xff] %v3047
  %3091 = vst [vmem:[%s3076] ss:$9 sm:$0xff] %v3048
  %3092 = vst [vmem:[%s3078] ss:$9 sm:$0xff] %v3049
  %3093 = vst [vmem:[%s3080] ss:$9 sm:$0xff] %v3050
  %v3094 = vld [vmem:[#allocation1] sm:$0xff]
  %3095 = vst [vmem:[#allocation1] ss:$9 sm:$0xff] %v3051
  %3096 = vst [vmem:[%s3074] ss:$9 sm:$0xff] %v3030
  %3097 = vst [vmem:[%s3076] ss:$9 sm:$0xff] %v3052
  %3098 = vst [vmem:[%s3078] ss:$9 sm:$0xff] %v3053
  %3099 = vst [vmem:[%s3080] ss:$9 sm:$0xff] %v3054
  %v3100 = vld [vmem:[#allocation1] sm:$0xff]
  %3101 = vst [vmem:[#allocation1] ss:$9 sm:$0xff] %v3055
  %3102 = vst [vmem:[%s3074] ss:$9 sm:$0xff] %v3056
  %3103 = vst [vmem:[%s3076] ss:$9 sm:$0xff] %v3057
  %3104 = vst [vmem:[%s3078] ss:$9 sm:$0xff] %v3058
  %3105 = vst [vmem:[%s3080] ss:$9 sm:$0xff] %v3031
  %v3106 = vld [vmem:[#allocation1] sm:$0xff]
  %3107 = vst [vmem:[#allocation1] ss:$9 sm:$0xff] %v3059
  %3108 = vst [vmem:[%s3074] ss:$9 sm:$0xff] %v3060
  %3109 = vst [vmem:[%s3076] ss:$9 sm:$0xff] %v3061
  %3110 = vst [vmem:[%s3078] ss:$9 sm:$0xff] %v3062
  %3111 = vst [vmem:[%s3080] ss:$9 sm:$0xff] %v3063
  %v3112 = vld [vmem:[#allocation1] sm:$0xff]
  %3113 = vst [vmem:[#allocation1] ss:$9 sm:$0xff] %v3064
  %3114 = vst [vmem:[%s3074] ss:$9 sm:$0xff] %v3065
  %3115 = vst [vmem:[%s3076] ss:$9 sm:$0xff] %v3032
  %3116 = vst [vmem:[%s3078] ss:$9 sm:$0xff] %v3066
  %3117 = vst [vmem:[%s3080] ss:$9 sm:$0xff] %v3067
  %v3118 = vld [vmem:[#allocation1] sm:$0xff]
  %3119 = vst [vmem:[#allocation1] ss:$9 sm:$0xff] %v3068
  %3120 = vst [vmem:[%s3074] ss:$9 sm:$0xff] %v3069
  %3121 = vst [vmem:[%s3076] ss:$9 sm:$0xff] %v3070
  %3122 = vst [vmem:[%s3078] ss:$9 sm:$0xff] %v3071
  %3123 = vst [vmem:[%s3080] ss:$9 sm:$0xff] %v3072
  %v3124 = vld [vmem:[#allocation1] sm:$0xff]
  %v3133 = vpack.c.bf16 %v3082, %v3082
  %v3134 = vpack.c.bf16 %v3088, %v3088
  %v3135 = vpack.c.bf16 %v3094, %v3094
  %v3136 = vpack.c.bf16 %v3100, %v3100
  %v3137 = vpack.c.bf16 %v3106, %v3106
  %v3138 = vpack.c.bf16 %v3112, %v3112
  %v3139 = vpack.c.bf16 %v3118, %v3118
  %v3140 = vpack.c.bf16 %v3124, %v3124
  %3141 = vrot.lane.b32.xlu0 %v1106, 116
  %v3142 = vpop.permute.xlu0 %3141
  %3143 = vrot.lane.b32.xlu0 %v1107, 116
  %v3144 = vpop.permute.xlu0 %3143
  %3145 = vrot.lane.b32.xlu0 %v1108, 116
  %v3146 = vpop.permute.xlu0 %3145
  %3147 = vrot.lane.b32.xlu0 %v1109, 116
  %v3148 = vpop.permute.xlu0 %3147
  %3149 = vrot.lane.b32.xlu0 %v1110, 116
  %v3150 = vpop.permute.xlu0 %3149
  %3151 = vrot.lane.b32.xlu0 %v1111, 116
  %v3152 = vpop.permute.xlu0 %3151
  %3153 = vrot.lane.b32.xlu0 %v1112, 116
  %v3154 = vpop.permute.xlu0 %3153
  %3155 = vrot.lane.b32.xlu0 %v1113, 116
  %v3156 = vpop.permute.xlu0 %3155
  %3157 = vrot.lane.b32.xlu0 %v1066, 18
  %v3158 = vpop.permute.xlu0 %3157
  %3159 = vrot.lane.b32.xlu0 %v1067, 18
  %v3160 = vpop.permute.xlu0 %3159
  %3161 = vrot.lane.b32.xlu0 %v1068, 18
  %v3162 = vpop.permute.xlu0 %3161
  %3163 = vrot.lane.b32.xlu0 %v1069, 18
  %v3164 = vpop.permute.xlu0 %3163
  %3165 = vrot.lane.b32.xlu0 %v1070, 18
  %v3166 = vpop.permute.xlu0 %3165
  %3167 = vrot.lane.b32.xlu0 %v1071, 18
  %v3168 = vpop.permute.xlu0 %3167
  %3169 = vrot.lane.b32.xlu0 %v1072, 18
  %v3170 = vpop.permute.xlu0 %3169
  %3171 = vrot.lane.b32.xlu0 %v1073, 18
  %v3172 = vpop.permute.xlu0 %3171
  %3173 = vrot.lane.b32.xlu0 %v1120, 48
  %v3174 = vpop.permute.xlu0 %3173
  %3175 = vrot.lane.b32.xlu0 %v1127, 48
  %v3176 = vpop.permute.xlu0 %3175
  %3177 = vrot.lane.b32.xlu0 %v1134, 48
  %v3178 = vpop.permute.xlu0 %3177
  %3179 = vrot.lane.b32.xlu0 %v1141, 48
  %v3180 = vpop.permute.xlu0 %3179
  %3181 = vrot.lane.b32.xlu0 %v1148, 48
  %v3182 = vpop.permute.xlu0 %3181
  %3183 = vrot.lane.b32.xlu0 %v1155, 48
  %v3184 = vpop.permute.xlu0 %3183
  %3185 = vrot.lane.b32.xlu0 %v1162, 48
  %v3186 = vpop.permute.xlu0 %3185
  %3187 = vrot.lane.b32.xlu0 %v1169, 48
  %v3188 = vpop.permute.xlu0 %3187
  %3189 = vrot.lane.b32.xlu0 %v1192, 78
  %v3190 = vpop.permute.xlu0 %3189
  %3191 = vrot.lane.b32.xlu0 %v1199, 78
  %v3192 = vpop.permute.xlu0 %3191
  %3193 = vrot.lane.b32.xlu0 %v1206, 78
  %v3194 = vpop.permute.xlu0 %3193
  %3195 = vrot.lane.b32.xlu0 %v1213, 78
  %v3196 = vpop.permute.xlu0 %3195
  %3197 = vrot.lane.b32.xlu0 %v1220, 78
  %v3198 = vpop.permute.xlu0 %3197
  %3199 = vrot.lane.b32.xlu0 %v1227, 78
  %v3200 = vpop.permute.xlu0 %3199
  %3201 = vrot.lane.b32.xlu0 %v1234, 78
  %v3202 = vpop.permute.xlu0 %3201
  %3203 = vrot.lane.b32.xlu0 %v1241, 78
  %v3204 = vpop.permute.xlu0 %3203
  %3205 = vrot.lane.b32.xlu0 %v1282, 108
  %v3206 = vpop.permute.xlu0 %3205
  %3207 = vrot.lane.b32.xlu0 %v1283, 108
  %v3208 = vpop.permute.xlu0 %3207
  %3209 = vrot.lane.b32.xlu0 %v1284, 108
  %v3210 = vpop.permute.xlu0 %3209
  %3211 = vrot.lane.b32.xlu0 %v1285, 108
  %v3212 = vpop.permute.xlu0 %3211
  %3213 = vrot.lane.b32.xlu0 %v1286, 108
  %v3214 = vpop.permute.xlu0 %3213
  %3215 = vrot.lane.b32.xlu0 %v1287, 108
  %v3216 = vpop.permute.xlu0 %3215
  %3217 = vrot.lane.b32.xlu0 %v1288, 108
  %v3218 = vpop.permute.xlu0 %3217
  %3219 = vrot.lane.b32.xlu0 %v1289, 108
  %v3220 = vpop.permute.xlu0 %3219
  %v3223 = vsel %vm1306, %v3142, %v3158
  %v3226 = vsel %vm1306, %v3144, %v3160
  %v3229 = vsel %vm1306, %v3146, %v3162
  %v3232 = vsel %vm1306, %v3148, %v3164
  %v3235 = vsel %vm1306, %v3150, %v3166
  %v3238 = vsel %vm1306, %v3152, %v3168
  %v3241 = vsel %vm1306, %v3154, %v3170
  %v3244 = vsel %vm1306, %v3156, %v3172
  %v3246 = vsel %vm1331, %v3223, %v3174
  %v3248 = vsel %vm1331, %v3226, %v3176
  %v3250 = vsel %vm1331, %v3229, %v3178
  %v3252 = vsel %vm1331, %v3232, %v3180
  %v3254 = vsel %vm1331, %v3235, %v3182
  %v3256 = vsel %vm1331, %v3238, %v3184
  %v3258 = vsel %vm1331, %v3241, %v3186
  %v3260 = vsel %vm1331, %v3244, %v3188
  %v3262 = vsel %vm1348, %v3246, %v3190
  %v3264 = vsel %vm1348, %v3248, %v3192
  %v3266 = vsel %vm1348, %v3250, %v3194
  %v3268 = vsel %vm1348, %v3252, %v3196
  %v3270 = vsel %vm1348, %v3254, %v3198
  %v3272 = vsel %vm1348, %v3256, %v3200
  %v3274 = vsel %vm1348, %v3258, %v3202
  %v3276 = vsel %vm1348, %v3260, %v3204
  %v3278 = vsel %vm1365, %v3262, %v3206
  %v3280 = vsel %vm1365, %v3264, %v3208
  %v3282 = vsel %vm1365, %v3266, %v3210
  %v3284 = vsel %vm1365, %v3268, %v3212
  %v3286 = vsel %vm1365, %v3270, %v3214
  %v3288 = vsel %vm1365, %v3272, %v3216
  %v3290 = vsel %vm1365, %v3274, %v3218
  %v3292 = vsel %vm1365, %v3276, %v3220
  %v3293 = vsel %vm1382, %v3206, 0
  %v3294 = vsel %vm1382, %v3208, 0
  %v3295 = vsel %vm1382, %v3210, 0
  %v3296 = vsel %vm1382, %v3212, 0
  %v3297 = vsel %vm1382, %v3214, 0
  %v3298 = vsel %vm1382, %v3216, 0
  %v3299 = vsel %vm1382, %v3218, 0
  %v3300 = vsel %vm1382, %v3220, 0
  %v3309 = vrot.slane %v3293, 7
  %v3310 = vrot.slane %v3294, 7
  %v3311 = vrot.slane %v3295, 7
  %v3312 = vrot.slane %v3296, 7
  %v3313 = vrot.slane %v3297, 7
  %v3314 = vrot.slane %v3298, 7
  %v3315 = vrot.slane %v3299, 7
  %v3316 = vrot.slane %v3300, 7
  %v3318 = vsel %vm1408, %v3278, %v3309
  %v3320 = vsel %vm1412, %v3278, %v3309
  %v3322 = vrot.slane %v3320, 1
  %v3323 = vsel %vm1416, %v3278, %v3309
  %v3325 = vrot.slane %v3323, 2
  %v3327 = vsel %vm1408, %v3280, %v3310
  %v3329 = vsel %vm1412, %v3280, %v3310
  %v3331 = vrot.slane %v3329, 1
  %v3332 = vsel %vm1416, %v3280, %v3310
  %v3334 = vrot.slane %v3332, 2
  %v3336 = vsel %vm1408, %v3282, %v3311
  %v3338 = vsel %vm1412, %v3282, %v3311
  %v3340 = vrot.slane %v3338, 1
  %v3341 = vsel %vm1416, %v3282, %v3311
  %v3343 = vrot.slane %v3341, 2
  %v3345 = vsel %vm1408, %v3284, %v3312
  %v3347 = vsel %vm1412, %v3284, %v3312
  %v3349 = vrot.slane %v3347, 1
  %v3350 = vsel %vm1416, %v3284, %v3312
  %v3352 = vrot.slane %v3350, 2
  %v3354 = vsel %vm1408, %v3286, %v3313
  %v3356 = vsel %vm1412, %v3286, %v3313
  %v3358 = vrot.slane %v3356, 1
  %v3359 = vsel %vm1416, %v3286, %v3313
  %v3361 = vrot.slane %v3359, 2
  %v3363 = vsel %vm1408, %v3288, %v3314
  %v3365 = vsel %vm1412, %v3288, %v3314
  %v3367 = vrot.slane %v3365, 1
  %v3368 = vsel %vm1416, %v3288, %v3314
  %v3370 = vrot.slane %v3368, 2
  %v3372 = vsel %vm1408, %v3290, %v3315
  %v3374 = vsel %vm1412, %v3290, %v3315
  %v3376 = vrot.slane %v3374, 1
  %v3377 = vsel %vm1416, %v3290, %v3315
  %v3379 = vrot.slane %v3377, 2
  %v3381 = vsel %vm1408, %v3292, %v3316
  %v3383 = vsel %vm1412, %v3292, %v3316
  %v3385 = vrot.slane %v3383, 1
  %v3386 = vsel %vm1416, %v3292, %v3316
  %v3388 = vrot.slane %v3386, 2
  %v3389 = vunpack.i.l.s16 %v3318
  %v3390 = vunpack.i.h.s16 %v3318
  %v3391 = vunpack.i.l.s16 %v3322
  %v3392 = vunpack.i.h.s16 %v3322
  %v3393 = vunpack.i.l.s16 %v3325
  %v3394 = vunpack.i.l.s16 %v3327
  %v3395 = vunpack.i.h.s16 %v3327
  %v3396 = vunpack.i.l.s16 %v3331
  %v3397 = vunpack.i.h.s16 %v3331
  %v3398 = vunpack.i.l.s16 %v3334
  %v3399 = vunpack.i.l.s16 %v3336
  %v3400 = vunpack.i.h.s16 %v3336
  %v3401 = vunpack.i.l.s16 %v3340
  %v3402 = vunpack.i.h.s16 %v3340
  %v3403 = vunpack.i.l.s16 %v3343
  %v3404 = vunpack.i.l.s16 %v3345
  %v3405 = vunpack.i.h.s16 %v3345
  %v3406 = vunpack.i.l.s16 %v3349
  %v3407 = vunpack.i.h.s16 %v3349
  %v3408 = vunpack.i.l.s16 %v3352
  %v3409 = vunpack.i.l.s16 %v3354
  %v3410 = vunpack.i.h.s16 %v3354
  %v3411 = vunpack.i.l.s16 %v3358
  %v3412 = vunpack.i.h.s16 %v3358
  %v3413 = vunpack.i.l.s16 %v3361
  %v3414 = vunpack.i.l.s16 %v3363
  %v3415 = vunpack.i.h.s16 %v3363
  %v3416 = vunpack.i.l.s16 %v3367
  %v3417 = vunpack.i.h.s16 %v3367
  %v3418 = vunpack.i.l.s16 %v3370
  %v3419 = vunpack.i.l.s16 %v3372
  %v3420 = vunpack.i.h.s16 %v3372
  %v3421 = vunpack.i.l.s16 %v3376
  %v3422 = vunpack.i.h.s16 %v3376
  %v3423 = vunpack.i.l.s16 %v3379
  %v3424 = vunpack.i.l.s16 %v3381
  %v3425 = vunpack.i.h.s16 %v3381
  %v3426 = vunpack.i.l.s16 %v3385
  %v3427 = vunpack.i.h.s16 %v3385
  %v3428 = vunpack.i.l.s16 %v3388
  %v3429 = vpack.i.b16 %v3390, %v3389
  %v3430 = vpack.i.b16 %v3392, %v3391
  %v3431 = vpack.i.b16 %v3394, %v3393
  %v3432 = vpack.i.b16 %v3396, %v3395
  %v3433 = vpack.i.b16 %v3398, %v3397
  %v3434 = vpack.i.b16 %v3400, %v3399
  %v3435 = vpack.i.b16 %v3402, %v3401
  %v3436 = vpack.i.b16 %v3404, %v3403
  %v3437 = vpack.i.b16 %v3406, %v3405
  %v3438 = vpack.i.b16 %v3408, %v3407
  %v3439 = vpack.i.b16 %v3410, %v3409
  %v3440 = vpack.i.b16 %v3412, %v3411
  %v3441 = vpack.i.b16 %v3414, %v3413
  %v3442 = vpack.i.b16 %v3416, %v3415
  %v3443 = vpack.i.b16 %v3418, %v3417
  %v3444 = vpack.i.b16 %v3420, %v3419
  %v3445 = vpack.i.b16 %v3422, %v3421
  %v3446 = vpack.i.b16 %v3424, %v3423
  %v3447 = vpack.i.b16 %v3426, %v3425
  %v3448 = vpack.i.b16 %v3428, %v3427
  %3450 = vst [vmem:[#allocation1] ss:$9 sm:$0xff] %v3429
  %s3452 = scalar_lea.vmem [#allocation1], 1
  %3453 = vst [vmem:[%s3452] ss:$9 sm:$0xff] %v3430
  %s3455 = scalar_lea.vmem [#allocation1], 2
  %3456 = vst [vmem:[%s3455] ss:$9 sm:$0xff] %v3431
  %s3458 = scalar_lea.vmem [#allocation1], 3
  %3459 = vst [vmem:[%s3458] ss:$9 sm:$0xff] %v3432
  %s3461 = scalar_lea.vmem [#allocation1], 4
  %3462 = vst [vmem:[%s3461] ss:$9 sm:$0xff] %v3433
  %s3464 = scalar_lea.vmem [#allocation1], 5
  %3465 = vst [vmem:[%s3464] ss:$9 sm:$0xff] %v3434
  %s3467 = scalar_lea.vmem [#allocation1], 6
  %3468 = vst [vmem:[%s3467] ss:$9 sm:$0xff] %v3435
  %s3470 = scalar_lea.vmem [#allocation1], 7
  %3471 = vst [vmem:[%s3470] ss:$9 sm:$0xff] %v3436
  %v3472 = vld [vmem:[#allocation1] sm:$0xff]
  %v3473 = vld [vmem:[#allocation1 + $0x9] sm:$0xff]
  %3475 = vst [vmem:[#allocation1] ss:$9 sm:$0xff] %v3437
  %3477 = vst [vmem:[%s3452] ss:$9 sm:$0xff] %v3438
  %3479 = vst [vmem:[%s3455] ss:$9 sm:$0xff] %v3439
  %3481 = vst [vmem:[%s3458] ss:$9 sm:$0xff] %v3440
  %3483 = vst [vmem:[%s3461] ss:$9 sm:$0xff] %v3441
  %3485 = vst [vmem:[%s3464] ss:$9 sm:$0xff] %v3442
  %3487 = vst [vmem:[%s3467] ss:$9 sm:$0xff] %v3443
  %3489 = vst [vmem:[%s3470] ss:$9 sm:$0xff] %v3444
  %v3490 = vld [vmem:[#allocation1] sm:$0xff]
  %v3491 = vld [vmem:[#allocation1 + $0x9] sm:$0xff]
  %3493 = vst [vmem:[#allocation1] ss:$9 sm:$0xff] %v3445
  %3495 = vst [vmem:[%s3452] ss:$9 sm:$0xff] %v3446
  %3497 = vst [vmem:[%s3455] ss:$9 sm:$0xff] %v3447
  %3499 = vst [vmem:[%s3458] ss:$9 sm:$0xff] %v3448
  %v3500 = vld [vmem:[#allocation1] sm:$0xff]
  %v3501 = vld [vmem:[#allocation1 + $0x9] sm:$0xff]
  %v3505 = vsel %vm1679, %v3473, 0
  %v3507 = vsel %vm1679, %v3491, 0
  %v3509 = vsel %vm1679, %v3501, 0
  %3511 = vmatpush.bf16.msra.mxu0 %v1666
  %3512 = vmatpush.bf16.msra.mxu0 %v1665
  %3513 = vmatpush.bf16.msra.mxu0 %v1664
  %3514 = vmatpush.bf16.msra.mxu0 %v1663
  %3515 = vmatpush.bf16.msra.mxu0 %v1662
  %3516 = vmatpush.bf16.msra.mxu0 %v1661
  %3517 = vmatpush.bf16.msra.mxu0 %v1660
  %3518 = vmatpush.bf16.msra.mxu0 %v1659
  %3519 = vmatmul.bf16.gmra.mxu0 %v3472
  %v3520 = vpop.f32.mrf.mxu0
  %v3521 = vadd.f32 0.0, %v3520
  %v3522 = vpop.f32.mrf.mxu0
  %v3523 = vadd.f32 0.0, %v3522
  %3524 = vmatmul.bf16.gmra.mxu0 %v3490
  %v3525 = vpop.f32.mrf.mxu0
  %v3526 = vadd.f32 0.0, %v3525
  %v3527 = vpop.f32.mrf.mxu0
  %v3528 = vadd.f32 0.0, %v3527
  %3529 = vmatmul.bf16.gmra.mxu0 %v3500
  %v3530 = vpop.f32.mrf.mxu0
  %v3531 = vadd.f32 0.0, %v3530
  %v3532 = vpop.f32.mrf.mxu0
  %3533 = vdwg.mxu0
  %3534 = vmatpush.bf16.msra.mxu0 0
  %3535 = vmatpush.bf16.msra.mxu0 0
  %3536 = vmatpush.bf16.msra.mxu0 0
  %3537 = vmatpush.bf16.msra.mxu0 0
  %3538 = vmatpush.bf16.msra.mxu0 0
  %3539 = vmatpush.bf16.msra.mxu0 0
  %3540 = vmatpush.bf16.msra.mxu0 %v1668
  %3541 = vmatpush.bf16.msra.mxu0 %v1667
  %3542 = vmatmul.bf16.gmra.mxu0 %v3505
  %v3543 = vpop.f32.mrf.mxu0
  %v3544 = vadd.f32 %v3521, %v3543
  %v3545 = vpop.f32.mrf.mxu0
  %v3546 = vadd.f32 %v3523, %v3545
  %3547 = vmatmul.bf16.gmra.mxu0 %v3507
  %v3548 = vpop.f32.mrf.mxu0
  %v3549 = vadd.f32 %v3526, %v3548
  %v3550 = vpop.f32.mrf.mxu0
  %v3551 = vadd.f32 %v3528, %v3550
  %3552 = vmatmul.bf16.gmra.mxu0 %v3509
  %v3553 = vpop.f32.mrf.mxu0
  %v3554 = vadd.f32 %v3531, %v3553
  %v3555 = vpop.f32.mrf.mxu0
  %3556 = vdwg.mxu0
  %3557 = vrot.lane.b32.xlu0 %v1106, 110
  %v3558 = vpop.permute.xlu0 %3557
  %3559 = vrot.lane.b32.xlu0 %v1107, 110
  %v3560 = vpop.permute.xlu0 %3559
  %3561 = vrot.lane.b32.xlu0 %v1108, 110
  %v3562 = vpop.permute.xlu0 %3561
  %3563 = vrot.lane.b32.xlu0 %v1109, 110
  %v3564 = vpop.permute.xlu0 %3563
  %3565 = vrot.lane.b32.xlu0 %v1110, 110
  %v3566 = vpop.permute.xlu0 %3565
  %3567 = vrot.lane.b32.xlu0 %v1111, 110
  %v3568 = vpop.permute.xlu0 %3567
  %3569 = vrot.lane.b32.xlu0 %v1112, 110
  %v3570 = vpop.permute.xlu0 %3569
  %3571 = vrot.lane.b32.xlu0 %v1113, 110
  %v3572 = vpop.permute.xlu0 %3571
  %3573 = vrot.lane.b32.xlu0 %v1066, 12
  %v3574 = vpop.permute.xlu0 %3573
  %3575 = vrot.lane.b32.xlu0 %v1067, 12
  %v3576 = vpop.permute.xlu0 %3575
  %3577 = vrot.lane.b32.xlu0 %v1068, 12
  %v3578 = vpop.permute.xlu0 %3577
  %3579 = vrot.lane.b32.xlu0 %v1069, 12
  %v3580 = vpop.permute.xlu0 %3579
  %3581 = vrot.lane.b32.xlu0 %v1070, 12
  %v3582 = vpop.permute.xlu0 %3581
  %3583 = vrot.lane.b32.xlu0 %v1071, 12
  %v3584 = vpop.permute.xlu0 %3583
  %3585 = vrot.lane.b32.xlu0 %v1072, 12
  %v3586 = vpop.permute.xlu0 %3585
  %3587 = vrot.lane.b32.xlu0 %v1073, 12
  %v3588 = vpop.permute.xlu0 %3587
  %3589 = vrot.lane.b32.xlu0 %v1120, 42
  %v3590 = vpop.permute.xlu0 %3589
  %3591 = vrot.lane.b32.xlu0 %v1127, 42
  %v3592 = vpop.permute.xlu0 %3591
  %3593 = vrot.lane.b32.xlu0 %v1134, 42
  %v3594 = vpop.permute.xlu0 %3593
  %3595 = vrot.lane.b32.xlu0 %v1141, 42
  %v3596 = vpop.permute.xlu0 %3595
  %3597 = vrot.lane.b32.xlu0 %v1148, 42
  %v3598 = vpop.permute.xlu0 %3597
  %3599 = vrot.lane.b32.xlu0 %v1155, 42
  %v3600 = vpop.permute.xlu0 %3599
  %3601 = vrot.lane.b32.xlu0 %v1162, 42
  %v3602 = vpop.permute.xlu0 %3601
  %3603 = vrot.lane.b32.xlu0 %v1169, 42
  %v3604 = vpop.permute.xlu0 %3603
  %3605 = vrot.lane.b32.xlu0 %v1192, 72
  %v3606 = vpop.permute.xlu0 %3605
  %3607 = vrot.lane.b32.xlu0 %v1199, 72
  %v3608 = vpop.permute.xlu0 %3607
  %3609 = vrot.lane.b32.xlu0 %v1206, 72
  %v3610 = vpop.permute.xlu0 %3609
  %3611 = vrot.lane.b32.xlu0 %v1213, 72
  %v3612 = vpop.permute.xlu0 %3611
  %3613 = vrot.lane.b32.xlu0 %v1220, 72
  %v3614 = vpop.permute.xlu0 %3613
  %3615 = vrot.lane.b32.xlu0 %v1227, 72
  %v3616 = vpop.permute.xlu0 %3615
  %3617 = vrot.lane.b32.xlu0 %v1234, 72
  %v3618 = vpop.permute.xlu0 %3617
  %3619 = vrot.lane.b32.xlu0 %v1241, 72
  %v3620 = vpop.permute.xlu0 %3619
  %3621 = vrot.lane.b32.xlu0 %v1282, 102
  %v3622 = vpop.permute.xlu0 %3621
  %3623 = vrot.lane.b32.xlu0 %v1283, 102
  %v3624 = vpop.permute.xlu0 %3623
  %3625 = vrot.lane.b32.xlu0 %v1284, 102
  %v3626 = vpop.permute.xlu0 %3625
  %3627 = vrot.lane.b32.xlu0 %v1285, 102
  %v3628 = vpop.permute.xlu0 %3627
  %3629 = vrot.lane.b32.xlu0 %v1286, 102
  %v3630 = vpop.permute.xlu0 %3629
  %3631 = vrot.lane.b32.xlu0 %v1287, 102
  %v3632 = vpop.permute.xlu0 %3631
  %3633 = vrot.lane.b32.xlu0 %v1288, 102
  %v3634 = vpop.permute.xlu0 %3633
  %3635 = vrot.lane.b32.xlu0 %v1289, 102
  %v3636 = vpop.permute.xlu0 %3635
  %v3639 = vsel %vm1306, %v3558, %v3574
  %v3642 = vsel %vm1306, %v3560, %v3576
  %v3645 = vsel %vm1306, %v3562, %v3578
  %v3648 = vsel %vm1306, %v3564, %v3580
  %v3651 = vsel %vm1306, %v3566, %v3582
  %v3654 = vsel %vm1306, %v3568, %v3584
  %v3657 = vsel %vm1306, %v3570, %v3586
  %v3660 = vsel %vm1306, %v3572, %v3588
  %v3662 = vsel %vm1331, %v3639, %v3590
  %v3664 = vsel %vm1331, %v3642, %v3592
  %v3666 = vsel %vm1331, %v3645, %v3594
  %v3668 = vsel %vm1331, %v3648, %v3596
  %v3670 = vsel %vm1331, %v3651, %v3598
  %v3672 = vsel %vm1331, %v3654, %v3600
  %v3674 = vsel %vm1331, %v3657, %v3602
  %v3676 = vsel %vm1331, %v3660, %v3604
  %v3678 = vsel %vm1348, %v3662, %v3606
  %v3680 = vsel %vm1348, %v3664, %v3608
  %v3682 = vsel %vm1348, %v3666, %v3610
  %v3684 = vsel %vm1348, %v3668, %v3612
  %v3686 = vsel %vm1348, %v3670, %v3614
  %v3688 = vsel %vm1348, %v3672, %v3616
  %v3690 = vsel %vm1348, %v3674, %v3618
  %v3692 = vsel %vm1348, %v3676, %v3620
  %v3694 = vsel %vm1365, %v3678, %v3622
  %v3696 = vsel %vm1365, %v3680, %v3624
  %v3698 = vsel %vm1365, %v3682, %v3626
  %v3700 = vsel %vm1365, %v3684, %v3628
  %v3702 = vsel %vm1365, %v3686, %v3630
  %v3704 = vsel %vm1365, %v3688, %v3632
  %v3706 = vsel %vm1365, %v3690, %v3634
  %v3708 = vsel %vm1365, %v3692, %v3636
  %v3709 = vsel %vm1382, %v3622, 0
  %v3710 = vsel %vm1382, %v3624, 0
  %v3711 = vsel %vm1382, %v3626, 0
  %v3712 = vsel %vm1382, %v3628, 0
  %v3713 = vsel %vm1382, %v3630, 0
  %v3714 = vsel %vm1382, %v3632, 0
  %v3715 = vsel %vm1382, %v3634, 0
  %v3716 = vsel %vm1382, %v3636, 0
  %v3725 = vrot.slane %v3709, 7
  %v3726 = vrot.slane %v3710, 7
  %v3727 = vrot.slane %v3711, 7
  %v3728 = vrot.slane %v3712, 7
  %v3729 = vrot.slane %v3713, 7
  %v3730 = vrot.slane %v3714, 7
  %v3731 = vrot.slane %v3715, 7
  %v3732 = vrot.slane %v3716, 7
  %v3734 = vsel %vm1408, %v3694, %v3725
  %v3736 = vsel %vm1412, %v3694, %v3725
  %v3738 = vrot.slane %v3736, 1
  %v3739 = vsel %vm1416, %v3694, %v3725
  %v3741 = vrot.slane %v3739, 2
  %v3743 = vsel %vm1408, %v3696, %v3726
  %v3745 = vsel %vm1412, %v3696, %v3726
  %v3747 = vrot.slane %v3745, 1
  %v3748 = vsel %vm1416, %v3696, %v3726
  %v3750 = vrot.slane %v3748, 2
  %v3752 = vsel %vm1408, %v3698, %v3727
  %v3754 = vsel %vm1412, %v3698, %v3727
  %v3756 = vrot.slane %v3754, 1
  %v3757 = vsel %vm1416, %v3698, %v3727
  %v3759 = vrot.slane %v3757, 2
  %v3761 = vsel %vm1408, %v3700, %v3728
  %v3763 = vsel %vm1412, %v3700, %v3728
  %v3765 = vrot.slane %v3763, 1
  %v3766 = vsel %vm1416, %v3700, %v3728
  %v3768 = vrot.slane %v3766, 2
  %v3770 = vsel %vm1408, %v3702, %v3729
  %v3772 = vsel %vm1412, %v3702, %v3729
  %v3774 = vrot.slane %v3772, 1
  %v3775 = vsel %vm1416, %v3702, %v3729
  %v3777 = vrot.slane %v3775, 2
  %v3779 = vsel %vm1408, %v3704, %v3730
  %v3781 = vsel %vm1412, %v3704, %v3730
  %v3783 = vrot.slane %v3781, 1
  %v3784 = vsel %vm1416, %v3704, %v3730
  %v3786 = vrot.slane %v3784, 2
  %v3788 = vsel %vm1408, %v3706, %v3731
  %v3790 = vsel %vm1412, %v3706, %v3731
  %v3792 = vrot.slane %v3790, 1
  %v3793 = vsel %vm1416, %v3706, %v3731
  %v3795 = vrot.slane %v3793, 2
  %v3797 = vsel %vm1408, %v3708, %v3732
  %v3799 = vsel %vm1412, %v3708, %v3732
  %v3801 = vrot.slane %v3799, 1
  %v3802 = vsel %vm1416, %v3708, %v3732
  %v3804 = vrot.slane %v3802, 2
  %v3805 = vunpack.i.l.s16 %v3734
  %v3806 = vunpack.i.h.s16 %v3734
  %v3807 = vunpack.i.l.s16 %v3738
  %v3808 = vunpack.i.h.s16 %v3738
  %v3809 = vunpack.i.l.s16 %v3741
  %v3810 = vunpack.i.l.s16 %v3743
  %v3811 = vunpack.i.h.s16 %v3743
  %v3812 = vunpack.i.l.s16 %v3747
  %v3813 = vunpack.i.h.s16 %v3747
  %v3814 = vunpack.i.l.s16 %v3750
  %v3815 = vunpack.i.l.s16 %v3752
  %v3816 = vunpack.i.h.s16 %v3752
  %v3817 = vunpack.i.l.s16 %v3756
  %v3818 = vunpack.i.h.s16 %v3756
  %v3819 = vunpack.i.l.s16 %v3759
  %v3820 = vunpack.i.l.s16 %v3761
  %v3821 = vunpack.i.h.s16 %v3761
  %v3822 = vunpack.i.l.s16 %v3765
  %v3823 = vunpack.i.h.s16 %v3765
  %v3824 = vunpack.i.l.s16 %v3768
  %v3825 = vunpack.i.l.s16 %v3770
  %v3826 = vunpack.i.h.s16 %v3770
  %v3827 = vunpack.i.l.s16 %v3774
  %v3828 = vunpack.i.h.s16 %v3774
  %v3829 = vunpack.i.l.s16 %v3777
  %v3830 = vunpack.i.l.s16 %v3779
  %v3831 = vunpack.i.h.s16 %v3779
  %v3832 = vunpack.i.l.s16 %v3783
  %v3833 = vunpack.i.h.s16 %v3783
  %v3834 = vunpack.i.l.s16 %v3786
  %v3835 = vunpack.i.l.s16 %v3788
  %v3836 = vunpack.i.h.s16 %v3788
  %v3837 = vunpack.i.l.s16 %v3792
  %v3838 = vunpack.i.h.s16 %v3792
  %v3839 = vunpack.i.l.s16 %v3795
  %v3840 = vunpack.i.l.s16 %v3797
  %v3841 = vunpack.i.h.s16 %v3797
  %v3842 = vunpack.i.l.s16 %v3801
  %v3843 = vunpack.i.h.s16 %v3801
  %v3844 = vunpack.i.l.s16 %v3804
  %v3845 = vpack.i.b16 %v3806, %v3805
  %v3846 = vpack.i.b16 %v3808, %v3807
  %v3847 = vpack.i.b16 %v3810, %v3809
  %v3848 = vpack.i.b16 %v3812, %v3811
  %v3849 = vpack.i.b16 %v3814, %v3813
  %v3850 = vpack.i.b16 %v3816, %v3815
  %v3851 = vpack.i.b16 %v3818, %v3817
  %v3852 = vpack.i.b16 %v3820, %v3819
  %v3853 = vpack.i.b16 %v3822, %v3821
  %v3854 = vpack.i.b16 %v3824, %v3823
  %v3855 = vpack.i.b16 %v3826, %v3825
  %v3856 = vpack.i.b16 %v3828, %v3827
  %v3857 = vpack.i.b16 %v3830, %v3829
  %v3858 = vpack.i.b16 %v3832, %v3831
  %v3859 = vpack.i.b16 %v3834, %v3833
  %v3860 = vpack.i.b16 %v3836, %v3835
  %v3861 = vpack.i.b16 %v3838, %v3837
  %v3862 = vpack.i.b16 %v3840, %v3839
  %v3863 = vpack.i.b16 %v3842, %v3841
  %v3864 = vpack.i.b16 %v3844, %v3843
  %3866 = vst [vmem:[#allocation1] ss:$9 sm:$0xff] %v3845
  %s3868 = scalar_lea.vmem [#allocation1], 1
  %3869 = vst [vmem:[%s3868] ss:$9 sm:$0xff] %v3846
  %s3871 = scalar_lea.vmem [#allocation1], 2
  %3872 = vst [vmem:[%s3871] ss:$9 sm:$0xff] %v3847
  %s3874 = scalar_lea.vmem [#allocation1], 3
  %3875 = vst [vmem:[%s3874] ss:$9 sm:$0xff] %v3848
  %s3877 = scalar_lea.vmem [#allocation1], 4
  %3878 = vst [vmem:[%s3877] ss:$9 sm:$0xff] %v3849
  %s3880 = scalar_lea.vmem [#allocation1], 5
  %3881 = vst [vmem:[%s3880] ss:$9 sm:$0xff] %v3850
  %s3883 = scalar_lea.vmem [#allocation1], 6
  %3884 = vst [vmem:[%s3883] ss:$9 sm:$0xff] %v3851
  %s3886 = scalar_lea.vmem [#allocation1], 7
  %3887 = vst [vmem:[%s3886] ss:$9 sm:$0xff] %v3852
  %v3888 = vld [vmem:[#allocation1] sm:$0xff]
  %v3889 = vld [vmem:[#allocation1 + $0x9] sm:$0xff]
  %3891 = vst [vmem:[#allocation1] ss:$9 sm:$0xff] %v3853
  %3893 = vst [vmem:[%s3868] ss:$9 sm:$0xff] %v3854
  %3895 = vst [vmem:[%s3871] ss:$9 sm:$0xff] %v3855
  %3897 = vst [vmem:[%s3874] ss:$9 sm:$0xff] %v3856
  %3899 = vst [vmem:[%s3877] ss:$9 sm:$0xff] %v3857
  %3901 = vst [vmem:[%s3880] ss:$9 sm:$0xff] %v3858
  %3903 = vst [vmem:[%s3883] ss:$9 sm:$0xff] %v3859
  %3905 = vst [vmem:[%s3886] ss:$9 sm:$0xff] %v3860
  %v3906 = vld [vmem:[#allocation1] sm:$0xff]
  %v3907 = vld [vmem:[#allocation1 + $0x9] sm:$0xff]
  %3909 = vst [vmem:[#allocation1] ss:$9 sm:$0xff] %v3861
  %3911 = vst [vmem:[%s3868] ss:$9 sm:$0xff] %v3862
  %3913 = vst [vmem:[%s3871] ss:$9 sm:$0xff] %v3863
  %3915 = vst [vmem:[%s3874] ss:$9 sm:$0xff] %v3864
  %v3916 = vld [vmem:[#allocation1] sm:$0xff]
  %v3917 = vld [vmem:[#allocation1 + $0x9] sm:$0xff]
  %v3921 = vsel %vm1679, %v3889, 0
  %v3923 = vsel %vm1679, %v3907, 0
  %v3925 = vsel %vm1679, %v3917, 0
  %3927 = vmatpush.bf16.msra.mxu0 %v1666
  %3928 = vmatpush.bf16.msra.mxu0 %v1665
  %3929 = vmatpush.bf16.msra.mxu0 %v1664
  %3930 = vmatpush.bf16.msra.mxu0 %v1663
  %3931 = vmatpush.bf16.msra.mxu0 %v1662
  %3932 = vmatpush.bf16.msra.mxu0 %v1661
  %3933 = vmatpush.bf16.msra.mxu0 %v1660
  %3934 = vmatpush.bf16.msra.mxu0 %v1659
  %3935 = vmatmul.bf16.gmra.mxu0 %v3888
  %v3936 = vpop.f32.mrf.mxu0
  %v3937 = vadd.f32 0.0, %v3936
  %v3938 = vpop.f32.mrf.mxu0
  %v3939 = vadd.f32 0.0, %v3938
  %3940 = vmatmul.bf16.gmra.mxu0 %v3906
  %v3941 = vpop.f32.mrf.mxu0
  %v3942 = vadd.f32 0.0, %v3941
  %v3943 = vpop.f32.mrf.mxu0
  %v3944 = vadd.f32 0.0, %v3943
  %3945 = vmatmul.bf16.gmra.mxu0 %v3916
  %v3946 = vpop.f32.mrf.mxu0
  %v3947 = vadd.f32 0.0, %v3946
  %v3948 = vpop.f32.mrf.mxu0
  %3949 = vdwg.mxu0
  %3950 = vmatpush.bf16.msra.mxu0 0
  %3951 = vmatpush.bf16.msra.mxu0 0
  %3952 = vmatpush.bf16.msra.mxu0 0
  %3953 = vmatpush.bf16.msra.mxu0 0
  %3954 = vmatpush.bf16.msra.mxu0 0
  %3955 = vmatpush.bf16.msra.mxu0 0
  %3956 = vmatpush.bf16.msra.mxu0 %v1668
  %3957 = vmatpush.bf16.msra.mxu0 %v1667
  %3958 = vmatmul.bf16.gmra.mxu0 %v3921
  %v3959 = vpop.f32.mrf.mxu0
  %v3960 = vadd.f32 %v3937, %v3959
  %v3961 = vpop.f32.mrf.mxu0
  %v3962 = vadd.f32 %v3939, %v3961
  %3963 = vmatmul.bf16.gmra.mxu0 %v3923
  %v3964 = vpop.f32.mrf.mxu0
  %v3965 = vadd.f32 %v3942, %v3964
  %v3966 = vpop.f32.mrf.mxu0
  %v3967 = vadd.f32 %v3944, %v3966
  %3968 = vmatmul.bf16.gmra.mxu0 %v3925
  %v3969 = vpop.f32.mrf.mxu0
  %v3970 = vadd.f32 %v3947, %v3969
  %v3971 = vpop.f32.mrf.mxu0
  %3972 = vdwg.mxu0
  %v3973 = vmax.f32 %v3544, %v3960
  %v3974 = vmax.f32 %v3546, %v3962
  %v3975 = vmax.f32 %v3549, %v3965
  %v3976 = vmax.f32 %v3551, %v3967
  %v3977 = vmax.f32 %v3554, %v3970
  %3978 = vrot.lane.b32.xlu0 %v1066, 116
  %v3979 = vpop.permute.xlu0 %3978
  %3980 = vrot.lane.b32.xlu0 %v1067, 116
  %v3981 = vpop.permute.xlu0 %3980
  %3982 = vrot.lane.b32.xlu0 %v1068, 116
  %v3983 = vpop.permute.xlu0 %3982
  %3984 = vrot.lane.b32.xlu0 %v1069, 116
  %v3985 = vpop.permute.xlu0 %3984
  %3986 = vrot.lane.b32.xlu0 %v1070, 116
  %v3987 = vpop.permute.xlu0 %3986
  %3988 = vrot.lane.b32.xlu0 %v1071, 116
  %v3989 = vpop.permute.xlu0 %3988
  %3990 = vrot.lane.b32.xlu0 %v1072, 116
  %v3991 = vpop.permute.xlu0 %3990
  %3992 = vrot.lane.b32.xlu0 %v1073, 116
  %v3993 = vpop.permute.xlu0 %3992
  %3994 = vrot.lane.b32.xlu0 %v1120, 18
  %v3995 = vpop.permute.xlu0 %3994
  %3996 = vrot.lane.b32.xlu0 %v1127, 18
  %v3997 = vpop.permute.xlu0 %3996
  %3998 = vrot.lane.b32.xlu0 %v1134, 18
  %v3999 = vpop.permute.xlu0 %3998
  %4000 = vrot.lane.b32.xlu0 %v1141, 18
  %v4001 = vpop.permute.xlu0 %4000
  %4002 = vrot.lane.b32.xlu0 %v1148, 18
  %v4003 = vpop.permute.xlu0 %4002
  %4004 = vrot.lane.b32.xlu0 %v1155, 18
  %v4005 = vpop.permute.xlu0 %4004
  %4006 = vrot.lane.b32.xlu0 %v1162, 18
  %v4007 = vpop.permute.xlu0 %4006
  %4008 = vrot.lane.b32.xlu0 %v1169, 18
  %v4009 = vpop.permute.xlu0 %4008
  %4010 = vrot.lane.b32.xlu0 %v1192, 48
  %v4011 = vpop.permute.xlu0 %4010
  %4012 = vrot.lane.b32.xlu0 %v1199, 48
  %v4013 = vpop.permute.xlu0 %4012
  %4014 = vrot.lane.b32.xlu0 %v1206, 48
  %v4015 = vpop.permute.xlu0 %4014
  %4016 = vrot.lane.b32.xlu0 %v1213, 48
  %v4017 = vpop.permute.xlu0 %4016
  %4018 = vrot.lane.b32.xlu0 %v1220, 48
  %v4019 = vpop.permute.xlu0 %4018
  %4020 = vrot.lane.b32.xlu0 %v1227, 48
  %v4021 = vpop.permute.xlu0 %4020
  %4022 = vrot.lane.b32.xlu0 %v1234, 48
  %v4023 = vpop.permute.xlu0 %4022
  %4024 = vrot.lane.b32.xlu0 %v1241, 48
  %v4025 = vpop.permute.xlu0 %4024
  %4026 = vrot.lane.b32.xlu0 %v1282, 78
  %v4027 = vpop.permute.xlu0 %4026
  %4028 = vrot.lane.b32.xlu0 %v1283, 78
  %v4029 = vpop.permute.xlu0 %4028
  %4030 = vrot.lane.b32.xlu0 %v1284, 78
  %v4031 = vpop.permute.xlu0 %4030
  %4032 = vrot.lane.b32.xlu0 %v1285, 78
  %v4033 = vpop.permute.xlu0 %4032
  %4034 = vrot.lane.b32.xlu0 %v1286, 78
  %v4035 = vpop.permute.xlu0 %4034
  %4036 = vrot.lane.b32.xlu0 %v1287, 78
  %v4037 = vpop.permute.xlu0 %4036
  %4038 = vrot.lane.b32.xlu0 %v1288, 78
  %v4039 = vpop.permute.xlu0 %4038
  %4040 = vrot.lane.b32.xlu0 %v1289, 78
  %v4041 = vpop.permute.xlu0 %4040
  %4042 = vrot.lane.b32.xlu0 %v2233, 108
  %v4043 = vpop.permute.xlu0 %4042
  %4044 = vrot.lane.b32.xlu0 %v2234, 108
  %v4045 = vpop.permute.xlu0 %4044
  %4046 = vrot.lane.b32.xlu0 %v2235, 108
  %v4047 = vpop.permute.xlu0 %4046
  %4048 = vrot.lane.b32.xlu0 %v2236, 108
  %v4049 = vpop.permute.xlu0 %4048
  %4050 = vrot.lane.b32.xlu0 %v2237, 108
  %v4051 = vpop.permute.xlu0 %4050
  %4052 = vrot.lane.b32.xlu0 %v2238, 108
  %v4053 = vpop.permute.xlu0 %4052
  %4054 = vrot.lane.b32.xlu0 %v2239, 108
  %v4055 = vpop.permute.xlu0 %4054
  %4056 = vrot.lane.b32.xlu0 %v2240, 108
  %v4057 = vpop.permute.xlu0 %4056
  %v4060 = vsel %vm1306, %v3979, %v3995
  %v4063 = vsel %vm1306, %v3981, %v3997
  %v4066 = vsel %vm1306, %v3983, %v3999
  %v4069 = vsel %vm1306, %v3985, %v4001
  %v4072 = vsel %vm1306, %v3987, %v4003
  %v4075 = vsel %vm1306, %v3989, %v4005
  %v4078 = vsel %vm1306, %v3991, %v4007
  %v4081 = vsel %vm1306, %v3993, %v4009
  %v4083 = vsel %vm1331, %v4060, %v4011
  %v4085 = vsel %vm1331, %v4063, %v4013
  %v4087 = vsel %vm1331, %v4066, %v4015
  %v4089 = vsel %vm1331, %v4069, %v4017
  %v4091 = vsel %vm1331, %v4072, %v4019
  %v4093 = vsel %vm1331, %v4075, %v4021
  %v4095 = vsel %vm1331, %v4078, %v4023
  %v4097 = vsel %vm1331, %v4081, %v4025
  %v4099 = vsel %vm1348, %v4083, %v4027
  %v4101 = vsel %vm1348, %v4085, %v4029
  %v4103 = vsel %vm1348, %v4087, %v4031
  %v4105 = vsel %vm1348, %v4089, %v4033
  %v4107 = vsel %vm1348, %v4091, %v4035
  %v4109 = vsel %vm1348, %v4093, %v4037
  %v4111 = vsel %vm1348, %v4095, %v4039
  %v4113 = vsel %vm1348, %v4097, %v4041
  %v4115 = vsel %vm1365, %v4099, %v4043
  %v4117 = vsel %vm1365, %v4101, %v4045
  %v4119 = vsel %vm1365, %v4103, %v4047
  %v4121 = vsel %vm1365, %v4105, %v4049
  %v4123 = vsel %vm1365, %v4107, %v4051
  %v4125 = vsel %vm1365, %v4109, %v4053
  %v4127 = vsel %vm1365, %v4111, %v4055
  %v4129 = vsel %vm1365, %v4113, %v4057
  %v4130 = vsel %vm1382, %v4043, 0
  %v4131 = vsel %vm1382, %v4045, 0
  %v4132 = vsel %vm1382, %v4047, 0
  %v4133 = vsel %vm1382, %v4049, 0
  %v4134 = vsel %vm1382, %v4051, 0
  %v4135 = vsel %vm1382, %v4053, 0
  %v4136 = vsel %vm1382, %v4055, 0
  %v4137 = vsel %vm1382, %v4057, 0
  %v4146 = vrot.slane %v4130, 7
  %v4147 = vrot.slane %v4131, 7
  %v4148 = vrot.slane %v4132, 7
  %v4149 = vrot.slane %v4133, 7
  %v4150 = vrot.slane %v4134, 7
  %v4151 = vrot.slane %v4135, 7
  %v4152 = vrot.slane %v4136, 7
  %v4153 = vrot.slane %v4137, 7
  %v4155 = vsel %vm1408, %v4115, %v4146
  %v4157 = vsel %vm1412, %v4115, %v4146
  %v4159 = vrot.slane %v4157, 1
  %v4160 = vsel %vm1416, %v4115, %v4146
  %v4162 = vrot.slane %v4160, 2
  %v4164 = vsel %vm1408, %v4117, %v4147
  %v4166 = vsel %vm1412, %v4117, %v4147
  %v4168 = vrot.slane %v4166, 1
  %v4169 = vsel %vm1416, %v4117, %v4147
  %v4171 = vrot.slane %v4169, 2
  %v4173 = vsel %vm1408, %v4119, %v4148
  %v4175 = vsel %vm1412, %v4119, %v4148
  %v4177 = vrot.slane %v4175, 1
  %v4178 = vsel %vm1416, %v4119, %v4148
  %v4180 = vrot.slane %v4178, 2
  %v4182 = vsel %vm1408, %v4121, %v4149
  %v4184 = vsel %vm1412, %v4121, %v4149
  %v4186 = vrot.slane %v4184, 1
  %v4187 = vsel %vm1416, %v4121, %v4149
  %v4189 = vrot.slane %v4187, 2
  %v4191 = vsel %vm1408, %v4123, %v4150
  %v4193 = vsel %vm1412, %v4123, %v4150
  %v4195 = vrot.slane %v4193, 1
  %v4196 = vsel %vm1416, %v4123, %v4150
  %v4198 = vrot.slane %v4196, 2
  %v4200 = vsel %vm1408, %v4125, %v4151
  %v4202 = vsel %vm1412, %v4125, %v4151
  %v4204 = vrot.slane %v4202, 1
  %v4205 = vsel %vm1416, %v4125, %v4151
  %v4207 = vrot.slane %v4205, 2
  %v4209 = vsel %vm1408, %v4127, %v4152
  %v4211 = vsel %vm1412, %v4127, %v4152
  %v4213 = vrot.slane %v4211, 1
  %v4214 = vsel %vm1416, %v4127, %v4152
  %v4216 = vrot.slane %v4214, 2
  %v4218 = vsel %vm1408, %v4129, %v4153
  %v4220 = vsel %vm1412, %v4129, %v4153
  %v4222 = vrot.slane %v4220, 1
  %v4223 = vsel %vm1416, %v4129, %v4153
  %v4225 = vrot.slane %v4223, 2
  %v4226 = vunpack.i.l.s16 %v4155
  %v4227 = vunpack.i.h.s16 %v4155
  %v4228 = vunpack.i.l.s16 %v4159
  %v4229 = vunpack.i.h.s16 %v4159
  %v4230 = vunpack.i.l.s16 %v4162
  %v4231 = vunpack.i.l.s16 %v4164
  %v4232 = vunpack.i.h.s16 %v4164
  %v4233 = vunpack.i.l.s16 %v4168
  %v4234 = vunpack.i.h.s16 %v4168
  %v4235 = vunpack.i.l.s16 %v4171
  %v4236 = vunpack.i.l.s16 %v4173
  %v4237 = vunpack.i.h.s16 %v4173
  %v4238 = vunpack.i.l.s16 %v4177
  %v4239 = vunpack.i.h.s16 %v4177
  %v4240 = vunpack.i.l.s16 %v4180
  %v4241 = vunpack.i.l.s16 %v4182
  %v4242 = vunpack.i.h.s16 %v4182
  %v4243 = vunpack.i.l.s16 %v4186
  %v4244 = vunpack.i.h.s16 %v4186
  %v4245 = vunpack.i.l.s16 %v4189
  %v4246 = vunpack.i.l.s16 %v4191
  %v4247 = vunpack.i.h.s16 %v4191
  %v4248 = vunpack.i.l.s16 %v4195
  %v4249 = vunpack.i.h.s16 %v4195
  %v4250 = vunpack.i.l.s16 %v4198
  %v4251 = vunpack.i.l.s16 %v4200
  %v4252 = vunpack.i.h.s16 %v4200
  %v4253 = vunpack.i.l.s16 %v4204
  %v4254 = vunpack.i.h.s16 %v4204
  %v4255 = vunpack.i.l.s16 %v4207
  %v4256 = vunpack.i.l.s16 %v4209
  %v4257 = vunpack.i.h.s16 %v4209
  %v4258 = vunpack.i.l.s16 %v4213
  %v4259 = vunpack.i.h.s16 %v4213
  %v4260 = vunpack.i.l.s16 %v4216
  %v4261 = vunpack.i.l.s16 %v4218
  %v4262 = vunpack.i.h.s16 %v4218
  %v4263 = vunpack.i.l.s16 %v4222
  %v4264 = vunpack.i.h.s16 %v4222
  %v4265 = vunpack.i.l.s16 %v4225
  %v4266 = vpack.i.b16 %v4227, %v4226
  %v4267 = vpack.i.b16 %v4229, %v4228
  %v4268 = vpack.i.b16 %v4231, %v4230
  %v4269 = vpack.i.b16 %v4233, %v4232
  %v4270 = vpack.i.b16 %v4235, %v4234
  %v4271 = vpack.i.b16 %v4237, %v4236
  %v4272 = vpack.i.b16 %v4239, %v4238
  %v4273 = vpack.i.b16 %v4241, %v4240
  %v4274 = vpack.i.b16 %v4243, %v4242
  %v4275 = vpack.i.b16 %v4245, %v4244
  %v4276 = vpack.i.b16 %v4247, %v4246
  %v4277 = vpack.i.b16 %v4249, %v4248
  %v4278 = vpack.i.b16 %v4251, %v4250
  %v4279 = vpack.i.b16 %v4253, %v4252
  %v4280 = vpack.i.b16 %v4255, %v4254
  %v4281 = vpack.i.b16 %v4257, %v4256
  %v4282 = vpack.i.b16 %v4259, %v4258
  %v4283 = vpack.i.b16 %v4261, %v4260
  %v4284 = vpack.i.b16 %v4263, %v4262
  %v4285 = vpack.i.b16 %v4265, %v4264
  %4287 = vst [vmem:[#allocation1] ss:$9 sm:$0xff] %v4266
  %s4289 = scalar_lea.vmem [#allocation1], 1
  %4290 = vst [vmem:[%s4289] ss:$9 sm:$0xff] %v4267
  %s4292 = scalar_lea.vmem [#allocation1], 2
  %4293 = vst [vmem:[%s4292] ss:$9 sm:$0xff] %v4268
  %s4295 = scalar_lea.vmem [#allocation1], 3
  %4296 = vst [vmem:[%s4295] ss:$9 sm:$0xff] %v4269
  %s4298 = scalar_lea.vmem [#allocation1], 4
  %4299 = vst [vmem:[%s4298] ss:$9 sm:$0xff] %v4270
  %s4301 = scalar_lea.vmem [#allocation1], 5
  %4302 = vst [vmem:[%s4301] ss:$9 sm:$0xff] %v4271
  %s4304 = scalar_lea.vmem [#allocation1], 6
  %4305 = vst [vmem:[%s4304] ss:$9 sm:$0xff] %v4272
  %s4307 = scalar_lea.vmem [#allocation1], 7
  %4308 = vst [vmem:[%s4307] ss:$9 sm:$0xff] %v4273
  %v4309 = vld [vmem:[#allocation1] sm:$0xff]
  %v4310 = vld [vmem:[#allocation1 + $0x9] sm:$0xff]
  %4312 = vst [vmem:[#allocation1] ss:$9 sm:$0xff] %v4274
  %4314 = vst [vmem:[%s4289] ss:$9 sm:$0xff] %v4275
  %4316 = vst [vmem:[%s4292] ss:$9 sm:$0xff] %v4276
  %4318 = vst [vmem:[%s4295] ss:$9 sm:$0xff] %v4277
  %4320 = vst [vmem:[%s4298] ss:$9 sm:$0xff] %v4278
  %4322 = vst [vmem:[%s4301] ss:$9 sm:$0xff] %v4279
  %4324 = vst [vmem:[%s4304] ss:$9 sm:$0xff] %v4280
  %4326 = vst [vmem:[%s4307] ss:$9 sm:$0xff] %v4281
  %v4327 = vld [vmem:[#allocation1] sm:$0xff]
  %v4328 = vld [vmem:[#allocation1 + $0x9] sm:$0xff]
  %4330 = vst [vmem:[#allocation1] ss:$9 sm:$0xff] %v4282
  %4332 = vst [vmem:[%s4289] ss:$9 sm:$0xff] %v4283
  %4334 = vst [vmem:[%s4292] ss:$9 sm:$0xff] %v4284
  %4336 = vst [vmem:[%s4295] ss:$9 sm:$0xff] %v4285
  %v4337 = vld [vmem:[#allocation1] sm:$0xff]
  %v4338 = vld [vmem:[#allocation1 + $0x9] sm:$0xff]
  %v4342 = vsel %vm1679, %v4310, 0
  %v4344 = vsel %vm1679, %v4328, 0
  %v4346 = vsel %vm1679, %v4338, 0
  %4348 = vmatpush.bf16.msra.mxu0 %v1666
  %4349 = vmatpush.bf16.msra.mxu0 %v1665
  %4350 = vmatpush.bf16.msra.mxu0 %v1664
  %4351 = vmatpush.bf16.msra.mxu0 %v1663
  %4352 = vmatpush.bf16.msra.mxu0 %v1662
  %4353 = vmatpush.bf16.msra.mxu0 %v1661
  %4354 = vmatpush.bf16.msra.mxu0 %v1660
  %4355 = vmatpush.bf16.msra.mxu0 %v1659
  %4356 = vmatmul.bf16.gmra.mxu0 %v4309
  %v4357 = vpop.f32.mrf.mxu0
  %v4358 = vadd.f32 0.0, %v4357
  %v4359 = vpop.f32.mrf.mxu0
  %v4360 = vadd.f32 0.0, %v4359
  %4361 = vmatmul.bf16.gmra.mxu0 %v4327
  %v4362 = vpop.f32.mrf.mxu0
  %v4363 = vadd.f32 0.0, %v4362
  %v4364 = vpop.f32.mrf.mxu0
  %v4365 = vadd.f32 0.0, %v4364
  %4366 = vmatmul.bf16.gmra.mxu0 %v4337
  %v4367 = vpop.f32.mrf.mxu0
  %v4368 = vadd.f32 0.0, %v4367
  %v4369 = vpop.f32.mrf.mxu0
  %4370 = vdwg.mxu0
  %4371 = vmatpush.bf16.msra.mxu0 0
  %4372 = vmatpush.bf16.msra.mxu0 0
  %4373 = vmatpush.bf16.msra.mxu0 0
  %4374 = vmatpush.bf16.msra.mxu0 0
  %4375 = vmatpush.bf16.msra.mxu0 0
  %4376 = vmatpush.bf16.msra.mxu0 0
  %4377 = vmatpush.bf16.msra.mxu0 %v1668
  %4378 = vmatpush.bf16.msra.mxu0 %v1667
  %4379 = vmatmul.bf16.gmra.mxu0 %v4342
  %v4380 = vpop.f32.mrf.mxu0
  %v4381 = vadd.f32 %v4358, %v4380
  %v4382 = vpop.f32.mrf.mxu0
  %v4383 = vadd.f32 %v4360, %v4382
  %4384 = vmatmul.bf16.gmra.mxu0 %v4344
  %v4385 = vpop.f32.mrf.mxu0
  %v4386 = vadd.f32 %v4363, %v4385
  %v4387 = vpop.f32.mrf.mxu0
  %v4388 = vadd.f32 %v4365, %v4387
  %4389 = vmatmul.bf16.gmra.mxu0 %v4346
  %v4390 = vpop.f32.mrf.mxu0
  %v4391 = vadd.f32 %v4368, %v4390
  %v4392 = vpop.f32.mrf.mxu0
  %4393 = vdwg.mxu0
  %v4394 = vmax.f32 %v3973, %v4381
  %v4395 = vmax.f32 %v3974, %v4383
  %v4396 = vmax.f32 %v3975, %v4386
  %v4397 = vmax.f32 %v3976, %v4388
  %v4398 = vmax.f32 %v3977, %v4391
  %4399 = vrot.lane.b32.xlu0 %v1066, 110
  %v4400 = vpop.permute.xlu0 %4399
  %4401 = vrot.lane.b32.xlu0 %v1067, 110
  %v4402 = vpop.permute.xlu0 %4401
  %4403 = vrot.lane.b32.xlu0 %v1068, 110
  %v4404 = vpop.permute.xlu0 %4403
  %4405 = vrot.lane.b32.xlu0 %v1069, 110
  %v4406 = vpop.permute.xlu0 %4405
  %4407 = vrot.lane.b32.xlu0 %v1070, 110
  %v4408 = vpop.permute.xlu0 %4407
  %4409 = vrot.lane.b32.xlu0 %v1071, 110
  %v4410 = vpop.permute.xlu0 %4409
  %4411 = vrot.lane.b32.xlu0 %v1072, 110
  %v4412 = vpop.permute.xlu0 %4411
  %4413 = vrot.lane.b32.xlu0 %v1073, 110
  %v4414 = vpop.permute.xlu0 %4413
  %4415 = vrot.lane.b32.xlu0 %v1120, 12
  %v4416 = vpop.permute.xlu0 %4415
  %4417 = vrot.lane.b32.xlu0 %v1127, 12
  %v4418 = vpop.permute.xlu0 %4417
  %4419 = vrot.lane.b32.xlu0 %v1134, 12
  %v4420 = vpop.permute.xlu0 %4419
  %4421 = vrot.lane.b32.xlu0 %v1141, 12
  %v4422 = vpop.permute.xlu0 %4421
  %4423 = vrot.lane.b32.xlu0 %v1148, 12
  %v4424 = vpop.permute.xlu0 %4423
  %4425 = vrot.lane.b32.xlu0 %v1155, 12
  %v4426 = vpop.permute.xlu0 %4425
  %4427 = vrot.lane.b32.xlu0 %v1162, 12
  %v4428 = vpop.permute.xlu0 %4427
  %4429 = vrot.lane.b32.xlu0 %v1169, 12
  %v4430 = vpop.permute.xlu0 %4429
  %4431 = vrot.lane.b32.xlu0 %v1192, 42
  %v4432 = vpop.permute.xlu0 %4431
  %4433 = vrot.lane.b32.xlu0 %v1199, 42
  %v4434 = vpop.permute.xlu0 %4433
  %4435 = vrot.lane.b32.xlu0 %v1206, 42
  %v4436 = vpop.permute.xlu0 %4435
  %4437 = vrot.lane.b32.xlu0 %v1213, 42
  %v4438 = vpop.permute.xlu0 %4437
  %4439 = vrot.lane.b32.xlu0 %v1220, 42
  %v4440 = vpop.permute.xlu0 %4439
  %4441 = vrot.lane.b32.xlu0 %v1227, 42
  %v4442 = vpop.permute.xlu0 %4441
  %4443 = vrot.lane.b32.xlu0 %v1234, 42
  %v4444 = vpop.permute.xlu0 %4443
  %4445 = vrot.lane.b32.xlu0 %v1241, 42
  %v4446 = vpop.permute.xlu0 %4445
  %4447 = vrot.lane.b32.xlu0 %v1282, 72
  %v4448 = vpop.permute.xlu0 %4447
  %4449 = vrot.lane.b32.xlu0 %v1283, 72
  %v4450 = vpop.permute.xlu0 %4449
  %4451 = vrot.lane.b32.xlu0 %v1284, 72
  %v4452 = vpop.permute.xlu0 %4451
  %4453 = vrot.lane.b32.xlu0 %v1285, 72
  %v4454 = vpop.permute.xlu0 %4453
  %4455 = vrot.lane.b32.xlu0 %v1286, 72
  %v4456 = vpop.permute.xlu0 %4455
  %4457 = vrot.lane.b32.xlu0 %v1287, 72
  %v4458 = vpop.permute.xlu0 %4457
  %4459 = vrot.lane.b32.xlu0 %v1288, 72
  %v4460 = vpop.permute.xlu0 %4459
  %4461 = vrot.lane.b32.xlu0 %v1289, 72
  %v4462 = vpop.permute.xlu0 %4461
  %4463 = vrot.lane.b32.xlu0 %v2233, 102
  %v4464 = vpop.permute.xlu0 %4463
  %4465 = vrot.lane.b32.xlu0 %v2234, 102
  %v4466 = vpop.permute.xlu0 %4465
  %4467 = vrot.lane.b32.xlu0 %v2235, 102
  %v4468 = vpop.permute.xlu0 %4467
  %4469 = vrot.lane.b32.xlu0 %v2236, 102
  %v4470 = vpop.permute.xlu0 %4469
  %4471 = vrot.lane.b32.xlu0 %v2237, 102
  %v4472 = vpop.permute.xlu0 %4471
  %4473 = vrot.lane.b32.xlu0 %v2238, 102
  %v4474 = vpop.permute.xlu0 %4473
  %4475 = vrot.lane.b32.xlu0 %v2239, 102
  %v4476 = vpop.permute.xlu0 %4475
  %4477 = vrot.lane.b32.xlu0 %v2240, 102
  %v4478 = vpop.permute.xlu0 %4477
  %v4481 = vsel %vm1306, %v4400, %v4416
  %v4484 = vsel %vm1306, %v4402, %v4418
  %v4487 = vsel %vm1306, %v4404, %v4420
  %v4490 = vsel %vm1306, %v4406, %v4422
  %v4493 = vsel %vm1306, %v4408, %v4424
  %v4496 = vsel %vm1306, %v4410, %v4426
  %v4499 = vsel %vm1306, %v4412, %v4428
  %v4502 = vsel %vm1306, %v4414, %v4430
  %v4504 = vsel %vm1331, %v4481, %v4432
  %v4506 = vsel %vm1331, %v4484, %v4434
  %v4508 = vsel %vm1331, %v4487, %v4436
  %v4510 = vsel %vm1331, %v4490, %v4438
  %v4512 = vsel %vm1331, %v4493, %v4440
  %v4514 = vsel %vm1331, %v4496, %v4442
  %v4516 = vsel %vm1331, %v4499, %v4444
  %v4518 = vsel %vm1331, %v4502, %v4446
  %v4520 = vsel %vm1348, %v4504, %v4448
  %v4522 = vsel %vm1348, %v4506, %v4450
  %v4524 = vsel %vm1348, %v4508, %v4452
  %v4526 = vsel %vm1348, %v4510, %v4454
  %v4528 = vsel %vm1348, %v4512, %v4456
  %v4530 = vsel %vm1348, %v4514, %v4458
  %v4532 = vsel %vm1348, %v4516, %v4460
  %v4534 = vsel %vm1348, %v4518, %v4462
  %v4536 = vsel %vm1365, %v4520, %v4464
  %v4538 = vsel %vm1365, %v4522, %v4466
  %v4540 = vsel %vm1365, %v4524, %v4468
  %v4542 = vsel %vm1365, %v4526, %v4470
  %v4544 = vsel %vm1365, %v4528, %v4472
  %v4546 = vsel %vm1365, %v4530, %v4474
  %v4548 = vsel %vm1365, %v4532, %v4476
  %v4550 = vsel %vm1365, %v4534, %v4478
  %v4551 = vsel %vm1382, %v4464, 0
  %v4552 = vsel %vm1382, %v4466, 0
  %v4553 = vsel %vm1382, %v4468, 0
  %v4554 = vsel %vm1382, %v4470, 0
  %v4555 = vsel %vm1382, %v4472, 0
  %v4556 = vsel %vm1382, %v4474, 0
  %v4557 = vsel %vm1382, %v4476, 0
  %v4558 = vsel %vm1382, %v4478, 0
  %v4567 = vrot.slane %v4551, 7
  %v4568 = vrot.slane %v4552, 7
  %v4569 = vrot.slane %v4553, 7
  %v4570 = vrot.slane %v4554, 7
  %v4571 = vrot.slane %v4555, 7
  %v4572 = vrot.slane %v4556, 7
  %v4573 = vrot.slane %v4557, 7
  %v4574 = vrot.slane %v4558, 7
  %v4576 = vsel %vm1408, %v4536, %v4567
  %v4578 = vsel %vm1412, %v4536, %v4567
  %v4580 = vrot.slane %v4578, 1
  %v4581 = vsel %vm1416, %v4536, %v4567
  %v4583 = vrot.slane %v4581, 2
  %v4585 = vsel %vm1408, %v4538, %v4568
  %v4587 = vsel %vm1412, %v4538, %v4568
  %v4589 = vrot.slane %v4587, 1
  %v4590 = vsel %vm1416, %v4538, %v4568
  %v4592 = vrot.slane %v4590, 2
  %v4594 = vsel %vm1408, %v4540, %v4569
  %v4596 = vsel %vm1412, %v4540, %v4569
  %v4598 = vrot.slane %v4596, 1
  %v4599 = vsel %vm1416, %v4540, %v4569
  %v4601 = vrot.slane %v4599, 2
  %v4603 = vsel %vm1408, %v4542, %v4570
  %v4605 = vsel %vm1412, %v4542, %v4570
  %v4607 = vrot.slane %v4605, 1
  %v4608 = vsel %vm1416, %v4542, %v4570
  %v4610 = vrot.slane %v4608, 2
  %v4612 = vsel %vm1408, %v4544, %v4571
  %v4614 = vsel %vm1412, %v4544, %v4571
  %v4616 = vrot.slane %v4614, 1
  %v4617 = vsel %vm1416, %v4544, %v4571
  %v4619 = vrot.slane %v4617, 2
  %v4621 = vsel %vm1408, %v4546, %v4572
  %v4623 = vsel %vm1412, %v4546, %v4572
  %v4625 = vrot.slane %v4623, 1
  %v4626 = vsel %vm1416, %v4546, %v4572
  %v4628 = vrot.slane %v4626, 2
  %v4630 = vsel %vm1408, %v4548, %v4573
  %v4632 = vsel %vm1412, %v4548, %v4573
  %v4634 = vrot.slane %v4632, 1
  %v4635 = vsel %vm1416, %v4548, %v4573
  %v4637 = vrot.slane %v4635, 2
  %v4639 = vsel %vm1408, %v4550, %v4574
  %v4641 = vsel %vm1412, %v4550, %v4574
  %v4643 = vrot.slane %v4641, 1
  %v4644 = vsel %vm1416, %v4550, %v4574
  %v4646 = vrot.slane %v4644, 2
  %v4647 = vunpack.i.l.s16 %v4576
  %v4648 = vunpack.i.h.s16 %v4576
  %v4649 = vunpack.i.l.s16 %v4580
  %v4650 = vunpack.i.h.s16 %v4580
  %v4651 = vunpack.i.l.s16 %v4583
  %v4652 = vunpack.i.l.s16 %v4585
  %v4653 = vunpack.i.h.s16 %v4585
  %v4654 = vunpack.i.l.s16 %v4589
  %v4655 = vunpack.i.h.s16 %v4589
  %v4656 = vunpack.i.l.s16 %v4592
  %v4657 = vunpack.i.l.s16 %v4594
  %v4658 = vunpack.i.h.s16 %v4594
  %v4659 = vunpack.i.l.s16 %v4598
  %v4660 = vunpack.i.h.s16 %v4598
  %v4661 = vunpack.i.l.s16 %v4601
  %v4662 = vunpack.i.l.s16 %v4603
  %v4663 = vunpack.i.h.s16 %v4603
  %v4664 = vunpack.i.l.s16 %v4607
  %v4665 = vunpack.i.h.s16 %v4607
  %v4666 = vunpack.i.l.s16 %v4610
  %v4667 = vunpack.i.l.s16 %v4612
  %v4668 = vunpack.i.h.s16 %v4612
  %v4669 = vunpack.i.l.s16 %v4616
  %v4670 = vunpack.i.h.s16 %v4616
  %v4671 = vunpack.i.l.s16 %v4619
  %v4672 = vunpack.i.l.s16 %v4621
  %v4673 = vunpack.i.h.s16 %v4621
  %v4674 = vunpack.i.l.s16 %v4625
  %v4675 = vunpack.i.h.s16 %v4625
  %v4676 = vunpack.i.l.s16 %v4628
  %v4677 = vunpack.i.l.s16 %v4630
  %v4678 = vunpack.i.h.s16 %v4630
  %v4679 = vunpack.i.l.s16 %v4634
  %v4680 = vunpack.i.h.s16 %v4634
  %v4681 = vunpack.i.l.s16 %v4637
  %v4682 = vunpack.i.l.s16 %v4639
  %v4683 = vunpack.i.h.s16 %v4639
  %v4684 = vunpack.i.l.s16 %v4643
  %v4685 = vunpack.i.h.s16 %v4643
  %v4686 = vunpack.i.l.s16 %v4646
  %v4687 = vpack.i.b16 %v4648, %v4647
  %v4688 = vpack.i.b16 %v4650, %v4649
  %v4689 = vpack.i.b16 %v4652, %v4651
  %v4690 = vpack.i.b16 %v4654, %v4653
  %v4691 = vpack.i.b16 %v4656, %v4655
  %v4692 = vpack.i.b16 %v4658, %v4657
  %v4693 = vpack.i.b16 %v4660, %v4659
  %v4694 = vpack.i.b16 %v4662, %v4661
  %v4695 = vpack.i.b16 %v4664, %v4663
  %v4696 = vpack.i.b16 %v4666, %v4665
  %v4697 = vpack.i.b16 %v4668, %v4667
  %v4698 = vpack.i.b16 %v4670, %v4669
  %v4699 = vpack.i.b16 %v4672, %v4671
  %v4700 = vpack.i.b16 %v4674, %v4673
  %v4701 = vpack.i.b16 %v4676, %v4675
  %v4702 = vpack.i.b16 %v4678, %v4677
  %v4703 = vpack.i.b16 %v4680, %v4679
  %v4704 = vpack.i.b16 %v4682, %v4681
  %v4705 = vpack.i.b16 %v4684, %v4683
  %v4706 = vpack.i.b16 %v4686, %v4685
  %4708 = vst [vmem:[#allocation1] ss:$9 sm:$0xff] %v4687
  %s4710 = scalar_lea.vmem [#allocation1], 1
  %4711 = vst [vmem:[%s4710] ss:$9 sm:$0xff] %v4688
  %s4713 = scalar_lea.vmem [#allocation1], 2
  %4714 = vst [vmem:[%s4713] ss:$9 sm:$0xff] %v4689
  %s4716 = scalar_lea.vmem [#allocation1], 3
  %4717 = vst [vmem:[%s4716] ss:$9 sm:$0xff] %v4690
  %s4719 = scalar_lea.vmem [#allocation1], 4
  %4720 = vst [vmem:[%s4719] ss:$9 sm:$0xff] %v4691
  %s4722 = scalar_lea.vmem [#allocation1], 5
  %4723 = vst [vmem:[%s4722] ss:$9 sm:$0xff] %v4692
  %s4725 = scalar_lea.vmem [#allocation1], 6
  %4726 = vst [vmem:[%s4725] ss:$9 sm:$0xff] %v4693
  %s4728 = scalar_lea.vmem [#allocation1], 7
  %4729 = vst [vmem:[%s4728] ss:$9 sm:$0xff] %v4694
  %v4730 = vld [vmem:[#allocation1] sm:$0xff]
  %v4731 = vld [vmem:[#allocation1 + $0x9] sm:$0xff]
  %4733 = vst [vmem:[#allocation1] ss:$9 sm:$0xff] %v4695
  %4735 = vst [vmem:[%s4710] ss:$9 sm:$0xff] %v4696
  %4737 = vst [vmem:[%s4713] ss:$9 sm:$0xff] %v4697
  %4739 = vst [vmem:[%s4716] ss:$9 sm:$0xff] %v4698
  %4741 = vst [vmem:[%s4719] ss:$9 sm:$0xff] %v4699
  %4743 = vst [vmem:[%s4722] ss:$9 sm:$0xff] %v4700
  %4745 = vst [vmem:[%s4725] ss:$9 sm:$0xff] %v4701
  %4747 = vst [vmem:[%s4728] ss:$9 sm:$0xff] %v4702
  %v4748 = vld [vmem:[#allocation1] sm:$0xff]
  %v4749 = vld [vmem:[#allocation1 + $0x9] sm:$0xff]
  %4751 = vst [vmem:[#allocation1] ss:$9 sm:$0xff] %v4703
  %4753 = vst [vmem:[%s4710] ss:$9 sm:$0xff] %v4704
  %4755 = vst [vmem:[%s4713] ss:$9 sm:$0xff] %v4705
  %4757 = vst [vmem:[%s4716] ss:$9 sm:$0xff] %v4706
  %v4758 = vld [vmem:[#allocation1] sm:$0xff]
  %v4759 = vld [vmem:[#allocation1 + $0x9] sm:$0xff]
  %v4763 = vsel %vm1679, %v4731, 0
  %v4765 = vsel %vm1679, %v4749, 0
  %v4767 = vsel %vm1679, %v4759, 0
  %4769 = vmatpush.bf16.msra.mxu0 %v1666
  %4770 = vmatpush.bf16.msra.mxu0 %v1665
  %4771 = vmatpush.bf16.msra.mxu0 %v1664
  %4772 = vmatpush.bf16.msra.mxu0 %v1663
  %4773 = vmatpush.bf16.msra.mxu0 %v1662
  %4774 = vmatpush.bf16.msra.mxu0 %v1661
  %4775 = vmatpush.bf16.msra.mxu0 %v1660
  %4776 = vmatpush.bf16.msra.mxu0 %v1659
  %4777 = vmatmul.bf16.gmra.mxu0 %v4730
  %v4778 = vpop.f32.mrf.mxu0
  %v4779 = vadd.f32 0.0, %v4778
  %v4780 = vpop.f32.mrf.mxu0
  %v4781 = vadd.f32 0.0, %v4780
  %4782 = vmatmul.bf16.gmra.mxu0 %v4748
  %v4783 = vpop.f32.mrf.mxu0
  %v4784 = vadd.f32 0.0, %v4783
  %v4785 = vpop.f32.mrf.mxu0
  %v4786 = vadd.f32 0.0, %v4785
  %4787 = vmatmul.bf16.gmra.mxu0 %v4758
  %v4788 = vpop.f32.mrf.mxu0
  %v4789 = vadd.f32 0.0, %v4788
  %v4790 = vpop.f32.mrf.mxu0
  %4791 = vdwg.mxu0
  %4792 = vmatpush.bf16.msra.mxu0 0
  %4793 = vmatpush.bf16.msra.mxu0 0
  %4794 = vmatpush.bf16.msra.mxu0 0
  %4795 = vmatpush.bf16.msra.mxu0 0
  %4796 = vmatpush.bf16.msra.mxu0 0
  %4797 = vmatpush.bf16.msra.mxu0 0
  %4798 = vmatpush.bf16.msra.mxu0 %v1668
  %4799 = vmatpush.bf16.msra.mxu0 %v1667
  %4800 = vmatmul.bf16.gmra.mxu0 %v4763
  %v4801 = vpop.f32.mrf.mxu0
  %v4802 = vadd.f32 %v4779, %v4801
  %v4803 = vpop.f32.mrf.mxu0
  %v4804 = vadd.f32 %v4781, %v4803
  %4805 = vmatmul.bf16.gmra.mxu0 %v4765
  %v4806 = vpop.f32.mrf.mxu0
  %v4807 = vadd.f32 %v4784, %v4806
  %v4808 = vpop.f32.mrf.mxu0
  %v4809 = vadd.f32 %v4786, %v4808
  %4810 = vmatmul.bf16.gmra.mxu0 %v4767
  %v4811 = vpop.f32.mrf.mxu0
  %v4812 = vadd.f32 %v4789, %v4811
  %v4813 = vpop.f32.mrf.mxu0
  %4814 = vdwg.mxu0
  %v4815 = vmax.f32 %v4394, %v4802
  %v4816 = vmax.f32 %v4395, %v4804
  %v4817 = vmax.f32 %v4396, %v4807
  %v4818 = vmax.f32 %v4397, %v4809
  %v4819 = vmax.f32 %v4398, %v4812
  %v4820 = vadd.f32 %v4815, %v3021
  %v4821 = vadd.f32 %v4816, %v3021
  %v4822 = vadd.f32 %v4817, %v3021
  %v4823 = vadd.f32 %v4818, %v3021
  %v4824 = vadd.f32 %v4819, %v3021
  %v4825 = vmax.f32 %v4820, 0.0
  %v4826 = vmax.f32 %v4821, 0.0
  %v4827 = vmax.f32 %v4822, 0.0
  %v4828 = vmax.f32 %v4823, 0.0
  %v4829 = vmax.f32 %v4824, 0.0
  %v4835 = vrot.slane %v4825, 1
  %v4836 = vrot.slane %v4825, 2
  %v4837 = vrot.slane %v4825, 3
  %v4838 = vrot.slane %v4825, 4
  %v4839 = vrot.slane %v4825, 5
  %v4840 = vrot.slane %v4825, 6
  %v4841 = vrot.slane %v4825, 7
  %v4842 = vrot.slane %v4826, 1
  %v4843 = vrot.slane %v4826, 2
  %v4844 = vrot.slane %v4826, 3
  %v4845 = vrot.slane %v4826, 4
  %v4846 = vrot.slane %v4826, 5
  %v4847 = vrot.slane %v4826, 6
  %v4848 = vrot.slane %v4826, 7
  %v4849 = vrot.slane %v4827, 1
  %v4850 = vrot.slane %v4827, 2
  %v4851 = vrot.slane %v4827, 3
  %v4852 = vrot.slane %v4827, 4
  %v4853 = vrot.slane %v4827, 5
  %v4854 = vrot.slane %v4827, 6
  %v4855 = vrot.slane %v4827, 7
  %v4856 = vrot.slane %v4828, 1
  %v4857 = vrot.slane %v4828, 2
  %v4858 = vrot.slane %v4828, 3
  %v4859 = vrot.slane %v4828, 4
  %v4860 = vrot.slane %v4828, 5
  %v4861 = vrot.slane %v4828, 6
  %v4862 = vrot.slane %v4828, 7
  %v4863 = vrot.slane %v4829, 1
  %v4864 = vrot.slane %v4829, 2
  %v4865 = vrot.slane %v4829, 3
  %v4866 = vrot.slane %v4829, 4
  %v4867 = vrot.slane %v4829, 5
  %v4868 = vrot.slane %v4829, 6
  %v4869 = vrot.slane %v4829, 7
  %4870 = vst [vmem:[#allocation1] ss:$9 sm:$0xff] %v4825
  %s4871 = scalar_lea.vmem [#allocation1], 1
  %4872 = vst [vmem:[%s4871] ss:$9 sm:$0xff] %v4835
  %s4873 = scalar_lea.vmem [#allocation1], 2
  %4874 = vst [vmem:[%s4873] ss:$9 sm:$0xff] %v4836
  %s4875 = scalar_lea.vmem [#allocation1], 3
  %4876 = vst [vmem:[%s4875] ss:$9 sm:$0xff] %v4837
  %s4877 = scalar_lea.vmem [#allocation1], 4
  %4878 = vst [vmem:[%s4877] ss:$9 sm:$0xff] %v4838
  %v4879 = vld [vmem:[#allocation1] sm:$0xff]
  %4880 = vst [vmem:[#allocation1] ss:$9 sm:$0xff] %v4839
  %4881 = vst [vmem:[%s4871] ss:$9 sm:$0xff] %v4840
  %4882 = vst [vmem:[%s4873] ss:$9 sm:$0xff] %v4841
  %4883 = vst [vmem:[%s4875] ss:$9 sm:$0xff] %v4826
  %4884 = vst [vmem:[%s4877] ss:$9 sm:$0xff] %v4842
  %v4885 = vld [vmem:[#allocation1] sm:$0xff]
  %4886 = vst [vmem:[#allocation1] ss:$9 sm:$0xff] %v4843
  %4887 = vst [vmem:[%s4871] ss:$9 sm:$0xff] %v4844
  %4888 = vst [vmem:[%s4873] ss:$9 sm:$0xff] %v4845
  %4889 = vst [vmem:[%s4875] ss:$9 sm:$0xff] %v4846
  %4890 = vst [vmem:[%s4877] ss:$9 sm:$0xff] %v4847
  %v4891 = vld [vmem:[#allocation1] sm:$0xff]
  %4892 = vst [vmem:[#allocation1] ss:$9 sm:$0xff] %v4848
  %4893 = vst [vmem:[%s4871] ss:$9 sm:$0xff] %v4827
  %4894 = vst [vmem:[%s4873] ss:$9 sm:$0xff] %v4849
  %4895 = vst [vmem:[%s4875] ss:$9 sm:$0xff] %v4850
  %4896 = vst [vmem:[%s4877] ss:$9 sm:$0xff] %v4851
  %v4897 = vld [vmem:[#allocation1] sm:$0xff]
  %4898 = vst [vmem:[#allocation1] ss:$9 sm:$0xff] %v4852
  %4899 = vst [vmem:[%s4871] ss:$9 sm:$0xff] %v4853
  %4900 = vst [vmem:[%s4873] ss:$9 sm:$0xff] %v4854
  %4901 = vst [vmem:[%s4875] ss:$9 sm:$0xff] %v4855
  %4902 = vst [vmem:[%s4877] ss:$9 sm:$0xff] %v4828
  %v4903 = vld [vmem:[#allocation1] sm:$0xff]
  %4904 = vst [vmem:[#allocation1] ss:$9 sm:$0xff] %v4856
  %4905 = vst [vmem:[%s4871] ss:$9 sm:$0xff] %v4857
  %4906 = vst [vmem:[%s4873] ss:$9 sm:$0xff] %v4858
  %4907 = vst [vmem:[%s4875] ss:$9 sm:$0xff] %v4859
  %4908 = vst [vmem:[%s4877] ss:$9 sm:$0xff] %v4860
  %v4909 = vld [vmem:[#allocation1] sm:$0xff]
  %4910 = vst [vmem:[#allocation1] ss:$9 sm:$0xff] %v4861
  %4911 = vst [vmem:[%s4871] ss:$9 sm:$0xff] %v4862
  %4912 = vst [vmem:[%s4873] ss:$9 sm:$0xff] %v4829
  %4913 = vst [vmem:[%s4875] ss:$9 sm:$0xff] %v4863
  %4914 = vst [vmem:[%s4877] ss:$9 sm:$0xff] %v4864
  %v4915 = vld [vmem:[#allocation1] sm:$0xff]
  %4916 = vst [vmem:[#allocation1] ss:$9 sm:$0xff] %v4865
  %4917 = vst [vmem:[%s4871] ss:$9 sm:$0xff] %v4866
  %4918 = vst [vmem:[%s4873] ss:$9 sm:$0xff] %v4867
  %4919 = vst [vmem:[%s4875] ss:$9 sm:$0xff] %v4868
  %4920 = vst [vmem:[%s4877] ss:$9 sm:$0xff] %v4869
  %v4921 = vld [vmem:[#allocation1] sm:$0xff]
  %v4930 = vpack.c.bf16 %v4879, %v4879
  %v4931 = vpack.c.bf16 %v4885, %v4885
  %v4932 = vpack.c.bf16 %v4891, %v4891
  %v4933 = vpack.c.bf16 %v4897, %v4897
  %v4934 = vpack.c.bf16 %v4903, %v4903
  %v4935 = vpack.c.bf16 %v4909, %v4909
  %v4936 = vpack.c.bf16 %v4915, %v4915
  %v4937 = vpack.c.bf16 %v4921, %v4921
  %4938 = vrot.lane.b32.xlu0 %v1106, 104
  %v4939 = vpop.permute.xlu0 %4938
  %4940 = vrot.lane.b32.xlu0 %v1107, 104
  %v4941 = vpop.permute.xlu0 %4940
  %4942 = vrot.lane.b32.xlu0 %v1108, 104
  %v4943 = vpop.permute.xlu0 %4942
  %4944 = vrot.lane.b32.xlu0 %v1109, 104
  %v4945 = vpop.permute.xlu0 %4944
  %4946 = vrot.lane.b32.xlu0 %v1110, 104
  %v4947 = vpop.permute.xlu0 %4946
  %4948 = vrot.lane.b32.xlu0 %v1111, 104
  %v4949 = vpop.permute.xlu0 %4948
  %4950 = vrot.lane.b32.xlu0 %v1112, 104
  %v4951 = vpop.permute.xlu0 %4950
  %4952 = vrot.lane.b32.xlu0 %v1113, 104
  %v4953 = vpop.permute.xlu0 %4952
  %4954 = vrot.lane.b32.xlu0 %v1066, 6
  %v4955 = vpop.permute.xlu0 %4954
  %4956 = vrot.lane.b32.xlu0 %v1067, 6
  %v4957 = vpop.permute.xlu0 %4956
  %4958 = vrot.lane.b32.xlu0 %v1068, 6
  %v4959 = vpop.permute.xlu0 %4958
  %4960 = vrot.lane.b32.xlu0 %v1069, 6
  %v4961 = vpop.permute.xlu0 %4960
  %4962 = vrot.lane.b32.xlu0 %v1070, 6
  %v4963 = vpop.permute.xlu0 %4962
  %4964 = vrot.lane.b32.xlu0 %v1071, 6
  %v4965 = vpop.permute.xlu0 %4964
  %4966 = vrot.lane.b32.xlu0 %v1072, 6
  %v4967 = vpop.permute.xlu0 %4966
  %4968 = vrot.lane.b32.xlu0 %v1073, 6
  %v4969 = vpop.permute.xlu0 %4968
  %4970 = vrot.lane.b32.xlu0 %v1120, 36
  %v4971 = vpop.permute.xlu0 %4970
  %4972 = vrot.lane.b32.xlu0 %v1127, 36
  %v4973 = vpop.permute.xlu0 %4972
  %4974 = vrot.lane.b32.xlu0 %v1134, 36
  %v4975 = vpop.permute.xlu0 %4974
  %4976 = vrot.lane.b32.xlu0 %v1141, 36
  %v4977 = vpop.permute.xlu0 %4976
  %4978 = vrot.lane.b32.xlu0 %v1148, 36
  %v4979 = vpop.permute.xlu0 %4978
  %4980 = vrot.lane.b32.xlu0 %v1155, 36
  %v4981 = vpop.permute.xlu0 %4980
  %4982 = vrot.lane.b32.xlu0 %v1162, 36
  %v4983 = vpop.permute.xlu0 %4982
  %4984 = vrot.lane.b32.xlu0 %v1169, 36
  %v4985 = vpop.permute.xlu0 %4984
  %4986 = vrot.lane.b32.xlu0 %v1192, 66
  %v4987 = vpop.permute.xlu0 %4986
  %4988 = vrot.lane.b32.xlu0 %v1199, 66
  %v4989 = vpop.permute.xlu0 %4988
  %4990 = vrot.lane.b32.xlu0 %v1206, 66
  %v4991 = vpop.permute.xlu0 %4990
  %4992 = vrot.lane.b32.xlu0 %v1213, 66
  %v4993 = vpop.permute.xlu0 %4992
  %4994 = vrot.lane.b32.xlu0 %v1220, 66
  %v4995 = vpop.permute.xlu0 %4994
  %4996 = vrot.lane.b32.xlu0 %v1227, 66
  %v4997 = vpop.permute.xlu0 %4996
  %4998 = vrot.lane.b32.xlu0 %v1234, 66
  %v4999 = vpop.permute.xlu0 %4998
  %5000 = vrot.lane.b32.xlu0 %v1241, 66
  %v5001 = vpop.permute.xlu0 %5000
  %5002 = vrot.lane.b32.xlu0 %v1282, 96
  %v5003 = vpop.permute.xlu0 %5002
  %5004 = vrot.lane.b32.xlu0 %v1283, 96
  %v5005 = vpop.permute.xlu0 %5004
  %5006 = vrot.lane.b32.xlu0 %v1284, 96
  %v5007 = vpop.permute.xlu0 %5006
  %5008 = vrot.lane.b32.xlu0 %v1285, 96
  %v5009 = vpop.permute.xlu0 %5008
  %5010 = vrot.lane.b32.xlu0 %v1286, 96
  %v5011 = vpop.permute.xlu0 %5010
  %5012 = vrot.lane.b32.xlu0 %v1287, 96
  %v5013 = vpop.permute.xlu0 %5012
  %5014 = vrot.lane.b32.xlu0 %v1288, 96
  %v5015 = vpop.permute.xlu0 %5014
  %5016 = vrot.lane.b32.xlu0 %v1289, 96
  %v5017 = vpop.permute.xlu0 %5016
  %v5020 = vsel %vm1306, %v4939, %v4955
  %v5023 = vsel %vm1306, %v4941, %v4957
  %v5026 = vsel %vm1306, %v4943, %v4959
  %v5029 = vsel %vm1306, %v4945, %v4961
  %v5032 = vsel %vm1306, %v4947, %v4963
  %v5035 = vsel %vm1306, %v4949, %v4965
  %v5038 = vsel %vm1306, %v4951, %v4967
  %v5041 = vsel %vm1306, %v4953, %v4969
  %v5043 = vsel %vm1331, %v5020, %v4971
  %v5045 = vsel %vm1331, %v5023, %v4973
  %v5047 = vsel %vm1331, %v5026, %v4975
  %v5049 = vsel %vm1331, %v5029, %v4977
  %v5051 = vsel %vm1331, %v5032, %v4979
  %v5053 = vsel %vm1331, %v5035, %v4981
  %v5055 = vsel %vm1331, %v5038, %v4983
  %v5057 = vsel %vm1331, %v5041, %v4985
  %v5059 = vsel %vm1348, %v5043, %v4987
  %v5061 = vsel %vm1348, %v5045, %v4989
  %v5063 = vsel %vm1348, %v5047, %v4991
  %v5065 = vsel %vm1348, %v5049, %v4993
  %v5067 = vsel %vm1348, %v5051, %v4995
  %v5069 = vsel %vm1348, %v5053, %v4997
  %v5071 = vsel %vm1348, %v5055, %v4999
  %v5073 = vsel %vm1348, %v5057, %v5001
  %v5075 = vsel %vm1365, %v5059, %v5003
  %v5077 = vsel %vm1365, %v5061, %v5005
  %v5079 = vsel %vm1365, %v5063, %v5007
  %v5081 = vsel %vm1365, %v5065, %v5009
  %v5083 = vsel %vm1365, %v5067, %v5011
  %v5085 = vsel %vm1365, %v5069, %v5013
  %v5087 = vsel %vm1365, %v5071, %v5015
  %v5089 = vsel %vm1365, %v5073, %v5017
  %v5090 = vsel %vm1382, %v5003, 0
  %v5091 = vsel %vm1382, %v5005, 0
  %v5092 = vsel %vm1382, %v5007, 0
  %v5093 = vsel %vm1382, %v5009, 0
  %v5094 = vsel %vm1382, %v5011, 0
  %v5095 = vsel %vm1382, %v5013, 0
  %v5096 = vsel %vm1382, %v5015, 0
  %v5097 = vsel %vm1382, %v5017, 0
  %v5106 = vrot.slane %v5090, 7
  %v5107 = vrot.slane %v5091, 7
  %v5108 = vrot.slane %v5092, 7
  %v5109 = vrot.slane %v5093, 7
  %v5110 = vrot.slane %v5094, 7
  %v5111 = vrot.slane %v5095, 7
  %v5112 = vrot.slane %v5096, 7
  %v5113 = vrot.slane %v5097, 7
  %v5115 = vsel %vm1408, %v5075, %v5106
  %v5117 = vsel %vm1412, %v5075, %v5106
  %v5119 = vrot.slane %v5117, 1
  %v5120 = vsel %vm1416, %v5075, %v5106
  %v5122 = vrot.slane %v5120, 2
  %v5124 = vsel %vm1408, %v5077, %v5107
  %v5126 = vsel %vm1412, %v5077, %v5107
  %v5128 = vrot.slane %v5126, 1
  %v5129 = vsel %vm1416, %v5077, %v5107
  %v5131 = vrot.slane %v5129, 2
  %v5133 = vsel %vm1408, %v5079, %v5108
  %v5135 = vsel %vm1412, %v5079, %v5108
  %v5137 = vrot.slane %v5135, 1
  %v5138 = vsel %vm1416, %v5079, %v5108
  %v5140 = vrot.slane %v5138, 2
  %v5142 = vsel %vm1408, %v5081, %v5109
  %v5144 = vsel %vm1412, %v5081, %v5109
  %v5146 = vrot.slane %v5144, 1
  %v5147 = vsel %vm1416, %v5081, %v5109
  %v5149 = vrot.slane %v5147, 2
  %v5151 = vsel %vm1408, %v5083, %v5110
  %v5153 = vsel %vm1412, %v5083, %v5110
  %v5155 = vrot.slane %v5153, 1
  %v5156 = vsel %vm1416, %v5083, %v5110
  %v5158 = vrot.slane %v5156, 2
  %v5160 = vsel %vm1408, %v5085, %v5111
  %v5162 = vsel %vm1412, %v5085, %v5111
  %v5164 = vrot.slane %v5162, 1
  %v5165 = vsel %vm1416, %v5085, %v5111
  %v5167 = vrot.slane %v5165, 2
  %v5169 = vsel %vm1408, %v5087, %v5112
  %v5171 = vsel %vm1412, %v5087, %v5112
  %v5173 = vrot.slane %v5171, 1
  %v5174 = vsel %vm1416, %v5087, %v5112
  %v5176 = vrot.slane %v5174, 2
  %v5178 = vsel %vm1408, %v5089, %v5113
  %v5180 = vsel %vm1412, %v5089, %v5113
  %v5182 = vrot.slane %v5180, 1
  %v5183 = vsel %vm1416, %v5089, %v5113
  %v5185 = vrot.slane %v5183, 2
  %v5186 = vunpack.i.l.s16 %v5115
  %v5187 = vunpack.i.h.s16 %v5115
  %v5188 = vunpack.i.l.s16 %v5119
  %v5189 = vunpack.i.h.s16 %v5119
  %v5190 = vunpack.i.l.s16 %v5122
  %v5191 = vunpack.i.l.s16 %v5124
  %v5192 = vunpack.i.h.s16 %v5124
  %v5193 = vunpack.i.l.s16 %v5128
  %v5194 = vunpack.i.h.s16 %v5128
  %v5195 = vunpack.i.l.s16 %v5131
  %v5196 = vunpack.i.l.s16 %v5133
  %v5197 = vunpack.i.h.s16 %v5133
  %v5198 = vunpack.i.l.s16 %v5137
  %v5199 = vunpack.i.h.s16 %v5137
  %v5200 = vunpack.i.l.s16 %v5140
  %v5201 = vunpack.i.l.s16 %v5142
  %v5202 = vunpack.i.h.s16 %v5142
  %v5203 = vunpack.i.l.s16 %v5146
  %v5204 = vunpack.i.h.s16 %v5146
  %v5205 = vunpack.i.l.s16 %v5149
  %v5206 = vunpack.i.l.s16 %v5151
  %v5207 = vunpack.i.h.s16 %v5151
  %v5208 = vunpack.i.l.s16 %v5155
  %v5209 = vunpack.i.h.s16 %v5155
  %v5210 = vunpack.i.l.s16 %v5158
  %v5211 = vunpack.i.l.s16 %v5160
  %v5212 = vunpack.i.h.s16 %v5160
  %v5213 = vunpack.i.l.s16 %v5164
  %v5214 = vunpack.i.h.s16 %v5164
  %v5215 = vunpack.i.l.s16 %v5167
  %v5216 = vunpack.i.l.s16 %v5169
  %v5217 = vunpack.i.h.s16 %v5169
  %v5218 = vunpack.i.l.s16 %v5173
  %v5219 = vunpack.i.h.s16 %v5173
  %v5220 = vunpack.i.l.s16 %v5176
  %v5221 = vunpack.i.l.s16 %v5178
  %v5222 = vunpack.i.h.s16 %v5178
  %v5223 = vunpack.i.l.s16 %v5182
  %v5224 = vunpack.i.h.s16 %v5182
  %v5225 = vunpack.i.l.s16 %v5185
  %v5226 = vpack.i.b16 %v5187, %v5186
  %v5227 = vpack.i.b16 %v5189, %v5188
  %v5228 = vpack.i.b16 %v5191, %v5190
  %v5229 = vpack.i.b16 %v5193, %v5192
  %v5230 = vpack.i.b16 %v5195, %v5194
  %v5231 = vpack.i.b16 %v5197, %v5196
  %v5232 = vpack.i.b16 %v5199, %v5198
  %v5233 = vpack.i.b16 %v5201, %v5200
  %v5234 = vpack.i.b16 %v5203, %v5202
  %v5235 = vpack.i.b16 %v5205, %v5204
  %v5236 = vpack.i.b16 %v5207, %v5206
  %v5237 = vpack.i.b16 %v5209, %v5208
  %v5238 = vpack.i.b16 %v5211, %v5210
  %v5239 = vpack.i.b16 %v5213, %v5212
  %v5240 = vpack.i.b16 %v5215, %v5214
  %v5241 = vpack.i.b16 %v5217, %v5216
  %v5242 = vpack.i.b16 %v5219, %v5218
  %v5243 = vpack.i.b16 %v5221, %v5220
  %v5244 = vpack.i.b16 %v5223, %v5222
  %v5245 = vpack.i.b16 %v5225, %v5224
  %5247 = vst [vmem:[#allocation1] ss:$9 sm:$0xff] %v5226
  %s5249 = scalar_lea.vmem [#allocation1], 1
  %5250 = vst [vmem:[%s5249] ss:$9 sm:$0xff] %v5227
  %s5252 = scalar_lea.vmem [#allocation1], 2
  %5253 = vst [vmem:[%s5252] ss:$9 sm:$0xff] %v5228
  %s5255 = scalar_lea.vmem [#allocation1], 3
  %5256 = vst [vmem:[%s5255] ss:$9 sm:$0xff] %v5229
  %s5258 = scalar_lea.vmem [#allocation1], 4
  %5259 = vst [vmem:[%s5258] ss:$9 sm:$0xff] %v5230
  %s5261 = scalar_lea.vmem [#allocation1], 5
  %5262 = vst [vmem:[%s5261] ss:$9 sm:$0xff] %v5231
  %s5264 = scalar_lea.vmem [#allocation1], 6
  %5265 = vst [vmem:[%s5264] ss:$9 sm:$0xff] %v5232
  %s5267 = scalar_lea.vmem [#allocation1], 7
  %5268 = vst [vmem:[%s5267] ss:$9 sm:$0xff] %v5233
  %v5269 = vld [vmem:[#allocation1] sm:$0xff]
  %v5270 = vld [vmem:[#allocation1 + $0x9] sm:$0xff]
  %5272 = vst [vmem:[#allocation1] ss:$9 sm:$0xff] %v5234
  %5274 = vst [vmem:[%s5249] ss:$9 sm:$0xff] %v5235
  %5276 = vst [vmem:[%s5252] ss:$9 sm:$0xff] %v5236
  %5278 = vst [vmem:[%s5255] ss:$9 sm:$0xff] %v5237
  %5280 = vst [vmem:[%s5258] ss:$9 sm:$0xff] %v5238
  %5282 = vst [vmem:[%s5261] ss:$9 sm:$0xff] %v5239
  %5284 = vst [vmem:[%s5264] ss:$9 sm:$0xff] %v5240
  %5286 = vst [vmem:[%s5267] ss:$9 sm:$0xff] %v5241
  %v5287 = vld [vmem:[#allocation1] sm:$0xff]
  %v5288 = vld [vmem:[#allocation1 + $0x9] sm:$0xff]
  %5290 = vst [vmem:[#allocation1] ss:$9 sm:$0xff] %v5242
  %5292 = vst [vmem:[%s5249] ss:$9 sm:$0xff] %v5243
  %5294 = vst [vmem:[%s5252] ss:$9 sm:$0xff] %v5244
  %5296 = vst [vmem:[%s5255] ss:$9 sm:$0xff] %v5245
  %v5297 = vld [vmem:[#allocation1] sm:$0xff]
  %v5298 = vld [vmem:[#allocation1 + $0x9] sm:$0xff]
  %v5302 = vsel %vm1679, %v5270, 0
  %v5304 = vsel %vm1679, %v5288, 0
  %v5306 = vsel %vm1679, %v5298, 0
  %5308 = vmatpush.bf16.msra.mxu0 %v1666
  %5309 = vmatpush.bf16.msra.mxu0 %v1665
  %5310 = vmatpush.bf16.msra.mxu0 %v1664
  %5311 = vmatpush.bf16.msra.mxu0 %v1663
  %5312 = vmatpush.bf16.msra.mxu0 %v1662
  %5313 = vmatpush.bf16.msra.mxu0 %v1661
  %5314 = vmatpush.bf16.msra.mxu0 %v1660
  %5315 = vmatpush.bf16.msra.mxu0 %v1659
  %5316 = vmatmul.bf16.gmra.mxu0 %v5269
  %v5317 = vpop.f32.mrf.mxu0
  %v5318 = vadd.f32 0.0, %v5317
  %v5319 = vpop.f32.mrf.mxu0
  %v5320 = vadd.f32 0.0, %v5319
  %5321 = vmatmul.bf16.gmra.mxu0 %v5287
  %v5322 = vpop.f32.mrf.mxu0
  %v5323 = vadd.f32 0.0, %v5322
  %v5324 = vpop.f32.mrf.mxu0
  %v5325 = vadd.f32 0.0, %v5324
  %5326 = vmatmul.bf16.gmra.mxu0 %v5297
  %v5327 = vpop.f32.mrf.mxu0
  %v5328 = vadd.f32 0.0, %v5327
  %v5329 = vpop.f32.mrf.mxu0
  %5330 = vdwg.mxu0
  %5331 = vmatpush.bf16.msra.mxu0 0
  %5332 = vmatpush.bf16.msra.mxu0 0
  %5333 = vmatpush.bf16.msra.mxu0 0
  %5334 = vmatpush.bf16.msra.mxu0 0
  %5335 = vmatpush.bf16.msra.mxu0 0
  %5336 = vmatpush.bf16.msra.mxu0 0
  %5337 = vmatpush.bf16.msra.mxu0 %v1668
  %5338 = vmatpush.bf16.msra.mxu0 %v1667
  %5339 = vmatmul.bf16.gmra.mxu0 %v5302
  %v5340 = vpop.f32.mrf.mxu0
  %v5341 = vadd.f32 %v5318, %v5340
  %v5342 = vpop.f32.mrf.mxu0
  %v5343 = vadd.f32 %v5320, %v5342
  %5344 = vmatmul.bf16.gmra.mxu0 %v5304
  %v5345 = vpop.f32.mrf.mxu0
  %v5346 = vadd.f32 %v5323, %v5345
  %v5347 = vpop.f32.mrf.mxu0
  %v5348 = vadd.f32 %v5325, %v5347
  %5349 = vmatmul.bf16.gmra.mxu0 %v5306
  %v5350 = vpop.f32.mrf.mxu0
  %v5351 = vadd.f32 %v5328, %v5350
  %v5352 = vpop.f32.mrf.mxu0
  %5353 = vdwg.mxu0
  %5354 = vrot.lane.b32.xlu0 %v1106, 98
  %v5355 = vpop.permute.xlu0 %5354
  %5356 = vrot.lane.b32.xlu0 %v1107, 98
  %v5357 = vpop.permute.xlu0 %5356
  %5358 = vrot.lane.b32.xlu0 %v1108, 98
  %v5359 = vpop.permute.xlu0 %5358
  %5360 = vrot.lane.b32.xlu0 %v1109, 98
  %v5361 = vpop.permute.xlu0 %5360
  %5362 = vrot.lane.b32.xlu0 %v1110, 98
  %v5363 = vpop.permute.xlu0 %5362
  %5364 = vrot.lane.b32.xlu0 %v1111, 98
  %v5365 = vpop.permute.xlu0 %5364
  %5366 = vrot.lane.b32.xlu0 %v1112, 98
  %v5367 = vpop.permute.xlu0 %5366
  %5368 = vrot.lane.b32.xlu0 %v1113, 98
  %v5369 = vpop.permute.xlu0 %5368
  %v5371 = vsel %vm1306, %v5355, %v1034
  %v5373 = vsel %vm1306, %v5357, %v1035
  %v5375 = vsel %vm1306, %v5359, %v1036
  %v5377 = vsel %vm1306, %v5361, %v1037
  %v5379 = vsel %vm1306, %v5363, %v1038
  %v5381 = vsel %vm1306, %v5365, %v1039
  %v5383 = vsel %vm1306, %v5367, %v1040
  %v5385 = vsel %vm1306, %v5369, %v1041
  %v5386 = vsel %vm1331, %v5371, %v2162
  %v5387 = vsel %vm1331, %v5373, %v2164
  %v5388 = vsel %vm1331, %v5375, %v2166
  %v5389 = vsel %vm1331, %v5377, %v2168
  %v5390 = vsel %vm1331, %v5379, %v2170
  %v5391 = vsel %vm1331, %v5381, %v2172
  %v5392 = vsel %vm1331, %v5383, %v2174
  %v5393 = vsel %vm1331, %v5385, %v2176
  %v5394 = vsel %vm1348, %v5386, %v2178
  %v5395 = vsel %vm1348, %v5387, %v2180
  %v5396 = vsel %vm1348, %v5388, %v2182
  %v5397 = vsel %vm1348, %v5389, %v2184
  %v5398 = vsel %vm1348, %v5390, %v2186
  %v5399 = vsel %vm1348, %v5391, %v2188
  %v5400 = vsel %vm1348, %v5392, %v2190
  %v5401 = vsel %vm1348, %v5393, %v2192
  %v5402 = vsel %vm1365, %v5394, %v2194
  %v5403 = vsel %vm1365, %v5395, %v2196
  %v5404 = vsel %vm1365, %v5396, %v2198
  %v5405 = vsel %vm1365, %v5397, %v2200
  %v5406 = vsel %vm1365, %v5398, %v2202
  %v5407 = vsel %vm1365, %v5399, %v2204
  %v5408 = vsel %vm1365, %v5400, %v2206
  %v5409 = vsel %vm1365, %v5401, %v2208
  %v5410 = vsel %vm1382, %v2194, 0
  %v5411 = vsel %vm1382, %v2196, 0
  %v5412 = vsel %vm1382, %v2198, 0
  %v5413 = vsel %vm1382, %v2200, 0
  %v5414 = vsel %vm1382, %v2202, 0
  %v5415 = vsel %vm1382, %v2204, 0
  %v5416 = vsel %vm1382, %v2206, 0
  %v5417 = vsel %vm1382, %v2208, 0
  %v5426 = vrot.slane %v5410, 7
  %v5427 = vrot.slane %v5411, 7
  %v5428 = vrot.slane %v5412, 7
  %v5429 = vrot.slane %v5413, 7
  %v5430 = vrot.slane %v5414, 7
  %v5431 = vrot.slane %v5415, 7
  %v5432 = vrot.slane %v5416, 7
  %v5433 = vrot.slane %v5417, 7
  %v5435 = vsel %vm1408, %v5402, %v5426
  %v5437 = vsel %vm1412, %v5402, %v5426
  %v5439 = vrot.slane %v5437, 1
  %v5440 = vsel %vm1416, %v5402, %v5426
  %v5442 = vrot.slane %v5440, 2
  %v5444 = vsel %vm1408, %v5403, %v5427
  %v5446 = vsel %vm1412, %v5403, %v5427
  %v5448 = vrot.slane %v5446, 1
  %v5449 = vsel %vm1416, %v5403, %v5427
  %v5451 = vrot.slane %v5449, 2
  %v5453 = vsel %vm1408, %v5404, %v5428
  %v5455 = vsel %vm1412, %v5404, %v5428
  %v5457 = vrot.slane %v5455, 1
  %v5458 = vsel %vm1416, %v5404, %v5428
  %v5460 = vrot.slane %v5458, 2
  %v5462 = vsel %vm1408, %v5405, %v5429
  %v5464 = vsel %vm1412, %v5405, %v5429
  %v5466 = vrot.slane %v5464, 1
  %v5467 = vsel %vm1416, %v5405, %v5429
  %v5469 = vrot.slane %v5467, 2
  %v5471 = vsel %vm1408, %v5406, %v5430
  %v5473 = vsel %vm1412, %v5406, %v5430
  %v5475 = vrot.slane %v5473, 1
  %v5476 = vsel %vm1416, %v5406, %v5430
  %v5478 = vrot.slane %v5476, 2
  %v5480 = vsel %vm1408, %v5407, %v5431
  %v5482 = vsel %vm1412, %v5407, %v5431
  %v5484 = vrot.slane %v5482, 1
  %v5485 = vsel %vm1416, %v5407, %v5431
  %v5487 = vrot.slane %v5485, 2
  %v5489 = vsel %vm1408, %v5408, %v5432
  %v5491 = vsel %vm1412, %v5408, %v5432
  %v5493 = vrot.slane %v5491, 1
  %v5494 = vsel %vm1416, %v5408, %v5432
  %v5496 = vrot.slane %v5494, 2
  %v5498 = vsel %vm1408, %v5409, %v5433
  %v5500 = vsel %vm1412, %v5409, %v5433
  %v5502 = vrot.slane %v5500, 1
  %v5503 = vsel %vm1416, %v5409, %v5433
  %v5505 = vrot.slane %v5503, 2
  %v5506 = vunpack.i.l.s16 %v5435
  %v5507 = vunpack.i.h.s16 %v5435
  %v5508 = vunpack.i.l.s16 %v5439
  %v5509 = vunpack.i.h.s16 %v5439
  %v5510 = vunpack.i.l.s16 %v5442
  %v5511 = vunpack.i.l.s16 %v5444
  %v5512 = vunpack.i.h.s16 %v5444
  %v5513 = vunpack.i.l.s16 %v5448
  %v5514 = vunpack.i.h.s16 %v5448
  %v5515 = vunpack.i.l.s16 %v5451
  %v5516 = vunpack.i.l.s16 %v5453
  %v5517 = vunpack.i.h.s16 %v5453
  %v5518 = vunpack.i.l.s16 %v5457
  %v5519 = vunpack.i.h.s16 %v5457
  %v5520 = vunpack.i.l.s16 %v5460
  %v5521 = vunpack.i.l.s16 %v5462
  %v5522 = vunpack.i.h.s16 %v5462
  %v5523 = vunpack.i.l.s16 %v5466
  %v5524 = vunpack.i.h.s16 %v5466
  %v5525 = vunpack.i.l.s16 %v5469
  %v5526 = vunpack.i.l.s16 %v5471
  %v5527 = vunpack.i.h.s16 %v5471
  %v5528 = vunpack.i.l.s16 %v5475
  %v5529 = vunpack.i.h.s16 %v5475
  %v5530 = vunpack.i.l.s16 %v5478
  %v5531 = vunpack.i.l.s16 %v5480
  %v5532 = vunpack.i.h.s16 %v5480
  %v5533 = vunpack.i.l.s16 %v5484
  %v5534 = vunpack.i.h.s16 %v5484
  %v5535 = vunpack.i.l.s16 %v5487
  %v5536 = vunpack.i.l.s16 %v5489
  %v5537 = vunpack.i.h.s16 %v5489
  %v5538 = vunpack.i.l.s16 %v5493
  %v5539 = vunpack.i.h.s16 %v5493
  %v5540 = vunpack.i.l.s16 %v5496
  %v5541 = vunpack.i.l.s16 %v5498
  %v5542 = vunpack.i.h.s16 %v5498
  %v5543 = vunpack.i.l.s16 %v5502
  %v5544 = vunpack.i.h.s16 %v5502
  %v5545 = vunpack.i.l.s16 %v5505
  %v5546 = vpack.i.b16 %v5507, %v5506
  %v5547 = vpack.i.b16 %v5509, %v5508
  %v5548 = vpack.i.b16 %v5511, %v5510
  %v5549 = vpack.i.b16 %v5513, %v5512
  %v5550 = vpack.i.b16 %v5515, %v5514
  %v5551 = vpack.i.b16 %v5517, %v5516
  %v5552 = vpack.i.b16 %v5519, %v5518
  %v5553 = vpack.i.b16 %v5521, %v5520
  %v5554 = vpack.i.b16 %v5523, %v5522
  %v5555 = vpack.i.b16 %v5525, %v5524
  %v5556 = vpack.i.b16 %v5527, %v5526
  %v5557 = vpack.i.b16 %v5529, %v5528
  %v5558 = vpack.i.b16 %v5531, %v5530
  %v5559 = vpack.i.b16 %v5533, %v5532
  %v5560 = vpack.i.b16 %v5535, %v5534
  %v5561 = vpack.i.b16 %v5537, %v5536
  %v5562 = vpack.i.b16 %v5539, %v5538
  %v5563 = vpack.i.b16 %v5541, %v5540
  %v5564 = vpack.i.b16 %v5543, %v5542
  %v5565 = vpack.i.b16 %v5545, %v5544
  %5567 = vst [vmem:[#allocation1] ss:$9 sm:$0xff] %v5546
  %s5569 = scalar_lea.vmem [#allocation1], 1
  %5570 = vst [vmem:[%s5569] ss:$9 sm:$0xff] %v5547
  %s5572 = scalar_lea.vmem [#allocation1], 2
  %5573 = vst [vmem:[%s5572] ss:$9 sm:$0xff] %v5548
  %s5575 = scalar_lea.vmem [#allocation1], 3
  %5576 = vst [vmem:[%s5575] ss:$9 sm:$0xff] %v5549
  %s5578 = scalar_lea.vmem [#allocation1], 4
  %5579 = vst [vmem:[%s5578] ss:$9 sm:$0xff] %v5550
  %s5581 = scalar_lea.vmem [#allocation1], 5
  %5582 = vst [vmem:[%s5581] ss:$9 sm:$0xff] %v5551
  %s5584 = scalar_lea.vmem [#allocation1], 6
  %5585 = vst [vmem:[%s5584] ss:$9 sm:$0xff] %v5552
  %s5587 = scalar_lea.vmem [#allocation1], 7
  %5588 = vst [vmem:[%s5587] ss:$9 sm:$0xff] %v5553
  %v5589 = vld [vmem:[#allocation1] sm:$0xff]
  %v5590 = vld [vmem:[#allocation1 + $0x9] sm:$0xff]
  %5592 = vst [vmem:[#allocation1] ss:$9 sm:$0xff] %v5554
  %5594 = vst [vmem:[%s5569] ss:$9 sm:$0xff] %v5555
  %5596 = vst [vmem:[%s5572] ss:$9 sm:$0xff] %v5556
  %5598 = vst [vmem:[%s5575] ss:$9 sm:$0xff] %v5557
  %5600 = vst [vmem:[%s5578] ss:$9 sm:$0xff] %v5558
  %5602 = vst [vmem:[%s5581] ss:$9 sm:$0xff] %v5559
  %5604 = vst [vmem:[%s5584] ss:$9 sm:$0xff] %v5560
  %5606 = vst [vmem:[%s5587] ss:$9 sm:$0xff] %v5561
  %v5607 = vld [vmem:[#allocation1] sm:$0xff]
  %v5608 = vld [vmem:[#allocation1 + $0x9] sm:$0xff]
  %5610 = vst [vmem:[#allocation1] ss:$9 sm:$0xff] %v5562
  %5612 = vst [vmem:[%s5569] ss:$9 sm:$0xff] %v5563
  %5614 = vst [vmem:[%s5572] ss:$9 sm:$0xff] %v5564
  %5616 = vst [vmem:[%s5575] ss:$9 sm:$0xff] %v5565
  %v5617 = vld [vmem:[#allocation1] sm:$0xff]
  %v5618 = vld [vmem:[#allocation1 + $0x9] sm:$0xff]
  %v5622 = vsel %vm1679, %v5590, 0
  %v5624 = vsel %vm1679, %v5608, 0
  %v5626 = vsel %vm1679, %v5618, 0
  %5628 = vmatpush.bf16.msra.mxu0 %v1666
  %5629 = vmatpush.bf16.msra.mxu0 %v1665
  %5630 = vmatpush.bf16.msra.mxu0 %v1664
  %5631 = vmatpush.bf16.msra.mxu0 %v1663
  %5632 = vmatpush.bf16.msra.mxu0 %v1662
  %5633 = vmatpush.bf16.msra.mxu0 %v1661
  %5634 = vmatpush.bf16.msra.mxu0 %v1660
  %5635 = vmatpush.bf16.msra.mxu0 %v1659
  %5636 = vmatmul.bf16.gmra.mxu0 %v5589
  %v5637 = vpop.f32.mrf.mxu0
  %v5638 = vadd.f32 0.0, %v5637
  %v5639 = vpop.f32.mrf.mxu0
  %v5640 = vadd.f32 0.0, %v5639
  %5641 = vmatmul.bf16.gmra.mxu0 %v5607
  %v5642 = vpop.f32.mrf.mxu0
  %v5643 = vadd.f32 0.0, %v5642
  %v5644 = vpop.f32.mrf.mxu0
  %v5645 = vadd.f32 0.0, %v5644
  %5646 = vmatmul.bf16.gmra.mxu0 %v5617
  %v5647 = vpop.f32.mrf.mxu0
  %v5648 = vadd.f32 0.0, %v5647
  %v5649 = vpop.f32.mrf.mxu0
  %5650 = vdwg.mxu0
  %5651 = vmatpush.bf16.msra.mxu0 0
  %5652 = vmatpush.bf16.msra.mxu0 0
  %5653 = vmatpush.bf16.msra.mxu0 0
  %5654 = vmatpush.bf16.msra.mxu0 0
  %5655 = vmatpush.bf16.msra.mxu0 0
  %5656 = vmatpush.bf16.msra.mxu0 0
  %5657 = vmatpush.bf16.msra.mxu0 %v1668
  %5658 = vmatpush.bf16.msra.mxu0 %v1667
  %5659 = vmatmul.bf16.gmra.mxu0 %v5622
  %v5660 = vpop.f32.mrf.mxu0
  %v5661 = vadd.f32 %v5638, %v5660
  %v5662 = vpop.f32.mrf.mxu0
  %v5663 = vadd.f32 %v5640, %v5662
  %5664 = vmatmul.bf16.gmra.mxu0 %v5624
  %v5665 = vpop.f32.mrf.mxu0
  %v5666 = vadd.f32 %v5643, %v5665
  %v5667 = vpop.f32.mrf.mxu0
  %v5668 = vadd.f32 %v5645, %v5667
  %5669 = vmatmul.bf16.gmra.mxu0 %v5626
  %v5670 = vpop.f32.mrf.mxu0
  %v5671 = vadd.f32 %v5648, %v5670
  %v5672 = vpop.f32.mrf.mxu0
  %5673 = vdwg.mxu0
  %v5674 = vmax.f32 %v5341, %v5661
  %v5675 = vmax.f32 %v5343, %v5663
  %v5676 = vmax.f32 %v5346, %v5666
  %v5677 = vmax.f32 %v5348, %v5668
  %v5678 = vmax.f32 %v5351, %v5671
  %5679 = vrot.lane.b32.xlu0 %v1066, 104
  %v5680 = vpop.permute.xlu0 %5679
  %5681 = vrot.lane.b32.xlu0 %v1067, 104
  %v5682 = vpop.permute.xlu0 %5681
  %5683 = vrot.lane.b32.xlu0 %v1068, 104
  %v5684 = vpop.permute.xlu0 %5683
  %5685 = vrot.lane.b32.xlu0 %v1069, 104
  %v5686 = vpop.permute.xlu0 %5685
  %5687 = vrot.lane.b32.xlu0 %v1070, 104
  %v5688 = vpop.permute.xlu0 %5687
  %5689 = vrot.lane.b32.xlu0 %v1071, 104
  %v5690 = vpop.permute.xlu0 %5689
  %5691 = vrot.lane.b32.xlu0 %v1072, 104
  %v5692 = vpop.permute.xlu0 %5691
  %5693 = vrot.lane.b32.xlu0 %v1073, 104
  %v5694 = vpop.permute.xlu0 %5693
  %5695 = vrot.lane.b32.xlu0 %v1120, 6
  %v5696 = vpop.permute.xlu0 %5695
  %5697 = vrot.lane.b32.xlu0 %v1127, 6
  %v5698 = vpop.permute.xlu0 %5697
  %5699 = vrot.lane.b32.xlu0 %v1134, 6
  %v5700 = vpop.permute.xlu0 %5699
  %5701 = vrot.lane.b32.xlu0 %v1141, 6
  %v5702 = vpop.permute.xlu0 %5701
  %5703 = vrot.lane.b32.xlu0 %v1148, 6
  %v5704 = vpop.permute.xlu0 %5703
  %5705 = vrot.lane.b32.xlu0 %v1155, 6
  %v5706 = vpop.permute.xlu0 %5705
  %5707 = vrot.lane.b32.xlu0 %v1162, 6
  %v5708 = vpop.permute.xlu0 %5707
  %5709 = vrot.lane.b32.xlu0 %v1169, 6
  %v5710 = vpop.permute.xlu0 %5709
  %5711 = vrot.lane.b32.xlu0 %v1192, 36
  %v5712 = vpop.permute.xlu0 %5711
  %5713 = vrot.lane.b32.xlu0 %v1199, 36
  %v5714 = vpop.permute.xlu0 %5713
  %5715 = vrot.lane.b32.xlu0 %v1206, 36
  %v5716 = vpop.permute.xlu0 %5715
  %5717 = vrot.lane.b32.xlu0 %v1213, 36
  %v5718 = vpop.permute.xlu0 %5717
  %5719 = vrot.lane.b32.xlu0 %v1220, 36
  %v5720 = vpop.permute.xlu0 %5719
  %5721 = vrot.lane.b32.xlu0 %v1227, 36
  %v5722 = vpop.permute.xlu0 %5721
  %5723 = vrot.lane.b32.xlu0 %v1234, 36
  %v5724 = vpop.permute.xlu0 %5723
  %5725 = vrot.lane.b32.xlu0 %v1241, 36
  %v5726 = vpop.permute.xlu0 %5725
  %5727 = vrot.lane.b32.xlu0 %v1282, 66
  %v5728 = vpop.permute.xlu0 %5727
  %5729 = vrot.lane.b32.xlu0 %v1283, 66
  %v5730 = vpop.permute.xlu0 %5729
  %5731 = vrot.lane.b32.xlu0 %v1284, 66
  %v5732 = vpop.permute.xlu0 %5731
  %5733 = vrot.lane.b32.xlu0 %v1285, 66
  %v5734 = vpop.permute.xlu0 %5733
  %5735 = vrot.lane.b32.xlu0 %v1286, 66
  %v5736 = vpop.permute.xlu0 %5735
  %5737 = vrot.lane.b32.xlu0 %v1287, 66
  %v5738 = vpop.permute.xlu0 %5737
  %5739 = vrot.lane.b32.xlu0 %v1288, 66
  %v5740 = vpop.permute.xlu0 %5739
  %5741 = vrot.lane.b32.xlu0 %v1289, 66
  %v5742 = vpop.permute.xlu0 %5741
  %5743 = vrot.lane.b32.xlu0 %v2233, 96
  %v5744 = vpop.permute.xlu0 %5743
  %5745 = vrot.lane.b32.xlu0 %v2234, 96
  %v5746 = vpop.permute.xlu0 %5745
  %5747 = vrot.lane.b32.xlu0 %v2235, 96
  %v5748 = vpop.permute.xlu0 %5747
  %5749 = vrot.lane.b32.xlu0 %v2236, 96
  %v5750 = vpop.permute.xlu0 %5749
  %5751 = vrot.lane.b32.xlu0 %v2237, 96
  %v5752 = vpop.permute.xlu0 %5751
  %5753 = vrot.lane.b32.xlu0 %v2238, 96
  %v5754 = vpop.permute.xlu0 %5753
  %5755 = vrot.lane.b32.xlu0 %v2239, 96
  %v5756 = vpop.permute.xlu0 %5755
  %5757 = vrot.lane.b32.xlu0 %v2240, 96
  %v5758 = vpop.permute.xlu0 %5757
  %v5761 = vsel %vm1306, %v5680, %v5696
  %v5764 = vsel %vm1306, %v5682, %v5698
  %v5767 = vsel %vm1306, %v5684, %v5700
  %v5770 = vsel %vm1306, %v5686, %v5702
  %v5773 = vsel %vm1306, %v5688, %v5704
  %v5776 = vsel %vm1306, %v5690, %v5706
  %v5779 = vsel %vm1306, %v5692, %v5708
  %v5782 = vsel %vm1306, %v5694, %v5710
  %v5784 = vsel %vm1331, %v5761, %v5712
  %v5786 = vsel %vm1331, %v5764, %v5714
  %v5788 = vsel %vm1331, %v5767, %v5716
  %v5790 = vsel %vm1331, %v5770, %v5718
  %v5792 = vsel %vm1331, %v5773, %v5720
  %v5794 = vsel %vm1331, %v5776, %v5722
  %v5796 = vsel %vm1331, %v5779, %v5724
  %v5798 = vsel %vm1331, %v5782, %v5726
  %v5800 = vsel %vm1348, %v5784, %v5728
  %v5802 = vsel %vm1348, %v5786, %v5730
  %v5804 = vsel %vm1348, %v5788, %v5732
  %v5806 = vsel %vm1348, %v5790, %v5734
  %v5808 = vsel %vm1348, %v5792, %v5736
  %v5810 = vsel %vm1348, %v5794, %v5738
  %v5812 = vsel %vm1348, %v5796, %v5740
  %v5814 = vsel %vm1348, %v5798, %v5742
  %v5816 = vsel %vm1365, %v5800, %v5744
  %v5818 = vsel %vm1365, %v5802, %v5746
  %v5820 = vsel %vm1365, %v5804, %v5748
  %v5822 = vsel %vm1365, %v5806, %v5750
  %v5824 = vsel %vm1365, %v5808, %v5752
  %v5826 = vsel %vm1365, %v5810, %v5754
  %v5828 = vsel %vm1365, %v5812, %v5756
  %v5830 = vsel %vm1365, %v5814, %v5758
  %v5831 = vsel %vm1382, %v5744, 0
  %v5832 = vsel %vm1382, %v5746, 0
  %v5833 = vsel %vm1382, %v5748, 0
  %v5834 = vsel %vm1382, %v5750, 0
  %v5835 = vsel %vm1382, %v5752, 0
  %v5836 = vsel %vm1382, %v5754, 0
  %v5837 = vsel %vm1382, %v5756, 0
  %v5838 = vsel %vm1382, %v5758, 0
  %v5847 = vrot.slane %v5831, 7
  %v5848 = vrot.slane %v5832, 7
  %v5849 = vrot.slane %v5833, 7
  %v5850 = vrot.slane %v5834, 7
  %v5851 = vrot.slane %v5835, 7
  %v5852 = vrot.slane %v5836, 7
  %v5853 = vrot.slane %v5837, 7
  %v5854 = vrot.slane %v5838, 7
  %v5856 = vsel %vm1408, %v5816, %v5847
  %v5858 = vsel %vm1412, %v5816, %v5847
  %v5860 = vrot.slane %v5858, 1
  %v5861 = vsel %vm1416, %v5816, %v5847
  %v5863 = vrot.slane %v5861, 2
  %v5865 = vsel %vm1408, %v5818, %v5848
  %v5867 = vsel %vm1412, %v5818, %v5848
  %v5869 = vrot.slane %v5867, 1
  %v5870 = vsel %vm1416, %v5818, %v5848
  %v5872 = vrot.slane %v5870, 2
  %v5874 = vsel %vm1408, %v5820, %v5849
  %v5876 = vsel %vm1412, %v5820, %v5849
  %v5878 = vrot.slane %v5876, 1
  %v5879 = vsel %vm1416, %v5820, %v5849
  %v5881 = vrot.slane %v5879, 2
  %v5883 = vsel %vm1408, %v5822, %v5850
  %v5885 = vsel %vm1412, %v5822, %v5850
  %v5887 = vrot.slane %v5885, 1
  %v5888 = vsel %vm1416, %v5822, %v5850
  %v5890 = vrot.slane %v5888, 2
  %v5892 = vsel %vm1408, %v5824, %v5851
  %v5894 = vsel %vm1412, %v5824, %v5851
  %v5896 = vrot.slane %v5894, 1
  %v5897 = vsel %vm1416, %v5824, %v5851
  %v5899 = vrot.slane %v5897, 2
  %v5901 = vsel %vm1408, %v5826, %v5852
  %v5903 = vsel %vm1412, %v5826, %v5852
  %v5905 = vrot.slane %v5903, 1
  %v5906 = vsel %vm1416, %v5826, %v5852
  %v5908 = vrot.slane %v5906, 2
  %v5910 = vsel %vm1408, %v5828, %v5853
  %v5912 = vsel %vm1412, %v5828, %v5853
  %v5914 = vrot.slane %v5912, 1
  %v5915 = vsel %vm1416, %v5828, %v5853
  %v5917 = vrot.slane %v5915, 2
  %v5919 = vsel %vm1408, %v5830, %v5854
  %v5921 = vsel %vm1412, %v5830, %v5854
  %v5923 = vrot.slane %v5921, 1
  %v5924 = vsel %vm1416, %v5830, %v5854
  %v5926 = vrot.slane %v5924, 2
  %v5927 = vunpack.i.l.s16 %v5856
  %v5928 = vunpack.i.h.s16 %v5856
  %v5929 = vunpack.i.l.s16 %v5860
  %v5930 = vunpack.i.h.s16 %v5860
  %v5931 = vunpack.i.l.s16 %v5863
  %v5932 = vunpack.i.l.s16 %v5865
  %v5933 = vunpack.i.h.s16 %v5865
  %v5934 = vunpack.i.l.s16 %v5869
  %v5935 = vunpack.i.h.s16 %v5869
  %v5936 = vunpack.i.l.s16 %v5872
  %v5937 = vunpack.i.l.s16 %v5874
  %v5938 = vunpack.i.h.s16 %v5874
  %v5939 = vunpack.i.l.s16 %v5878
  %v5940 = vunpack.i.h.s16 %v5878
  %v5941 = vunpack.i.l.s16 %v5881
  %v5942 = vunpack.i.l.s16 %v5883
  %v5943 = vunpack.i.h.s16 %v5883
  %v5944 = vunpack.i.l.s16 %v5887
  %v5945 = vunpack.i.h.s16 %v5887
  %v5946 = vunpack.i.l.s16 %v5890
  %v5947 = vunpack.i.l.s16 %v5892
  %v5948 = vunpack.i.h.s16 %v5892
  %v5949 = vunpack.i.l.s16 %v5896
  %v5950 = vunpack.i.h.s16 %v5896
  %v5951 = vunpack.i.l.s16 %v5899
  %v5952 = vunpack.i.l.s16 %v5901
  %v5953 = vunpack.i.h.s16 %v5901
  %v5954 = vunpack.i.l.s16 %v5905
  %v5955 = vunpack.i.h.s16 %v5905
  %v5956 = vunpack.i.l.s16 %v5908
  %v5957 = vunpack.i.l.s16 %v5910
  %v5958 = vunpack.i.h.s16 %v5910
  %v5959 = vunpack.i.l.s16 %v5914
  %v5960 = vunpack.i.h.s16 %v5914
  %v5961 = vunpack.i.l.s16 %v5917
  %v5962 = vunpack.i.l.s16 %v5919
  %v5963 = vunpack.i.h.s16 %v5919
  %v5964 = vunpack.i.l.s16 %v5923
  %v5965 = vunpack.i.h.s16 %v5923
  %v5966 = vunpack.i.l.s16 %v5926
  %v5967 = vpack.i.b16 %v5928, %v5927
  %v5968 = vpack.i.b16 %v5930, %v5929
  %v5969 = vpack.i.b16 %v5932, %v5931
  %v5970 = vpack.i.b16 %v5934, %v5933
  %v5971 = vpack.i.b16 %v5936, %v5935
  %v5972 = vpack.i.b16 %v5938, %v5937
  %v5973 = vpack.i.b16 %v5940, %v5939
  %v5974 = vpack.i.b16 %v5942, %v5941
  %v5975 = vpack.i.b16 %v5944, %v5943
  %v5976 = vpack.i.b16 %v5946, %v5945
  %v5977 = vpack.i.b16 %v5948, %v5947
  %v5978 = vpack.i.b16 %v5950, %v5949
  %v5979 = vpack.i.b16 %v5952, %v5951
  %v5980 = vpack.i.b16 %v5954, %v5953
  %v5981 = vpack.i.b16 %v5956, %v5955
  %v5982 = vpack.i.b16 %v5958, %v5957
  %v5983 = vpack.i.b16 %v5960, %v5959
  %v5984 = vpack.i.b16 %v5962, %v5961
  %v5985 = vpack.i.b16 %v5964, %v5963
  %v5986 = vpack.i.b16 %v5966, %v5965
  %5988 = vst [vmem:[#allocation1] ss:$9 sm:$0xff] %v5967
  %s5990 = scalar_lea.vmem [#allocation1], 1
  %5991 = vst [vmem:[%s5990] ss:$9 sm:$0xff] %v5968
  %s5993 = scalar_lea.vmem [#allocation1], 2
  %5994 = vst [vmem:[%s5993] ss:$9 sm:$0xff] %v5969
  %s5996 = scalar_lea.vmem [#allocation1], 3
  %5997 = vst [vmem:[%s5996] ss:$9 sm:$0xff] %v5970
  %s5999 = scalar_lea.vmem [#allocation1], 4
  %6000 = vst [vmem:[%s5999] ss:$9 sm:$0xff] %v5971
  %s6002 = scalar_lea.vmem [#allocation1], 5
  %6003 = vst [vmem:[%s6002] ss:$9 sm:$0xff] %v5972
  %s6005 = scalar_lea.vmem [#allocation1], 6
  %6006 = vst [vmem:[%s6005] ss:$9 sm:$0xff] %v5973
  %s6008 = scalar_lea.vmem [#allocation1], 7
  %6009 = vst [vmem:[%s6008] ss:$9 sm:$0xff] %v5974
  %v6010 = vld [vmem:[#allocation1] sm:$0xff]
  %v6011 = vld [vmem:[#allocation1 + $0x9] sm:$0xff]
  %6013 = vst [vmem:[#allocation1] ss:$9 sm:$0xff] %v5975
  %6015 = vst [vmem:[%s5990] ss:$9 sm:$0xff] %v5976
  %6017 = vst [vmem:[%s5993] ss:$9 sm:$0xff] %v5977
  %6019 = vst [vmem:[%s5996] ss:$9 sm:$0xff] %v5978
  %6021 = vst [vmem:[%s5999] ss:$9 sm:$0xff] %v5979
  %6023 = vst [vmem:[%s6002] ss:$9 sm:$0xff] %v5980
  %6025 = vst [vmem:[%s6005] ss:$9 sm:$0xff] %v5981
  %6027 = vst [vmem:[%s6008] ss:$9 sm:$0xff] %v5982
  %v6028 = vld [vmem:[#allocation1] sm:$0xff]
  %v6029 = vld [vmem:[#allocation1 + $0x9] sm:$0xff]
  %6031 = vst [vmem:[#allocation1] ss:$9 sm:$0xff] %v5983
  %6033 = vst [vmem:[%s5990] ss:$9 sm:$0xff] %v5984
  %6035 = vst [vmem:[%s5993] ss:$9 sm:$0xff] %v5985
  %6037 = vst [vmem:[%s5996] ss:$9 sm:$0xff] %v5986
  %v6038 = vld [vmem:[#allocation1] sm:$0xff]
  %v6039 = vld [vmem:[#allocation1 + $0x9] sm:$0xff]
  %v6043 = vsel %vm1679, %v6011, 0
  %v6045 = vsel %vm1679, %v6029, 0
  %v6047 = vsel %vm1679, %v6039, 0
  %6049 = vmatpush.bf16.msra.mxu0 %v1666
  %6050 = vmatpush.bf16.msra.mxu0 %v1665
  %6051 = vmatpush.bf16.msra.mxu0 %v1664
  %6052 = vmatpush.bf16.msra.mxu0 %v1663
  %6053 = vmatpush.bf16.msra.mxu0 %v1662
  %6054 = vmatpush.bf16.msra.mxu0 %v1661
  %6055 = vmatpush.bf16.msra.mxu0 %v1660
  %6056 = vmatpush.bf16.msra.mxu0 %v1659
  %6057 = vmatmul.bf16.gmra.mxu0 %v6010
  %v6058 = vpop.f32.mrf.mxu0
  %v6059 = vadd.f32 0.0, %v6058
  %v6060 = vpop.f32.mrf.mxu0
  %v6061 = vadd.f32 0.0, %v6060
  %6062 = vmatmul.bf16.gmra.mxu0 %v6028
  %v6063 = vpop.f32.mrf.mxu0
  %v6064 = vadd.f32 0.0, %v6063
  %v6065 = vpop.f32.mrf.mxu0
  %v6066 = vadd.f32 0.0, %v6065
  %6067 = vmatmul.bf16.gmra.mxu0 %v6038
  %v6068 = vpop.f32.mrf.mxu0
  %v6069 = vadd.f32 0.0, %v6068
  %v6070 = vpop.f32.mrf.mxu0
  %6071 = vdwg.mxu0
  %6072 = vmatpush.bf16.msra.mxu0 0
  %6073 = vmatpush.bf16.msra.mxu0 0
  %6074 = vmatpush.bf16.msra.mxu0 0
  %6075 = vmatpush.bf16.msra.mxu0 0
  %6076 = vmatpush.bf16.msra.mxu0 0
  %6077 = vmatpush.bf16.msra.mxu0 0
  %6078 = vmatpush.bf16.msra.mxu0 %v1668
  %6079 = vmatpush.bf16.msra.mxu0 %v1667
  %6080 = vmatmul.bf16.gmra.mxu0 %v6043
  %v6081 = vpop.f32.mrf.mxu0
  %v6082 = vadd.f32 %v6059, %v6081
  %v6083 = vpop.f32.mrf.mxu0
  %v6084 = vadd.f32 %v6061, %v6083
  %6085 = vmatmul.bf16.gmra.mxu0 %v6045
  %v6086 = vpop.f32.mrf.mxu0
  %v6087 = vadd.f32 %v6064, %v6086
  %v6088 = vpop.f32.mrf.mxu0
  %v6089 = vadd.f32 %v6066, %v6088
  %6090 = vmatmul.bf16.gmra.mxu0 %v6047
  %v6091 = vpop.f32.mrf.mxu0
  %v6092 = vadd.f32 %v6069, %v6091
  %v6093 = vpop.f32.mrf.mxu0
  %6094 = vdwg.mxu0
  %v6095 = vmax.f32 %v5674, %v6082
  %v6096 = vmax.f32 %v5675, %v6084
  %v6097 = vmax.f32 %v5676, %v6087
  %v6098 = vmax.f32 %v5677, %v6089
  %v6099 = vmax.f32 %v5678, %v6092
  %6100 = vrot.lane.b32.xlu0 %v1066, 98
  %v6101 = vpop.permute.xlu0 %6100
  %6102 = vrot.lane.b32.xlu0 %v1067, 98
  %v6103 = vpop.permute.xlu0 %6102
  %6104 = vrot.lane.b32.xlu0 %v1068, 98
  %v6105 = vpop.permute.xlu0 %6104
  %6106 = vrot.lane.b32.xlu0 %v1069, 98
  %v6107 = vpop.permute.xlu0 %6106
  %6108 = vrot.lane.b32.xlu0 %v1070, 98
  %v6109 = vpop.permute.xlu0 %6108
  %6110 = vrot.lane.b32.xlu0 %v1071, 98
  %v6111 = vpop.permute.xlu0 %6110
  %6112 = vrot.lane.b32.xlu0 %v1072, 98
  %v6113 = vpop.permute.xlu0 %6112
  %6114 = vrot.lane.b32.xlu0 %v1073, 98
  %v6115 = vpop.permute.xlu0 %6114
  %6116 = vrot.lane.b32.xlu0 %v1192, 30
  %v6117 = vpop.permute.xlu0 %6116
  %6118 = vrot.lane.b32.xlu0 %v1199, 30
  %v6119 = vpop.permute.xlu0 %6118
  %6120 = vrot.lane.b32.xlu0 %v1206, 30
  %v6121 = vpop.permute.xlu0 %6120
  %6122 = vrot.lane.b32.xlu0 %v1213, 30
  %v6123 = vpop.permute.xlu0 %6122
  %6124 = vrot.lane.b32.xlu0 %v1220, 30
  %v6125 = vpop.permute.xlu0 %6124
  %6126 = vrot.lane.b32.xlu0 %v1227, 30
  %v6127 = vpop.permute.xlu0 %6126
  %6128 = vrot.lane.b32.xlu0 %v1234, 30
  %v6129 = vpop.permute.xlu0 %6128
  %6130 = vrot.lane.b32.xlu0 %v1241, 30
  %v6131 = vpop.permute.xlu0 %6130
  %6132 = vrot.lane.b32.xlu0 %v1282, 60
  %v6133 = vpop.permute.xlu0 %6132
  %6134 = vrot.lane.b32.xlu0 %v1283, 60
  %v6135 = vpop.permute.xlu0 %6134
  %6136 = vrot.lane.b32.xlu0 %v1284, 60
  %v6137 = vpop.permute.xlu0 %6136
  %6138 = vrot.lane.b32.xlu0 %v1285, 60
  %v6139 = vpop.permute.xlu0 %6138
  %6140 = vrot.lane.b32.xlu0 %v1286, 60
  %v6141 = vpop.permute.xlu0 %6140
  %6142 = vrot.lane.b32.xlu0 %v1287, 60
  %v6143 = vpop.permute.xlu0 %6142
  %6144 = vrot.lane.b32.xlu0 %v1288, 60
  %v6145 = vpop.permute.xlu0 %6144
  %6146 = vrot.lane.b32.xlu0 %v1289, 60
  %v6147 = vpop.permute.xlu0 %6146
  %6148 = vrot.lane.b32.xlu0 %v2233, 90
  %v6149 = vpop.permute.xlu0 %6148
  %6150 = vrot.lane.b32.xlu0 %v2234, 90
  %v6151 = vpop.permute.xlu0 %6150
  %6152 = vrot.lane.b32.xlu0 %v2235, 90
  %v6153 = vpop.permute.xlu0 %6152
  %6154 = vrot.lane.b32.xlu0 %v2236, 90
  %v6155 = vpop.permute.xlu0 %6154
  %6156 = vrot.lane.b32.xlu0 %v2237, 90
  %v6157 = vpop.permute.xlu0 %6156
  %6158 = vrot.lane.b32.xlu0 %v2238, 90
  %v6159 = vpop.permute.xlu0 %6158
  %6160 = vrot.lane.b32.xlu0 %v2239, 90
  %v6161 = vpop.permute.xlu0 %6160
  %6162 = vrot.lane.b32.xlu0 %v2240, 90
  %v6163 = vpop.permute.xlu0 %6162
  %v6166 = vsel %vm1306, %v6101, %v1120
  %v6169 = vsel %vm1306, %v6103, %v1127
  %v6172 = vsel %vm1306, %v6105, %v1134
  %v6175 = vsel %vm1306, %v6107, %v1141
  %v6178 = vsel %vm1306, %v6109, %v1148
  %v6181 = vsel %vm1306, %v6111, %v1155
  %v6184 = vsel %vm1306, %v6113, %v1162
  %v6187 = vsel %vm1306, %v6115, %v1169
  %v6189 = vsel %vm1331, %v6166, %v6117
  %v6191 = vsel %vm1331, %v6169, %v6119
  %v6193 = vsel %vm1331, %v6172, %v6121
  %v6195 = vsel %vm1331, %v6175, %v6123
  %v6197 = vsel %vm1331, %v6178, %v6125
  %v6199 = vsel %vm1331, %v6181, %v6127
  %v6201 = vsel %vm1331, %v6184, %v6129
  %v6203 = vsel %vm1331, %v6187, %v6131
  %v6205 = vsel %vm1348, %v6189, %v6133
  %v6207 = vsel %vm1348, %v6191, %v6135
  %v6209 = vsel %vm1348, %v6193, %v6137
  %v6211 = vsel %vm1348, %v6195, %v6139
  %v6213 = vsel %vm1348, %v6197, %v6141
  %v6215 = vsel %vm1348, %v6199, %v6143
  %v6217 = vsel %vm1348, %v6201, %v6145
  %v6219 = vsel %vm1348, %v6203, %v6147
  %v6221 = vsel %vm1365, %v6205, %v6149
  %v6223 = vsel %vm1365, %v6207, %v6151
  %v6225 = vsel %vm1365, %v6209, %v6153
  %v6227 = vsel %vm1365, %v6211, %v6155
  %v6229 = vsel %vm1365, %v6213, %v6157
  %v6231 = vsel %vm1365, %v6215, %v6159
  %v6233 = vsel %vm1365, %v6217, %v6161
  %v6235 = vsel %vm1365, %v6219, %v6163
  %v6236 = vsel %vm1382, %v6149, 0
  %v6237 = vsel %vm1382, %v6151, 0
  %v6238 = vsel %vm1382, %v6153, 0
  %v6239 = vsel %vm1382, %v6155, 0
  %v6240 = vsel %vm1382, %v6157, 0
  %v6241 = vsel %vm1382, %v6159, 0
  %v6242 = vsel %vm1382, %v6161, 0
  %v6243 = vsel %vm1382, %v6163, 0
  %v6252 = vrot.slane %v6236, 7
  %v6253 = vrot.slane %v6237, 7
  %v6254 = vrot.slane %v6238, 7
  %v6255 = vrot.slane %v6239, 7
  %v6256 = vrot.slane %v6240, 7
  %v6257 = vrot.slane %v6241, 7
  %v6258 = vrot.slane %v6242, 7
  %v6259 = vrot.slane %v6243, 7
  %v6261 = vsel %vm1408, %v6221, %v6252
  %v6263 = vsel %vm1412, %v6221, %v6252
  %v6265 = vrot.slane %v6263, 1
  %v6266 = vsel %vm1416, %v6221, %v6252
  %v6268 = vrot.slane %v6266, 2
  %v6270 = vsel %vm1408, %v6223, %v6253
  %v6272 = vsel %vm1412, %v6223, %v6253
  %v6274 = vrot.slane %v6272, 1
  %v6275 = vsel %vm1416, %v6223, %v6253
  %v6277 = vrot.slane %v6275, 2
  %v6279 = vsel %vm1408, %v6225, %v6254
  %v6281 = vsel %vm1412, %v6225, %v6254
  %v6283 = vrot.slane %v6281, 1
  %v6284 = vsel %vm1416, %v6225, %v6254
  %v6286 = vrot.slane %v6284, 2
  %v6288 = vsel %vm1408, %v6227, %v6255
  %v6290 = vsel %vm1412, %v6227, %v6255
  %v6292 = vrot.slane %v6290, 1
  %v6293 = vsel %vm1416, %v6227, %v6255
  %v6295 = vrot.slane %v6293, 2
  %v6297 = vsel %vm1408, %v6229, %v6256
  %v6299 = vsel %vm1412, %v6229, %v6256
  %v6301 = vrot.slane %v6299, 1
  %v6302 = vsel %vm1416, %v6229, %v6256
  %v6304 = vrot.slane %v6302, 2
  %v6306 = vsel %vm1408, %v6231, %v6257
  %v6308 = vsel %vm1412, %v6231, %v6257
  %v6310 = vrot.slane %v6308, 1
  %v6311 = vsel %vm1416, %v6231, %v6257
  %v6313 = vrot.slane %v6311, 2
  %v6315 = vsel %vm1408, %v6233, %v6258
  %v6317 = vsel %vm1412, %v6233, %v6258
  %v6319 = vrot.slane %v6317, 1
  %v6320 = vsel %vm1416, %v6233, %v6258
  %v6322 = vrot.slane %v6320, 2
  %v6324 = vsel %vm1408, %v6235, %v6259
  %v6326 = vsel %vm1412, %v6235, %v6259
  %v6328 = vrot.slane %v6326, 1
  %v6329 = vsel %vm1416, %v6235, %v6259
  %v6331 = vrot.slane %v6329, 2
  %v6332 = vunpack.i.l.s16 %v6261
  %v6333 = vunpack.i.h.s16 %v6261
  %v6334 = vunpack.i.l.s16 %v6265
  %v6335 = vunpack.i.h.s16 %v6265
  %v6336 = vunpack.i.l.s16 %v6268
  %v6337 = vunpack.i.l.s16 %v6270
  %v6338 = vunpack.i.h.s16 %v6270
  %v6339 = vunpack.i.l.s16 %v6274
  %v6340 = vunpack.i.h.s16 %v6274
  %v6341 = vunpack.i.l.s16 %v6277
  %v6342 = vunpack.i.l.s16 %v6279
  %v6343 = vunpack.i.h.s16 %v6279
  %v6344 = vunpack.i.l.s16 %v6283
  %v6345 = vunpack.i.h.s16 %v6283
  %v6346 = vunpack.i.l.s16 %v6286
  %v6347 = vunpack.i.l.s16 %v6288
  %v6348 = vunpack.i.h.s16 %v6288
  %v6349 = vunpack.i.l.s16 %v6292
  %v6350 = vunpack.i.h.s16 %v6292
  %v6351 = vunpack.i.l.s16 %v6295
  %v6352 = vunpack.i.l.s16 %v6297
  %v6353 = vunpack.i.h.s16 %v6297
  %v6354 = vunpack.i.l.s16 %v6301
  %v6355 = vunpack.i.h.s16 %v6301
  %v6356 = vunpack.i.l.s16 %v6304
  %v6357 = vunpack.i.l.s16 %v6306
  %v6358 = vunpack.i.h.s16 %v6306
  %v6359 = vunpack.i.l.s16 %v6310
  %v6360 = vunpack.i.h.s16 %v6310
  %v6361 = vunpack.i.l.s16 %v6313
  %v6362 = vunpack.i.l.s16 %v6315
  %v6363 = vunpack.i.h.s16 %v6315
  %v6364 = vunpack.i.l.s16 %v6319
  %v6365 = vunpack.i.h.s16 %v6319
  %v6366 = vunpack.i.l.s16 %v6322
  %v6367 = vunpack.i.l.s16 %v6324
  %v6368 = vunpack.i.h.s16 %v6324
  %v6369 = vunpack.i.l.s16 %v6328
  %v6370 = vunpack.i.h.s16 %v6328
  %v6371 = vunpack.i.l.s16 %v6331
  %v6372 = vpack.i.b16 %v6333, %v6332
  %v6373 = vpack.i.b16 %v6335, %v6334
  %v6374 = vpack.i.b16 %v6337, %v6336
  %v6375 = vpack.i.b16 %v6339, %v6338
  %v6376 = vpack.i.b16 %v6341, %v6340
  %v6377 = vpack.i.b16 %v6343, %v6342
  %v6378 = vpack.i.b16 %v6345, %v6344
  %v6379 = vpack.i.b16 %v6347, %v6346
  %v6380 = vpack.i.b16 %v6349, %v6348
  %v6381 = vpack.i.b16 %v6351, %v6350
  %v6382 = vpack.i.b16 %v6353, %v6352
  %v6383 = vpack.i.b16 %v6355, %v6354
  %v6384 = vpack.i.b16 %v6357, %v6356
  %v6385 = vpack.i.b16 %v6359, %v6358
  %v6386 = vpack.i.b16 %v6361, %v6360
  %v6387 = vpack.i.b16 %v6363, %v6362
  %v6388 = vpack.i.b16 %v6365, %v6364
  %v6389 = vpack.i.b16 %v6367, %v6366
  %v6390 = vpack.i.b16 %v6369, %v6368
  %v6391 = vpack.i.b16 %v6371, %v6370
  %6393 = vst [vmem:[#allocation1] ss:$9 sm:$0xff] %v6372
  %s6395 = scalar_lea.vmem [#allocation1], 1
  %6396 = vst [vmem:[%s6395] ss:$9 sm:$0xff] %v6373
  %s6398 = scalar_lea.vmem [#allocation1], 2
  %6399 = vst [vmem:[%s6398] ss:$9 sm:$0xff] %v6374
  %s6401 = scalar_lea.vmem [#allocation1], 3
  %6402 = vst [vmem:[%s6401] ss:$9 sm:$0xff] %v6375
  %s6404 = scalar_lea.vmem [#allocation1], 4
  %6405 = vst [vmem:[%s6404] ss:$9 sm:$0xff] %v6376
  %s6407 = scalar_lea.vmem [#allocation1], 5
  %6408 = vst [vmem:[%s6407] ss:$9 sm:$0xff] %v6377
  %s6410 = scalar_lea.vmem [#allocation1], 6
  %6411 = vst [vmem:[%s6410] ss:$9 sm:$0xff] %v6378
  %s6413 = scalar_lea.vmem [#allocation1], 7
  %6414 = vst [vmem:[%s6413] ss:$9 sm:$0xff] %v6379
  %v6415 = vld [vmem:[#allocation1] sm:$0xff]
  %v6416 = vld [vmem:[#allocation1 + $0x9] sm:$0xff]
  %6418 = vst [vmem:[#allocation1] ss:$9 sm:$0xff] %v6380
  %6420 = vst [vmem:[%s6395] ss:$9 sm:$0xff] %v6381
  %6422 = vst [vmem:[%s6398] ss:$9 sm:$0xff] %v6382
  %6424 = vst [vmem:[%s6401] ss:$9 sm:$0xff] %v6383
  %6426 = vst [vmem:[%s6404] ss:$9 sm:$0xff] %v6384
  %6428 = vst [vmem:[%s6407] ss:$9 sm:$0xff] %v6385
  %6430 = vst [vmem:[%s6410] ss:$9 sm:$0xff] %v6386
  %6432 = vst [vmem:[%s6413] ss:$9 sm:$0xff] %v6387
  %v6433 = vld [vmem:[#allocation1] sm:$0xff]
  %v6434 = vld [vmem:[#allocation1 + $0x9] sm:$0xff]
  %6436 = vst [vmem:[#allocation1] ss:$9 sm:$0xff] %v6388
  %6438 = vst [vmem:[%s6395] ss:$9 sm:$0xff] %v6389
  %6440 = vst [vmem:[%s6398] ss:$9 sm:$0xff] %v6390
  %6442 = vst [vmem:[%s6401] ss:$9 sm:$0xff] %v6391
  %v6443 = vld [vmem:[#allocation1] sm:$0xff]
  %v6444 = vld [vmem:[#allocation1 + $0x9] sm:$0xff]
  %v6448 = vsel %vm1679, %v6416, 0
  %v6450 = vsel %vm1679, %v6434, 0
  %v6452 = vsel %vm1679, %v6444, 0
  %6454 = vmatpush.bf16.msra.mxu0 %v1666
  %6455 = vmatpush.bf16.msra.mxu0 %v1665
  %6456 = vmatpush.bf16.msra.mxu0 %v1664
  %6457 = vmatpush.bf16.msra.mxu0 %v1663
  %6458 = vmatpush.bf16.msra.mxu0 %v1662
  %6459 = vmatpush.bf16.msra.mxu0 %v1661
  %6460 = vmatpush.bf16.msra.mxu0 %v1660
  %6461 = vmatpush.bf16.msra.mxu0 %v1659
  %6462 = vmatmul.bf16.gmra.mxu0 %v6415
  %v6463 = vpop.f32.mrf.mxu0
  %v6464 = vadd.f32 0.0, %v6463
  %v6465 = vpop.f32.mrf.mxu0
  %v6466 = vadd.f32 0.0, %v6465
  %6467 = vmatmul.bf16.gmra.mxu0 %v6433
  %v6468 = vpop.f32.mrf.mxu0
  %v6469 = vadd.f32 0.0, %v6468
  %v6470 = vpop.f32.mrf.mxu0
  %v6471 = vadd.f32 0.0, %v6470
  %6472 = vmatmul.bf16.gmra.mxu0 %v6443
  %v6473 = vpop.f32.mrf.mxu0
  %v6474 = vadd.f32 0.0, %v6473
  %v6475 = vpop.f32.mrf.mxu0
  %6476 = vdwg.mxu0
  %6477 = vmatpush.bf16.msra.mxu0 0
  %6478 = vmatpush.bf16.msra.mxu0 0
  %6479 = vmatpush.bf16.msra.mxu0 0
  %6480 = vmatpush.bf16.msra.mxu0 0
  %6481 = vmatpush.bf16.msra.mxu0 0
  %6482 = vmatpush.bf16.msra.mxu0 0
  %6483 = vmatpush.bf16.msra.mxu0 %v1668
  %6484 = vmatpush.bf16.msra.mxu0 %v1667
  %6485 = vmatmul.bf16.gmra.mxu0 %v6448
  %v6486 = vpop.f32.mrf.mxu0
  %v6487 = vadd.f32 %v6464, %v6486
  %v6488 = vpop.f32.mrf.mxu0
  %v6489 = vadd.f32 %v6466, %v6488
  %6490 = vmatmul.bf16.gmra.mxu0 %v6450
  %v6491 = vpop.f32.mrf.mxu0
  %v6492 = vadd.f32 %v6469, %v6491
  %v6493 = vpop.f32.mrf.mxu0
  %v6494 = vadd.f32 %v6471, %v6493
  %6495 = vmatmul.bf16.gmra.mxu0 %v6452
  %v6496 = vpop.f32.mrf.mxu0
  %v6497 = vadd.f32 %v6474, %v6496
  %v6498 = vpop.f32.mrf.mxu0
  %6499 = vdwg.mxu0
  %v6500 = vmax.f32 %v6095, %v6487
  %v6501 = vmax.f32 %v6096, %v6489
  %v6502 = vmax.f32 %v6097, %v6492
  %v6503 = vmax.f32 %v6098, %v6494
  %v6504 = vmax.f32 %v6099, %v6497
  %v6505 = vadd.f32 %v6500, %v3021
  %v6506 = vadd.f32 %v6501, %v3021
  %v6507 = vadd.f32 %v6502, %v3021
  %v6508 = vadd.f32 %v6503, %v3021
  %v6509 = vadd.f32 %v6504, %v3021
  %v6510 = vmax.f32 %v6505, 0.0
  %v6511 = vmax.f32 %v6506, 0.0
  %v6512 = vmax.f32 %v6507, 0.0
  %v6513 = vmax.f32 %v6508, 0.0
  %v6514 = vmax.f32 %v6509, 0.0
  %v6520 = vrot.slane %v6510, 1
  %v6521 = vrot.slane %v6510, 2
  %v6522 = vrot.slane %v6510, 3
  %v6523 = vrot.slane %v6510, 4
  %v6524 = vrot.slane %v6510, 5
  %v6525 = vrot.slane %v6510, 6
  %v6526 = vrot.slane %v6510, 7
  %v6527 = vrot.slane %v6511, 1
  %v6528 = vrot.slane %v6511, 2
  %v6529 = vrot.slane %v6511, 3
  %v6530 = vrot.slane %v6511, 4
  %v6531 = vrot.slane %v6511, 5
  %v6532 = vrot.slane %v6511, 6
  %v6533 = vrot.slane %v6511, 7
  %v6534 = vrot.slane %v6512, 1
  %v6535 = vrot.slane %v6512, 2
  %v6536 = vrot.slane %v6512, 3
  %v6537 = vrot.slane %v6512, 4
  %v6538 = vrot.slane %v6512, 5
  %v6539 = vrot.slane %v6512, 6
  %v6540 = vrot.slane %v6512, 7
  %v6541 = vrot.slane %v6513, 1
  %v6542 = vrot.slane %v6513, 2
  %v6543 = vrot.slane %v6513, 3
  %v6544 = vrot.slane %v6513, 4
  %v6545 = vrot.slane %v6513, 5
  %v6546 = vrot.slane %v6513, 6
  %v6547 = vrot.slane %v6513, 7
  %v6548 = vrot.slane %v6514, 1
  %v6549 = vrot.slane %v6514, 2
  %v6550 = vrot.slane %v6514, 3
  %v6551 = vrot.slane %v6514, 4
  %v6552 = vrot.slane %v6514, 5
  %v6553 = vrot.slane %v6514, 6
  %v6554 = vrot.slane %v6514, 7
  %6555 = vst [vmem:[#allocation1] ss:$9 sm:$0xff] %v6510
  %s6556 = scalar_lea.vmem [#allocation1], 1
  %6557 = vst [vmem:[%s6556] ss:$9 sm:$0xff] %v6520
  %s6558 = scalar_lea.vmem [#allocation1], 2
  %6559 = vst [vmem:[%s6558] ss:$9 sm:$0xff] %v6521
  %s6560 = scalar_lea.vmem [#allocation1], 3
  %6561 = vst [vmem:[%s6560] ss:$9 sm:$0xff] %v6522
  %s6562 = scalar_lea.vmem [#allocation1], 4
  %6563 = vst [vmem:[%s6562] ss:$9 sm:$0xff] %v6523
  %v6564 = vld [vmem:[#allocation1] sm:$0xff]
  %6565 = vst [vmem:[#allocation1] ss:$9 sm:$0xff] %v6524
  %6566 = vst [vmem:[%s6556] ss:$9 sm:$0xff] %v6525
  %6567 = vst [vmem:[%s6558] ss:$9 sm:$0xff] %v6526
  %6568 = vst [vmem:[%s6560] ss:$9 sm:$0xff] %v6511
  %6569 = vst [vmem:[%s6562] ss:$9 sm:$0xff] %v6527
  %v6570 = vld [vmem:[#allocation1] sm:$0xff]
  %6571 = vst [vmem:[#allocation1] ss:$9 sm:$0xff] %v6528
  %6572 = vst [vmem:[%s6556] ss:$9 sm:$0xff] %v6529
  %6573 = vst [vmem:[%s6558] ss:$9 sm:$0xff] %v6530
  %6574 = vst [vmem:[%s6560] ss:$9 sm:$0xff] %v6531
  %6575 = vst [vmem:[%s6562] ss:$9 sm:$0xff] %v6532
  %v6576 = vld [vmem:[#allocation1] sm:$0xff]
  %6577 = vst [vmem:[#allocation1] ss:$9 sm:$0xff] %v6533
  %6578 = vst [vmem:[%s6556] ss:$9 sm:$0xff] %v6512
  %6579 = vst [vmem:[%s6558] ss:$9 sm:$0xff] %v6534
  %6580 = vst [vmem:[%s6560] ss:$9 sm:$0xff] %v6535
  %6581 = vst [vmem:[%s6562] ss:$9 sm:$0xff] %v6536
  %v6582 = vld [vmem:[#allocation1] sm:$0xff]
  %6583 = vst [vmem:[#allocation1] ss:$9 sm:$0xff] %v6537
  %6584 = vst [vmem:[%s6556] ss:$9 sm:$0xff] %v6538
  %6585 = vst [vmem:[%s6558] ss:$9 sm:$0xff] %v6539
  %6586 = vst [vmem:[%s6560] ss:$9 sm:$0xff] %v6540
  %6587 = vst [vmem:[%s6562] ss:$9 sm:$0xff] %v6513
  %v6588 = vld [vmem:[#allocation1] sm:$0xff]
  %6589 = vst [vmem:[#allocation1] ss:$9 sm:$0xff] %v6541
  %6590 = vst [vmem:[%s6556] ss:$9 sm:$0xff] %v6542
  %6591 = vst [vmem:[%s6558] ss:$9 sm:$0xff] %v6543
  %6592 = vst [vmem:[%s6560] ss:$9 sm:$0xff] %v6544
  %6593 = vst [vmem:[%s6562] ss:$9 sm:$0xff] %v6545
  %v6594 = vld [vmem:[#allocation1] sm:$0xff]
  %6595 = vst [vmem:[#allocation1] ss:$9 sm:$0xff] %v6546
  %6596 = vst [vmem:[%s6556] ss:$9 sm:$0xff] %v6547
  %6597 = vst [vmem:[%s6558] ss:$9 sm:$0xff] %v6514
  %6598 = vst [vmem:[%s6560] ss:$9 sm:$0xff] %v6548
  %6599 = vst [vmem:[%s6562] ss:$9 sm:$0xff] %v6549
  %v6600 = vld [vmem:[#allocation1] sm:$0xff]
  %6601 = vst [vmem:[#allocation1] ss:$9 sm:$0xff] %v6550
  %6602 = vst [vmem:[%s6556] ss:$9 sm:$0xff] %v6551
  %6603 = vst [vmem:[%s6558] ss:$9 sm:$0xff] %v6552
  %6604 = vst [vmem:[%s6560] ss:$9 sm:$0xff] %v6553
  %6605 = vst [vmem:[%s6562] ss:$9 sm:$0xff] %v6554
  %v6606 = vld [vmem:[#allocation1] sm:$0xff]
  %v6615 = vpack.c.bf16 %v6564, %v6564
  %v6616 = vpack.c.bf16 %v6570, %v6570
  %v6617 = vpack.c.bf16 %v6576, %v6576
  %v6618 = vpack.c.bf16 %v6582, %v6582
  %v6619 = vpack.c.bf16 %v6588, %v6588
  %v6620 = vpack.c.bf16 %v6594, %v6594
  %v6621 = vpack.c.bf16 %v6600, %v6600
  %v6622 = vpack.c.bf16 %v6606, %v6606
  %6623 = vrot.lane.b32.xlu0 %v1106, 92
  %v6624 = vpop.permute.xlu0 %6623
  %6625 = vrot.lane.b32.xlu0 %v1107, 92
  %v6626 = vpop.permute.xlu0 %6625
  %6627 = vrot.lane.b32.xlu0 %v1108, 92
  %v6628 = vpop.permute.xlu0 %6627
  %6629 = vrot.lane.b32.xlu0 %v1109, 92
  %v6630 = vpop.permute.xlu0 %6629
  %6631 = vrot.lane.b32.xlu0 %v1110, 92
  %v6632 = vpop.permute.xlu0 %6631
  %6633 = vrot.lane.b32.xlu0 %v1111, 92
  %v6634 = vpop.permute.xlu0 %6633
  %6635 = vrot.lane.b32.xlu0 %v1112, 92
  %v6636 = vpop.permute.xlu0 %6635
  %6637 = vrot.lane.b32.xlu0 %v1113, 92
  %v6638 = vpop.permute.xlu0 %6637
  %v6640 = vsel %vm1306, %v6624, %v2599
  %v6642 = vsel %vm1306, %v6626, %v2601
  %v6644 = vsel %vm1306, %v6628, %v2603
  %v6646 = vsel %vm1306, %v6630, %v2605
  %v6648 = vsel %vm1306, %v6632, %v2607
  %v6650 = vsel %vm1306, %v6634, %v2609
  %v6652 = vsel %vm1306, %v6636, %v2611
  %v6654 = vsel %vm1306, %v6638, %v2613
  %v6655 = vsel %vm1331, %v6640, %v2615
  %v6656 = vsel %vm1331, %v6642, %v2617
  %v6657 = vsel %vm1331, %v6644, %v2619
  %v6658 = vsel %vm1331, %v6646, %v2621
  %v6659 = vsel %vm1331, %v6648, %v2623
  %v6660 = vsel %vm1331, %v6650, %v2625
  %v6661 = vsel %vm1331, %v6652, %v2627
  %v6662 = vsel %vm1331, %v6654, %v2629
  %v6663 = vsel %vm1348, %v6655, %v2631
  %v6664 = vsel %vm1348, %v6656, %v2633
  %v6665 = vsel %vm1348, %v6657, %v2635
  %v6666 = vsel %vm1348, %v6658, %v2637
  %v6667 = vsel %vm1348, %v6659, %v2639
  %v6668 = vsel %vm1348, %v6660, %v2641
  %v6669 = vsel %vm1348, %v6661, %v2643
  %v6670 = vsel %vm1348, %v6662, %v2645
  %v6671 = vsel %vm1365, %v6663, %v2647
  %v6672 = vsel %vm1365, %v6664, %v2649
  %v6673 = vsel %vm1365, %v6665, %v2651
  %v6674 = vsel %vm1365, %v6666, %v2653
  %v6675 = vsel %vm1365, %v6667, %v2655
  %v6676 = vsel %vm1365, %v6668, %v2657
  %v6677 = vsel %vm1365, %v6669, %v2659
  %v6678 = vsel %vm1365, %v6670, %v2661
  %v6679 = vsel %vm1382, %v2647, 0
  %v6680 = vsel %vm1382, %v2649, 0
  %v6681 = vsel %vm1382, %v2651, 0
  %v6682 = vsel %vm1382, %v2653, 0
  %v6683 = vsel %vm1382, %v2655, 0
  %v6684 = vsel %vm1382, %v2657, 0
  %v6685 = vsel %vm1382, %v2659, 0
  %v6686 = vsel %vm1382, %v2661, 0
  %v6695 = vrot.slane %v6679, 7
  %v6696 = vrot.slane %v6680, 7
  %v6697 = vrot.slane %v6681, 7
  %v6698 = vrot.slane %v6682, 7
  %v6699 = vrot.slane %v6683, 7
  %v6700 = vrot.slane %v6684, 7
  %v6701 = vrot.slane %v6685, 7
  %v6702 = vrot.slane %v6686, 7
  %v6704 = vsel %vm1408, %v6671, %v6695
  %v6706 = vsel %vm1412, %v6671, %v6695
  %v6708 = vrot.slane %v6706, 1
  %v6709 = vsel %vm1416, %v6671, %v6695
  %v6711 = vrot.slane %v6709, 2
  %v6713 = vsel %vm1408, %v6672, %v6696
  %v6715 = vsel %vm1412, %v6672, %v6696
  %v6717 = vrot.slane %v6715, 1
  %v6718 = vsel %vm1416, %v6672, %v6696
  %v6720 = vrot.slane %v6718, 2
  %v6722 = vsel %vm1408, %v6673, %v6697
  %v6724 = vsel %vm1412, %v6673, %v6697
  %v6726 = vrot.slane %v6724, 1
  %v6727 = vsel %vm1416, %v6673, %v6697
  %v6729 = vrot.slane %v6727, 2
  %v6731 = vsel %vm1408, %v6674, %v6698
  %v6733 = vsel %vm1412, %v6674, %v6698
  %v6735 = vrot.slane %v6733, 1
  %v6736 = vsel %vm1416, %v6674, %v6698
  %v6738 = vrot.slane %v6736, 2
  %v6740 = vsel %vm1408, %v6675, %v6699
  %v6742 = vsel %vm1412, %v6675, %v6699
  %v6744 = vrot.slane %v6742, 1
  %v6745 = vsel %vm1416, %v6675, %v6699
  %v6747 = vrot.slane %v6745, 2
  %v6749 = vsel %vm1408, %v6676, %v6700
  %v6751 = vsel %vm1412, %v6676, %v6700
  %v6753 = vrot.slane %v6751, 1
  %v6754 = vsel %vm1416, %v6676, %v6700
  %v6756 = vrot.slane %v6754, 2
  %v6758 = vsel %vm1408, %v6677, %v6701
  %v6760 = vsel %vm1412, %v6677, %v6701
  %v6762 = vrot.slane %v6760, 1
  %v6763 = vsel %vm1416, %v6677, %v6701
  %v6765 = vrot.slane %v6763, 2
  %v6767 = vsel %vm1408, %v6678, %v6702
  %v6769 = vsel %vm1412, %v6678, %v6702
  %v6771 = vrot.slane %v6769, 1
  %v6772 = vsel %vm1416, %v6678, %v6702
  %v6774 = vrot.slane %v6772, 2
  %v6775 = vunpack.i.l.s16 %v6704
  %v6776 = vunpack.i.h.s16 %v6704
  %v6777 = vunpack.i.l.s16 %v6708
  %v6778 = vunpack.i.h.s16 %v6708
  %v6779 = vunpack.i.l.s16 %v6711
  %v6780 = vunpack.i.l.s16 %v6713
  %v6781 = vunpack.i.h.s16 %v6713
  %v6782 = vunpack.i.l.s16 %v6717
  %v6783 = vunpack.i.h.s16 %v6717
  %v6784 = vunpack.i.l.s16 %v6720
  %v6785 = vunpack.i.l.s16 %v6722
  %v6786 = vunpack.i.h.s16 %v6722
  %v6787 = vunpack.i.l.s16 %v6726
  %v6788 = vunpack.i.h.s16 %v6726
  %v6789 = vunpack.i.l.s16 %v6729
  %v6790 = vunpack.i.l.s16 %v6731
  %v6791 = vunpack.i.h.s16 %v6731
  %v6792 = vunpack.i.l.s16 %v6735
  %v6793 = vunpack.i.h.s16 %v6735
  %v6794 = vunpack.i.l.s16 %v6738
  %v6795 = vunpack.i.l.s16 %v6740
  %v6796 = vunpack.i.h.s16 %v6740
  %v6797 = vunpack.i.l.s16 %v6744
  %v6798 = vunpack.i.h.s16 %v6744
  %v6799 = vunpack.i.l.s16 %v6747
  %v6800 = vunpack.i.l.s16 %v6749
  %v6801 = vunpack.i.h.s16 %v6749
  %v6802 = vunpack.i.l.s16 %v6753
  %v6803 = vunpack.i.h.s16 %v6753
  %v6804 = vunpack.i.l.s16 %v6756
  %v6805 = vunpack.i.l.s16 %v6758
  %v6806 = vunpack.i.h.s16 %v6758
  %v6807 = vunpack.i.l.s16 %v6762
  %v6808 = vunpack.i.h.s16 %v6762
  %v6809 = vunpack.i.l.s16 %v6765
  %v6810 = vunpack.i.l.s16 %v6767
  %v6811 = vunpack.i.h.s16 %v6767
  %v6812 = vunpack.i.l.s16 %v6771
  %v6813 = vunpack.i.h.s16 %v6771
  %v6814 = vunpack.i.l.s16 %v6774
  %v6815 = vpack.i.b16 %v6776, %v6775
  %v6816 = vpack.i.b16 %v6778, %v6777
  %v6817 = vpack.i.b16 %v6780, %v6779
  %v6818 = vpack.i.b16 %v6782, %v6781
  %v6819 = vpack.i.b16 %v6784, %v6783
  %v6820 = vpack.i.b16 %v6786, %v6785
  %v6821 = vpack.i.b16 %v6788, %v6787
  %v6822 = vpack.i.b16 %v6790, %v6789
  %v6823 = vpack.i.b16 %v6792, %v6791
  %v6824 = vpack.i.b16 %v6794, %v6793
  %v6825 = vpack.i.b16 %v6796, %v6795
  %v6826 = vpack.i.b16 %v6798, %v6797
  %v6827 = vpack.i.b16 %v6800, %v6799
  %v6828 = vpack.i.b16 %v6802, %v6801
  %v6829 = vpack.i.b16 %v6804, %v6803
  %v6830 = vpack.i.b16 %v6806, %v6805
  %v6831 = vpack.i.b16 %v6808, %v6807
  %v6832 = vpack.i.b16 %v6810, %v6809
  %v6833 = vpack.i.b16 %v6812, %v6811
  %v6834 = vpack.i.b16 %v6814, %v6813
  %6836 = vst [vmem:[#allocation1] ss:$9 sm:$0xff] %v6815
  %s6838 = scalar_lea.vmem [#allocation1], 1
  %6839 = vst [vmem:[%s6838] ss:$9 sm:$0xff] %v6816
  %s6841 = scalar_lea.vmem [#allocation1], 2
  %6842 = vst [vmem:[%s6841] ss:$9 sm:$0xff] %v6817
  %s6844 = scalar_lea.vmem [#allocation1], 3
  %6845 = vst [vmem:[%s6844] ss:$9 sm:$0xff] %v6818
  %s6847 = scalar_lea.vmem [#allocation1], 4
  %6848 = vst [vmem:[%s6847] ss:$9 sm:$0xff] %v6819
  %s6850 = scalar_lea.vmem [#allocation1], 5
  %6851 = vst [vmem:[%s6850] ss:$9 sm:$0xff] %v6820
  %s6853 = scalar_lea.vmem [#allocation1], 6
  %6854 = vst [vmem:[%s6853] ss:$9 sm:$0xff] %v6821
  %s6856 = scalar_lea.vmem [#allocation1], 7
  %6857 = vst [vmem:[%s6856] ss:$9 sm:$0xff] %v6822
  %v6858 = vld [vmem:[#allocation1] sm:$0xff]
  %v6859 = vld [vmem:[#allocation1 + $0x9] sm:$0xff]
  %6861 = vst [vmem:[#allocation1] ss:$9 sm:$0xff] %v6823
  %6863 = vst [vmem:[%s6838] ss:$9 sm:$0xff] %v6824
  %6865 = vst [vmem:[%s6841] ss:$9 sm:$0xff] %v6825
  %6867 = vst [vmem:[%s6844] ss:$9 sm:$0xff] %v6826
  %6869 = vst [vmem:[%s6847] ss:$9 sm:$0xff] %v6827
  %6871 = vst [vmem:[%s6850] ss:$9 sm:$0xff] %v6828
  %6873 = vst [vmem:[%s6853] ss:$9 sm:$0xff] %v6829
  %6875 = vst [vmem:[%s6856] ss:$9 sm:$0xff] %v6830
  %v6876 = vld [vmem:[#allocation1] sm:$0xff]
  %v6877 = vld [vmem:[#allocation1 + $0x9] sm:$0xff]
  %6879 = vst [vmem:[#allocation1] ss:$9 sm:$0xff] %v6831
  %6881 = vst [vmem:[%s6838] ss:$9 sm:$0xff] %v6832
  %6883 = vst [vmem:[%s6841] ss:$9 sm:$0xff] %v6833
  %6885 = vst [vmem:[%s6844] ss:$9 sm:$0xff] %v6834
  %v6886 = vld [vmem:[#allocation1] sm:$0xff]
  %v6887 = vld [vmem:[#allocation1 + $0x9] sm:$0xff]
  %v6891 = vsel %vm1679, %v6859, 0
  %v6893 = vsel %vm1679, %v6877, 0
  %v6895 = vsel %vm1679, %v6887, 0
  %6897 = vmatpush.bf16.msra.mxu0 %v1666
  %6898 = vmatpush.bf16.msra.mxu0 %v1665
  %6899 = vmatpush.bf16.msra.mxu0 %v1664
  %6900 = vmatpush.bf16.msra.mxu0 %v1663
  %6901 = vmatpush.bf16.msra.mxu0 %v1662
  %6902 = vmatpush.bf16.msra.mxu0 %v1661
  %6903 = vmatpush.bf16.msra.mxu0 %v1660
  %6904 = vmatpush.bf16.msra.mxu0 %v1659
  %6905 = vmatmul.bf16.gmra.mxu0 %v6858
  %v6906 = vpop.f32.mrf.mxu0
  %v6907 = vadd.f32 0.0, %v6906
  %v6908 = vpop.f32.mrf.mxu0
  %v6909 = vadd.f32 0.0, %v6908
  %6910 = vmatmul.bf16.gmra.mxu0 %v6876
  %v6911 = vpop.f32.mrf.mxu0
  %v6912 = vadd.f32 0.0, %v6911
  %v6913 = vpop.f32.mrf.mxu0
  %v6914 = vadd.f32 0.0, %v6913
  %6915 = vmatmul.bf16.gmra.mxu0 %v6886
  %v6916 = vpop.f32.mrf.mxu0
  %v6917 = vadd.f32 0.0, %v6916
  %v6918 = vpop.f32.mrf.mxu0
  %6919 = vdwg.mxu0
  %6920 = vmatpush.bf16.msra.mxu0 0
  %6921 = vmatpush.bf16.msra.mxu0 0
  %6922 = vmatpush.bf16.msra.mxu0 0
  %6923 = vmatpush.bf16.msra.mxu0 0
  %6924 = vmatpush.bf16.msra.mxu0 0
  %6925 = vmatpush.bf16.msra.mxu0 0
  %6926 = vmatpush.bf16.msra.mxu0 %v1668
  %6927 = vmatpush.bf16.msra.mxu0 %v1667
  %6928 = vmatmul.bf16.gmra.mxu0 %v6891
  %v6929 = vpop.f32.mrf.mxu0
  %v6930 = vadd.f32 %v6907, %v6929
  %v6931 = vpop.f32.mrf.mxu0
  %v6932 = vadd.f32 %v6909, %v6931
  %6933 = vmatmul.bf16.gmra.mxu0 %v6893
  %v6934 = vpop.f32.mrf.mxu0
  %v6935 = vadd.f32 %v6912, %v6934
  %v6936 = vpop.f32.mrf.mxu0
  %v6937 = vadd.f32 %v6914, %v6936
  %6938 = vmatmul.bf16.gmra.mxu0 %v6895
  %v6939 = vpop.f32.mrf.mxu0
  %v6940 = vadd.f32 %v6917, %v6939
  %v6941 = vpop.f32.mrf.mxu0
  %6942 = vdwg.mxu0
  %6943 = vrot.lane.b32.xlu0 %v1106, 86
  %v6944 = vpop.permute.xlu0 %6943
  %6945 = vrot.lane.b32.xlu0 %v1107, 86
  %v6946 = vpop.permute.xlu0 %6945
  %6947 = vrot.lane.b32.xlu0 %v1108, 86
  %v6948 = vpop.permute.xlu0 %6947
  %6949 = vrot.lane.b32.xlu0 %v1109, 86
  %v6950 = vpop.permute.xlu0 %6949
  %6951 = vrot.lane.b32.xlu0 %v1110, 86
  %v6952 = vpop.permute.xlu0 %6951
  %6953 = vrot.lane.b32.xlu0 %v1111, 86
  %v6954 = vpop.permute.xlu0 %6953
  %6955 = vrot.lane.b32.xlu0 %v1112, 86
  %v6956 = vpop.permute.xlu0 %6955
  %6957 = vrot.lane.b32.xlu0 %v1113, 86
  %v6958 = vpop.permute.xlu0 %6957
  %v6960 = vsel %vm1306, %v6944, %v3979
  %v6962 = vsel %vm1306, %v6946, %v3981
  %v6964 = vsel %vm1306, %v6948, %v3983
  %v6966 = vsel %vm1306, %v6950, %v3985
  %v6968 = vsel %vm1306, %v6952, %v3987
  %v6970 = vsel %vm1306, %v6954, %v3989
  %v6972 = vsel %vm1306, %v6956, %v3991
  %v6974 = vsel %vm1306, %v6958, %v3993
  %v6975 = vsel %vm1331, %v6960, %v3995
  %v6976 = vsel %vm1331, %v6962, %v3997
  %v6977 = vsel %vm1331, %v6964, %v3999
  %v6978 = vsel %vm1331, %v6966, %v4001
  %v6979 = vsel %vm1331, %v6968, %v4003
  %v6980 = vsel %vm1331, %v6970, %v4005
  %v6981 = vsel %vm1331, %v6972, %v4007
  %v6982 = vsel %vm1331, %v6974, %v4009
  %v6983 = vsel %vm1348, %v6975, %v4011
  %v6984 = vsel %vm1348, %v6976, %v4013
  %v6985 = vsel %vm1348, %v6977, %v4015
  %v6986 = vsel %vm1348, %v6978, %v4017
  %v6987 = vsel %vm1348, %v6979, %v4019
  %v6988 = vsel %vm1348, %v6980, %v4021
  %v6989 = vsel %vm1348, %v6981, %v4023
  %v6990 = vsel %vm1348, %v6982, %v4025
  %v6991 = vsel %vm1365, %v6983, %v4027
  %v6992 = vsel %vm1365, %v6984, %v4029
  %v6993 = vsel %vm1365, %v6985, %v4031
  %v6994 = vsel %vm1365, %v6986, %v4033
  %v6995 = vsel %vm1365, %v6987, %v4035
  %v6996 = vsel %vm1365, %v6988, %v4037
  %v6997 = vsel %vm1365, %v6989, %v4039
  %v6998 = vsel %vm1365, %v6990, %v4041
  %v6999 = vsel %vm1382, %v4027, 0
  %v7000 = vsel %vm1382, %v4029, 0
  %v7001 = vsel %vm1382, %v4031, 0
  %v7002 = vsel %vm1382, %v4033, 0
  %v7003 = vsel %vm1382, %v4035, 0
  %v7004 = vsel %vm1382, %v4037, 0
  %v7005 = vsel %vm1382, %v4039, 0
  %v7006 = vsel %vm1382, %v4041, 0
  %v7015 = vrot.slane %v6999, 7
  %v7016 = vrot.slane %v7000, 7
  %v7017 = vrot.slane %v7001, 7
  %v7018 = vrot.slane %v7002, 7
  %v7019 = vrot.slane %v7003, 7
  %v7020 = vrot.slane %v7004, 7
  %v7021 = vrot.slane %v7005, 7
  %v7022 = vrot.slane %v7006, 7
  %v7024 = vsel %vm1408, %v6991, %v7015
  %v7026 = vsel %vm1412, %v6991, %v7015
  %v7028 = vrot.slane %v7026, 1
  %v7029 = vsel %vm1416, %v6991, %v7015
  %v7031 = vrot.slane %v7029, 2
  %v7033 = vsel %vm1408, %v6992, %v7016
  %v7035 = vsel %vm1412, %v6992, %v7016
  %v7037 = vrot.slane %v7035, 1
  %v7038 = vsel %vm1416, %v6992, %v7016
  %v7040 = vrot.slane %v7038, 2
  %v7042 = vsel %vm1408, %v6993, %v7017
  %v7044 = vsel %vm1412, %v6993, %v7017
  %v7046 = vrot.slane %v7044, 1
  %v7047 = vsel %vm1416, %v6993, %v7017
  %v7049 = vrot.slane %v7047, 2
  %v7051 = vsel %vm1408, %v6994, %v7018
  %v7053 = vsel %vm1412, %v6994, %v7018
  %v7055 = vrot.slane %v7053, 1
  %v7056 = vsel %vm1416, %v6994, %v7018
  %v7058 = vrot.slane %v7056, 2
  %v7060 = vsel %vm1408, %v6995, %v7019
  %v7062 = vsel %vm1412, %v6995, %v7019
  %v7064 = vrot.slane %v7062, 1
  %v7065 = vsel %vm1416, %v6995, %v7019
  %v7067 = vrot.slane %v7065, 2
  %v7069 = vsel %vm1408, %v6996, %v7020
  %v7071 = vsel %vm1412, %v6996, %v7020
  %v7073 = vrot.slane %v7071, 1
  %v7074 = vsel %vm1416, %v6996, %v7020
  %v7076 = vrot.slane %v7074, 2
  %v7078 = vsel %vm1408, %v6997, %v7021
  %v7080 = vsel %vm1412, %v6997, %v7021
  %v7082 = vrot.slane %v7080, 1
  %v7083 = vsel %vm1416, %v6997, %v7021
  %v7085 = vrot.slane %v7083, 2
  %v7087 = vsel %vm1408, %v6998, %v7022
  %v7089 = vsel %vm1412, %v6998, %v7022
  %v7091 = vrot.slane %v7089, 1
  %v7092 = vsel %vm1416, %v6998, %v7022
  %v7094 = vrot.slane %v7092, 2
  %v7095 = vunpack.i.l.s16 %v7024
  %v7096 = vunpack.i.h.s16 %v7024
  %v7097 = vunpack.i.l.s16 %v7028
  %v7098 = vunpack.i.h.s16 %v7028
  %v7099 = vunpack.i.l.s16 %v7031
  %v7100 = vunpack.i.l.s16 %v7033
  %v7101 = vunpack.i.h.s16 %v7033
  %v7102 = vunpack.i.l.s16 %v7037
  %v7103 = vunpack.i.h.s16 %v7037
  %v7104 = vunpack.i.l.s16 %v7040
  %v7105 = vunpack.i.l.s16 %v7042
  %v7106 = vunpack.i.h.s16 %v7042
  %v7107 = vunpack.i.l.s16 %v7046
  %v7108 = vunpack.i.h.s16 %v7046
  %v7109 = vunpack.i.l.s16 %v7049
  %v7110 = vunpack.i.l.s16 %v7051
  %v7111 = vunpack.i.h.s16 %v7051
  %v7112 = vunpack.i.l.s16 %v7055
  %v7113 = vunpack.i.h.s16 %v7055
  %v7114 = vunpack.i.l.s16 %v7058
  %v7115 = vunpack.i.l.s16 %v7060
  %v7116 = vunpack.i.h.s16 %v7060
  %v7117 = vunpack.i.l.s16 %v7064
  %v7118 = vunpack.i.h.s16 %v7064
  %v7119 = vunpack.i.l.s16 %v7067
  %v7120 = vunpack.i.l.s16 %v7069
  %v7121 = vunpack.i.h.s16 %v7069
  %v7122 = vunpack.i.l.s16 %v7073
  %v7123 = vunpack.i.h.s16 %v7073
  %v7124 = vunpack.i.l.s16 %v7076
  %v7125 = vunpack.i.l.s16 %v7078
  %v7126 = vunpack.i.h.s16 %v7078
  %v7127 = vunpack.i.l.s16 %v7082
  %v7128 = vunpack.i.h.s16 %v7082
  %v7129 = vunpack.i.l.s16 %v7085
  %v7130 = vunpack.i.l.s16 %v7087
  %v7131 = vunpack.i.h.s16 %v7087
  %v7132 = vunpack.i.l.s16 %v7091
  %v7133 = vunpack.i.h.s16 %v7091
  %v7134 = vunpack.i.l.s16 %v7094
  %v7135 = vpack.i.b16 %v7096, %v7095
  %v7136 = vpack.i.b16 %v7098, %v7097
  %v7137 = vpack.i.b16 %v7100, %v7099
  %v7138 = vpack.i.b16 %v7102, %v7101
  %v7139 = vpack.i.b16 %v7104, %v7103
  %v7140 = vpack.i.b16 %v7106, %v7105
  %v7141 = vpack.i.b16 %v7108, %v7107
  %v7142 = vpack.i.b16 %v7110, %v7109
  %v7143 = vpack.i.b16 %v7112, %v7111
  %v7144 = vpack.i.b16 %v7114, %v7113
  %v7145 = vpack.i.b16 %v7116, %v7115
  %v7146 = vpack.i.b16 %v7118, %v7117
  %v7147 = vpack.i.b16 %v7120, %v7119
  %v7148 = vpack.i.b16 %v7122, %v7121
  %v7149 = vpack.i.b16 %v7124, %v7123
  %v7150 = vpack.i.b16 %v7126, %v7125
  %v7151 = vpack.i.b16 %v7128, %v7127
  %v7152 = vpack.i.b16 %v7130, %v7129
  %v7153 = vpack.i.b16 %v7132, %v7131
  %v7154 = vpack.i.b16 %v7134, %v7133
  %7156 = vst [vmem:[#allocation1] ss:$9 sm:$0xff] %v7135
  %s7158 = scalar_lea.vmem [#allocation1], 1
  %7159 = vst [vmem:[%s7158] ss:$9 sm:$0xff] %v7136
  %s7161 = scalar_lea.vmem [#allocation1], 2
  %7162 = vst [vmem:[%s7161] ss:$9 sm:$0xff] %v7137
  %s7164 = scalar_lea.vmem [#allocation1], 3
  %7165 = vst [vmem:[%s7164] ss:$9 sm:$0xff] %v7138
  %s7167 = scalar_lea.vmem [#allocation1], 4
  %7168 = vst [vmem:[%s7167] ss:$9 sm:$0xff] %v7139
  %s7170 = scalar_lea.vmem [#allocation1], 5
  %7171 = vst [vmem:[%s7170] ss:$9 sm:$0xff] %v7140
  %s7173 = scalar_lea.vmem [#allocation1], 6
  %7174 = vst [vmem:[%s7173] ss:$9 sm:$0xff] %v7141
  %s7176 = scalar_lea.vmem [#allocation1], 7
  %7177 = vst [vmem:[%s7176] ss:$9 sm:$0xff] %v7142
  %v7178 = vld [vmem:[#allocation1] sm:$0xff]
  %v7179 = vld [vmem:[#allocation1 + $0x9] sm:$0xff]
  %7181 = vst [vmem:[#allocation1] ss:$9 sm:$0xff] %v7143
  %7183 = vst [vmem:[%s7158] ss:$9 sm:$0xff] %v7144
  %7185 = vst [vmem:[%s7161] ss:$9 sm:$0xff] %v7145
  %7187 = vst [vmem:[%s7164] ss:$9 sm:$0xff] %v7146
  %7189 = vst [vmem:[%s7167] ss:$9 sm:$0xff] %v7147
  %7191 = vst [vmem:[%s7170] ss:$9 sm:$0xff] %v7148
  %7193 = vst [vmem:[%s7173] ss:$9 sm:$0xff] %v7149
  %7195 = vst [vmem:[%s7176] ss:$9 sm:$0xff] %v7150
  %v7196 = vld [vmem:[#allocation1] sm:$0xff]
  %v7197 = vld [vmem:[#allocation1 + $0x9] sm:$0xff]
  %7199 = vst [vmem:[#allocation1] ss:$9 sm:$0xff] %v7151
  %7201 = vst [vmem:[%s7158] ss:$9 sm:$0xff] %v7152
  %7203 = vst [vmem:[%s7161] ss:$9 sm:$0xff] %v7153
  %7205 = vst [vmem:[%s7164] ss:$9 sm:$0xff] %v7154
  %v7206 = vld [vmem:[#allocation1] sm:$0xff]
  %v7207 = vld [vmem:[#allocation1 + $0x9] sm:$0xff]
  %v7211 = vsel %vm1679, %v7179, 0
  %v7213 = vsel %vm1679, %v7197, 0
  %v7215 = vsel %vm1679, %v7207, 0
  %7217 = vmatpush.bf16.msra.mxu0 %v1666
  %7218 = vmatpush.bf16.msra.mxu0 %v1665
  %7219 = vmatpush.bf16.msra.mxu0 %v1664
  %7220 = vmatpush.bf16.msra.mxu0 %v1663
  %7221 = vmatpush.bf16.msra.mxu0 %v1662
  %7222 = vmatpush.bf16.msra.mxu0 %v1661
  %7223 = vmatpush.bf16.msra.mxu0 %v1660
  %7224 = vmatpush.bf16.msra.mxu0 %v1659
  %7225 = vmatmul.bf16.gmra.mxu0 %v7178
  %v7226 = vpop.f32.mrf.mxu0
  %v7227 = vadd.f32 0.0, %v7226
  %v7228 = vpop.f32.mrf.mxu0
  %v7229 = vadd.f32 0.0, %v7228
  %7230 = vmatmul.bf16.gmra.mxu0 %v7196
  %v7231 = vpop.f32.mrf.mxu0
  %v7232 = vadd.f32 0.0, %v7231
  %v7233 = vpop.f32.mrf.mxu0
  %v7234 = vadd.f32 0.0, %v7233
  %7235 = vmatmul.bf16.gmra.mxu0 %v7206
  %v7236 = vpop.f32.mrf.mxu0
  %v7237 = vadd.f32 0.0, %v7236
  %v7238 = vpop.f32.mrf.mxu0
  %7239 = vdwg.mxu0
  %7240 = vmatpush.bf16.msra.mxu0 0
  %7241 = vmatpush.bf16.msra.mxu0 0
  %7242 = vmatpush.bf16.msra.mxu0 0
  %7243 = vmatpush.bf16.msra.mxu0 0
  %7244 = vmatpush.bf16.msra.mxu0 0
  %7245 = vmatpush.bf16.msra.mxu0 0
  %7246 = vmatpush.bf16.msra.mxu0 %v1668
  %7247 = vmatpush.bf16.msra.mxu0 %v1667
  %7248 = vmatmul.bf16.gmra.mxu0 %v7211
  %v7249 = vpop.f32.mrf.mxu0
  %v7250 = vadd.f32 %v7227, %v7249
  %v7251 = vpop.f32.mrf.mxu0
  %v7252 = vadd.f32 %v7229, %v7251
  %7253 = vmatmul.bf16.gmra.mxu0 %v7213
  %v7254 = vpop.f32.mrf.mxu0
  %v7255 = vadd.f32 %v7232, %v7254
  %v7256 = vpop.f32.mrf.mxu0
  %v7257 = vadd.f32 %v7234, %v7256
  %7258 = vmatmul.bf16.gmra.mxu0 %v7215
  %v7259 = vpop.f32.mrf.mxu0
  %v7260 = vadd.f32 %v7237, %v7259
  %v7261 = vpop.f32.mrf.mxu0
  %7262 = vdwg.mxu0
  %v7263 = vmax.f32 %v6930, %v7250
  %v7264 = vmax.f32 %v6932, %v7252
  %v7265 = vmax.f32 %v6935, %v7255
  %v7266 = vmax.f32 %v6937, %v7257
  %v7267 = vmax.f32 %v6940, %v7260
  %7268 = vrot.lane.b32.xlu0 %v1066, 92
  %v7269 = vpop.permute.xlu0 %7268
  %7270 = vrot.lane.b32.xlu0 %v1067, 92
  %v7271 = vpop.permute.xlu0 %7270
  %7272 = vrot.lane.b32.xlu0 %v1068, 92
  %v7273 = vpop.permute.xlu0 %7272
  %7274 = vrot.lane.b32.xlu0 %v1069, 92
  %v7275 = vpop.permute.xlu0 %7274
  %7276 = vrot.lane.b32.xlu0 %v1070, 92
  %v7277 = vpop.permute.xlu0 %7276
  %7278 = vrot.lane.b32.xlu0 %v1071, 92
  %v7279 = vpop.permute.xlu0 %7278
  %7280 = vrot.lane.b32.xlu0 %v1072, 92
  %v7281 = vpop.permute.xlu0 %7280
  %7282 = vrot.lane.b32.xlu0 %v1073, 92
  %v7283 = vpop.permute.xlu0 %7282
  %7284 = vrot.lane.b32.xlu0 %v1120, 122
  %v7285 = vpop.permute.xlu0 %7284
  %7286 = vrot.lane.b32.xlu0 %v1127, 122
  %v7287 = vpop.permute.xlu0 %7286
  %7288 = vrot.lane.b32.xlu0 %v1134, 122
  %v7289 = vpop.permute.xlu0 %7288
  %7290 = vrot.lane.b32.xlu0 %v1141, 122
  %v7291 = vpop.permute.xlu0 %7290
  %7292 = vrot.lane.b32.xlu0 %v1148, 122
  %v7293 = vpop.permute.xlu0 %7292
  %7294 = vrot.lane.b32.xlu0 %v1155, 122
  %v7295 = vpop.permute.xlu0 %7294
  %7296 = vrot.lane.b32.xlu0 %v1162, 122
  %v7297 = vpop.permute.xlu0 %7296
  %7298 = vrot.lane.b32.xlu0 %v1169, 122
  %v7299 = vpop.permute.xlu0 %7298
  %7300 = vrot.lane.b32.xlu0 %v1192, 24
  %v7301 = vpop.permute.xlu0 %7300
  %7302 = vrot.lane.b32.xlu0 %v1199, 24
  %v7303 = vpop.permute.xlu0 %7302
  %7304 = vrot.lane.b32.xlu0 %v1206, 24
  %v7305 = vpop.permute.xlu0 %7304
  %7306 = vrot.lane.b32.xlu0 %v1213, 24
  %v7307 = vpop.permute.xlu0 %7306
  %7308 = vrot.lane.b32.xlu0 %v1220, 24
  %v7309 = vpop.permute.xlu0 %7308
  %7310 = vrot.lane.b32.xlu0 %v1227, 24
  %v7311 = vpop.permute.xlu0 %7310
  %7312 = vrot.lane.b32.xlu0 %v1234, 24
  %v7313 = vpop.permute.xlu0 %7312
  %7314 = vrot.lane.b32.xlu0 %v1241, 24
  %v7315 = vpop.permute.xlu0 %7314
  %7316 = vrot.lane.b32.xlu0 %v1282, 54
  %v7317 = vpop.permute.xlu0 %7316
  %7318 = vrot.lane.b32.xlu0 %v1283, 54
  %v7319 = vpop.permute.xlu0 %7318
  %7320 = vrot.lane.b32.xlu0 %v1284, 54
  %v7321 = vpop.permute.xlu0 %7320
  %7322 = vrot.lane.b32.xlu0 %v1285, 54
  %v7323 = vpop.permute.xlu0 %7322
  %7324 = vrot.lane.b32.xlu0 %v1286, 54
  %v7325 = vpop.permute.xlu0 %7324
  %7326 = vrot.lane.b32.xlu0 %v1287, 54
  %v7327 = vpop.permute.xlu0 %7326
  %7328 = vrot.lane.b32.xlu0 %v1288, 54
  %v7329 = vpop.permute.xlu0 %7328
  %7330 = vrot.lane.b32.xlu0 %v1289, 54
  %v7331 = vpop.permute.xlu0 %7330
  %7332 = vrot.lane.b32.xlu0 %v2233, 84
  %v7333 = vpop.permute.xlu0 %7332
  %7334 = vrot.lane.b32.xlu0 %v2234, 84
  %v7335 = vpop.permute.xlu0 %7334
  %7336 = vrot.lane.b32.xlu0 %v2235, 84
  %v7337 = vpop.permute.xlu0 %7336
  %7338 = vrot.lane.b32.xlu0 %v2236, 84
  %v7339 = vpop.permute.xlu0 %7338
  %7340 = vrot.lane.b32.xlu0 %v2237, 84
  %v7341 = vpop.permute.xlu0 %7340
  %7342 = vrot.lane.b32.xlu0 %v2238, 84
  %v7343 = vpop.permute.xlu0 %7342
  %7344 = vrot.lane.b32.xlu0 %v2239, 84
  %v7345 = vpop.permute.xlu0 %7344
  %7346 = vrot.lane.b32.xlu0 %v2240, 84
  %v7347 = vpop.permute.xlu0 %7346
  %v7350 = vsel %vm1306, %v7269, %v7285
  %v7353 = vsel %vm1306, %v7271, %v7287
  %v7356 = vsel %vm1306, %v7273, %v7289
  %v7359 = vsel %vm1306, %v7275, %v7291
  %v7362 = vsel %vm1306, %v7277, %v7293
  %v7365 = vsel %vm1306, %v7279, %v7295
  %v7368 = vsel %vm1306, %v7281, %v7297
  %v7371 = vsel %vm1306, %v7283, %v7299
  %v7373 = vsel %vm1331, %v7350, %v7301
  %v7375 = vsel %vm1331, %v7353, %v7303
  %v7377 = vsel %vm1331, %v7356, %v7305
  %v7379 = vsel %vm1331, %v7359, %v7307
  %v7381 = vsel %vm1331, %v7362, %v7309
  %v7383 = vsel %vm1331, %v7365, %v7311
  %v7385 = vsel %vm1331, %v7368, %v7313
  %v7387 = vsel %vm1331, %v7371, %v7315
  %v7389 = vsel %vm1348, %v7373, %v7317
  %v7391 = vsel %vm1348, %v7375, %v7319
  %v7393 = vsel %vm1348, %v7377, %v7321
  %v7395 = vsel %vm1348, %v7379, %v7323
  %v7397 = vsel %vm1348, %v7381, %v7325
  %v7399 = vsel %vm1348, %v7383, %v7327
  %v7401 = vsel %vm1348, %v7385, %v7329
  %v7403 = vsel %vm1348, %v7387, %v7331
  %v7405 = vsel %vm1365, %v7389, %v7333
  %v7407 = vsel %vm1365, %v7391, %v7335
  %v7409 = vsel %vm1365, %v7393, %v7337
  %v7411 = vsel %vm1365, %v7395, %v7339
  %v7413 = vsel %vm1365, %v7397, %v7341
  %v7415 = vsel %vm1365, %v7399, %v7343
  %v7417 = vsel %vm1365, %v7401, %v7345
  %v7419 = vsel %vm1365, %v7403, %v7347
  %v7420 = vsel %vm1382, %v7333, 0
  %v7421 = vsel %vm1382, %v7335, 0
  %v7422 = vsel %vm1382, %v7337, 0
  %v7423 = vsel %vm1382, %v7339, 0
  %v7424 = vsel %vm1382, %v7341, 0
  %v7425 = vsel %vm1382, %v7343, 0
  %v7426 = vsel %vm1382, %v7345, 0
  %v7427 = vsel %vm1382, %v7347, 0
  %v7436 = vrot.slane %v7420, 7
  %v7437 = vrot.slane %v7421, 7
  %v7438 = vrot.slane %v7422, 7
  %v7439 = vrot.slane %v7423, 7
  %v7440 = vrot.slane %v7424, 7
  %v7441 = vrot.slane %v7425, 7
  %v7442 = vrot.slane %v7426, 7
  %v7443 = vrot.slane %v7427, 7
  %v7445 = vsel %vm1408, %v7405, %v7436
  %v7447 = vsel %vm1412, %v7405, %v7436
  %v7449 = vrot.slane %v7447, 1
  %v7450 = vsel %vm1416, %v7405, %v7436
  %v7452 = vrot.slane %v7450, 2
  %v7454 = vsel %vm1408, %v7407, %v7437
  %v7456 = vsel %vm1412, %v7407, %v7437
  %v7458 = vrot.slane %v7456, 1
  %v7459 = vsel %vm1416, %v7407, %v7437
  %v7461 = vrot.slane %v7459, 2
  %v7463 = vsel %vm1408, %v7409, %v7438
  %v7465 = vsel %vm1412, %v7409, %v7438
  %v7467 = vrot.slane %v7465, 1
  %v7468 = vsel %vm1416, %v7409, %v7438
  %v7470 = vrot.slane %v7468, 2
  %v7472 = vsel %vm1408, %v7411, %v7439
  %v7474 = vsel %vm1412, %v7411, %v7439
  %v7476 = vrot.slane %v7474, 1
  %v7477 = vsel %vm1416, %v7411, %v7439
  %v7479 = vrot.slane %v7477, 2
  %v7481 = vsel %vm1408, %v7413, %v7440
  %v7483 = vsel %vm1412, %v7413, %v7440
  %v7485 = vrot.slane %v7483, 1
  %v7486 = vsel %vm1416, %v7413, %v7440
  %v7488 = vrot.slane %v7486, 2
  %v7490 = vsel %vm1408, %v7415, %v7441
  %v7492 = vsel %vm1412, %v7415, %v7441
  %v7494 = vrot.slane %v7492, 1
  %v7495 = vsel %vm1416, %v7415, %v7441
  %v7497 = vrot.slane %v7495, 2
  %v7499 = vsel %vm1408, %v7417, %v7442
  %v7501 = vsel %vm1412, %v7417, %v7442
  %v7503 = vrot.slane %v7501, 1
  %v7504 = vsel %vm1416, %v7417, %v7442
  %v7506 = vrot.slane %v7504, 2
  %v7508 = vsel %vm1408, %v7419, %v7443
  %v7510 = vsel %vm1412, %v7419, %v7443
  %v7512 = vrot.slane %v7510, 1
  %v7513 = vsel %vm1416, %v7419, %v7443
  %v7515 = vrot.slane %v7513, 2
  %v7516 = vunpack.i.l.s16 %v7445
  %v7517 = vunpack.i.h.s16 %v7445
  %v7518 = vunpack.i.l.s16 %v7449
  %v7519 = vunpack.i.h.s16 %v7449
  %v7520 = vunpack.i.l.s16 %v7452
  %v7521 = vunpack.i.l.s16 %v7454
  %v7522 = vunpack.i.h.s16 %v7454
  %v7523 = vunpack.i.l.s16 %v7458
  %v7524 = vunpack.i.h.s16 %v7458
  %v7525 = vunpack.i.l.s16 %v7461
  %v7526 = vunpack.i.l.s16 %v7463
  %v7527 = vunpack.i.h.s16 %v7463
  %v7528 = vunpack.i.l.s16 %v7467
  %v7529 = vunpack.i.h.s16 %v7467
  %v7530 = vunpack.i.l.s16 %v7470
  %v7531 = vunpack.i.l.s16 %v7472
  %v7532 = vunpack.i.h.s16 %v7472
  %v7533 = vunpack.i.l.s16 %v7476
  %v7534 = vunpack.i.h.s16 %v7476
  %v7535 = vunpack.i.l.s16 %v7479
  %v7536 = vunpack.i.l.s16 %v7481
  %v7537 = vunpack.i.h.s16 %v7481
  %v7538 = vunpack.i.l.s16 %v7485
  %v7539 = vunpack.i.h.s16 %v7485
  %v7540 = vunpack.i.l.s16 %v7488
  %v7541 = vunpack.i.l.s16 %v7490
  %v7542 = vunpack.i.h.s16 %v7490
  %v7543 = vunpack.i.l.s16 %v7494
  %v7544 = vunpack.i.h.s16 %v7494
  %v7545 = vunpack.i.l.s16 %v7497
  %v7546 = vunpack.i.l.s16 %v7499
  %v7547 = vunpack.i.h.s16 %v7499
  %v7548 = vunpack.i.l.s16 %v7503
  %v7549 = vunpack.i.h.s16 %v7503
  %v7550 = vunpack.i.l.s16 %v7506
  %v7551 = vunpack.i.l.s16 %v7508
  %v7552 = vunpack.i.h.s16 %v7508
  %v7553 = vunpack.i.l.s16 %v7512
  %v7554 = vunpack.i.h.s16 %v7512
  %v7555 = vunpack.i.l.s16 %v7515
  %v7556 = vpack.i.b16 %v7517, %v7516
  %v7557 = vpack.i.b16 %v7519, %v7518
  %v7558 = vpack.i.b16 %v7521, %v7520
  %v7559 = vpack.i.b16 %v7523, %v7522
  %v7560 = vpack.i.b16 %v7525, %v7524
  %v7561 = vpack.i.b16 %v7527, %v7526
  %v7562 = vpack.i.b16 %v7529, %v7528
  %v7563 = vpack.i.b16 %v7531, %v7530
  %v7564 = vpack.i.b16 %v7533, %v7532
  %v7565 = vpack.i.b16 %v7535, %v7534
  %v7566 = vpack.i.b16 %v7537, %v7536
  %v7567 = vpack.i.b16 %v7539, %v7538
  %v7568 = vpack.i.b16 %v7541, %v7540
  %v7569 = vpack.i.b16 %v7543, %v7542
  %v7570 = vpack.i.b16 %v7545, %v7544
  %v7571 = vpack.i.b16 %v7547, %v7546
  %v7572 = vpack.i.b16 %v7549, %v7548
  %v7573 = vpack.i.b16 %v7551, %v7550
  %v7574 = vpack.i.b16 %v7553, %v7552
  %v7575 = vpack.i.b16 %v7555, %v7554
  %7577 = vst [vmem:[#allocation1] ss:$9 sm:$0xff] %v7556
  %s7579 = scalar_lea.vmem [#allocation1], 1
  %7580 = vst [vmem:[%s7579] ss:$9 sm:$0xff] %v7557
  %s7582 = scalar_lea.vmem [#allocation1], 2
  %7583 = vst [vmem:[%s7582] ss:$9 sm:$0xff] %v7558
  %s7585 = scalar_lea.vmem [#allocation1], 3
  %7586 = vst [vmem:[%s7585] ss:$9 sm:$0xff] %v7559
  %s7588 = scalar_lea.vmem [#allocation1], 4
  %7589 = vst [vmem:[%s7588] ss:$9 sm:$0xff] %v7560
  %s7591 = scalar_lea.vmem [#allocation1], 5
  %7592 = vst [vmem:[%s7591] ss:$9 sm:$0xff] %v7561
  %s7594 = scalar_lea.vmem [#allocation1], 6
  %7595 = vst [vmem:[%s7594] ss:$9 sm:$0xff] %v7562
  %s7597 = scalar_lea.vmem [#allocation1], 7
  %7598 = vst [vmem:[%s7597] ss:$9 sm:$0xff] %v7563
  %v7599 = vld [vmem:[#allocation1] sm:$0xff]
  %v7600 = vld [vmem:[#allocation1 + $0x9] sm:$0xff]
  %7602 = vst [vmem:[#allocation1] ss:$9 sm:$0xff] %v7564
  %7604 = vst [vmem:[%s7579] ss:$9 sm:$0xff] %v7565
  %7606 = vst [vmem:[%s7582] ss:$9 sm:$0xff] %v7566
  %7608 = vst [vmem:[%s7585] ss:$9 sm:$0xff] %v7567
  %7610 = vst [vmem:[%s7588] ss:$9 sm:$0xff] %v7568
  %7612 = vst [vmem:[%s7591] ss:$9 sm:$0xff] %v7569
  %7614 = vst [vmem:[%s7594] ss:$9 sm:$0xff] %v7570
  %7616 = vst [vmem:[%s7597] ss:$9 sm:$0xff] %v7571
  %v7617 = vld [vmem:[#allocation1] sm:$0xff]
  %v7618 = vld [vmem:[#allocation1 + $0x9] sm:$0xff]
  %7620 = vst [vmem:[#allocation1] ss:$9 sm:$0xff] %v7572
  %7622 = vst [vmem:[%s7579] ss:$9 sm:$0xff] %v7573
  %7624 = vst [vmem:[%s7582] ss:$9 sm:$0xff] %v7574
  %7626 = vst [vmem:[%s7585] ss:$9 sm:$0xff] %v7575
  %v7627 = vld [vmem:[#allocation1] sm:$0xff]
  %v7628 = vld [vmem:[#allocation1 + $0x9] sm:$0xff]
  %v7632 = vsel %vm1679, %v7600, 0
  %v7634 = vsel %vm1679, %v7618, 0
  %v7636 = vsel %vm1679, %v7628, 0
  %7638 = vmatpush.bf16.msra.mxu0 %v1666
  %7639 = vmatpush.bf16.msra.mxu0 %v1665
  %7640 = vmatpush.bf16.msra.mxu0 %v1664
  %7641 = vmatpush.bf16.msra.mxu0 %v1663
  %7642 = vmatpush.bf16.msra.mxu0 %v1662
  %7643 = vmatpush.bf16.msra.mxu0 %v1661
  %7644 = vmatpush.bf16.msra.mxu0 %v1660
  %7645 = vmatpush.bf16.msra.mxu0 %v1659
  %7646 = vmatmul.bf16.gmra.mxu0 %v7599
  %v7647 = vpop.f32.mrf.mxu0
  %v7648 = vadd.f32 0.0, %v7647
  %v7649 = vpop.f32.mrf.mxu0
  %v7650 = vadd.f32 0.0, %v7649
  %7651 = vmatmul.bf16.gmra.mxu0 %v7617
  %v7652 = vpop.f32.mrf.mxu0
  %v7653 = vadd.f32 0.0, %v7652
  %v7654 = vpop.f32.mrf.mxu0
  %v7655 = vadd.f32 0.0, %v7654
  %7656 = vmatmul.bf16.gmra.mxu0 %v7627
  %v7657 = vpop.f32.mrf.mxu0
  %v7658 = vadd.f32 0.0, %v7657
  %v7659 = vpop.f32.mrf.mxu0
  %7660 = vdwg.mxu0
  %7661 = vmatpush.bf16.msra.mxu0 0
  %7662 = vmatpush.bf16.msra.mxu0 0
  %7663 = vmatpush.bf16.msra.mxu0 0
  %7664 = vmatpush.bf16.msra.mxu0 0
  %7665 = vmatpush.bf16.msra.mxu0 0
  %7666 = vmatpush.bf16.msra.mxu0 0
  %7667 = vmatpush.bf16.msra.mxu0 %v1668
  %7668 = vmatpush.bf16.msra.mxu0 %v1667
  %7669 = vmatmul.bf16.gmra.mxu0 %v7632
  %v7670 = vpop.f32.mrf.mxu0
  %v7671 = vadd.f32 %v7648, %v7670
  %v7672 = vpop.f32.mrf.mxu0
  %v7673 = vadd.f32 %v7650, %v7672
  %7674 = vmatmul.bf16.gmra.mxu0 %v7634
  %v7675 = vpop.f32.mrf.mxu0
  %v7676 = vadd.f32 %v7653, %v7675
  %v7677 = vpop.f32.mrf.mxu0
  %v7678 = vadd.f32 %v7655, %v7677
  %7679 = vmatmul.bf16.gmra.mxu0 %v7636
  %v7680 = vpop.f32.mrf.mxu0
  %v7681 = vadd.f32 %v7658, %v7680
  %v7682 = vpop.f32.mrf.mxu0
  %7683 = vdwg.mxu0
  %v7684 = vmax.f32 %v7263, %v7671
  %v7685 = vmax.f32 %v7264, %v7673
  %v7686 = vmax.f32 %v7265, %v7676
  %v7687 = vmax.f32 %v7266, %v7678
  %v7688 = vmax.f32 %v7267, %v7681
  %7689 = vrot.lane.b32.xlu0 %v1066, 86
  %v7690 = vpop.permute.xlu0 %7689
  %7691 = vrot.lane.b32.xlu0 %v1067, 86
  %v7692 = vpop.permute.xlu0 %7691
  %7693 = vrot.lane.b32.xlu0 %v1068, 86
  %v7694 = vpop.permute.xlu0 %7693
  %7695 = vrot.lane.b32.xlu0 %v1069, 86
  %v7696 = vpop.permute.xlu0 %7695
  %7697 = vrot.lane.b32.xlu0 %v1070, 86
  %v7698 = vpop.permute.xlu0 %7697
  %7699 = vrot.lane.b32.xlu0 %v1071, 86
  %v7700 = vpop.permute.xlu0 %7699
  %7701 = vrot.lane.b32.xlu0 %v1072, 86
  %v7702 = vpop.permute.xlu0 %7701
  %7703 = vrot.lane.b32.xlu0 %v1073, 86
  %v7704 = vpop.permute.xlu0 %7703
  %7705 = vrot.lane.b32.xlu0 %v1120, 116
  %v7706 = vpop.permute.xlu0 %7705
  %7707 = vrot.lane.b32.xlu0 %v1127, 116
  %v7708 = vpop.permute.xlu0 %7707
  %7709 = vrot.lane.b32.xlu0 %v1134, 116
  %v7710 = vpop.permute.xlu0 %7709
  %7711 = vrot.lane.b32.xlu0 %v1141, 116
  %v7712 = vpop.permute.xlu0 %7711
  %7713 = vrot.lane.b32.xlu0 %v1148, 116
  %v7714 = vpop.permute.xlu0 %7713
  %7715 = vrot.lane.b32.xlu0 %v1155, 116
  %v7716 = vpop.permute.xlu0 %7715
  %7717 = vrot.lane.b32.xlu0 %v1162, 116
  %v7718 = vpop.permute.xlu0 %7717
  %7719 = vrot.lane.b32.xlu0 %v1169, 116
  %v7720 = vpop.permute.xlu0 %7719
  %7721 = vrot.lane.b32.xlu0 %v1192, 18
  %v7722 = vpop.permute.xlu0 %7721
  %7723 = vrot.lane.b32.xlu0 %v1199, 18
  %v7724 = vpop.permute.xlu0 %7723
  %7725 = vrot.lane.b32.xlu0 %v1206, 18
  %v7726 = vpop.permute.xlu0 %7725
  %7727 = vrot.lane.b32.xlu0 %v1213, 18
  %v7728 = vpop.permute.xlu0 %7727
  %7729 = vrot.lane.b32.xlu0 %v1220, 18
  %v7730 = vpop.permute.xlu0 %7729
  %7731 = vrot.lane.b32.xlu0 %v1227, 18
  %v7732 = vpop.permute.xlu0 %7731
  %7733 = vrot.lane.b32.xlu0 %v1234, 18
  %v7734 = vpop.permute.xlu0 %7733
  %7735 = vrot.lane.b32.xlu0 %v1241, 18
  %v7736 = vpop.permute.xlu0 %7735
  %7737 = vrot.lane.b32.xlu0 %v1282, 48
  %v7738 = vpop.permute.xlu0 %7737
  %7739 = vrot.lane.b32.xlu0 %v1283, 48
  %v7740 = vpop.permute.xlu0 %7739
  %7741 = vrot.lane.b32.xlu0 %v1284, 48
  %v7742 = vpop.permute.xlu0 %7741
  %7743 = vrot.lane.b32.xlu0 %v1285, 48
  %v7744 = vpop.permute.xlu0 %7743
  %7745 = vrot.lane.b32.xlu0 %v1286, 48
  %v7746 = vpop.permute.xlu0 %7745
  %7747 = vrot.lane.b32.xlu0 %v1287, 48
  %v7748 = vpop.permute.xlu0 %7747
  %7749 = vrot.lane.b32.xlu0 %v1288, 48
  %v7750 = vpop.permute.xlu0 %7749
  %7751 = vrot.lane.b32.xlu0 %v1289, 48
  %v7752 = vpop.permute.xlu0 %7751
  %7753 = vrot.lane.b32.xlu0 %v2233, 78
  %v7754 = vpop.permute.xlu0 %7753
  %7755 = vrot.lane.b32.xlu0 %v2234, 78
  %v7756 = vpop.permute.xlu0 %7755
  %7757 = vrot.lane.b32.xlu0 %v2235, 78
  %v7758 = vpop.permute.xlu0 %7757
  %7759 = vrot.lane.b32.xlu0 %v2236, 78
  %v7760 = vpop.permute.xlu0 %7759
  %7761 = vrot.lane.b32.xlu0 %v2237, 78
  %v7762 = vpop.permute.xlu0 %7761
  %7763 = vrot.lane.b32.xlu0 %v2238, 78
  %v7764 = vpop.permute.xlu0 %7763
  %7765 = vrot.lane.b32.xlu0 %v2239, 78
  %v7766 = vpop.permute.xlu0 %7765
  %7767 = vrot.lane.b32.xlu0 %v2240, 78
  %v7768 = vpop.permute.xlu0 %7767
  %v7771 = vsel %vm1306, %v7690, %v7706
  %v7774 = vsel %vm1306, %v7692, %v7708
  %v7777 = vsel %vm1306, %v7694, %v7710
  %v7780 = vsel %vm1306, %v7696, %v7712
  %v7783 = vsel %vm1306, %v7698, %v7714
  %v7786 = vsel %vm1306, %v7700, %v7716
  %v7789 = vsel %vm1306, %v7702, %v7718
  %v7792 = vsel %vm1306, %v7704, %v7720
  %v7794 = vsel %vm1331, %v7771, %v7722
  %v7796 = vsel %vm1331, %v7774, %v7724
  %v7798 = vsel %vm1331, %v7777, %v7726
  %v7800 = vsel %vm1331, %v7780, %v7728
  %v7802 = vsel %vm1331, %v7783, %v7730
  %v7804 = vsel %vm1331, %v7786, %v7732
  %v7806 = vsel %vm1331, %v7789, %v7734
  %v7808 = vsel %vm1331, %v7792, %v7736
  %v7810 = vsel %vm1348, %v7794, %v7738
  %v7812 = vsel %vm1348, %v7796, %v7740
  %v7814 = vsel %vm1348, %v7798, %v7742
  %v7816 = vsel %vm1348, %v7800, %v7744
  %v7818 = vsel %vm1348, %v7802, %v7746
  %v7820 = vsel %vm1348, %v7804, %v7748
  %v7822 = vsel %vm1348, %v7806, %v7750
  %v7824 = vsel %vm1348, %v7808, %v7752
  %v7826 = vsel %vm1365, %v7810, %v7754
  %v7828 = vsel %vm1365, %v7812, %v7756
  %v7830 = vsel %vm1365, %v7814, %v7758
  %v7832 = vsel %vm1365, %v7816, %v7760
  %v7834 = vsel %vm1365, %v7818, %v7762
  %v7836 = vsel %vm1365, %v7820, %v7764
  %v7838 = vsel %vm1365, %v7822, %v7766
  %v7840 = vsel %vm1365, %v7824, %v7768
  %v7841 = vsel %vm1382, %v7754, 0
  %v7842 = vsel %vm1382, %v7756, 0
  %v7843 = vsel %vm1382, %v7758, 0
  %v7844 = vsel %vm1382, %v7760, 0
  %v7845 = vsel %vm1382, %v7762, 0
  %v7846 = vsel %vm1382, %v7764, 0
  %v7847 = vsel %vm1382, %v7766, 0
  %v7848 = vsel %vm1382, %v7768, 0
  %v7857 = vrot.slane %v7841, 7
  %v7858 = vrot.slane %v7842, 7
  %v7859 = vrot.slane %v7843, 7
  %v7860 = vrot.slane %v7844, 7
  %v7861 = vrot.slane %v7845, 7
  %v7862 = vrot.slane %v7846, 7
  %v7863 = vrot.slane %v7847, 7
  %v7864 = vrot.slane %v7848, 7
  %v7866 = vsel %vm1408, %v7826, %v7857
  %v7868 = vsel %vm1412, %v7826, %v7857
  %v7870 = vrot.slane %v7868, 1
  %v7871 = vsel %vm1416, %v7826, %v7857
  %v7873 = vrot.slane %v7871, 2
  %v7875 = vsel %vm1408, %v7828, %v7858
  %v7877 = vsel %vm1412, %v7828, %v7858
  %v7879 = vrot.slane %v7877, 1
  %v7880 = vsel %vm1416, %v7828, %v7858
  %v7882 = vrot.slane %v7880, 2
  %v7884 = vsel %vm1408, %v7830, %v7859
  %v7886 = vsel %vm1412, %v7830, %v7859
  %v7888 = vrot.slane %v7886, 1
  %v7889 = vsel %vm1416, %v7830, %v7859
  %v7891 = vrot.slane %v7889, 2
  %v7893 = vsel %vm1408, %v7832, %v7860
  %v7895 = vsel %vm1412, %v7832, %v7860
  %v7897 = vrot.slane %v7895, 1
  %v7898 = vsel %vm1416, %v7832, %v7860
  %v7900 = vrot.slane %v7898, 2
  %v7902 = vsel %vm1408, %v7834, %v7861
  %v7904 = vsel %vm1412, %v7834, %v7861
  %v7906 = vrot.slane %v7904, 1
  %v7907 = vsel %vm1416, %v7834, %v7861
  %v7909 = vrot.slane %v7907, 2
  %v7911 = vsel %vm1408, %v7836, %v7862
  %v7913 = vsel %vm1412, %v7836, %v7862
  %v7915 = vrot.slane %v7913, 1
  %v7916 = vsel %vm1416, %v7836, %v7862
  %v7918 = vrot.slane %v7916, 2
  %v7920 = vsel %vm1408, %v7838, %v7863
  %v7922 = vsel %vm1412, %v7838, %v7863
  %v7924 = vrot.slane %v7922, 1
  %v7925 = vsel %vm1416, %v7838, %v7863
  %v7927 = vrot.slane %v7925, 2
  %v7929 = vsel %vm1408, %v7840, %v7864
  %v7931 = vsel %vm1412, %v7840, %v7864
  %v7933 = vrot.slane %v7931, 1
  %v7934 = vsel %vm1416, %v7840, %v7864
  %v7936 = vrot.slane %v7934, 2
  %v7937 = vunpack.i.l.s16 %v7866
  %v7938 = vunpack.i.h.s16 %v7866
  %v7939 = vunpack.i.l.s16 %v7870
  %v7940 = vunpack.i.h.s16 %v7870
  %v7941 = vunpack.i.l.s16 %v7873
  %v7942 = vunpack.i.l.s16 %v7875
  %v7943 = vunpack.i.h.s16 %v7875
  %v7944 = vunpack.i.l.s16 %v7879
  %v7945 = vunpack.i.h.s16 %v7879
  %v7946 = vunpack.i.l.s16 %v7882
  %v7947 = vunpack.i.l.s16 %v7884
  %v7948 = vunpack.i.h.s16 %v7884
  %v7949 = vunpack.i.l.s16 %v7888
  %v7950 = vunpack.i.h.s16 %v7888
  %v7951 = vunpack.i.l.s16 %v7891
  %v7952 = vunpack.i.l.s16 %v7893
  %v7953 = vunpack.i.h.s16 %v7893
  %v7954 = vunpack.i.l.s16 %v7897
  %v7955 = vunpack.i.h.s16 %v7897
  %v7956 = vunpack.i.l.s16 %v7900
  %v7957 = vunpack.i.l.s16 %v7902
  %v7958 = vunpack.i.h.s16 %v7902
  %v7959 = vunpack.i.l.s16 %v7906
  %v7960 = vunpack.i.h.s16 %v7906
  %v7961 = vunpack.i.l.s16 %v7909
  %v7962 = vunpack.i.l.s16 %v7911
  %v7963 = vunpack.i.h.s16 %v7911
  %v7964 = vunpack.i.l.s16 %v7915
  %v7965 = vunpack.i.h.s16 %v7915
  %v7966 = vunpack.i.l.s16 %v7918
  %v7967 = vunpack.i.l.s16 %v7920
  %v7968 = vunpack.i.h.s16 %v7920
  %v7969 = vunpack.i.l.s16 %v7924
  %v7970 = vunpack.i.h.s16 %v7924
  %v7971 = vunpack.i.l.s16 %v7927
  %v7972 = vunpack.i.l.s16 %v7929
  %v7973 = vunpack.i.h.s16 %v7929
  %v7974 = vunpack.i.l.s16 %v7933
  %v7975 = vunpack.i.h.s16 %v7933
  %v7976 = vunpack.i.l.s16 %v7936
  %v7977 = vpack.i.b16 %v7938, %v7937
  %v7978 = vpack.i.b16 %v7940, %v7939
  %v7979 = vpack.i.b16 %v7942, %v7941
  %v7980 = vpack.i.b16 %v7944, %v7943
  %v7981 = vpack.i.b16 %v7946, %v7945
  %v7982 = vpack.i.b16 %v7948, %v7947
  %v7983 = vpack.i.b16 %v7950, %v7949
  %v7984 = vpack.i.b16 %v7952, %v7951
  %v7985 = vpack.i.b16 %v7954, %v7953
  %v7986 = vpack.i.b16 %v7956, %v7955
  %v7987 = vpack.i.b16 %v7958, %v7957
  %v7988 = vpack.i.b16 %v7960, %v7959
  %v7989 = vpack.i.b16 %v7962, %v7961
  %v7990 = vpack.i.b16 %v7964, %v7963
  %v7991 = vpack.i.b16 %v7966, %v7965
  %v7992 = vpack.i.b16 %v7968, %v7967
  %v7993 = vpack.i.b16 %v7970, %v7969
  %v7994 = vpack.i.b16 %v7972, %v7971
  %v7995 = vpack.i.b16 %v7974, %v7973
  %v7996 = vpack.i.b16 %v7976, %v7975
  %7998 = vst [vmem:[#allocation1] ss:$9 sm:$0xff] %v7977
  %s8000 = scalar_lea.vmem [#allocation1], 1
  %8001 = vst [vmem:[%s8000] ss:$9 sm:$0xff] %v7978
  %s8003 = scalar_lea.vmem [#allocation1], 2
  %8004 = vst [vmem:[%s8003] ss:$9 sm:$0xff] %v7979
  %s8006 = scalar_lea.vmem [#allocation1], 3
  %8007 = vst [vmem:[%s8006] ss:$9 sm:$0xff] %v7980
  %s8009 = scalar_lea.vmem [#allocation1], 4
  %8010 = vst [vmem:[%s8009] ss:$9 sm:$0xff] %v7981
  %s8012 = scalar_lea.vmem [#allocation1], 5
  %8013 = vst [vmem:[%s8012] ss:$9 sm:$0xff] %v7982
  %s8015 = scalar_lea.vmem [#allocation1], 6
  %8016 = vst [vmem:[%s8015] ss:$9 sm:$0xff] %v7983
  %s8018 = scalar_lea.vmem [#allocation1], 7
  %8019 = vst [vmem:[%s8018] ss:$9 sm:$0xff] %v7984
  %v8020 = vld [vmem:[#allocation1] sm:$0xff]
  %v8021 = vld [vmem:[#allocation1 + $0x9] sm:$0xff]
  %8023 = vst [vmem:[#allocation1] ss:$9 sm:$0xff] %v7985
  %8025 = vst [vmem:[%s8000] ss:$9 sm:$0xff] %v7986
  %8027 = vst [vmem:[%s8003] ss:$9 sm:$0xff] %v7987
  %8029 = vst [vmem:[%s8006] ss:$9 sm:$0xff] %v7988
  %8031 = vst [vmem:[%s8009] ss:$9 sm:$0xff] %v7989
  %8033 = vst [vmem:[%s8012] ss:$9 sm:$0xff] %v7990
  %8035 = vst [vmem:[%s8015] ss:$9 sm:$0xff] %v7991
  %8037 = vst [vmem:[%s8018] ss:$9 sm:$0xff] %v7992
  %v8038 = vld [vmem:[#allocation1] sm:$0xff]
  %v8039 = vld [vmem:[#allocation1 + $0x9] sm:$0xff]
  %8041 = vst [vmem:[#allocation1] ss:$9 sm:$0xff] %v7993
  %8043 = vst [vmem:[%s8000] ss:$9 sm:$0xff] %v7994
  %8045 = vst [vmem:[%s8003] ss:$9 sm:$0xff] %v7995
  %8047 = vst [vmem:[%s8006] ss:$9 sm:$0xff] %v7996
  %v8048 = vld [vmem:[#allocation1] sm:$0xff]
  %v8049 = vld [vmem:[#allocation1 + $0x9] sm:$0xff]
  %v8053 = vsel %vm1679, %v8021, 0
  %v8055 = vsel %vm1679, %v8039, 0
  %v8057 = vsel %vm1679, %v8049, 0
  %8059 = vmatpush.bf16.msra.mxu0 %v1666
  %8060 = vmatpush.bf16.msra.mxu0 %v1665
  %8061 = vmatpush.bf16.msra.mxu0 %v1664
  %8062 = vmatpush.bf16.msra.mxu0 %v1663
  %8063 = vmatpush.bf16.msra.mxu0 %v1662
  %8064 = vmatpush.bf16.msra.mxu0 %v1661
  %8065 = vmatpush.bf16.msra.mxu0 %v1660
  %8066 = vmatpush.bf16.msra.mxu0 %v1659
  %8067 = vmatmul.bf16.gmra.mxu0 %v8020
  %v8068 = vpop.f32.mrf.mxu0
  %v8069 = vadd.f32 0.0, %v8068
  %v8070 = vpop.f32.mrf.mxu0
  %v8071 = vadd.f32 0.0, %v8070
  %8072 = vmatmul.bf16.gmra.mxu0 %v8038
  %v8073 = vpop.f32.mrf.mxu0
  %v8074 = vadd.f32 0.0, %v8073
  %v8075 = vpop.f32.mrf.mxu0
  %v8076 = vadd.f32 0.0, %v8075
  %8077 = vmatmul.bf16.gmra.mxu0 %v8048
  %v8078 = vpop.f32.mrf.mxu0
  %v8079 = vadd.f32 0.0, %v8078
  %v8080 = vpop.f32.mrf.mxu0
  %8081 = vdwg.mxu0
  %8082 = vmatpush.bf16.msra.mxu0 0
  %8083 = vmatpush.bf16.msra.mxu0 0
  %8084 = vmatpush.bf16.msra.mxu0 0
  %8085 = vmatpush.bf16.msra.mxu0 0
  %8086 = vmatpush.bf16.msra.mxu0 0
  %8087 = vmatpush.bf16.msra.mxu0 0
  %8088 = vmatpush.bf16.msra.mxu0 %v1668
  %8089 = vmatpush.bf16.msra.mxu0 %v1667
  %8090 = vmatmul.bf16.gmra.mxu0 %v8053
  %v8091 = vpop.f32.mrf.mxu0
  %v8092 = vadd.f32 %v8069, %v8091
  %v8093 = vpop.f32.mrf.mxu0
  %v8094 = vadd.f32 %v8071, %v8093
  %8095 = vmatmul.bf16.gmra.mxu0 %v8055
  %v8096 = vpop.f32.mrf.mxu0
  %v8097 = vadd.f32 %v8074, %v8096
  %v8098 = vpop.f32.mrf.mxu0
  %v8099 = vadd.f32 %v8076, %v8098
  %8100 = vmatmul.bf16.gmra.mxu0 %v8057
  %v8101 = vpop.f32.mrf.mxu0
  %v8102 = vadd.f32 %v8079, %v8101
  %v8103 = vpop.f32.mrf.mxu0
  %8104 = vdwg.mxu0
  %v8105 = vmax.f32 %v7684, %v8092
  %v8106 = vmax.f32 %v7685, %v8094
  %v8107 = vmax.f32 %v7686, %v8097
  %v8108 = vmax.f32 %v7687, %v8099
  %v8109 = vmax.f32 %v7688, %v8102
  %v8110 = vadd.f32 %v8105, %v3021
  %v8111 = vadd.f32 %v8106, %v3021
  %v8112 = vadd.f32 %v8107, %v3021
  %v8113 = vadd.f32 %v8108, %v3021
  %v8114 = vadd.f32 %v8109, %v3021
  %v8115 = vmax.f32 %v8110, 0.0
  %v8116 = vmax.f32 %v8111, 0.0
  %v8117 = vmax.f32 %v8112, 0.0
  %v8118 = vmax.f32 %v8113, 0.0
  %v8119 = vmax.f32 %v8114, 0.0
  %v8125 = vrot.slane %v8115, 1
  %v8126 = vrot.slane %v8115, 2
  %v8127 = vrot.slane %v8115, 3
  %v8128 = vrot.slane %v8115, 4
  %v8129 = vrot.slane %v8115, 5
  %v8130 = vrot.slane %v8115, 6
  %v8131 = vrot.slane %v8115, 7
  %v8132 = vrot.slane %v8116, 1
  %v8133 = vrot.slane %v8116, 2
  %v8134 = vrot.slane %v8116, 3
  %v8135 = vrot.slane %v8116, 4
  %v8136 = vrot.slane %v8116, 5
  %v8137 = vrot.slane %v8116, 6
  %v8138 = vrot.slane %v8116, 7
  %v8139 = vrot.slane %v8117, 1
  %v8140 = vrot.slane %v8117, 2
  %v8141 = vrot.slane %v8117, 3
  %v8142 = vrot.slane %v8117, 4
  %v8143 = vrot.slane %v8117, 5
  %v8144 = vrot.slane %v8117, 6
  %v8145 = vrot.slane %v8117, 7
  %v8146 = vrot.slane %v8118, 1
  %v8147 = vrot.slane %v8118, 2
  %v8148 = vrot.slane %v8118, 3
  %v8149 = vrot.slane %v8118, 4
  %v8150 = vrot.slane %v8118, 5
  %v8151 = vrot.slane %v8118, 6
  %v8152 = vrot.slane %v8118, 7
  %v8153 = vrot.slane %v8119, 1
  %v8154 = vrot.slane %v8119, 2
  %v8155 = vrot.slane %v8119, 3
  %v8156 = vrot.slane %v8119, 4
  %v8157 = vrot.slane %v8119, 5
  %v8158 = vrot.slane %v8119, 6
  %v8159 = vrot.slane %v8119, 7
  %8160 = vst [vmem:[#allocation1] ss:$9 sm:$0xff] %v8115
  %s8161 = scalar_lea.vmem [#allocation1], 1
  %8162 = vst [vmem:[%s8161] ss:$9 sm:$0xff] %v8125
  %s8163 = scalar_lea.vmem [#allocation1], 2
  %8164 = vst [vmem:[%s8163] ss:$9 sm:$0xff] %v8126
  %s8165 = scalar_lea.vmem [#allocation1], 3
  %8166 = vst [vmem:[%s8165] ss:$9 sm:$0xff] %v8127
  %s8167 = scalar_lea.vmem [#allocation1], 4
  %8168 = vst [vmem:[%s8167] ss:$9 sm:$0xff] %v8128
  %v8169 = vld [vmem:[#allocation1] sm:$0xff]
  %8170 = vst [vmem:[#allocation1] ss:$9 sm:$0xff] %v8129
  %8171 = vst [vmem:[%s8161] ss:$9 sm:$0xff] %v8130
  %8172 = vst [vmem:[%s8163] ss:$9 sm:$0xff] %v8131
  %8173 = vst [vmem:[%s8165] ss:$9 sm:$0xff] %v8116
  %8174 = vst [vmem:[%s8167] ss:$9 sm:$0xff] %v8132
  %v8175 = vld [vmem:[#allocation1] sm:$0xff]
  %8176 = vst [vmem:[#allocation1] ss:$9 sm:$0xff] %v8133
  %8177 = vst [vmem:[%s8161] ss:$9 sm:$0xff] %v8134
  %8178 = vst [vmem:[%s8163] ss:$9 sm:$0xff] %v8135
  %8179 = vst [vmem:[%s8165] ss:$9 sm:$0xff] %v8136
  %8180 = vst [vmem:[%s8167] ss:$9 sm:$0xff] %v8137
  %v8181 = vld [vmem:[#allocation1] sm:$0xff]
  %8182 = vst [vmem:[#allocation1] ss:$9 sm:$0xff] %v8138
  %8183 = vst [vmem:[%s8161] ss:$9 sm:$0xff] %v8117
  %8184 = vst [vmem:[%s8163] ss:$9 sm:$0xff] %v8139
  %8185 = vst [vmem:[%s8165] ss:$9 sm:$0xff] %v8140
  %8186 = vst [vmem:[%s8167] ss:$9 sm:$0xff] %v8141
  %v8187 = vld [vmem:[#allocation1] sm:$0xff]
  %8188 = vst [vmem:[#allocation1] ss:$9 sm:$0xff] %v8142
  %8189 = vst [vmem:[%s8161] ss:$9 sm:$0xff] %v8143
  %8190 = vst [vmem:[%s8163] ss:$9 sm:$0xff] %v8144
  %8191 = vst [vmem:[%s8165] ss:$9 sm:$0xff] %v8145
  %8192 = vst [vmem:[%s8167] ss:$9 sm:$0xff] %v8118
  %v8193 = vld [vmem:[#allocation1] sm:$0xff]
  %8194 = vst [vmem:[#allocation1] ss:$9 sm:$0xff] %v8146
  %8195 = vst [vmem:[%s8161] ss:$9 sm:$0xff] %v8147
  %8196 = vst [vmem:[%s8163] ss:$9 sm:$0xff] %v8148
  %8197 = vst [vmem:[%s8165] ss:$9 sm:$0xff] %v8149
  %8198 = vst [vmem:[%s8167] ss:$9 sm:$0xff] %v8150
  %v8199 = vld [vmem:[#allocation1] sm:$0xff]
  %8200 = vst [vmem:[#allocation1] ss:$9 sm:$0xff] %v8151
  %8201 = vst [vmem:[%s8161] ss:$9 sm:$0xff] %v8152
  %8202 = vst [vmem:[%s8163] ss:$9 sm:$0xff] %v8119
  %8203 = vst [vmem:[%s8165] ss:$9 sm:$0xff] %v8153
  %8204 = vst [vmem:[%s8167] ss:$9 sm:$0xff] %v8154
  %v8205 = vld [vmem:[#allocation1] sm:$0xff]
  %8206 = vst [vmem:[#allocation1] ss:$9 sm:$0xff] %v8155
  %8207 = vst [vmem:[%s8161] ss:$9 sm:$0xff] %v8156
  %8208 = vst [vmem:[%s8163] ss:$9 sm:$0xff] %v8157
  %8209 = vst [vmem:[%s8165] ss:$9 sm:$0xff] %v8158
  %8210 = vst [vmem:[%s8167] ss:$9 sm:$0xff] %v8159
  %v8211 = vld [vmem:[#allocation1] sm:$0xff]
  %v8220 = vpack.c.bf16 %v8169, %v8169
  %v8221 = vpack.c.bf16 %v8175, %v8175
  %v8222 = vpack.c.bf16 %v8181, %v8181
  %v8223 = vpack.c.bf16 %v8187, %v8187
  %v8224 = vpack.c.bf16 %v8193, %v8193
  %v8225 = vpack.c.bf16 %v8199, %v8199
  %v8226 = vpack.c.bf16 %v8205, %v8205
  %v8227 = vpack.c.bf16 %v8211, %v8211
  %8228 = vrot.lane.b32.xlu0 %v1106, 80
  %v8229 = vpop.permute.xlu0 %8228
  %8230 = vrot.lane.b32.xlu0 %v1107, 80
  %v8231 = vpop.permute.xlu0 %8230
  %8232 = vrot.lane.b32.xlu0 %v1108, 80
  %v8233 = vpop.permute.xlu0 %8232
  %8234 = vrot.lane.b32.xlu0 %v1109, 80
  %v8235 = vpop.permute.xlu0 %8234
  %8236 = vrot.lane.b32.xlu0 %v1110, 80
  %v8237 = vpop.permute.xlu0 %8236
  %8238 = vrot.lane.b32.xlu0 %v1111, 80
  %v8239 = vpop.permute.xlu0 %8238
  %8240 = vrot.lane.b32.xlu0 %v1112, 80
  %v8241 = vpop.permute.xlu0 %8240
  %8242 = vrot.lane.b32.xlu0 %v1113, 80
  %v8243 = vpop.permute.xlu0 %8242
  %v8245 = vsel %vm1306, %v8229, %v4400
  %v8247 = vsel %vm1306, %v8231, %v4402
  %v8249 = vsel %vm1306, %v8233, %v4404
  %v8251 = vsel %vm1306, %v8235, %v4406
  %v8253 = vsel %vm1306, %v8237, %v4408
  %v8255 = vsel %vm1306, %v8239, %v4410
  %v8257 = vsel %vm1306, %v8241, %v4412
  %v8259 = vsel %vm1306, %v8243, %v4414
  %v8260 = vsel %vm1331, %v8245, %v4416
  %v8261 = vsel %vm1331, %v8247, %v4418
  %v8262 = vsel %vm1331, %v8249, %v4420
  %v8263 = vsel %vm1331, %v8251, %v4422
  %v8264 = vsel %vm1331, %v8253, %v4424
  %v8265 = vsel %vm1331, %v8255, %v4426
  %v8266 = vsel %vm1331, %v8257, %v4428
  %v8267 = vsel %vm1331, %v8259, %v4430
  %v8268 = vsel %vm1348, %v8260, %v4432
  %v8269 = vsel %vm1348, %v8261, %v4434
  %v8270 = vsel %vm1348, %v8262, %v4436
  %v8271 = vsel %vm1348, %v8263, %v4438
  %v8272 = vsel %vm1348, %v8264, %v4440
  %v8273 = vsel %vm1348, %v8265, %v4442
  %v8274 = vsel %vm1348, %v8266, %v4444
  %v8275 = vsel %vm1348, %v8267, %v4446
  %v8276 = vsel %vm1365, %v8268, %v4448
  %v8277 = vsel %vm1365, %v8269, %v4450
  %v8278 = vsel %vm1365, %v8270, %v4452
  %v8279 = vsel %vm1365, %v8271, %v4454
  %v8280 = vsel %vm1365, %v8272, %v4456
  %v8281 = vsel %vm1365, %v8273, %v4458
  %v8282 = vsel %vm1365, %v8274, %v4460
  %v8283 = vsel %vm1365, %v8275, %v4462
  %v8284 = vsel %vm1382, %v4448, 0
  %v8285 = vsel %vm1382, %v4450, 0
  %v8286 = vsel %vm1382, %v4452, 0
  %v8287 = vsel %vm1382, %v4454, 0
  %v8288 = vsel %vm1382, %v4456, 0
  %v8289 = vsel %vm1382, %v4458, 0
  %v8290 = vsel %vm1382, %v4460, 0
  %v8291 = vsel %vm1382, %v4462, 0
  %v8300 = vrot.slane %v8284, 7
  %v8301 = vrot.slane %v8285, 7
  %v8302 = vrot.slane %v8286, 7
  %v8303 = vrot.slane %v8287, 7
  %v8304 = vrot.slane %v8288, 7
  %v8305 = vrot.slane %v8289, 7
  %v8306 = vrot.slane %v8290, 7
  %v8307 = vrot.slane %v8291, 7
  %v8309 = vsel %vm1408, %v8276, %v8300
  %v8311 = vsel %vm1412, %v8276, %v8300
  %v8313 = vrot.slane %v8311, 1
  %v8314 = vsel %vm1416, %v8276, %v8300
  %v8316 = vrot.slane %v8314, 2
  %v8318 = vsel %vm1408, %v8277, %v8301
  %v8320 = vsel %vm1412, %v8277, %v8301
  %v8322 = vrot.slane %v8320, 1
  %v8323 = vsel %vm1416, %v8277, %v8301
  %v8325 = vrot.slane %v8323, 2
  %v8327 = vsel %vm1408, %v8278, %v8302
  %v8329 = vsel %vm1412, %v8278, %v8302
  %v8331 = vrot.slane %v8329, 1
  %v8332 = vsel %vm1416, %v8278, %v8302
  %v8334 = vrot.slane %v8332, 2
  %v8336 = vsel %vm1408, %v8279, %v8303
  %v8338 = vsel %vm1412, %v8279, %v8303
  %v8340 = vrot.slane %v8338, 1
  %v8341 = vsel %vm1416, %v8279, %v8303
  %v8343 = vrot.slane %v8341, 2
  %v8345 = vsel %vm1408, %v8280, %v8304
  %v8347 = vsel %vm1412, %v8280, %v8304
  %v8349 = vrot.slane %v8347, 1
  %v8350 = vsel %vm1416, %v8280, %v8304
  %v8352 = vrot.slane %v8350, 2
  %v8354 = vsel %vm1408, %v8281, %v8305
  %v8356 = vsel %vm1412, %v8281, %v8305
  %v8358 = vrot.slane %v8356, 1
  %v8359 = vsel %vm1416, %v8281, %v8305
  %v8361 = vrot.slane %v8359, 2
  %v8363 = vsel %vm1408, %v8282, %v8306
  %v8365 = vsel %vm1412, %v8282, %v8306
  %v8367 = vrot.slane %v8365, 1
  %v8368 = vsel %vm1416, %v8282, %v8306
  %v8370 = vrot.slane %v8368, 2
  %v8372 = vsel %vm1408, %v8283, %v8307
  %v8374 = vsel %vm1412, %v8283, %v8307
  %v8376 = vrot.slane %v8374, 1
  %v8377 = vsel %vm1416, %v8283, %v8307
  %v8379 = vrot.slane %v8377, 2
  %v8380 = vunpack.i.l.s16 %v8309
  %v8381 = vunpack.i.h.s16 %v8309
  %v8382 = vunpack.i.l.s16 %v8313
  %v8383 = vunpack.i.h.s16 %v8313
  %v8384 = vunpack.i.l.s16 %v8316
  %v8385 = vunpack.i.l.s16 %v8318
  %v8386 = vunpack.i.h.s16 %v8318
  %v8387 = vunpack.i.l.s16 %v8322
  %v8388 = vunpack.i.h.s16 %v8322
  %v8389 = vunpack.i.l.s16 %v8325
  %v8390 = vunpack.i.l.s16 %v8327
  %v8391 = vunpack.i.h.s16 %v8327
  %v8392 = vunpack.i.l.s16 %v8331
  %v8393 = vunpack.i.h.s16 %v8331
  %v8394 = vunpack.i.l.s16 %v8334
  %v8395 = vunpack.i.l.s16 %v8336
  %v8396 = vunpack.i.h.s16 %v8336
  %v8397 = vunpack.i.l.s16 %v8340
  %v8398 = vunpack.i.h.s16 %v8340
  %v8399 = vunpack.i.l.s16 %v8343
  %v8400 = vunpack.i.l.s16 %v8345
  %v8401 = vunpack.i.h.s16 %v8345
  %v8402 = vunpack.i.l.s16 %v8349
  %v8403 = vunpack.i.h.s16 %v8349
  %v8404 = vunpack.i.l.s16 %v8352
  %v8405 = vunpack.i.l.s16 %v8354
  %v8406 = vunpack.i.h.s16 %v8354
  %v8407 = vunpack.i.l.s16 %v8358
  %v8408 = vunpack.i.h.s16 %v8358
  %v8409 = vunpack.i.l.s16 %v8361
  %v8410 = vunpack.i.l.s16 %v8363
  %v8411 = vunpack.i.h.s16 %v8363
  %v8412 = vunpack.i.l.s16 %v8367
  %v8413 = vunpack.i.h.s16 %v8367
  %v8414 = vunpack.i.l.s16 %v8370
  %v8415 = vunpack.i.l.s16 %v8372
  %v8416 = vunpack.i.h.s16 %v8372
  %v8417 = vunpack.i.l.s16 %v8376
  %v8418 = vunpack.i.h.s16 %v8376
  %v8419 = vunpack.i.l.s16 %v8379
  %v8420 = vpack.i.b16 %v8381, %v8380
  %v8421 = vpack.i.b16 %v8383, %v8382
  %v8422 = vpack.i.b16 %v8385, %v8384
  %v8423 = vpack.i.b16 %v8387, %v8386
  %v8424 = vpack.i.b16 %v8389, %v8388
  %v8425 = vpack.i.b16 %v8391, %v8390
  %v8426 = vpack.i.b16 %v8393, %v8392
  %v8427 = vpack.i.b16 %v8395, %v8394
  %v8428 = vpack.i.b16 %v8397, %v8396
  %v8429 = vpack.i.b16 %v8399, %v8398
  %v8430 = vpack.i.b16 %v8401, %v8400
  %v8431 = vpack.i.b16 %v8403, %v8402
  %v8432 = vpack.i.b16 %v8405, %v8404
  %v8433 = vpack.i.b16 %v8407, %v8406
  %v8434 = vpack.i.b16 %v8409, %v8408
  %v8435 = vpack.i.b16 %v8411, %v8410
  %v8436 = vpack.i.b16 %v8413, %v8412
  %v8437 = vpack.i.b16 %v8415, %v8414
  %v8438 = vpack.i.b16 %v8417, %v8416
  %v8439 = vpack.i.b16 %v8419, %v8418
  %8441 = vst [vmem:[#allocation1] ss:$9 sm:$0xff] %v8420
  %s8443 = scalar_lea.vmem [#allocation1], 1
  %8444 = vst [vmem:[%s8443] ss:$9 sm:$0xff] %v8421
  %s8446 = scalar_lea.vmem [#allocation1], 2
  %8447 = vst [vmem:[%s8446] ss:$9 sm:$0xff] %v8422
  %s8449 = scalar_lea.vmem [#allocation1], 3
  %8450 = vst [vmem:[%s8449] ss:$9 sm:$0xff] %v8423
  %s8452 = scalar_lea.vmem [#allocation1], 4
  %8453 = vst [vmem:[%s8452] ss:$9 sm:$0xff] %v8424
  %s8455 = scalar_lea.vmem [#allocation1], 5
  %8456 = vst [vmem:[%s8455] ss:$9 sm:$0xff] %v8425
  %s8458 = scalar_lea.vmem [#allocation1], 6
  %8459 = vst [vmem:[%s8458] ss:$9 sm:$0xff] %v8426
  %s8461 = scalar_lea.vmem [#allocation1], 7
  %8462 = vst [vmem:[%s8461] ss:$9 sm:$0xff] %v8427
  %v8463 = vld [vmem:[#allocation1] sm:$0xff]
  %v8464 = vld [vmem:[#allocation1 + $0x9] sm:$0xff]
  %8466 = vst [vmem:[#allocation1] ss:$9 sm:$0xff] %v8428
  %8468 = vst [vmem:[%s8443] ss:$9 sm:$0xff] %v8429
  %8470 = vst [vmem:[%s8446] ss:$9 sm:$0xff] %v8430
  %8472 = vst [vmem:[%s8449] ss:$9 sm:$0xff] %v8431
  %8474 = vst [vmem:[%s8452] ss:$9 sm:$0xff] %v8432
  %8476 = vst [vmem:[%s8455] ss:$9 sm:$0xff] %v8433
  %8478 = vst [vmem:[%s8458] ss:$9 sm:$0xff] %v8434
  %8480 = vst [vmem:[%s8461] ss:$9 sm:$0xff] %v8435
  %v8481 = vld [vmem:[#allocation1] sm:$0xff]
  %v8482 = vld [vmem:[#allocation1 + $0x9] sm:$0xff]
  %8484 = vst [vmem:[#allocation1] ss:$9 sm:$0xff] %v8436
  %8486 = vst [vmem:[%s8443] ss:$9 sm:$0xff] %v8437
  %8488 = vst [vmem:[%s8446] ss:$9 sm:$0xff] %v8438
  %8490 = vst [vmem:[%s8449] ss:$9 sm:$0xff] %v8439
  %v8491 = vld [vmem:[#allocation1] sm:$0xff]
  %v8492 = vld [vmem:[#allocation1 + $0x9] sm:$0xff]
  %v8496 = vsel %vm1679, %v8464, 0
  %v8498 = vsel %vm1679, %v8482, 0
  %v8500 = vsel %vm1679, %v8492, 0
  %8502 = vmatpush.bf16.msra.mxu0 %v1666
  %8503 = vmatpush.bf16.msra.mxu0 %v1665
  %8504 = vmatpush.bf16.msra.mxu0 %v1664
  %8505 = vmatpush.bf16.msra.mxu0 %v1663
  %8506 = vmatpush.bf16.msra.mxu0 %v1662
  %8507 = vmatpush.bf16.msra.mxu0 %v1661
  %8508 = vmatpush.bf16.msra.mxu0 %v1660
  %8509 = vmatpush.bf16.msra.mxu0 %v1659
  %8510 = vmatmul.bf16.gmra.mxu0 %v8463
  %v8511 = vpop.f32.mrf.mxu0
  %v8512 = vadd.f32 0.0, %v8511
  %v8513 = vpop.f32.mrf.mxu0
  %v8514 = vadd.f32 0.0, %v8513
  %8515 = vmatmul.bf16.gmra.mxu0 %v8481
  %v8516 = vpop.f32.mrf.mxu0
  %v8517 = vadd.f32 0.0, %v8516
  %v8518 = vpop.f32.mrf.mxu0
  %v8519 = vadd.f32 0.0, %v8518
  %8520 = vmatmul.bf16.gmra.mxu0 %v8491
  %v8521 = vpop.f32.mrf.mxu0
  %v8522 = vadd.f32 0.0, %v8521
  %v8523 = vpop.f32.mrf.mxu0
  %8524 = vdwg.mxu0
  %8525 = vmatpush.bf16.msra.mxu0 0
  %8526 = vmatpush.bf16.msra.mxu0 0
  %8527 = vmatpush.bf16.msra.mxu0 0
  %8528 = vmatpush.bf16.msra.mxu0 0
  %8529 = vmatpush.bf16.msra.mxu0 0
  %8530 = vmatpush.bf16.msra.mxu0 0
  %8531 = vmatpush.bf16.msra.mxu0 %v1668
  %8532 = vmatpush.bf16.msra.mxu0 %v1667
  %8533 = vmatmul.bf16.gmra.mxu0 %v8496
  %v8534 = vpop.f32.mrf.mxu0
  %v8535 = vadd.f32 %v8512, %v8534
  %v8536 = vpop.f32.mrf.mxu0
  %v8537 = vadd.f32 %v8514, %v8536
  %8538 = vmatmul.bf16.gmra.mxu0 %v8498
  %v8539 = vpop.f32.mrf.mxu0
  %v8540 = vadd.f32 %v8517, %v8539
  %v8541 = vpop.f32.mrf.mxu0
  %v8542 = vadd.f32 %v8519, %v8541
  %8543 = vmatmul.bf16.gmra.mxu0 %v8500
  %v8544 = vpop.f32.mrf.mxu0
  %v8545 = vadd.f32 %v8522, %v8544
  %v8546 = vpop.f32.mrf.mxu0
  %8547 = vdwg.mxu0
  %8548 = vrot.lane.b32.xlu0 %v1106, 74
  %v8549 = vpop.permute.xlu0 %8548
  %8550 = vrot.lane.b32.xlu0 %v1107, 74
  %v8551 = vpop.permute.xlu0 %8550
  %8552 = vrot.lane.b32.xlu0 %v1108, 74
  %v8553 = vpop.permute.xlu0 %8552
  %8554 = vrot.lane.b32.xlu0 %v1109, 74
  %v8555 = vpop.permute.xlu0 %8554
  %8556 = vrot.lane.b32.xlu0 %v1110, 74
  %v8557 = vpop.permute.xlu0 %8556
  %8558 = vrot.lane.b32.xlu0 %v1111, 74
  %v8559 = vpop.permute.xlu0 %8558
  %8560 = vrot.lane.b32.xlu0 %v1112, 74
  %v8561 = vpop.permute.xlu0 %8560
  %8562 = vrot.lane.b32.xlu0 %v1113, 74
  %v8563 = vpop.permute.xlu0 %8562
  %v8565 = vsel %vm1306, %v8549, %v5680
  %v8567 = vsel %vm1306, %v8551, %v5682
  %v8569 = vsel %vm1306, %v8553, %v5684
  %v8571 = vsel %vm1306, %v8555, %v5686
  %v8573 = vsel %vm1306, %v8557, %v5688
  %v8575 = vsel %vm1306, %v8559, %v5690
  %v8577 = vsel %vm1306, %v8561, %v5692
  %v8579 = vsel %vm1306, %v8563, %v5694
  %v8580 = vsel %vm1331, %v8565, %v5696
  %v8581 = vsel %vm1331, %v8567, %v5698
  %v8582 = vsel %vm1331, %v8569, %v5700
  %v8583 = vsel %vm1331, %v8571, %v5702
  %v8584 = vsel %vm1331, %v8573, %v5704
  %v8585 = vsel %vm1331, %v8575, %v5706
  %v8586 = vsel %vm1331, %v8577, %v5708
  %v8587 = vsel %vm1331, %v8579, %v5710
  %v8588 = vsel %vm1348, %v8580, %v5712
  %v8589 = vsel %vm1348, %v8581, %v5714
  %v8590 = vsel %vm1348, %v8582, %v5716
  %v8591 = vsel %vm1348, %v8583, %v5718
  %v8592 = vsel %vm1348, %v8584, %v5720
  %v8593 = vsel %vm1348, %v8585, %v5722
  %v8594 = vsel %vm1348, %v8586, %v5724
  %v8595 = vsel %vm1348, %v8587, %v5726
  %v8596 = vsel %vm1365, %v8588, %v5728
  %v8597 = vsel %vm1365, %v8589, %v5730
  %v8598 = vsel %vm1365, %v8590, %v5732
  %v8599 = vsel %vm1365, %v8591, %v5734
  %v8600 = vsel %vm1365, %v8592, %v5736
  %v8601 = vsel %vm1365, %v8593, %v5738
  %v8602 = vsel %vm1365, %v8594, %v5740
  %v8603 = vsel %vm1365, %v8595, %v5742
  %v8604 = vsel %vm1382, %v5728, 0
  %v8605 = vsel %vm1382, %v5730, 0
  %v8606 = vsel %vm1382, %v5732, 0
  %v8607 = vsel %vm1382, %v5734, 0
  %v8608 = vsel %vm1382, %v5736, 0
  %v8609 = vsel %vm1382, %v5738, 0
  %v8610 = vsel %vm1382, %v5740, 0
  %v8611 = vsel %vm1382, %v5742, 0
  %v8620 = vrot.slane %v8604, 7
  %v8621 = vrot.slane %v8605, 7
  %v8622 = vrot.slane %v8606, 7
  %v8623 = vrot.slane %v8607, 7
  %v8624 = vrot.slane %v8608, 7
  %v8625 = vrot.slane %v8609, 7
  %v8626 = vrot.slane %v8610, 7
  %v8627 = vrot.slane %v8611, 7
  %v8629 = vsel %vm1408, %v8596, %v8620
  %v8631 = vsel %vm1412, %v8596, %v8620
  %v8633 = vrot.slane %v8631, 1
  %v8634 = vsel %vm1416, %v8596, %v8620
  %v8636 = vrot.slane %v8634, 2
  %v8638 = vsel %vm1408, %v8597, %v8621
  %v8640 = vsel %vm1412, %v8597, %v8621
  %v8642 = vrot.slane %v8640, 1
  %v8643 = vsel %vm1416, %v8597, %v8621
  %v8645 = vrot.slane %v8643, 2
  %v8647 = vsel %vm1408, %v8598, %v8622
  %v8649 = vsel %vm1412, %v8598, %v8622
  %v8651 = vrot.slane %v8649, 1
  %v8652 = vsel %vm1416, %v8598, %v8622
  %v8654 = vrot.slane %v8652, 2
  %v8656 = vsel %vm1408, %v8599, %v8623
  %v8658 = vsel %vm1412, %v8599, %v8623
  %v8660 = vrot.slane %v8658, 1
  %v8661 = vsel %vm1416, %v8599, %v8623
  %v8663 = vrot.slane %v8661, 2
  %v8665 = vsel %vm1408, %v8600, %v8624
  %v8667 = vsel %vm1412, %v8600, %v8624
  %v8669 = vrot.slane %v8667, 1
  %v8670 = vsel %vm1416, %v8600, %v8624
  %v8672 = vrot.slane %v8670, 2
  %v8674 = vsel %vm1408, %v8601, %v8625
  %v8676 = vsel %vm1412, %v8601, %v8625
  %v8678 = vrot.slane %v8676, 1
  %v8679 = vsel %vm1416, %v8601, %v8625
  %v8681 = vrot.slane %v8679, 2
  %v8683 = vsel %vm1408, %v8602, %v8626
  %v8685 = vsel %vm1412, %v8602, %v8626
  %v8687 = vrot.slane %v8685, 1
  %v8688 = vsel %vm1416, %v8602, %v8626
  %v8690 = vrot.slane %v8688, 2
  %v8692 = vsel %vm1408, %v8603, %v8627
  %v8694 = vsel %vm1412, %v8603, %v8627
  %v8696 = vrot.slane %v8694, 1
  %v8697 = vsel %vm1416, %v8603, %v8627
  %v8699 = vrot.slane %v8697, 2
  %v8700 = vunpack.i.l.s16 %v8629
  %v8701 = vunpack.i.h.s16 %v8629
  %v8702 = vunpack.i.l.s16 %v8633
  %v8703 = vunpack.i.h.s16 %v8633
  %v8704 = vunpack.i.l.s16 %v8636
  %v8705 = vunpack.i.l.s16 %v8638
  %v8706 = vunpack.i.h.s16 %v8638
  %v8707 = vunpack.i.l.s16 %v8642
  %v8708 = vunpack.i.h.s16 %v8642
  %v8709 = vunpack.i.l.s16 %v8645
  %v8710 = vunpack.i.l.s16 %v8647
  %v8711 = vunpack.i.h.s16 %v8647
  %v8712 = vunpack.i.l.s16 %v8651
  %v8713 = vunpack.i.h.s16 %v8651
  %v8714 = vunpack.i.l.s16 %v8654
  %v8715 = vunpack.i.l.s16 %v8656
  %v8716 = vunpack.i.h.s16 %v8656
  %v8717 = vunpack.i.l.s16 %v8660
  %v8718 = vunpack.i.h.s16 %v8660
  %v8719 = vunpack.i.l.s16 %v8663
  %v8720 = vunpack.i.l.s16 %v8665
  %v8721 = vunpack.i.h.s16 %v8665
  %v8722 = vunpack.i.l.s16 %v8669
  %v8723 = vunpack.i.h.s16 %v8669
  %v8724 = vunpack.i.l.s16 %v8672
  %v8725 = vunpack.i.l.s16 %v8674
  %v8726 = vunpack.i.h.s16 %v8674
  %v8727 = vunpack.i.l.s16 %v8678
  %v8728 = vunpack.i.h.s16 %v8678
  %v8729 = vunpack.i.l.s16 %v8681
  %v8730 = vunpack.i.l.s16 %v8683
  %v8731 = vunpack.i.h.s16 %v8683
  %v8732 = vunpack.i.l.s16 %v8687
  %v8733 = vunpack.i.h.s16 %v8687
  %v8734 = vunpack.i.l.s16 %v8690
  %v8735 = vunpack.i.l.s16 %v8692
  %v8736 = vunpack.i.h.s16 %v8692
  %v8737 = vunpack.i.l.s16 %v8696
  %v8738 = vunpack.i.h.s16 %v8696
  %v8739 = vunpack.i.l.s16 %v8699
  %v8740 = vpack.i.b16 %v8701, %v8700
  %v8741 = vpack.i.b16 %v8703, %v8702
  %v8742 = vpack.i.b16 %v8705, %v8704
  %v8743 = vpack.i.b16 %v8707, %v8706
  %v8744 = vpack.i.b16 %v8709, %v8708
  %v8745 = vpack.i.b16 %v8711, %v8710
  %v8746 = vpack.i.b16 %v8713, %v8712
  %v8747 = vpack.i.b16 %v8715, %v8714
  %v8748 = vpack.i.b16 %v8717, %v8716
  %v8749 = vpack.i.b16 %v8719, %v8718
  %v8750 = vpack.i.b16 %v8721, %v8720
  %v8751 = vpack.i.b16 %v8723, %v8722
  %v8752 = vpack.i.b16 %v8725, %v8724
  %v8753 = vpack.i.b16 %v8727, %v8726
  %v8754 = vpack.i.b16 %v8729, %v8728
  %v8755 = vpack.i.b16 %v8731, %v8730
  %v8756 = vpack.i.b16 %v8733, %v8732
  %v8757 = vpack.i.b16 %v8735, %v8734
  %v8758 = vpack.i.b16 %v8737, %v8736
  %v8759 = vpack.i.b16 %v8739, %v8738
  %8761 = vst [vmem:[#allocation1] ss:$9 sm:$0xff] %v8740
  %s8763 = scalar_lea.vmem [#allocation1], 1
  %8764 = vst [vmem:[%s8763] ss:$9 sm:$0xff] %v8741
  %s8766 = scalar_lea.vmem [#allocation1], 2
  %8767 = vst [vmem:[%s8766] ss:$9 sm:$0xff] %v8742
  %s8769 = scalar_lea.vmem [#allocation1], 3
  %8770 = vst [vmem:[%s8769] ss:$9 sm:$0xff] %v8743
  %s8772 = scalar_lea.vmem [#allocation1], 4
  %8773 = vst [vmem:[%s8772] ss:$9 sm:$0xff] %v8744
  %s8775 = scalar_lea.vmem [#allocation1], 5
  %8776 = vst [vmem:[%s8775] ss:$9 sm:$0xff] %v8745
  %s8778 = scalar_lea.vmem [#allocation1], 6
  %8779 = vst [vmem:[%s8778] ss:$9 sm:$0xff] %v8746
  %s8781 = scalar_lea.vmem [#allocation1], 7
  %8782 = vst [vmem:[%s8781] ss:$9 sm:$0xff] %v8747
  %v8783 = vld [vmem:[#allocation1] sm:$0xff]
  %v8784 = vld [vmem:[#allocation1 + $0x9] sm:$0xff]
  %8786 = vst [vmem:[#allocation1] ss:$9 sm:$0xff] %v8748
  %8788 = vst [vmem:[%s8763] ss:$9 sm:$0xff] %v8749
  %8790 = vst [vmem:[%s8766] ss:$9 sm:$0xff] %v8750
  %8792 = vst [vmem:[%s8769] ss:$9 sm:$0xff] %v8751
  %8794 = vst [vmem:[%s8772] ss:$9 sm:$0xff] %v8752
  %8796 = vst [vmem:[%s8775] ss:$9 sm:$0xff] %v8753
  %8798 = vst [vmem:[%s8778] ss:$9 sm:$0xff] %v8754
  %8800 = vst [vmem:[%s8781] ss:$9 sm:$0xff] %v8755
  %v8801 = vld [vmem:[#allocation1] sm:$0xff]
  %v8802 = vld [vmem:[#allocation1 + $0x9] sm:$0xff]
  %8804 = vst [vmem:[#allocation1] ss:$9 sm:$0xff] %v8756
  %8806 = vst [vmem:[%s8763] ss:$9 sm:$0xff] %v8757
  %8808 = vst [vmem:[%s8766] ss:$9 sm:$0xff] %v8758
  %8810 = vst [vmem:[%s8769] ss:$9 sm:$0xff] %v8759
  %v8811 = vld [vmem:[#allocation1] sm:$0xff]
  %v8812 = vld [vmem:[#allocation1 + $0x9] sm:$0xff]
  %v8816 = vsel %vm1679, %v8784, 0
  %v8818 = vsel %vm1679, %v8802, 0
  %v8820 = vsel %vm1679, %v8812, 0
  %8822 = vmatpush.bf16.msra.mxu0 %v1666
  %8823 = vmatpush.bf16.msra.mxu0 %v1665
  %8824 = vmatpush.bf16.msra.mxu0 %v1664
  %8825 = vmatpush.bf16.msra.mxu0 %v1663
  %8826 = vmatpush.bf16.msra.mxu0 %v1662
  %8827 = vmatpush.bf16.msra.mxu0 %v1661
  %8828 = vmatpush.bf16.msra.mxu0 %v1660
  %8829 = vmatpush.bf16.msra.mxu0 %v1659
  %8830 = vmatmul.bf16.gmra.mxu0 %v8783
  %v8831 = vpop.f32.mrf.mxu0
  %v8832 = vadd.f32 0.0, %v8831
  %v8833 = vpop.f32.mrf.mxu0
  %v8834 = vadd.f32 0.0, %v8833
  %8835 = vmatmul.bf16.gmra.mxu0 %v8801
  %v8836 = vpop.f32.mrf.mxu0
  %v8837 = vadd.f32 0.0, %v8836
  %v8838 = vpop.f32.mrf.mxu0
  %v8839 = vadd.f32 0.0, %v8838
  %8840 = vmatmul.bf16.gmra.mxu0 %v8811
  %v8841 = vpop.f32.mrf.mxu0
  %v8842 = vadd.f32 0.0, %v8841
  %v8843 = vpop.f32.mrf.mxu0
  %8844 = vdwg.mxu0
  %8845 = vmatpush.bf16.msra.mxu0 0
  %8846 = vmatpush.bf16.msra.mxu0 0
  %8847 = vmatpush.bf16.msra.mxu0 0
  %8848 = vmatpush.bf16.msra.mxu0 0
  %8849 = vmatpush.bf16.msra.mxu0 0
  %8850 = vmatpush.bf16.msra.mxu0 0
  %8851 = vmatpush.bf16.msra.mxu0 %v1668
  %8852 = vmatpush.bf16.msra.mxu0 %v1667
  %8853 = vmatmul.bf16.gmra.mxu0 %v8816
  %v8854 = vpop.f32.mrf.mxu0
  %v8855 = vadd.f32 %v8832, %v8854
  %v8856 = vpop.f32.mrf.mxu0
  %v8857 = vadd.f32 %v8834, %v8856
  %8858 = vmatmul.bf16.gmra.mxu0 %v8818
  %v8859 = vpop.f32.mrf.mxu0
  %v8860 = vadd.f32 %v8837, %v8859
  %v8861 = vpop.f32.mrf.mxu0
  %v8862 = vadd.f32 %v8839, %v8861
  %8863 = vmatmul.bf16.gmra.mxu0 %v8820
  %v8864 = vpop.f32.mrf.mxu0
  %v8865 = vadd.f32 %v8842, %v8864
  %v8866 = vpop.f32.mrf.mxu0
  %8867 = vdwg.mxu0
  %v8868 = vmax.f32 %v8535, %v8855
  %v8869 = vmax.f32 %v8537, %v8857
  %v8870 = vmax.f32 %v8540, %v8860
  %v8871 = vmax.f32 %v8542, %v8862
  %v8872 = vmax.f32 %v8545, %v8865
  %8873 = vrot.lane.b32.xlu0 %v1066, 80
  %v8874 = vpop.permute.xlu0 %8873
  %8875 = vrot.lane.b32.xlu0 %v1067, 80
  %v8876 = vpop.permute.xlu0 %8875
  %8877 = vrot.lane.b32.xlu0 %v1068, 80
  %v8878 = vpop.permute.xlu0 %8877
  %8879 = vrot.lane.b32.xlu0 %v1069, 80
  %v8880 = vpop.permute.xlu0 %8879
  %8881 = vrot.lane.b32.xlu0 %v1070, 80
  %v8882 = vpop.permute.xlu0 %8881
  %8883 = vrot.lane.b32.xlu0 %v1071, 80
  %v8884 = vpop.permute.xlu0 %8883
  %8885 = vrot.lane.b32.xlu0 %v1072, 80
  %v8886 = vpop.permute.xlu0 %8885
  %8887 = vrot.lane.b32.xlu0 %v1073, 80
  %v8888 = vpop.permute.xlu0 %8887
  %8889 = vrot.lane.b32.xlu0 %v1120, 110
  %v8890 = vpop.permute.xlu0 %8889
  %8891 = vrot.lane.b32.xlu0 %v1127, 110
  %v8892 = vpop.permute.xlu0 %8891
  %8893 = vrot.lane.b32.xlu0 %v1134, 110
  %v8894 = vpop.permute.xlu0 %8893
  %8895 = vrot.lane.b32.xlu0 %v1141, 110
  %v8896 = vpop.permute.xlu0 %8895
  %8897 = vrot.lane.b32.xlu0 %v1148, 110
  %v8898 = vpop.permute.xlu0 %8897
  %8899 = vrot.lane.b32.xlu0 %v1155, 110
  %v8900 = vpop.permute.xlu0 %8899
  %8901 = vrot.lane.b32.xlu0 %v1162, 110
  %v8902 = vpop.permute.xlu0 %8901
  %8903 = vrot.lane.b32.xlu0 %v1169, 110
  %v8904 = vpop.permute.xlu0 %8903
  %8905 = vrot.lane.b32.xlu0 %v1192, 12
  %v8906 = vpop.permute.xlu0 %8905
  %8907 = vrot.lane.b32.xlu0 %v1199, 12
  %v8908 = vpop.permute.xlu0 %8907
  %8909 = vrot.lane.b32.xlu0 %v1206, 12
  %v8910 = vpop.permute.xlu0 %8909
  %8911 = vrot.lane.b32.xlu0 %v1213, 12
  %v8912 = vpop.permute.xlu0 %8911
  %8913 = vrot.lane.b32.xlu0 %v1220, 12
  %v8914 = vpop.permute.xlu0 %8913
  %8915 = vrot.lane.b32.xlu0 %v1227, 12
  %v8916 = vpop.permute.xlu0 %8915
  %8917 = vrot.lane.b32.xlu0 %v1234, 12
  %v8918 = vpop.permute.xlu0 %8917
  %8919 = vrot.lane.b32.xlu0 %v1241, 12
  %v8920 = vpop.permute.xlu0 %8919
  %8921 = vrot.lane.b32.xlu0 %v1282, 42
  %v8922 = vpop.permute.xlu0 %8921
  %8923 = vrot.lane.b32.xlu0 %v1283, 42
  %v8924 = vpop.permute.xlu0 %8923
  %8925 = vrot.lane.b32.xlu0 %v1284, 42
  %v8926 = vpop.permute.xlu0 %8925
  %8927 = vrot.lane.b32.xlu0 %v1285, 42
  %v8928 = vpop.permute.xlu0 %8927
  %8929 = vrot.lane.b32.xlu0 %v1286, 42
  %v8930 = vpop.permute.xlu0 %8929
  %8931 = vrot.lane.b32.xlu0 %v1287, 42
  %v8932 = vpop.permute.xlu0 %8931
  %8933 = vrot.lane.b32.xlu0 %v1288, 42
  %v8934 = vpop.permute.xlu0 %8933
  %8935 = vrot.lane.b32.xlu0 %v1289, 42
  %v8936 = vpop.permute.xlu0 %8935
  %8937 = vrot.lane.b32.xlu0 %v2233, 72
  %v8938 = vpop.permute.xlu0 %8937
  %8939 = vrot.lane.b32.xlu0 %v2234, 72
  %v8940 = vpop.permute.xlu0 %8939
  %8941 = vrot.lane.b32.xlu0 %v2235, 72
  %v8942 = vpop.permute.xlu0 %8941
  %8943 = vrot.lane.b32.xlu0 %v2236, 72
  %v8944 = vpop.permute.xlu0 %8943
  %8945 = vrot.lane.b32.xlu0 %v2237, 72
  %v8946 = vpop.permute.xlu0 %8945
  %8947 = vrot.lane.b32.xlu0 %v2238, 72
  %v8948 = vpop.permute.xlu0 %8947
  %8949 = vrot.lane.b32.xlu0 %v2239, 72
  %v8950 = vpop.permute.xlu0 %8949
  %8951 = vrot.lane.b32.xlu0 %v2240, 72
  %v8952 = vpop.permute.xlu0 %8951
  %v8955 = vsel %vm1306, %v8874, %v8890
  %v8958 = vsel %vm1306, %v8876, %v8892
  %v8961 = vsel %vm1306, %v8878, %v8894
  %v8964 = vsel %vm1306, %v8880, %v8896
  %v8967 = vsel %vm1306, %v8882, %v8898
  %v8970 = vsel %vm1306, %v8884, %v8900
  %v8973 = vsel %vm1306, %v8886, %v8902
  %v8976 = vsel %vm1306, %v8888, %v8904
  %v8978 = vsel %vm1331, %v8955, %v8906
  %v8980 = vsel %vm1331, %v8958, %v8908
  %v8982 = vsel %vm1331, %v8961, %v8910
  %v8984 = vsel %vm1331, %v8964, %v8912
  %v8986 = vsel %vm1331, %v8967, %v8914
  %v8988 = vsel %vm1331, %v8970, %v8916
  %v8990 = vsel %vm1331, %v8973, %v8918
  %v8992 = vsel %vm1331, %v8976, %v8920
  %v8994 = vsel %vm1348, %v8978, %v8922
  %v8996 = vsel %vm1348, %v8980, %v8924
  %v8998 = vsel %vm1348, %v8982, %v8926
  %v9000 = vsel %vm1348, %v8984, %v8928
  %v9002 = vsel %vm1348, %v8986, %v8930
  %v9004 = vsel %vm1348, %v8988, %v8932
  %v9006 = vsel %vm1348, %v8990, %v8934
  %v9008 = vsel %vm1348, %v8992, %v8936
  %v9010 = vsel %vm1365, %v8994, %v8938
  %v9012 = vsel %vm1365, %v8996, %v8940
  %v9014 = vsel %vm1365, %v8998, %v8942
  %v9016 = vsel %vm1365, %v9000, %v8944
  %v9018 = vsel %vm1365, %v9002, %v8946
  %v9020 = vsel %vm1365, %v9004, %v8948
  %v9022 = vsel %vm1365, %v9006, %v8950
  %v9024 = vsel %vm1365, %v9008, %v8952
  %v9025 = vsel %vm1382, %v8938, 0
  %v9026 = vsel %vm1382, %v8940, 0
  %v9027 = vsel %vm1382, %v8942, 0
  %v9028 = vsel %vm1382, %v8944, 0
  %v9029 = vsel %vm1382, %v8946, 0
  %v9030 = vsel %vm1382, %v8948, 0
  %v9031 = vsel %vm1382, %v8950, 0
  %v9032 = vsel %vm1382, %v8952, 0
  %v9041 = vrot.slane %v9025, 7
  %v9042 = vrot.slane %v9026, 7
  %v9043 = vrot.slane %v9027, 7
  %v9044 = vrot.slane %v9028, 7
  %v9045 = vrot.slane %v9029, 7
  %v9046 = vrot.slane %v9030, 7
  %v9047 = vrot.slane %v9031, 7
  %v9048 = vrot.slane %v9032, 7
  %v9050 = vsel %vm1408, %v9010, %v9041
  %v9052 = vsel %vm1412, %v9010, %v9041
  %v9054 = vrot.slane %v9052, 1
  %v9055 = vsel %vm1416, %v9010, %v9041
  %v9057 = vrot.slane %v9055, 2
  %v9059 = vsel %vm1408, %v9012, %v9042
  %v9061 = vsel %vm1412, %v9012, %v9042
  %v9063 = vrot.slane %v9061, 1
  %v9064 = vsel %vm1416, %v9012, %v9042
  %v9066 = vrot.slane %v9064, 2
  %v9068 = vsel %vm1408, %v9014, %v9043
  %v9070 = vsel %vm1412, %v9014, %v9043
  %v9072 = vrot.slane %v9070, 1
  %v9073 = vsel %vm1416, %v9014, %v9043
  %v9075 = vrot.slane %v9073, 2
  %v9077 = vsel %vm1408, %v9016, %v9044
  %v9079 = vsel %vm1412, %v9016, %v9044
  %v9081 = vrot.slane %v9079, 1
  %v9082 = vsel %vm1416, %v9016, %v9044
  %v9084 = vrot.slane %v9082, 2
  %v9086 = vsel %vm1408, %v9018, %v9045
  %v9088 = vsel %vm1412, %v9018, %v9045
  %v9090 = vrot.slane %v9088, 1
  %v9091 = vsel %vm1416, %v9018, %v9045
  %v9093 = vrot.slane %v9091, 2
  %v9095 = vsel %vm1408, %v9020, %v9046
  %v9097 = vsel %vm1412, %v9020, %v9046
  %v9099 = vrot.slane %v9097, 1
  %v9100 = vsel %vm1416, %v9020, %v9046
  %v9102 = vrot.slane %v9100, 2
  %v9104 = vsel %vm1408, %v9022, %v9047
  %v9106 = vsel %vm1412, %v9022, %v9047
  %v9108 = vrot.slane %v9106, 1
  %v9109 = vsel %vm1416, %v9022, %v9047
  %v9111 = vrot.slane %v9109, 2
  %v9113 = vsel %vm1408, %v9024, %v9048
  %v9115 = vsel %vm1412, %v9024, %v9048
  %v9117 = vrot.slane %v9115, 1
  %v9118 = vsel %vm1416, %v9024, %v9048
  %v9120 = vrot.slane %v9118, 2
  %v9121 = vunpack.i.l.s16 %v9050
  %v9122 = vunpack.i.h.s16 %v9050
  %v9123 = vunpack.i.l.s16 %v9054
  %v9124 = vunpack.i.h.s16 %v9054
  %v9125 = vunpack.i.l.s16 %v9057
  %v9126 = vunpack.i.l.s16 %v9059
  %v9127 = vunpack.i.h.s16 %v9059
  %v9128 = vunpack.i.l.s16 %v9063
  %v9129 = vunpack.i.h.s16 %v9063
  %v9130 = vunpack.i.l.s16 %v9066
  %v9131 = vunpack.i.l.s16 %v9068
  %v9132 = vunpack.i.h.s16 %v9068
  %v9133 = vunpack.i.l.s16 %v9072
  %v9134 = vunpack.i.h.s16 %v9072
  %v9135 = vunpack.i.l.s16 %v9075
  %v9136 = vunpack.i.l.s16 %v9077
  %v9137 = vunpack.i.h.s16 %v9077
  %v9138 = vunpack.i.l.s16 %v9081
  %v9139 = vunpack.i.h.s16 %v9081
  %v9140 = vunpack.i.l.s16 %v9084
  %v9141 = vunpack.i.l.s16 %v9086
  %v9142 = vunpack.i.h.s16 %v9086
  %v9143 = vunpack.i.l.s16 %v9090
  %v9144 = vunpack.i.h.s16 %v9090
  %v9145 = vunpack.i.l.s16 %v9093
  %v9146 = vunpack.i.l.s16 %v9095
  %v9147 = vunpack.i.h.s16 %v9095
  %v9148 = vunpack.i.l.s16 %v9099
  %v9149 = vunpack.i.h.s16 %v9099
  %v9150 = vunpack.i.l.s16 %v9102
  %v9151 = vunpack.i.l.s16 %v9104
  %v9152 = vunpack.i.h.s16 %v9104
  %v9153 = vunpack.i.l.s16 %v9108
  %v9154 = vunpack.i.h.s16 %v9108
  %v9155 = vunpack.i.l.s16 %v9111
  %v9156 = vunpack.i.l.s16 %v9113
  %v9157 = vunpack.i.h.s16 %v9113
  %v9158 = vunpack.i.l.s16 %v9117
  %v9159 = vunpack.i.h.s16 %v9117
  %v9160 = vunpack.i.l.s16 %v9120
  %v9161 = vpack.i.b16 %v9122, %v9121
  %v9162 = vpack.i.b16 %v9124, %v9123
  %v9163 = vpack.i.b16 %v9126, %v9125
  %v9164 = vpack.i.b16 %v9128, %v9127
  %v9165 = vpack.i.b16 %v9130, %v9129
  %v9166 = vpack.i.b16 %v9132, %v9131
  %v9167 = vpack.i.b16 %v9134, %v9133
  %v9168 = vpack.i.b16 %v9136, %v9135
  %v9169 = vpack.i.b16 %v9138, %v9137
  %v9170 = vpack.i.b16 %v9140, %v9139
  %v9171 = vpack.i.b16 %v9142, %v9141
  %v9172 = vpack.i.b16 %v9144, %v9143
  %v9173 = vpack.i.b16 %v9146, %v9145
  %v9174 = vpack.i.b16 %v9148, %v9147
  %v9175 = vpack.i.b16 %v9150, %v9149
  %v9176 = vpack.i.b16 %v9152, %v9151
  %v9177 = vpack.i.b16 %v9154, %v9153
  %v9178 = vpack.i.b16 %v9156, %v9155
  %v9179 = vpack.i.b16 %v9158, %v9157
  %v9180 = vpack.i.b16 %v9160, %v9159
  %9182 = vst [vmem:[#allocation1] ss:$9 sm:$0xff] %v9161
  %s9184 = scalar_lea.vmem [#allocation1], 1
  %9185 = vst [vmem:[%s9184] ss:$9 sm:$0xff] %v9162
  %s9187 = scalar_lea.vmem [#allocation1], 2
  %9188 = vst [vmem:[%s9187] ss:$9 sm:$0xff] %v9163
  %s9190 = scalar_lea.vmem [#allocation1], 3
  %9191 = vst [vmem:[%s9190] ss:$9 sm:$0xff] %v9164
  %s9193 = scalar_lea.vmem [#allocation1], 4
  %9194 = vst [vmem:[%s9193] ss:$9 sm:$0xff] %v9165
  %s9196 = scalar_lea.vmem [#allocation1], 5
  %9197 = vst [vmem:[%s9196] ss:$9 sm:$0xff] %v9166
  %s9199 = scalar_lea.vmem [#allocation1], 6
  %9200 = vst [vmem:[%s9199] ss:$9 sm:$0xff] %v9167
  %s9202 = scalar_lea.vmem [#allocation1], 7
  %9203 = vst [vmem:[%s9202] ss:$9 sm:$0xff] %v9168
  %v9204 = vld [vmem:[#allocation1] sm:$0xff]
  %v9205 = vld [vmem:[#allocation1 + $0x9] sm:$0xff]
  %9207 = vst [vmem:[#allocation1] ss:$9 sm:$0xff] %v9169
  %9209 = vst [vmem:[%s9184] ss:$9 sm:$0xff] %v9170
  %9211 = vst [vmem:[%s9187] ss:$9 sm:$0xff] %v9171
  %9213 = vst [vmem:[%s9190] ss:$9 sm:$0xff] %v9172
  %9215 = vst [vmem:[%s9193] ss:$9 sm:$0xff] %v9173
  %9217 = vst [vmem:[%s9196] ss:$9 sm:$0xff] %v9174
  %9219 = vst [vmem:[%s9199] ss:$9 sm:$0xff] %v9175
  %9221 = vst [vmem:[%s9202] ss:$9 sm:$0xff] %v9176
  %v9222 = vld [vmem:[#allocation1] sm:$0xff]
  %v9223 = vld [vmem:[#allocation1 + $0x9] sm:$0xff]
  %9225 = vst [vmem:[#allocation1] ss:$9 sm:$0xff] %v9177
  %9227 = vst [vmem:[%s9184] ss:$9 sm:$0xff] %v9178
  %9229 = vst [vmem:[%s9187] ss:$9 sm:$0xff] %v9179
  %9231 = vst [vmem:[%s9190] ss:$9 sm:$0xff] %v9180
  %v9232 = vld [vmem:[#allocation1] sm:$0xff]
  %v9233 = vld [vmem:[#allocation1 + $0x9] sm:$0xff]
  %v9237 = vsel %vm1679, %v9205, 0
  %v9239 = vsel %vm1679, %v9223, 0
  %v9241 = vsel %vm1679, %v9233, 0
  %9243 = vmatpush.bf16.msra.mxu0 %v1666
  %9244 = vmatpush.bf16.msra.mxu0 %v1665
  %9245 = vmatpush.bf16.msra.mxu0 %v1664
  %9246 = vmatpush.bf16.msra.mxu0 %v1663
  %9247 = vmatpush.bf16.msra.mxu0 %v1662
  %9248 = vmatpush.bf16.msra.mxu0 %v1661
  %9249 = vmatpush.bf16.msra.mxu0 %v1660
  %9250 = vmatpush.bf16.msra.mxu0 %v1659
  %9251 = vmatmul.bf16.gmra.mxu0 %v9204
  %v9252 = vpop.f32.mrf.mxu0
  %v9253 = vadd.f32 0.0, %v9252
  %v9254 = vpop.f32.mrf.mxu0
  %v9255 = vadd.f32 0.0, %v9254
  %9256 = vmatmul.bf16.gmra.mxu0 %v9222
  %v9257 = vpop.f32.mrf.mxu0
  %v9258 = vadd.f32 0.0, %v9257
  %v9259 = vpop.f32.mrf.mxu0
  %v9260 = vadd.f32 0.0, %v9259
  %9261 = vmatmul.bf16.gmra.mxu0 %v9232
  %v9262 = vpop.f32.mrf.mxu0
  %v9263 = vadd.f32 0.0, %v9262
  %v9264 = vpop.f32.mrf.mxu0
  %9265 = vdwg.mxu0
  %9266 = vmatpush.bf16.msra.mxu0 0
  %9267 = vmatpush.bf16.msra.mxu0 0
  %9268 = vmatpush.bf16.msra.mxu0 0
  %9269 = vmatpush.bf16.msra.mxu0 0
  %9270 = vmatpush.bf16.msra.mxu0 0
  %9271 = vmatpush.bf16.msra.mxu0 0
  %9272 = vmatpush.bf16.msra.mxu0 %v1668
  %9273 = vmatpush.bf16.msra.mxu0 %v1667
  %9274 = vmatmul.bf16.gmra.mxu0 %v9237
  %v9275 = vpop.f32.mrf.mxu0
  %v9276 = vadd.f32 %v9253, %v9275
  %v9277 = vpop.f32.mrf.mxu0
  %v9278 = vadd.f32 %v9255, %v9277
  %9279 = vmatmul.bf16.gmra.mxu0 %v9239
  %v9280 = vpop.f32.mrf.mxu0
  %v9281 = vadd.f32 %v9258, %v9280
  %v9282 = vpop.f32.mrf.mxu0
  %v9283 = vadd.f32 %v9260, %v9282
  %9284 = vmatmul.bf16.gmra.mxu0 %v9241
  %v9285 = vpop.f32.mrf.mxu0
  %v9286 = vadd.f32 %v9263, %v9285
  %v9287 = vpop.f32.mrf.mxu0
  %9288 = vdwg.mxu0
  %v9289 = vmax.f32 %v8868, %v9276
  %v9290 = vmax.f32 %v8869, %v9278
  %v9291 = vmax.f32 %v8870, %v9281
  %v9292 = vmax.f32 %v8871, %v9283
  %v9293 = vmax.f32 %v8872, %v9286
  %9294 = vrot.lane.b32.xlu0 %v1066, 74
  %v9295 = vpop.permute.xlu0 %9294
  %9296 = vrot.lane.b32.xlu0 %v1067, 74
  %v9297 = vpop.permute.xlu0 %9296
  %9298 = vrot.lane.b32.xlu0 %v1068, 74
  %v9299 = vpop.permute.xlu0 %9298
  %9300 = vrot.lane.b32.xlu0 %v1069, 74
  %v9301 = vpop.permute.xlu0 %9300
  %9302 = vrot.lane.b32.xlu0 %v1070, 74
  %v9303 = vpop.permute.xlu0 %9302
  %9304 = vrot.lane.b32.xlu0 %v1071, 74
  %v9305 = vpop.permute.xlu0 %9304
  %9306 = vrot.lane.b32.xlu0 %v1072, 74
  %v9307 = vpop.permute.xlu0 %9306
  %9308 = vrot.lane.b32.xlu0 %v1073, 74
  %v9309 = vpop.permute.xlu0 %9308
  %9310 = vrot.lane.b32.xlu0 %v1120, 104
  %v9311 = vpop.permute.xlu0 %9310
  %9312 = vrot.lane.b32.xlu0 %v1127, 104
  %v9313 = vpop.permute.xlu0 %9312
  %9314 = vrot.lane.b32.xlu0 %v1134, 104
  %v9315 = vpop.permute.xlu0 %9314
  %9316 = vrot.lane.b32.xlu0 %v1141, 104
  %v9317 = vpop.permute.xlu0 %9316
  %9318 = vrot.lane.b32.xlu0 %v1148, 104
  %v9319 = vpop.permute.xlu0 %9318
  %9320 = vrot.lane.b32.xlu0 %v1155, 104
  %v9321 = vpop.permute.xlu0 %9320
  %9322 = vrot.lane.b32.xlu0 %v1162, 104
  %v9323 = vpop.permute.xlu0 %9322
  %9324 = vrot.lane.b32.xlu0 %v1169, 104
  %v9325 = vpop.permute.xlu0 %9324
  %9326 = vrot.lane.b32.xlu0 %v1192, 6
  %v9327 = vpop.permute.xlu0 %9326
  %9328 = vrot.lane.b32.xlu0 %v1199, 6
  %v9329 = vpop.permute.xlu0 %9328
  %9330 = vrot.lane.b32.xlu0 %v1206, 6
  %v9331 = vpop.permute.xlu0 %9330
  %9332 = vrot.lane.b32.xlu0 %v1213, 6
  %v9333 = vpop.permute.xlu0 %9332
  %9334 = vrot.lane.b32.xlu0 %v1220, 6
  %v9335 = vpop.permute.xlu0 %9334
  %9336 = vrot.lane.b32.xlu0 %v1227, 6
  %v9337 = vpop.permute.xlu0 %9336
  %9338 = vrot.lane.b32.xlu0 %v1234, 6
  %v9339 = vpop.permute.xlu0 %9338
  %9340 = vrot.lane.b32.xlu0 %v1241, 6
  %v9341 = vpop.permute.xlu0 %9340
  %9342 = vrot.lane.b32.xlu0 %v1282, 36
  %v9343 = vpop.permute.xlu0 %9342
  %9344 = vrot.lane.b32.xlu0 %v1283, 36
  %v9345 = vpop.permute.xlu0 %9344
  %9346 = vrot.lane.b32.xlu0 %v1284, 36
  %v9347 = vpop.permute.xlu0 %9346
  %9348 = vrot.lane.b32.xlu0 %v1285, 36
  %v9349 = vpop.permute.xlu0 %9348
  %9350 = vrot.lane.b32.xlu0 %v1286, 36
  %v9351 = vpop.permute.xlu0 %9350
  %9352 = vrot.lane.b32.xlu0 %v1287, 36
  %v9353 = vpop.permute.xlu0 %9352
  %9354 = vrot.lane.b32.xlu0 %v1288, 36
  %v9355 = vpop.permute.xlu0 %9354
  %9356 = vrot.lane.b32.xlu0 %v1289, 36
  %v9357 = vpop.permute.xlu0 %9356
  %9358 = vrot.lane.b32.xlu0 %v2233, 66
  %v9359 = vpop.permute.xlu0 %9358
  %9360 = vrot.lane.b32.xlu0 %v2234, 66
  %v9361 = vpop.permute.xlu0 %9360
  %9362 = vrot.lane.b32.xlu0 %v2235, 66
  %v9363 = vpop.permute.xlu0 %9362
  %9364 = vrot.lane.b32.xlu0 %v2236, 66
  %v9365 = vpop.permute.xlu0 %9364
  %9366 = vrot.lane.b32.xlu0 %v2237, 66
  %v9367 = vpop.permute.xlu0 %9366
  %9368 = vrot.lane.b32.xlu0 %v2238, 66
  %v9369 = vpop.permute.xlu0 %9368
  %9370 = vrot.lane.b32.xlu0 %v2239, 66
  %v9371 = vpop.permute.xlu0 %9370
  %9372 = vrot.lane.b32.xlu0 %v2240, 66
  %v9373 = vpop.permute.xlu0 %9372
  %v9376 = vsel %vm1306, %v9295, %v9311
  %v9379 = vsel %vm1306, %v9297, %v9313
  %v9382 = vsel %vm1306, %v9299, %v9315
  %v9385 = vsel %vm1306, %v9301, %v9317
  %v9388 = vsel %vm1306, %v9303, %v9319
  %v9391 = vsel %vm1306, %v9305, %v9321
  %v9394 = vsel %vm1306, %v9307, %v9323
  %v9397 = vsel %vm1306, %v9309, %v9325
  %v9399 = vsel %vm1331, %v9376, %v9327
  %v9401 = vsel %vm1331, %v9379, %v9329
  %v9403 = vsel %vm1331, %v9382, %v9331
  %v9405 = vsel %vm1331, %v9385, %v9333
  %v9407 = vsel %vm1331, %v9388, %v9335
  %v9409 = vsel %vm1331, %v9391, %v9337
  %v9411 = vsel %vm1331, %v9394, %v9339
  %v9413 = vsel %vm1331, %v9397, %v9341
  %v9415 = vsel %vm1348, %v9399, %v9343
  %v9417 = vsel %vm1348, %v9401, %v9345
  %v9419 = vsel %vm1348, %v9403, %v9347
  %v9421 = vsel %vm1348, %v9405, %v9349
  %v9423 = vsel %vm1348, %v9407, %v9351
  %v9425 = vsel %vm1348, %v9409, %v9353
  %v9427 = vsel %vm1348, %v9411, %v9355
  %v9429 = vsel %vm1348, %v9413, %v9357
  %v9431 = vsel %vm1365, %v9415, %v9359
  %v9433 = vsel %vm1365, %v9417, %v9361
  %v9435 = vsel %vm1365, %v9419, %v9363
  %v9437 = vsel %vm1365, %v9421, %v9365
  %v9439 = vsel %vm1365, %v9423, %v9367
  %v9441 = vsel %vm1365, %v9425, %v9369
  %v9443 = vsel %vm1365, %v9427, %v9371
  %v9445 = vsel %vm1365, %v9429, %v9373
  %v9446 = vsel %vm1382, %v9359, 0
  %v9447 = vsel %vm1382, %v9361, 0
  %v9448 = vsel %vm1382, %v9363, 0
  %v9449 = vsel %vm1382, %v9365, 0
  %v9450 = vsel %vm1382, %v9367, 0
  %v9451 = vsel %vm1382, %v9369, 0
  %v9452 = vsel %vm1382, %v9371, 0
  %v9453 = vsel %vm1382, %v9373, 0
  %v9462 = vrot.slane %v9446, 7
  %v9463 = vrot.slane %v9447, 7
  %v9464 = vrot.slane %v9448, 7
  %v9465 = vrot.slane %v9449, 7
  %v9466 = vrot.slane %v9450, 7
  %v9467 = vrot.slane %v9451, 7
  %v9468 = vrot.slane %v9452, 7
  %v9469 = vrot.slane %v9453, 7
  %v9471 = vsel %vm1408, %v9431, %v9462
  %v9473 = vsel %vm1412, %v9431, %v9462
  %v9475 = vrot.slane %v9473, 1
  %v9476 = vsel %vm1416, %v9431, %v9462
  %v9478 = vrot.slane %v9476, 2
  %v9480 = vsel %vm1408, %v9433, %v9463
  %v9482 = vsel %vm1412, %v9433, %v9463
  %v9484 = vrot.slane %v9482, 1
  %v9485 = vsel %vm1416, %v9433, %v9463
  %v9487 = vrot.slane %v9485, 2
  %v9489 = vsel %vm1408, %v9435, %v9464
  %v9491 = vsel %vm1412, %v9435, %v9464
  %v9493 = vrot.slane %v9491, 1
  %v9494 = vsel %vm1416, %v9435, %v9464
  %v9496 = vrot.slane %v9494, 2
  %v9498 = vsel %vm1408, %v9437, %v9465
  %v9500 = vsel %vm1412, %v9437, %v9465
  %v9502 = vrot.slane %v9500, 1
  %v9503 = vsel %vm1416, %v9437, %v9465
  %v9505 = vrot.slane %v9503, 2
  %v9507 = vsel %vm1408, %v9439, %v9466
  %v9509 = vsel %vm1412, %v9439, %v9466
  %v9511 = vrot.slane %v9509, 1
  %v9512 = vsel %vm1416, %v9439, %v9466
  %v9514 = vrot.slane %v9512, 2
  %v9516 = vsel %vm1408, %v9441, %v9467
  %v9518 = vsel %vm1412, %v9441, %v9467
  %v9520 = vrot.slane %v9518, 1
  %v9521 = vsel %vm1416, %v9441, %v9467
  %v9523 = vrot.slane %v9521, 2
  %v9525 = vsel %vm1408, %v9443, %v9468
  %v9527 = vsel %vm1412, %v9443, %v9468
  %v9529 = vrot.slane %v9527, 1
  %v9530 = vsel %vm1416, %v9443, %v9468
  %v9532 = vrot.slane %v9530, 2
  %v9534 = vsel %vm1408, %v9445, %v9469
  %v9536 = vsel %vm1412, %v9445, %v9469
  %v9538 = vrot.slane %v9536, 1
  %v9539 = vsel %vm1416, %v9445, %v9469
  %v9541 = vrot.slane %v9539, 2
  %v9542 = vunpack.i.l.s16 %v9471
  %v9543 = vunpack.i.h.s16 %v9471
  %v9544 = vunpack.i.l.s16 %v9475
  %v9545 = vunpack.i.h.s16 %v9475
  %v9546 = vunpack.i.l.s16 %v9478
  %v9547 = vunpack.i.l.s16 %v9480
  %v9548 = vunpack.i.h.s16 %v9480
  %v9549 = vunpack.i.l.s16 %v9484
  %v9550 = vunpack.i.h.s16 %v9484
  %v9551 = vunpack.i.l.s16 %v9487
  %v9552 = vunpack.i.l.s16 %v9489
  %v9553 = vunpack.i.h.s16 %v9489
  %v9554 = vunpack.i.l.s16 %v9493
  %v9555 = vunpack.i.h.s16 %v9493
  %v9556 = vunpack.i.l.s16 %v9496
  %v9557 = vunpack.i.l.s16 %v9498
  %v9558 = vunpack.i.h.s16 %v9498
  %v9559 = vunpack.i.l.s16 %v9502
  %v9560 = vunpack.i.h.s16 %v9502
  %v9561 = vunpack.i.l.s16 %v9505
  %v9562 = vunpack.i.l.s16 %v9507
  %v9563 = vunpack.i.h.s16 %v9507
  %v9564 = vunpack.i.l.s16 %v9511
  %v9565 = vunpack.i.h.s16 %v9511
  %v9566 = vunpack.i.l.s16 %v9514
  %v9567 = vunpack.i.l.s16 %v9516
  %v9568 = vunpack.i.h.s16 %v9516
  %v9569 = vunpack.i.l.s16 %v9520
  %v9570 = vunpack.i.h.s16 %v9520
  %v9571 = vunpack.i.l.s16 %v9523
  %v9572 = vunpack.i.l.s16 %v9525
  %v9573 = vunpack.i.h.s16 %v9525
  %v9574 = vunpack.i.l.s16 %v9529
  %v9575 = vunpack.i.h.s16 %v9529
  %v9576 = vunpack.i.l.s16 %v9532
  %v9577 = vunpack.i.l.s16 %v9534
  %v9578 = vunpack.i.h.s16 %v9534
  %v9579 = vunpack.i.l.s16 %v9538
  %v9580 = vunpack.i.h.s16 %v9538
  %v9581 = vunpack.i.l.s16 %v9541
  %v9582 = vpack.i.b16 %v9543, %v9542
  %v9583 = vpack.i.b16 %v9545, %v9544
  %v9584 = vpack.i.b16 %v9547, %v9546
  %v9585 = vpack.i.b16 %v9549, %v9548
  %v9586 = vpack.i.b16 %v9551, %v9550
  %v9587 = vpack.i.b16 %v9553, %v9552
  %v9588 = vpack.i.b16 %v9555, %v9554
  %v9589 = vpack.i.b16 %v9557, %v9556
  %v9590 = vpack.i.b16 %v9559, %v9558
  %v9591 = vpack.i.b16 %v9561, %v9560
  %v9592 = vpack.i.b16 %v9563, %v9562
  %v9593 = vpack.i.b16 %v9565, %v9564
  %v9594 = vpack.i.b16 %v9567, %v9566
  %v9595 = vpack.i.b16 %v9569, %v9568
  %v9596 = vpack.i.b16 %v9571, %v9570
  %v9597 = vpack.i.b16 %v9573, %v9572
  %v9598 = vpack.i.b16 %v9575, %v9574
  %v9599 = vpack.i.b16 %v9577, %v9576
  %v9600 = vpack.i.b16 %v9579, %v9578
  %v9601 = vpack.i.b16 %v9581, %v9580
  %9603 = vst [vmem:[#allocation1] ss:$9 sm:$0xff] %v9582
  %s9605 = scalar_lea.vmem [#allocation1], 1
  %9606 = vst [vmem:[%s9605] ss:$9 sm:$0xff] %v9583
  %s9608 = scalar_lea.vmem [#allocation1], 2
  %9609 = vst [vmem:[%s9608] ss:$9 sm:$0xff] %v9584
  %s9611 = scalar_lea.vmem [#allocation1], 3
  %9612 = vst [vmem:[%s9611] ss:$9 sm:$0xff] %v9585
  %s9614 = scalar_lea.vmem [#allocation1], 4
  %9615 = vst [vmem:[%s9614] ss:$9 sm:$0xff] %v9586
  %s9617 = scalar_lea.vmem [#allocation1], 5
  %9618 = vst [vmem:[%s9617] ss:$9 sm:$0xff] %v9587
  %s9620 = scalar_lea.vmem [#allocation1], 6
  %9621 = vst [vmem:[%s9620] ss:$9 sm:$0xff] %v9588
  %s9623 = scalar_lea.vmem [#allocation1], 7
  %9624 = vst [vmem:[%s9623] ss:$9 sm:$0xff] %v9589
  %v9625 = vld [vmem:[#allocation1] sm:$0xff]
  %v9626 = vld [vmem:[#allocation1 + $0x9] sm:$0xff]
  %9628 = vst [vmem:[#allocation1] ss:$9 sm:$0xff] %v9590
  %9630 = vst [vmem:[%s9605] ss:$9 sm:$0xff] %v9591
  %9632 = vst [vmem:[%s9608] ss:$9 sm:$0xff] %v9592
  %9634 = vst [vmem:[%s9611] ss:$9 sm:$0xff] %v9593
  %9636 = vst [vmem:[%s9614] ss:$9 sm:$0xff] %v9594
  %9638 = vst [vmem:[%s9617] ss:$9 sm:$0xff] %v9595
  %9640 = vst [vmem:[%s9620] ss:$9 sm:$0xff] %v9596
  %9642 = vst [vmem:[%s9623] ss:$9 sm:$0xff] %v9597
  %v9643 = vld [vmem:[#allocation1] sm:$0xff]
  %v9644 = vld [vmem:[#allocation1 + $0x9] sm:$0xff]
  %9646 = vst [vmem:[#allocation1] ss:$9 sm:$0xff] %v9598
  %9648 = vst [vmem:[%s9605] ss:$9 sm:$0xff] %v9599
  %9650 = vst [vmem:[%s9608] ss:$9 sm:$0xff] %v9600
  %9652 = vst [vmem:[%s9611] ss:$9 sm:$0xff] %v9601
  %v9653 = vld [vmem:[#allocation1] sm:$0xff]
  %v9654 = vld [vmem:[#allocation1 + $0x9] sm:$0xff]
  %v9658 = vsel %vm1679, %v9626, 0
  %v9660 = vsel %vm1679, %v9644, 0
  %v9662 = vsel %vm1679, %v9654, 0
  %9664 = vmatpush.bf16.msra.mxu0 %v1666
  %9665 = vmatpush.bf16.msra.mxu0 %v1665
  %9666 = vmatpush.bf16.msra.mxu0 %v1664
  %9667 = vmatpush.bf16.msra.mxu0 %v1663
  %9668 = vmatpush.bf16.msra.mxu0 %v1662
  %9669 = vmatpush.bf16.msra.mxu0 %v1661
  %9670 = vmatpush.bf16.msra.mxu0 %v1660
  %9671 = vmatpush.bf16.msra.mxu0 %v1659
  %9672 = vmatmul.bf16.gmra.mxu0 %v9625
  %v9673 = vpop.f32.mrf.mxu0
  %v9674 = vadd.f32 0.0, %v9673
  %v9675 = vpop.f32.mrf.mxu0
  %v9676 = vadd.f32 0.0, %v9675
  %9677 = vmatmul.bf16.gmra.mxu0 %v9643
  %v9678 = vpop.f32.mrf.mxu0
  %v9679 = vadd.f32 0.0, %v9678
  %v9680 = vpop.f32.mrf.mxu0
  %v9681 = vadd.f32 0.0, %v9680
  %9682 = vmatmul.bf16.gmra.mxu0 %v9653
  %v9683 = vpop.f32.mrf.mxu0
  %v9684 = vadd.f32 0.0, %v9683
  %v9685 = vpop.f32.mrf.mxu0
  %9686 = vdwg.mxu0
  %9687 = vmatpush.bf16.msra.mxu0 0
  %9688 = vmatpush.bf16.msra.mxu0 0
  %9689 = vmatpush.bf16.msra.mxu0 0
  %9690 = vmatpush.bf16.msra.mxu0 0
  %9691 = vmatpush.bf16.msra.mxu0 0
  %9692 = vmatpush.bf16.msra.mxu0 0
  %9693 = vmatpush.bf16.msra.mxu0 %v1668
  %9694 = vmatpush.bf16.msra.mxu0 %v1667
  %9695 = vmatmul.bf16.gmra.mxu0 %v9658
  %v9696 = vpop.f32.mrf.mxu0
  %v9697 = vadd.f32 %v9674, %v9696
  %v9698 = vpop.f32.mrf.mxu0
  %v9699 = vadd.f32 %v9676, %v9698
  %9700 = vmatmul.bf16.gmra.mxu0 %v9660
  %v9701 = vpop.f32.mrf.mxu0
  %v9702 = vadd.f32 %v9679, %v9701
  %v9703 = vpop.f32.mrf.mxu0
  %v9704 = vadd.f32 %v9681, %v9703
  %9705 = vmatmul.bf16.gmra.mxu0 %v9662
  %v9706 = vpop.f32.mrf.mxu0
  %v9707 = vadd.f32 %v9684, %v9706
  %v9708 = vpop.f32.mrf.mxu0
  %9709 = vdwg.mxu0
  %v9710 = vmax.f32 %v9289, %v9697
  %v9711 = vmax.f32 %v9290, %v9699
  %v9712 = vmax.f32 %v9291, %v9702
  %v9713 = vmax.f32 %v9292, %v9704
  %v9714 = vmax.f32 %v9293, %v9707
  %v9715 = vadd.f32 %v9710, %v3021
  %v9716 = vadd.f32 %v9711, %v3021
  %v9717 = vadd.f32 %v9712, %v3021
  %v9718 = vadd.f32 %v9713, %v3021
  %v9719 = vadd.f32 %v9714, %v3021
  %v9720 = vmax.f32 %v9715, 0.0
  %v9721 = vmax.f32 %v9716, 0.0
  %v9722 = vmax.f32 %v9717, 0.0
  %v9723 = vmax.f32 %v9718, 0.0
  %v9724 = vmax.f32 %v9719, 0.0
  %v9730 = vrot.slane %v9720, 1
  %v9731 = vrot.slane %v9720, 2
  %v9732 = vrot.slane %v9720, 3
  %v9733 = vrot.slane %v9720, 4
  %v9734 = vrot.slane %v9720, 5
  %v9735 = vrot.slane %v9720, 6
  %v9736 = vrot.slane %v9720, 7
  %v9737 = vrot.slane %v9721, 1
  %v9738 = vrot.slane %v9721, 2
  %v9739 = vrot.slane %v9721, 3
  %v9740 = vrot.slane %v9721, 4
  %v9741 = vrot.slane %v9721, 5
  %v9742 = vrot.slane %v9721, 6
  %v9743 = vrot.slane %v9721, 7
  %v9744 = vrot.slane %v9722, 1
  %v9745 = vrot.slane %v9722, 2
  %v9746 = vrot.slane %v9722, 3
  %v9747 = vrot.slane %v9722, 4
  %v9748 = vrot.slane %v9722, 5
  %v9749 = vrot.slane %v9722, 6
  %v9750 = vrot.slane %v9722, 7
  %v9751 = vrot.slane %v9723, 1
  %v9752 = vrot.slane %v9723, 2
  %v9753 = vrot.slane %v9723, 3
  %v9754 = vrot.slane %v9723, 4
  %v9755 = vrot.slane %v9723, 5
  %v9756 = vrot.slane %v9723, 6
  %v9757 = vrot.slane %v9723, 7
  %v9758 = vrot.slane %v9724, 1
  %v9759 = vrot.slane %v9724, 2
  %v9760 = vrot.slane %v9724, 3
  %v9761 = vrot.slane %v9724, 4
  %v9762 = vrot.slane %v9724, 5
  %v9763 = vrot.slane %v9724, 6
  %v9764 = vrot.slane %v9724, 7
  %9765 = vst [vmem:[#allocation1] ss:$9 sm:$0xff] %v9720
  %s9766 = scalar_lea.vmem [#allocation1], 1
  %9767 = vst [vmem:[%s9766] ss:$9 sm:$0xff] %v9730
  %s9768 = scalar_lea.vmem [#allocation1], 2
  %9769 = vst [vmem:[%s9768] ss:$9 sm:$0xff] %v9731
  %s9770 = scalar_lea.vmem [#allocation1], 3
  %9771 = vst [vmem:[%s9770] ss:$9 sm:$0xff] %v9732
  %s9772 = scalar_lea.vmem [#allocation1], 4
  %9773 = vst [vmem:[%s9772] ss:$9 sm:$0xff] %v9733
  %v9774 = vld [vmem:[#allocation1] sm:$0xff]
  %9775 = vst [vmem:[#allocation1] ss:$9 sm:$0xff] %v9734
  %9776 = vst [vmem:[%s9766] ss:$9 sm:$0xff] %v9735
  %9777 = vst [vmem:[%s9768] ss:$9 sm:$0xff] %v9736
  %9778 = vst [vmem:[%s9770] ss:$9 sm:$0xff] %v9721
  %9779 = vst [vmem:[%s9772] ss:$9 sm:$0xff] %v9737
  %v9780 = vld [vmem:[#allocation1] sm:$0xff]
  %9781 = vst [vmem:[#allocation1] ss:$9 sm:$0xff] %v9738
  %9782 = vst [vmem:[%s9766] ss:$9 sm:$0xff] %v9739
  %9783 = vst [vmem:[%s9768] ss:$9 sm:$0xff] %v9740
  %9784 = vst [vmem:[%s9770] ss:$9 sm:$0xff] %v9741
  %9785 = vst [vmem:[%s9772] ss:$9 sm:$0xff] %v9742
  %v9786 = vld [vmem:[#allocation1] sm:$0xff]
  %9787 = vst [vmem:[#allocation1] ss:$9 sm:$0xff] %v9743
  %9788 = vst [vmem:[%s9766] ss:$9 sm:$0xff] %v9722
  %9789 = vst [vmem:[%s9768] ss:$9 sm:$0xff] %v9744
  %9790 = vst [vmem:[%s9770] ss:$9 sm:$0xff] %v9745
  %9791 = vst [vmem:[%s9772] ss:$9 sm:$0xff] %v9746
  %v9792 = vld [vmem:[#allocation1] sm:$0xff]
  %9793 = vst [vmem:[#allocation1] ss:$9 sm:$0xff] %v9747
  %9794 = vst [vmem:[%s9766] ss:$9 sm:$0xff] %v9748
  %9795 = vst [vmem:[%s9768] ss:$9 sm:$0xff] %v9749
  %9796 = vst [vmem:[%s9770] ss:$9 sm:$0xff] %v9750
  %9797 = vst [vmem:[%s9772] ss:$9 sm:$0xff] %v9723
  %v9798 = vld [vmem:[#allocation1] sm:$0xff]
  %9799 = vst [vmem:[#allocation1] ss:$9 sm:$0xff] %v9751
  %9800 = vst [vmem:[%s9766] ss:$9 sm:$0xff] %v9752
  %9801 = vst [vmem:[%s9768] ss:$9 sm:$0xff] %v9753
  %9802 = vst [vmem:[%s9770] ss:$9 sm:$0xff] %v9754
  %9803 = vst [vmem:[%s9772] ss:$9 sm:$0xff] %v9755
  %v9804 = vld [vmem:[#allocation1] sm:$0xff]
  %9805 = vst [vmem:[#allocation1] ss:$9 sm:$0xff] %v9756
  %9806 = vst [vmem:[%s9766] ss:$9 sm:$0xff] %v9757
  %9807 = vst [vmem:[%s9768] ss:$9 sm:$0xff] %v9724
  %9808 = vst [vmem:[%s9770] ss:$9 sm:$0xff] %v9758
  %9809 = vst [vmem:[%s9772] ss:$9 sm:$0xff] %v9759
  %v9810 = vld [vmem:[#allocation1] sm:$0xff]
  %9811 = vst [vmem:[#allocation1] ss:$9 sm:$0xff] %v9760
  %9812 = vst [vmem:[%s9766] ss:$9 sm:$0xff] %v9761
  %9813 = vst [vmem:[%s9768] ss:$9 sm:$0xff] %v9762
  %9814 = vst [vmem:[%s9770] ss:$9 sm:$0xff] %v9763
  %9815 = vst [vmem:[%s9772] ss:$9 sm:$0xff] %v9764
  %v9816 = vld [vmem:[#allocation1] sm:$0xff]
  %v9825 = vpack.c.bf16 %v9774, %v9774
  %v9826 = vpack.c.bf16 %v9780, %v9780
  %v9827 = vpack.c.bf16 %v9786, %v9786
  %v9828 = vpack.c.bf16 %v9792, %v9792
  %v9829 = vpack.c.bf16 %v9798, %v9798
  %v9830 = vpack.c.bf16 %v9804, %v9804
  %v9831 = vpack.c.bf16 %v9810, %v9810
  %v9832 = vpack.c.bf16 %v9816, %v9816
  %v9841 = vunpack.c.l.b16 %v3133
  %v9842 = vunpack.c.l.b16 %v3134
  %v9843 = vunpack.c.l.b16 %v3135
  %v9844 = vunpack.c.l.b16 %v3136
  %v9845 = vunpack.c.l.b16 %v3137
  %v9846 = vunpack.c.l.b16 %v3138
  %v9847 = vunpack.c.l.b16 %v3139
  %v9848 = vunpack.c.l.b16 %v3140
  %v9849 = vpack.c.b16 %v9841, %v9841
  %v9850 = vpack.c.b16 %v9842, %v9842
  %v9851 = vpack.c.b16 %v9843, %v9843
  %v9852 = vpack.c.b16 %v9844, %v9844
  %v9853 = vpack.c.b16 %v9845, %v9845
  %v9854 = vpack.c.b16 %v9846, %v9846
  %v9855 = vpack.c.b16 %v9847, %v9847
  %v9856 = vpack.c.b16 %v9848, %v9848
  %v9857 = vunpack.c.l.b16 %v9849
  %v9858 = vunpack.c.l.b16 %v9850
  %v9859 = vunpack.c.l.b16 %v9851
  %v9860 = vunpack.c.l.b16 %v9852
  %v9861 = vunpack.c.l.b16 %v9853
  %v9862 = vunpack.c.l.b16 %v9854
  %v9863 = vunpack.c.l.b16 %v9855
  %v9864 = vunpack.c.l.b16 %v9856
  %v9865 = vrot.slane %v9858, 7
  %v9866 = vsel %vm1412, %v9865, %v9857
  %v9867 = vrot.slane %v9859, 6
  %v9868 = vsel %vm1416, %v9867, %v9866
  %v9869 = vrot.slane %v9860, 5
  %vm9870 = vcmask 1043459
  %v9871 = vsel %vm9870, %v9869, %v9868
  %v9872 = vrot.slane %v9861, 4
  %vm9873 = vcmask 1044484
  %v9874 = vsel %vm9873, %v9872, %v9871
  %v9875 = vrot.slane %v9862, 3
  %vm9876 = vcmask 1045509
  %v9877 = vsel %vm9876, %v9875, %v9874
  %v9878 = vrot.slane %v9863, 2
  %vm9879 = vcmask 1046534
  %v9880 = vsel %vm9879, %v9878, %v9877
  %v9881 = vrot.slane %v9864, 1
  %vm9882 = vcmask 1047559
  %v9883 = vsel %vm9882, %v9881, %v9880
  %v9884 = vpack.c.b16 %v9883, %v9883
  %v9894 = vunpack.c.l.b16 %v4930
  %v9895 = vunpack.c.l.b16 %v4931
  %v9896 = vunpack.c.l.b16 %v4932
  %v9897 = vunpack.c.l.b16 %v4933
  %v9898 = vunpack.c.l.b16 %v4934
  %v9899 = vunpack.c.l.b16 %v4935
  %v9900 = vunpack.c.l.b16 %v4936
  %v9901 = vunpack.c.l.b16 %v4937
  %v9902 = vpack.c.b16 %v9894, %v9894
  %v9903 = vpack.c.b16 %v9895, %v9895
  %v9904 = vpack.c.b16 %v9896, %v9896
  %v9905 = vpack.c.b16 %v9897, %v9897
  %v9906 = vpack.c.b16 %v9898, %v9898
  %v9907 = vpack.c.b16 %v9899, %v9899
  %v9908 = vpack.c.b16 %v9900, %v9900
  %v9909 = vpack.c.b16 %v9901, %v9901
  %v9910 = vunpack.c.l.b16 %v9902
  %v9911 = vunpack.c.l.b16 %v9903
  %v9912 = vunpack.c.l.b16 %v9904
  %v9913 = vunpack.c.l.b16 %v9905
  %v9914 = vunpack.c.l.b16 %v9906
  %v9915 = vunpack.c.l.b16 %v9907
  %v9916 = vunpack.c.l.b16 %v9908
  %v9917 = vunpack.c.l.b16 %v9909
  %v9918 = vrot.slane %v9911, 7
  %v9919 = vsel %vm1412, %v9918, %v9910
  %v9920 = vrot.slane %v9912, 6
  %v9921 = vsel %vm1416, %v9920, %v9919
  %v9922 = vrot.slane %v9913, 5
  %v9923 = vsel %vm9870, %v9922, %v9921
  %v9924 = vrot.slane %v9914, 4
  %v9925 = vsel %vm9873, %v9924, %v9923
  %v9926 = vrot.slane %v9915, 3
  %v9927 = vsel %vm9876, %v9926, %v9925
  %v9928 = vrot.slane %v9916, 2
  %v9929 = vsel %vm9879, %v9928, %v9927
  %v9930 = vrot.slane %v9917, 1
  %v9931 = vsel %vm9882, %v9930, %v9929
  %v9932 = vpack.c.b16 %v9931, %v9931
  %v9942 = vunpack.c.l.b16 %v6615
  %v9943 = vunpack.c.l.b16 %v6616
  %v9944 = vunpack.c.l.b16 %v6617
  %v9945 = vunpack.c.l.b16 %v6618
  %v9946 = vunpack.c.l.b16 %v6619
  %v9947 = vunpack.c.l.b16 %v6620
  %v9948 = vunpack.c.l.b16 %v6621
  %v9949 = vunpack.c.l.b16 %v6622
  %v9950 = vpack.c.b16 %v9942, %v9942
  %v9951 = vpack.c.b16 %v9943, %v9943
  %v9952 = vpack.c.b16 %v9944, %v9944
  %v9953 = vpack.c.b16 %v9945, %v9945
  %v9954 = vpack.c.b16 %v9946, %v9946
  %v9955 = vpack.c.b16 %v9947, %v9947
  %v9956 = vpack.c.b16 %v9948, %v9948
  %v9957 = vpack.c.b16 %v9949, %v9949
  %v9958 = vunpack.c.l.b16 %v9950
  %v9959 = vunpack.c.l.b16 %v9951
  %v9960 = vunpack.c.l.b16 %v9952
  %v9961 = vunpack.c.l.b16 %v9953
  %v9962 = vunpack.c.l.b16 %v9954
  %v9963 = vunpack.c.l.b16 %v9955
  %v9964 = vunpack.c.l.b16 %v9956
  %v9965 = vunpack.c.l.b16 %v9957
  %v9966 = vrot.slane %v9959, 7
  %v9967 = vsel %vm1412, %v9966, %v9958
  %v9968 = vrot.slane %v9960, 6
  %v9969 = vsel %vm1416, %v9968, %v9967
  %v9970 = vrot.slane %v9961, 5
  %v9971 = vsel %vm9870, %v9970, %v9969
  %v9972 = vrot.slane %v9962, 4
  %v9973 = vsel %vm9873, %v9972, %v9971
  %v9974 = vrot.slane %v9963, 3
  %v9975 = vsel %vm9876, %v9974, %v9973
  %v9976 = vrot.slane %v9964, 2
  %v9977 = vsel %vm9879, %v9976, %v9975
  %v9978 = vrot.slane %v9965, 1
  %v9979 = vsel %vm9882, %v9978, %v9977
  %v9980 = vpack.c.b16 %v9979, %v9979
  %v9990 = vunpack.c.l.b16 %v8220
  %v9991 = vunpack.c.l.b16 %v8221
  %v9992 = vunpack.c.l.b16 %v8222
  %v9993 = vunpack.c.l.b16 %v8223
  %v9994 = vunpack.c.l.b16 %v8224
  %v9995 = vunpack.c.l.b16 %v8225
  %v9996 = vunpack.c.l.b16 %v8226
  %v9997 = vunpack.c.l.b16 %v8227
  %v9998 = vpack.c.b16 %v9990, %v9990
  %v9999 = vpack.c.b16 %v9991, %v9991
  %v10000 = vpack.c.b16 %v9992, %v9992
  %v10001 = vpack.c.b16 %v9993, %v9993
  %v10002 = vpack.c.b16 %v9994, %v9994
  %v10003 = vpack.c.b16 %v9995, %v9995
  %v10004 = vpack.c.b16 %v9996, %v9996
  %v10005 = vpack.c.b16 %v9997, %v9997
  %v10006 = vunpack.c.l.b16 %v9998
  %v10007 = vunpack.c.l.b16 %v9999
  %v10008 = vunpack.c.l.b16 %v10000
  %v10009 = vunpack.c.l.b16 %v10001
  %v10010 = vunpack.c.l.b16 %v10002
  %v10011 = vunpack.c.l.b16 %v10003
  %v10012 = vunpack.c.l.b16 %v10004
  %v10013 = vunpack.c.l.b16 %v10005
  %v10014 = vrot.slane %v10007, 7
  %v10015 = vsel %vm1412, %v10014, %v10006
  %v10016 = vrot.slane %v10008, 6
  %v10017 = vsel %vm1416, %v10016, %v10015
  %v10018 = vrot.slane %v10009, 5
  %v10019 = vsel %vm9870, %v10018, %v10017
  %v10020 = vrot.slane %v10010, 4
  %v10021 = vsel %vm9873, %v10020, %v10019
  %v10022 = vrot.slane %v10011, 3
  %v10023 = vsel %vm9876, %v10022, %v10021
  %v10024 = vrot.slane %v10012, 2
  %v10025 = vsel %vm9879, %v10024, %v10023
  %v10026 = vrot.slane %v10013, 1
  %v10027 = vsel %vm9882, %v10026, %v10025
  %v10028 = vpack.c.b16 %v10027, %v10027
  %v10038 = vunpack.c.l.b16 %v9825
  %v10039 = vunpack.c.l.b16 %v9826
  %v10040 = vunpack.c.l.b16 %v9827
  %v10041 = vunpack.c.l.b16 %v9828
  %v10042 = vunpack.c.l.b16 %v9829
  %v10043 = vunpack.c.l.b16 %v9830
  %v10044 = vunpack.c.l.b16 %v9831
  %v10045 = vunpack.c.l.b16 %v9832
  %v10046 = vpack.c.b16 %v10038, %v10038
  %v10047 = vpack.c.b16 %v10039, %v10039
  %v10048 = vpack.c.b16 %v10040, %v10040
  %v10049 = vpack.c.b16 %v10041, %v10041
  %v10050 = vpack.c.b16 %v10042, %v10042
  %v10051 = vpack.c.b16 %v10043, %v10043
  %v10052 = vpack.c.b16 %v10044, %v10044
  %v10053 = vpack.c.b16 %v10045, %v10045
  %v10054 = vunpack.c.l.b16 %v10046
  %v10055 = vunpack.c.l.b16 %v10047
  %v10056 = vunpack.c.l.b16 %v10048
  %v10057 = vunpack.c.l.b16 %v10049
  %v10058 = vunpack.c.l.b16 %v10050
  %v10059 = vunpack.c.l.b16 %v10051
  %v10060 = vunpack.c.l.b16 %v10052
  %v10061 = vunpack.c.l.b16 %v10053
  %v10062 = vrot.slane %v10055, 7
  %v10063 = vsel %vm1412, %v10062, %v10054
  %v10064 = vrot.slane %v10056, 6
  %v10065 = vsel %vm1416, %v10064, %v10063
  %v10066 = vrot.slane %v10057, 5
  %v10067 = vsel %vm9870, %v10066, %v10065
  %v10068 = vrot.slane %v10058, 4
  %v10069 = vsel %vm9873, %v10068, %v10067
  %v10070 = vrot.slane %v10059, 3
  %v10071 = vsel %vm9876, %v10070, %v10069
  %v10072 = vrot.slane %v10060, 2
  %v10073 = vsel %vm9879, %v10072, %v10071
  %v10074 = vrot.slane %v10061, 1
  %v10075 = vsel %vm9882, %v10074, %v10073
  %v10076 = vpack.c.b16 %v10075, %v10075
  %v10078 = vrot.slane %v9857, 1
  %v10079 = vsel %vm1412, %v9858, %v10078
  %v10080 = vrot.slane %v9859, 7
  %v10081 = vsel %vm1416, %v10080, %v10079
  %v10082 = vrot.slane %v9860, 6
  %v10083 = vsel %vm9870, %v10082, %v10081
  %v10084 = vrot.slane %v9861, 5
  %v10085 = vsel %vm9873, %v10084, %v10083
  %v10086 = vrot.slane %v9862, 4
  %v10087 = vsel %vm9876, %v10086, %v10085
  %v10088 = vrot.slane %v9863, 3
  %v10089 = vsel %vm9879, %v10088, %v10087
  %v10090 = vrot.slane %v9864, 2
  %v10091 = vsel %vm9882, %v10090, %v10089
  %v10092 = vpack.c.b16 %v10091, %v10091
  %v10094 = vrot.slane %v9910, 1
  %v10095 = vsel %vm1412, %v9911, %v10094
  %v10096 = vrot.slane %v9912, 7
  %v10097 = vsel %vm1416, %v10096, %v10095
  %v10098 = vrot.slane %v9913, 6
  %v10099 = vsel %vm9870, %v10098, %v10097
  %v10100 = vrot.slane %v9914, 5
  %v10101 = vsel %vm9873, %v10100, %v10099
  %v10102 = vrot.slane %v9915, 4
  %v10103 = vsel %vm9876, %v10102, %v10101
  %v10104 = vrot.slane %v9916, 3
  %v10105 = vsel %vm9879, %v10104, %v10103
  %v10106 = vrot.slane %v9917, 2
  %v10107 = vsel %vm9882, %v10106, %v10105
  %v10108 = vpack.c.b16 %v10107, %v10107
  %v10110 = vrot.slane %v9958, 1
  %v10111 = vsel %vm1412, %v9959, %v10110
  %v10112 = vrot.slane %v9960, 7
  %v10113 = vsel %vm1416, %v10112, %v10111
  %v10114 = vrot.slane %v9961, 6
  %v10115 = vsel %vm9870, %v10114, %v10113
  %v10116 = vrot.slane %v9962, 5
  %v10117 = vsel %vm9873, %v10116, %v10115
  %v10118 = vrot.slane %v9963, 4
  %v10119 = vsel %vm9876, %v10118, %v10117
  %v10120 = vrot.slane %v9964, 3
  %v10121 = vsel %vm9879, %v10120, %v10119
  %v10122 = vrot.slane %v9965, 2
  %v10123 = vsel %vm9882, %v10122, %v10121
  %v10124 = vpack.c.b16 %v10123, %v10123
  %v10126 = vrot.slane %v10006, 1
  %v10127 = vsel %vm1412, %v10007, %v10126
  %v10128 = vrot.slane %v10008, 7
  %v10129 = vsel %vm1416, %v10128, %v10127
  %v10130 = vrot.slane %v10009, 6
  %v10131 = vsel %vm9870, %v10130, %v10129
  %v10132 = vrot.slane %v10010, 5
  %v10133 = vsel %vm9873, %v10132, %v10131
  %v10134 = vrot.slane %v10011, 4
  %v10135 = vsel %vm9876, %v10134, %v10133
  %v10136 = vrot.slane %v10012, 3
  %v10137 = vsel %vm9879, %v10136, %v10135
  %v10138 = vrot.slane %v10013, 2
  %v10139 = vsel %vm9882, %v10138, %v10137
  %v10140 = vpack.c.b16 %v10139, %v10139
  %v10142 = vrot.slane %v10054, 1
  %v10143 = vsel %vm1412, %v10055, %v10142
  %v10144 = vrot.slane %v10056, 7
  %v10145 = vsel %vm1416, %v10144, %v10143
  %v10146 = vrot.slane %v10057, 6
  %v10147 = vsel %vm9870, %v10146, %v10145
  %v10148 = vrot.slane %v10058, 5
  %v10149 = vsel %vm9873, %v10148, %v10147
  %v10150 = vrot.slane %v10059, 4
  %v10151 = vsel %vm9876, %v10150, %v10149
  %v10152 = vrot.slane %v10060, 3
  %v10153 = vsel %vm9879, %v10152, %v10151
  %v10154 = vrot.slane %v10061, 2
  %v10155 = vsel %vm9882, %v10154, %v10153
  %v10156 = vpack.c.b16 %v10155, %v10155
  %v10158 = vrot.slane %v9857, 2
  %v10159 = vrot.slane %v9858, 1
  %v10160 = vsel %vm1412, %v10159, %v10158
  %v10161 = vsel %vm1416, %v9859, %v10160
  %v10162 = vrot.slane %v9860, 7
  %v10163 = vsel %vm9870, %v10162, %v10161
  %v10164 = vrot.slane %v9861, 6
  %v10165 = vsel %vm9873, %v10164, %v10163
  %v10166 = vrot.slane %v9862, 5
  %v10167 = vsel %vm9876, %v10166, %v10165
  %v10168 = vrot.slane %v9863, 4
  %v10169 = vsel %vm9879, %v10168, %v10167
  %v10170 = vrot.slane %v9864, 3
  %v10171 = vsel %vm9882, %v10170, %v10169
  %v10172 = vpack.c.b16 %v10171, %v10171
  %v10174 = vrot.slane %v9910, 2
  %v10175 = vrot.slane %v9911, 1
  %v10176 = vsel %vm1412, %v10175, %v10174
  %v10177 = vsel %vm1416, %v9912, %v10176
  %v10178 = vrot.slane %v9913, 7
  %v10179 = vsel %vm9870, %v10178, %v10177
  %v10180 = vrot.slane %v9914, 6
  %v10181 = vsel %vm9873, %v10180, %v10179
  %v10182 = vrot.slane %v9915, 5
  %v10183 = vsel %vm9876, %v10182, %v10181
  %v10184 = vrot.slane %v9916, 4
  %v10185 = vsel %vm9879, %v10184, %v10183
  %v10186 = vrot.slane %v9917, 3
  %v10187 = vsel %vm9882, %v10186, %v10185
  %v10188 = vpack.c.b16 %v10187, %v10187
  %v10190 = vrot.slane %v9958, 2
  %v10191 = vrot.slane %v9959, 1
  %v10192 = vsel %vm1412, %v10191, %v10190
  %v10193 = vsel %vm1416, %v9960, %v10192
  %v10194 = vrot.slane %v9961, 7
  %v10195 = vsel %vm9870, %v10194, %v10193
  %v10196 = vrot.slane %v9962, 6
  %v10197 = vsel %vm9873, %v10196, %v10195
  %v10198 = vrot.slane %v9963, 5
  %v10199 = vsel %vm9876, %v10198, %v10197
  %v10200 = vrot.slane %v9964, 4
  %v10201 = vsel %vm9879, %v10200, %v10199
  %v10202 = vrot.slane %v9965, 3
  %v10203 = vsel %vm9882, %v10202, %v10201
  %v10204 = vpack.c.b16 %v10203, %v10203
  %v10206 = vrot.slane %v10006, 2
  %v10207 = vrot.slane %v10007, 1
  %v10208 = vsel %vm1412, %v10207, %v10206
  %v10209 = vsel %vm1416, %v10008, %v10208
  %v10210 = vrot.slane %v10009, 7
  %v10211 = vsel %vm9870, %v10210, %v10209
  %v10212 = vrot.slane %v10010, 6
  %v10213 = vsel %vm9873, %v10212, %v10211
  %v10214 = vrot.slane %v10011, 5
  %v10215 = vsel %vm9876, %v10214, %v10213
  %v10216 = vrot.slane %v10012, 4
  %v10217 = vsel %vm9879, %v10216, %v10215
  %v10218 = vrot.slane %v10013, 3
  %v10219 = vsel %vm9882, %v10218, %v10217
  %v10220 = vpack.c.b16 %v10219, %v10219
  %v10222 = vrot.slane %v10054, 2
  %v10223 = vrot.slane %v10055, 1
  %v10224 = vsel %vm1412, %v10223, %v10222
  %v10225 = vsel %vm1416, %v10056, %v10224
  %v10226 = vrot.slane %v10057, 7
  %v10227 = vsel %vm9870, %v10226, %v10225
  %v10228 = vrot.slane %v10058, 6
  %v10229 = vsel %vm9873, %v10228, %v10227
  %v10230 = vrot.slane %v10059, 5
  %v10231 = vsel %vm9876, %v10230, %v10229
  %v10232 = vrot.slane %v10060, 4
  %v10233 = vsel %vm9879, %v10232, %v10231
  %v10234 = vrot.slane %v10061, 3
  %v10235 = vsel %vm9882, %v10234, %v10233
  %v10236 = vpack.c.b16 %v10235, %v10235
  %v10238 = vrot.slane %v9857, 3
  %v10239 = vrot.slane %v9858, 2
  %v10240 = vsel %vm1412, %v10239, %v10238
  %v10241 = vrot.slane %v9859, 1
  %v10242 = vsel %vm1416, %v10241, %v10240
  %v10243 = vsel %vm9870, %v9860, %v10242
  %v10244 = vrot.slane %v9861, 7
  %v10245 = vsel %vm9873, %v10244, %v10243
  %v10246 = vrot.slane %v9862, 6
  %v10247 = vsel %vm9876, %v10246, %v10245
  %v10248 = vrot.slane %v9863, 5
  %v10249 = vsel %vm9879, %v10248, %v10247
  %v10250 = vrot.slane %v9864, 4
  %v10251 = vsel %vm9882, %v10250, %v10249
  %v10252 = vpack.c.b16 %v10251, %v10251
  %v10254 = vsel %vm9873, %v9918, %v9910
  %v10255 = vsel %vm9876, %v9920, %v10254
  %v10256 = vsel %vm9879, %v9922, %v10255
  %v10257 = vsel %vm9882, %v9924, %v10256
  %v10258 = vsel %vm1412, %v9928, %v9926
  %v10259 = vsel %vm1416, %v9930, %v10258
  %v10260 = vpack.c.b16 %v10259, %v10257
  %v10261 = vsel %vm9873, %v9966, %v9958
  %v10262 = vsel %vm9876, %v9968, %v10261
  %v10263 = vsel %vm9879, %v9970, %v10262
  %v10264 = vsel %vm9882, %v9972, %v10263
  %v10265 = vsel %vm1412, %v9976, %v9974
  %v10266 = vsel %vm1416, %v9978, %v10265
  %v10267 = vpack.c.b16 %v10266, %v10264
  %v10268 = vsel %vm9873, %v10014, %v10006
  %v10269 = vsel %vm9876, %v10016, %v10268
  %v10270 = vsel %vm9879, %v10018, %v10269
  %v10271 = vsel %vm9882, %v10020, %v10270
  %v10272 = vsel %vm1412, %v10024, %v10022
  %v10273 = vsel %vm1416, %v10026, %v10272
  %v10274 = vpack.c.b16 %v10273, %v10271
  %v10275 = vsel %vm9873, %v10062, %v10054
  %v10276 = vsel %vm9876, %v10064, %v10275
  %v10277 = vsel %vm9879, %v10066, %v10276
  %v10278 = vsel %vm9882, %v10068, %v10277
  %v10279 = vsel %vm1412, %v10072, %v10070
  %v10280 = vsel %vm1416, %v10074, %v10279
  %v10281 = vpack.c.b16 %v10280, %v10278
  %v10282 = vsel %vm9873, %v9858, %v10078
  %v10283 = vsel %vm9876, %v10080, %v10282
  %v10284 = vsel %vm9879, %v10082, %v10283
  %v10285 = vsel %vm9882, %v10084, %v10284
  %v10286 = vsel %vm1412, %v10088, %v10086
  %v10287 = vsel %vm1416, %v10090, %v10286
  %v10288 = vpack.c.b16 %v10287, %v10285
  %v10289 = vsel %vm9873, %v9911, %v10094
  %v10290 = vsel %vm9876, %v10096, %v10289
  %v10291 = vsel %vm9879, %v10098, %v10290
  %v10292 = vsel %vm9882, %v10100, %v10291
  %v10293 = vsel %vm1412, %v10104, %v10102
  %v10294 = vsel %vm1416, %v10106, %v10293
  %v10295 = vpack.c.b16 %v10294, %v10292
  %v10296 = vsel %vm9873, %v9959, %v10110
  %v10297 = vsel %vm9876, %v10112, %v10296
  %v10298 = vsel %vm9879, %v10114, %v10297
  %v10299 = vsel %vm9882, %v10116, %v10298
  %v10300 = vsel %vm1412, %v10120, %v10118
  %v10301 = vsel %vm1416, %v10122, %v10300
  %v10302 = vpack.c.b16 %v10301, %v10299
  %v10303 = vsel %vm9873, %v10007, %v10126
  %v10304 = vsel %vm9876, %v10128, %v10303
  %v10305 = vsel %vm9879, %v10130, %v10304
  %v10306 = vsel %vm9882, %v10132, %v10305
  %v10307 = vsel %vm1412, %v10136, %v10134
  %v10308 = vsel %vm1416, %v10138, %v10307
  %v10309 = vpack.c.b16 %v10308, %v10306
  %v10310 = vsel %vm9873, %v10055, %v10142
  %v10311 = vsel %vm9876, %v10144, %v10310
  %v10312 = vsel %vm9879, %v10146, %v10311
  %v10313 = vsel %vm9882, %v10148, %v10312
  %v10314 = vsel %vm1412, %v10152, %v10150
  %v10315 = vsel %vm1416, %v10154, %v10314
  %v10316 = vpack.c.b16 %v10315, %v10313
  %v10318 = vshrl.u32 %v10260, 16
  %v10320 = vrot.slane %v10318, 1
  %v10321 = vshll.u32 %v10260, 16
  %v10323 = vrot.slane %v10321, 2
  %v10324 = vor.u32 %v10320, %v10323
  %v10326 = vshrl.u32 %v10267, 16
  %v10328 = vrot.slane %v10326, 1
  %v10329 = vshll.u32 %v10267, 16
  %v10331 = vrot.slane %v10329, 2
  %v10332 = vor.u32 %v10328, %v10331
  %v10334 = vshrl.u32 %v10274, 16
  %v10336 = vrot.slane %v10334, 1
  %v10337 = vshll.u32 %v10274, 16
  %v10339 = vrot.slane %v10337, 2
  %v10340 = vor.u32 %v10336, %v10339
  %v10342 = vshrl.u32 %v10281, 16
  %v10344 = vrot.slane %v10342, 1
  %v10345 = vshll.u32 %v10281, 16
  %v10347 = vrot.slane %v10345, 2
  %v10348 = vor.u32 %v10344, %v10347
  %v10350 = vshrl.u32 %v10288, 16
  %v10352 = vrot.slane %v10350, 1
  %v10353 = vshll.u32 %v10288, 16
  %v10355 = vrot.slane %v10353, 2
  %v10356 = vor.u32 %v10352, %v10355
  %v10358 = vshrl.u32 %v10295, 16
  %v10360 = vrot.slane %v10358, 1
  %v10361 = vshll.u32 %v10295, 16
  %v10363 = vrot.slane %v10361, 2
  %v10364 = vor.u32 %v10360, %v10363
  %v10366 = vshrl.u32 %v10302, 16
  %v10368 = vrot.slane %v10366, 1
  %v10369 = vshll.u32 %v10302, 16
  %v10371 = vrot.slane %v10369, 2
  %v10372 = vor.u32 %v10368, %v10371
  %v10374 = vshrl.u32 %v10309, 16
  %v10376 = vrot.slane %v10374, 1
  %v10377 = vshll.u32 %v10309, 16
  %v10379 = vrot.slane %v10377, 2
  %v10380 = vor.u32 %v10376, %v10379
  %v10382 = vshrl.u32 %v10316, 16
  %v10384 = vrot.slane %v10382, 1
  %v10385 = vshll.u32 %v10316, 16
  %v10387 = vrot.slane %v10385, 2
  %v10388 = vor.u32 %v10384, %v10387
  %v10398 = vld [vmem:[%s5] sm:$0xf]
  %v10399 = vld [vmem:[%s5 + $0x4] sm:$0xf]
  %v10400 = vld [vmem:[%s5 + $0x8] sm:$0xf]
  %v10401 = vld [vmem:[%s5 + $0xc] sm:$0xf]
  %v10402 = vld [vmem:[%s5 + $0x10] sm:$0xf]
  %v10403 = vld [vmem:[%s5 + $0x14] sm:$0xf]
  %v10404 = vld [vmem:[%s5 + $0x18] sm:$0xf]
  %v10405 = vld [vmem:[%s5 + $0x1c] sm:$0xf]
  %v10406 = vld [vmem:[%s5 + $0x20] sm:$0xf]
  %v10407 = vld [vmem:[%s5 + $0x24] sm:$0xf]
  %v10408 = vld [vmem:[%s5 + $0x28] sm:$0xf]
  %v10409 = vld [vmem:[%s5 + $0x2c] sm:$0xf]
  %v10410 = vld [vmem:[%s5 + $0x30] sm:$0xf]
  %v10411 = vld [vmem:[%s5 + $0x34] sm:$0xf]
  %v10412 = vld [vmem:[%s5 + $0x38] sm:$0xf]
  %v10413 = vld [vmem:[%s5 + $0x3c] sm:$0xf]
  %v10414 = vld [vmem:[%s5 + $0x40] sm:$0xf]
  %v10415 = vld [vmem:[%s5 + $0x44] sm:$0xf]
  %v10416 = vld [vmem:[%s5 + $0x48] sm:$0xf]
  %v10417 = vld [vmem:[%s5 + $0x4c] sm:$0xf]
  %v10418 = vld [vmem:[%s5 + $0x50] sm:$0xf]
  %v10419 = vld [vmem:[%s5 + $0x54] sm:$0xf]
  %v10420 = vld [vmem:[%s5 + $0x58] sm:$0xf]
  %v10421 = vld [vmem:[%s5 + $0x5c] sm:$0xf]
  %v10422 = vld [vmem:[%s5 + $0x60] sm:$0xf]
  %v10423 = vld [vmem:[%s5 + $0x64] sm:$0xf]
  %v10424 = vld [vmem:[%s5 + $0x68] sm:$0xf]
  %v10425 = vld [vmem:[%s5 + $0x6c] sm:$0xf]
  %v10426 = vld [vmem:[%s5 + $0x70] sm:$0xf]
  %v10427 = vld [vmem:[%s5 + $0x74] sm:$0xf]
  %v10428 = vld [vmem:[%s5 + $0x78] sm:$0xf]
  %v10429 = vld [vmem:[%s5 + $0x7c] sm:$0xf]
  %v10430 = vld [vmem:[%s5 + $0x80] sm:$0xf]
  %v10431 = vld [vmem:[%s5 + $0x84] sm:$0xf]
  %v10432 = vld [vmem:[%s5 + $0x88] sm:$0xf]
  %v10433 = vld [vmem:[%s5 + $0x8c] sm:$0xf]
  %v10434 = vld [vmem:[%s5 + $0x90] sm:$0xf]
  %v10435 = vld [vmem:[%s5 + $0x94] sm:$0xf]
  %v10436 = vld [vmem:[%s5 + $0x98] sm:$0xf]
  %v10437 = vld [vmem:[%s5 + $0x9c] sm:$0xf]
  %v10438 = vld [vmem:[%s5 + $0xa0] sm:$0xf]
  %v10439 = vld [vmem:[%s5 + $0xa4] sm:$0xf]
  %v10440 = vld [vmem:[%s5 + $0xa8] sm:$0xf]
  %v10441 = vld [vmem:[%s5 + $0xac] sm:$0xf]
  %v10442 = vld [vmem:[%s5 + $0xb0] sm:$0xf]
  %v10443 = vld [vmem:[%s5 + $0xb4] sm:$0xf]
  %v10444 = vld [vmem:[%s5 + $0xb8] sm:$0xf]
  %v10445 = vld [vmem:[%s5 + $0xbc] sm:$0xf]
  %v10446 = vld [vmem:[%s5 + $0xc0] sm:$0xf]
  %v10447 = vld [vmem:[%s5 + $0xc4] sm:$0xf]
  %v10448 = vld [vmem:[%s5 + $0xc8] sm:$0xf]
  %v10449 = vld [vmem:[%s5 + $0xcc] sm:$0xf]
  %v10450 = vld [vmem:[%s5 + $0xd0] sm:$0xf]
  %v10451 = vld [vmem:[%s5 + $0xd4] sm:$0xf]
  %v10452 = vld [vmem:[%s5 + $0xd8] sm:$0xf]
  %v10453 = vld [vmem:[%s5 + $0xdc] sm:$0xf]
  %v10454 = vld [vmem:[%s5 + $0xe0] sm:$0xf]
  %v10455 = vld [vmem:[%s5 + $0xe4] sm:$0xf]
  %v10456 = vld [vmem:[%s5 + $0xe8] sm:$0xf]
  %v10457 = vld [vmem:[%s5 + $0xec] sm:$0xf]
  %v10458 = vld [vmem:[%s5 + $0xf0] sm:$0xf]
  %v10459 = vld [vmem:[%s5 + $0xf4] sm:$0xf]
  %v10460 = vld [vmem:[%s5 + $0xf8] sm:$0xf]
  %v10461 = vld [vmem:[%s5 + $0xfc] sm:$0xf]
  %v10462 = vld [vmem:[%s5 + $0x100] sm:$0xf]
  %v10463 = vld [vmem:[%s5 + $0x104] sm:$0xf]
  %v10464 = vld [vmem:[%s5 + $0x108] sm:$0xf]
  %v10465 = vld [vmem:[%s5 + $0x10c] sm:$0xf]
  %v10466 = vld [vmem:[%s5 + $0x110] sm:$0xf]
  %v10467 = vld [vmem:[%s5 + $0x114] sm:$0xf]
  %v10468 = vld [vmem:[%s5 + $0x118] sm:$0xf]
  %v10469 = vld [vmem:[%s5 + $0x11c] sm:$0xf]
  %v10470 = vld [vmem:[%s5 + $0x120] sm:$0xf]
  %v10471 = vld [vmem:[%s5 + $0x124] sm:$0xf]
  %v10472 = vld [vmem:[%s5 + $0x128] sm:$0xf]
  %v10473 = vld [vmem:[%s5 + $0x12c] sm:$0xf]
  %v10474 = vld [vmem:[%s5 + $0x130] sm:$0xf]
  %v10475 = vld [vmem:[%s5 + $0x134] sm:$0xf]
  %v10476 = vld [vmem:[%s5 + $0x138] sm:$0xf]
  %v10477 = vld [vmem:[%s5 + $0x13c] sm:$0xf]
  %v10478 = vld [vmem:[%s5 + $0x140] sm:$0xf]
  %v10479 = vld [vmem:[%s5 + $0x144] sm:$0xf]
  %v10480 = vld [vmem:[%s5 + $0x148] sm:$0xf]
  %v10481 = vld [vmem:[%s5 + $0x14c] sm:$0xf]
  %v10482 = vld [vmem:[%s5 + $0x150] sm:$0xf]
  %v10483 = vld [vmem:[%s5 + $0x154] sm:$0xf]
  %v10484 = vld [vmem:[%s5 + $0x158] sm:$0xf]
  %v10485 = vld [vmem:[%s5 + $0x15c] sm:$0xf]
  %v10486 = vld [vmem:[%s5 + $0x160] sm:$0xf]
  %v10487 = vld [vmem:[%s5 + $0x164] sm:$0xf]
  %v10488 = vld [vmem:[%s5 + $0x168] sm:$0xf]
  %v10489 = vld [vmem:[%s5 + $0x16c] sm:$0xf]
  %v10490 = vld [vmem:[%s5 + $0x170] sm:$0xf]
  %v10491 = vld [vmem:[%s5 + $0x174] sm:$0xf]
  %v10492 = vld [vmem:[%s5 + $0x178] sm:$0xf]
  %v10493 = vld [vmem:[%s5 + $0x17c] sm:$0xf]
  %v10494 = vld [vmem:[%s5 + $0x180] sm:$0xf]
  %v10495 = vld [vmem:[%s5 + $0x184] sm:$0xf]
  %v10496 = vld [vmem:[%s5 + $0x188] sm:$0xf]
  %v10497 = vld [vmem:[%s5 + $0x18c] sm:$0xf]
  %v10498 = vld [vmem:[%s5 + $0x190] sm:$0xf]
  %v10499 = vld [vmem:[%s5 + $0x194] sm:$0xf]
  %v10500 = vld [vmem:[%s5 + $0x198] sm:$0xf]
  %v10501 = vld [vmem:[%s5 + $0x19c] sm:$0xf]
  %v10502 = vld [vmem:[%s5 + $0x1a0] sm:$0xf]
  %v10503 = vld [vmem:[%s5 + $0x1a4] sm:$0xf]
  %v10504 = vld [vmem:[%s5 + $0x1a8] sm:$0xf]
  %v10505 = vld [vmem:[%s5 + $0x1ac] sm:$0xf]
  %v10506 = vld [vmem:[%s5 + $0x1b0] sm:$0xf]
  %v10507 = vld [vmem:[%s5 + $0x1b4] sm:$0xf]
  %v10508 = vld [vmem:[%s5 + $0x1b8] sm:$0xf]
  %v10509 = vld [vmem:[%s5 + $0x1bc] sm:$0xf]
  %v10510 = vld [vmem:[%s5 + $0x1c0] sm:$0xf]
  %v10511 = vld [vmem:[%s5 + $0x1c4] sm:$0xf]
  %v10512 = vld [vmem:[%s5 + $0x1c8] sm:$0xf]
  %v10513 = vld [vmem:[%s5 + $0x1cc] sm:$0xf]
  %v10514 = vld [vmem:[%s5 + $0x1d0] sm:$0xf]
  %v10515 = vld [vmem:[%s5 + $0x1d4] sm:$0xf]
  %v10516 = vld [vmem:[%s5 + $0x1d8] sm:$0xf]
  %v10517 = vld [vmem:[%s5 + $0x1dc] sm:$0xf]
  %v10518 = vld [vmem:[%s5 + $0x1e0] sm:$0xf]
  %v10519 = vld [vmem:[%s5 + $0x1e4] sm:$0xf]
  %v10520 = vld [vmem:[%s5 + $0x1e8] sm:$0xf]
  %v10521 = vld [vmem:[%s5 + $0x1ec] sm:$0xf]
  %v10522 = vld [vmem:[%s5 + $0x1f0] sm:$0xf]
  %v10523 = vld [vmem:[%s5 + $0x1f4] sm:$0xf]
  %v10524 = vld [vmem:[%s5 + $0x1f8] sm:$0xf]
  %v10525 = vld [vmem:[%s5 + $0x1fc] sm:$0xf]
  %v10526 = vld [vmem:[%s5 + $0x200] sm:$0xf]
  %v10527 = vld [vmem:[%s5 + $0x204] sm:$0xf]
  %v10528 = vld [vmem:[%s5 + $0x208] sm:$0xf]
  %v10529 = vld [vmem:[%s5 + $0x20c] sm:$0xf]
  %v10530 = vld [vmem:[%s5 + $0x210] sm:$0xf]
  %v10531 = vld [vmem:[%s5 + $0x214] sm:$0xf]
  %v10532 = vld [vmem:[%s5 + $0x218] sm:$0xf]
  %v10533 = vld [vmem:[%s5 + $0x21c] sm:$0xf]
  %v10534 = vld [vmem:[%s5 + $0x220] sm:$0xf]
  %v10535 = vld [vmem:[%s5 + $0x224] sm:$0xf]
  %v10536 = vld [vmem:[%s5 + $0x228] sm:$0xf]
  %v10537 = vld [vmem:[%s5 + $0x22c] sm:$0xf]
  %v10538 = vld [vmem:[%s5 + $0x230] sm:$0xf]
  %v10539 = vld [vmem:[%s5 + $0x234] sm:$0xf]
  %v10540 = vld [vmem:[%s5 + $0x238] sm:$0xf]
  %v10541 = vld [vmem:[%s5 + $0x23c] sm:$0xf]
  %v10542 = vld [vmem:[%s5 + $0x240] sm:$0xf]
  %v10543 = vld [vmem:[%s5 + $0x244] sm:$0xf]
  %v10544 = vld [vmem:[%s5 + $0x248] sm:$0xf]
  %v10545 = vld [vmem:[%s5 + $0x24c] sm:$0xf]
  %v10546 = vld [vmem:[%s5 + $0x250] sm:$0xf]
  %v10547 = vld [vmem:[%s5 + $0x254] sm:$0xf]
  %v10548 = vld [vmem:[%s5 + $0x258] sm:$0xf]
  %v10549 = vld [vmem:[%s5 + $0x25c] sm:$0xf]
  %v10550 = vld [vmem:[%s5 + $0x260] sm:$0xf]
  %v10551 = vld [vmem:[%s5 + $0x264] sm:$0xf]
  %v10552 = vld [vmem:[%s5 + $0x268] sm:$0xf]
  %v10553 = vld [vmem:[%s5 + $0x26c] sm:$0xf]
  %v10554 = vld [vmem:[%s5 + $0x270] sm:$0xf]
  %v10555 = vld [vmem:[%s5 + $0x274] sm:$0xf]
  %v10556 = vld [vmem:[%s5 + $0x278] sm:$0xf]
  %v10557 = vld [vmem:[%s5 + $0x27c] sm:$0xf]
  %v10558 = vld [vmem:[%s5 + $0x280] sm:$0xf]
  %v10559 = vld [vmem:[%s5 + $0x284] sm:$0xf]
  %v10560 = vld [vmem:[%s5 + $0x288] sm:$0xf]
  %v10561 = vld [vmem:[%s5 + $0x28c] sm:$0xf]
  %v10562 = vld [vmem:[%s5 + $0x290] sm:$0xf]
  %v10563 = vld [vmem:[%s5 + $0x294] sm:$0xf]
  %v10564 = vld [vmem:[%s5 + $0x298] sm:$0xf]
  %v10565 = vld [vmem:[%s5 + $0x29c] sm:$0xf]
  %v10566 = vld [vmem:[%s5 + $0x2a0] sm:$0xf]
  %v10567 = vld [vmem:[%s5 + $0x2a4] sm:$0xf]
  %v10568 = vld [vmem:[%s5 + $0x2a8] sm:$0xf]
  %v10569 = vld [vmem:[%s5 + $0x2ac] sm:$0xf]
  %v10570 = vld [vmem:[%s5 + $0x2b0] sm:$0xf]
  %v10571 = vld [vmem:[%s5 + $0x2b4] sm:$0xf]
  %v10572 = vld [vmem:[%s5 + $0x2b8] sm:$0xf]
  %v10573 = vld [vmem:[%s5 + $0x2bc] sm:$0xf]
  %v10574 = vld [vmem:[%s5 + $0x2c0] sm:$0xf]
  %v10575 = vld [vmem:[%s5 + $0x2c4] sm:$0xf]
  %v10576 = vld [vmem:[%s5 + $0x2c8] sm:$0xf]
  %v10577 = vld [vmem:[%s5 + $0x2cc] sm:$0xf]
  %v10578 = vld [vmem:[%s5 + $0x2d0] sm:$0xf]
  %v10579 = vld [vmem:[%s5 + $0x2d4] sm:$0xf]
  %v10580 = vld [vmem:[%s5 + $0x2d8] sm:$0xf]
  %v10581 = vld [vmem:[%s5 + $0x2dc] sm:$0xf]
  %v10582 = vld [vmem:[%s5 + $0x2e0] sm:$0xf]
  %v10583 = vld [vmem:[%s5 + $0x2e4] sm:$0xf]
  %v10584 = vld [vmem:[%s5 + $0x2e8] sm:$0xf]
  %v10585 = vld [vmem:[%s5 + $0x2ec] sm:$0xf]
  %v10586 = vld [vmem:[%s5 + $0x2f0] sm:$0xf]
  %v10587 = vld [vmem:[%s5 + $0x2f4] sm:$0xf]
  %v10588 = vld [vmem:[%s5 + $0x2f8] sm:$0xf]
  %v10589 = vld [vmem:[%s5 + $0x2fc] sm:$0xf]
  %v10590 = vld [vmem:[%s5 + $0x300] sm:$0xf]
  %v10591 = vld [vmem:[%s5 + $0x304] sm:$0xf]
  %v10592 = vld [vmem:[%s5 + $0x308] sm:$0xf]
  %v10593 = vld [vmem:[%s5 + $0x30c] sm:$0xf]
  %v10594 = vld [vmem:[%s5 + $0x310] sm:$0xf]
  %v10595 = vld [vmem:[%s5 + $0x314] sm:$0xf]
  %v10596 = vld [vmem:[%s5 + $0x318] sm:$0xf]
  %v10597 = vld [vmem:[%s5 + $0x31c] sm:$0xf]
  %v10598 = vld [vmem:[%s5 + $0x320] sm:$0xf]
  %v10599 = vld [vmem:[%s5 + $0x324] sm:$0xf]
  %v10600 = vld [vmem:[%s5 + $0x328] sm:$0xf]
  %v10601 = vld [vmem:[%s5 + $0x32c] sm:$0xf]
  %v10602 = vld [vmem:[%s5 + $0x330] sm:$0xf]
  %v10603 = vld [vmem:[%s5 + $0x334] sm:$0xf]
  %v10604 = vld [vmem:[%s5 + $0x338] sm:$0xf]
  %v10605 = vld [vmem:[%s5 + $0x33c] sm:$0xf]
  %v10606 = vld [vmem:[%s5 + $0x340] sm:$0xf]
  %v10607 = vld [vmem:[%s5 + $0x344] sm:$0xf]
  %v10608 = vld [vmem:[%s5 + $0x348] sm:$0xf]
  %v10609 = vld [vmem:[%s5 + $0x34c] sm:$0xf]
  %v10610 = vld [vmem:[%s5 + $0x350] sm:$0xf]
  %v10611 = vld [vmem:[%s5 + $0x354] sm:$0xf]
  %v10612 = vld [vmem:[%s5 + $0x358] sm:$0xf]
  %v10613 = vld [vmem:[%s5 + $0x35c] sm:$0xf]
  %v10614 = vld [vmem:[%s5 + $0x360] sm:$0xf]
  %v10615 = vld [vmem:[%s5 + $0x364] sm:$0xf]
  %v10616 = vld [vmem:[%s5 + $0x368] sm:$0xf]
  %v10617 = vld [vmem:[%s5 + $0x36c] sm:$0xf]
  %v10618 = vld [vmem:[%s5 + $0x370] sm:$0xf]
  %v10619 = vld [vmem:[%s5 + $0x374] sm:$0xf]
  %v10620 = vld [vmem:[%s5 + $0x378] sm:$0xf]
  %v10621 = vld [vmem:[%s5 + $0x37c] sm:$0xf]
  %v10622 = vld [vmem:[%s5 + $0x380] sm:$0xf]
  %v10623 = vld [vmem:[%s5 + $0x384] sm:$0xf]
  %v10624 = vld [vmem:[%s5 + $0x388] sm:$0xf]
  %v10625 = vld [vmem:[%s5 + $0x38c] sm:$0xf]
  %v10626 = vld [vmem:[%s5 + $0x390] sm:$0xf]
  %v10627 = vld [vmem:[%s5 + $0x394] sm:$0xf]
  %v10628 = vld [vmem:[%s5 + $0x398] sm:$0xf]
  %v10629 = vld [vmem:[%s5 + $0x39c] sm:$0xf]
  %v10630 = vld [vmem:[%s5 + $0x3a0] sm:$0xf]
  %v10631 = vld [vmem:[%s5 + $0x3a4] sm:$0xf]
  %v10632 = vld [vmem:[%s5 + $0x3a8] sm:$0xf]
  %v10633 = vld [vmem:[%s5 + $0x3ac] sm:$0xf]
  %v10634 = vld [vmem:[%s5 + $0x3b0] sm:$0xf]
  %v10635 = vld [vmem:[%s5 + $0x3b4] sm:$0xf]
  %v10636 = vld [vmem:[%s5 + $0x3b8] sm:$0xf]
  %v10637 = vld [vmem:[%s5 + $0x3bc] sm:$0xf]
  %v10638 = vld [vmem:[%s5 + $0x3c0] sm:$0xf]
  %v10639 = vld [vmem:[%s5 + $0x3c4] sm:$0xf]
  %v10640 = vld [vmem:[%s5 + $0x3c8] sm:$0xf]
  %v10641 = vld [vmem:[%s5 + $0x3cc] sm:$0xf]
  %v10642 = vld [vmem:[%s5 + $0x3d0] sm:$0xf]
  %v10643 = vld [vmem:[%s5 + $0x3d4] sm:$0xf]
  %v10644 = vld [vmem:[%s5 + $0x3d8] sm:$0xf]
  %v10645 = vld [vmem:[%s5 + $0x3dc] sm:$0xf]
  %v10646 = vld [vmem:[%s5 + $0x3e0] sm:$0xf]
  %v10647 = vld [vmem:[%s5 + $0x3e4] sm:$0xf]
  %v10648 = vld [vmem:[%s5 + $0x3e8] sm:$0xf]
  %v10649 = vld [vmem:[%s5 + $0x3ec] sm:$0xf]
  %v10650 = vld [vmem:[%s5 + $0x3f0] sm:$0xf]
  %v10651 = vld [vmem:[%s5 + $0x3f4] sm:$0xf]
  %v10652 = vld [vmem:[%s5 + $0x3f8] sm:$0xf]
  %v10653 = vld [vmem:[%s5 + $0x3fc] sm:$0xf]
  %v10654 = vld [vmem:[%s5 + $0x400] sm:$0xf]
  %v10655 = vld [vmem:[%s5 + $0x404] sm:$0xf]
  %v10656 = vld [vmem:[%s5 + $0x408] sm:$0xf]
  %v10657 = vld [vmem:[%s5 + $0x40c] sm:$0xf]
  %v10658 = vld [vmem:[%s5 + $0x410] sm:$0xf]
  %v10659 = vld [vmem:[%s5 + $0x414] sm:$0xf]
  %v10660 = vld [vmem:[%s5 + $0x418] sm:$0xf]
  %v10661 = vld [vmem:[%s5 + $0x41c] sm:$0xf]
  %v10662 = vld [vmem:[%s5 + $0x420] sm:$0xf]
  %v10663 = vld [vmem:[%s5 + $0x424] sm:$0xf]
  %v10664 = vld [vmem:[%s5 + $0x428] sm:$0xf]
  %v10665 = vld [vmem:[%s5 + $0x42c] sm:$0xf]
  %v10666 = vld [vmem:[%s5 + $0x430] sm:$0xf]
  %v10667 = vld [vmem:[%s5 + $0x434] sm:$0xf]
  %v10668 = vld [vmem:[%s5 + $0x438] sm:$0xf]
  %v10669 = vld [vmem:[%s5 + $0x43c] sm:$0xf]
  %v10670 = vld [vmem:[%s5 + $0x440] sm:$0xf]
  %v10671 = vld [vmem:[%s5 + $0x444] sm:$0xf]
  %v10672 = vld [vmem:[%s5 + $0x448] sm:$0xf]
  %v10673 = vld [vmem:[%s5 + $0x44c] sm:$0xf]
  %v10674 = vld [vmem:[%s5 + $0x450] sm:$0xf]
  %v10675 = vld [vmem:[%s5 + $0x454] sm:$0xf]
  %v10676 = vld [vmem:[%s5 + $0x458] sm:$0xf]
  %v10677 = vld [vmem:[%s5 + $0x45c] sm:$0xf]
  %v10678 = vld [vmem:[%s5 + $0x460] sm:$0xf]
  %v10679 = vld [vmem:[%s5 + $0x464] sm:$0xf]
  %v10680 = vld [vmem:[%s5 + $0x468] sm:$0xf]
  %v10681 = vld [vmem:[%s5 + $0x46c] sm:$0xf]
  %v10682 = vld [vmem:[%s5 + $0x470] sm:$0xf]
  %v10683 = vld [vmem:[%s5 + $0x474] sm:$0xf]
  %v10684 = vld [vmem:[%s5 + $0x478] sm:$0xf]
  %v10685 = vld [vmem:[%s5 + $0x47c] sm:$0xf]
  %v10686 = vld [vmem:[%s5 + $0x480] sm:$0xf]
  %v10687 = vld [vmem:[%s5 + $0x484] sm:$0xf]
  %v10688 = vld [vmem:[%s5 + $0x488] sm:$0xf]
  %v10689 = vld [vmem:[%s5 + $0x48c] sm:$0xf]
  %v10690 = vld [vmem:[%s5 + $0x490] sm:$0xf]
  %v10691 = vld [vmem:[%s5 + $0x494] sm:$0xf]
  %v10692 = vld [vmem:[%s5 + $0x498] sm:$0xf]
  %v10693 = vld [vmem:[%s5 + $0x49c] sm:$0xf]
  %v10694 = vld [vmem:[%s5 + $0x4a0] sm:$0xf]
  %v10695 = vld [vmem:[%s5 + $0x4a4] sm:$0xf]
  %v10696 = vld [vmem:[%s5 + $0x4a8] sm:$0xf]
  %v10697 = vld [vmem:[%s5 + $0x4ac] sm:$0xf]
  %v10698 = vld [vmem:[%s5 + $0x4b0] sm:$0xf]
  %v10699 = vld [vmem:[%s5 + $0x4b4] sm:$0xf]
  %v10700 = vld [vmem:[%s5 + $0x4b8] sm:$0xf]
  %v10701 = vld [vmem:[%s5 + $0x4bc] sm:$0xf]
  %v10702 = vld [vmem:[%s5 + $0x4c0] sm:$0xf]
  %v10703 = vld [vmem:[%s5 + $0x4c4] sm:$0xf]
  %v10704 = vld [vmem:[%s5 + $0x4c8] sm:$0xf]
  %v10705 = vld [vmem:[%s5 + $0x4cc] sm:$0xf]
  %v10706 = vld [vmem:[%s5 + $0x4d0] sm:$0xf]
  %v10707 = vld [vmem:[%s5 + $0x4d4] sm:$0xf]
  %v10708 = vld [vmem:[%s5 + $0x4d8] sm:$0xf]
  %v10709 = vld [vmem:[%s5 + $0x4dc] sm:$0xf]
  %v10710 = vld [vmem:[%s5 + $0x4e0] sm:$0xf]
  %v10711 = vld [vmem:[%s5 + $0x4e4] sm:$0xf]
  %v10712 = vld [vmem:[%s5 + $0x4e8] sm:$0xf]
  %v10713 = vld [vmem:[%s5 + $0x4ec] sm:$0xf]
  %v10714 = vld [vmem:[%s5 + $0x4f0] sm:$0xf]
  %v10715 = vld [vmem:[%s5 + $0x4f4] sm:$0xf]
  %v10716 = vld [vmem:[%s5 + $0x4f8] sm:$0xf]
  %v10717 = vld [vmem:[%s5 + $0x4fc] sm:$0xf]
  %v10718 = vld [vmem:[%s5 + $0x500] sm:$0xf]
  %v10719 = vld [vmem:[%s5 + $0x504] sm:$0xf]
  %v10720 = vld [vmem:[%s5 + $0x508] sm:$0xf]
  %v10721 = vld [vmem:[%s5 + $0x50c] sm:$0xf]
  %v10722 = vld [vmem:[%s5 + $0x510] sm:$0xf]
  %v10723 = vld [vmem:[%s5 + $0x514] sm:$0xf]
  %v10724 = vld [vmem:[%s5 + $0x518] sm:$0xf]
  %v10725 = vld [vmem:[%s5 + $0x51c] sm:$0xf]
  %v10726 = vld [vmem:[%s5 + $0x520] sm:$0xf]
  %v10727 = vld [vmem:[%s5 + $0x524] sm:$0xf]
  %v10728 = vld [vmem:[%s5 + $0x528] sm:$0xf]
  %v10729 = vld [vmem:[%s5 + $0x52c] sm:$0xf]
  %v10730 = vld [vmem:[%s5 + $0x530] sm:$0xf]
  %v10731 = vld [vmem:[%s5 + $0x534] sm:$0xf]
  %v10732 = vld [vmem:[%s5 + $0x538] sm:$0xf]
  %v10733 = vld [vmem:[%s5 + $0x53c] sm:$0xf]
  %v10734 = vld [vmem:[%s5 + $0x540] sm:$0xf]
  %v10735 = vld [vmem:[%s5 + $0x544] sm:$0xf]
  %v10736 = vld [vmem:[%s5 + $0x548] sm:$0xf]
  %v10737 = vld [vmem:[%s5 + $0x54c] sm:$0xf]
  %v10738 = vld [vmem:[%s5 + $0x550] sm:$0xf]
  %v10739 = vld [vmem:[%s5 + $0x554] sm:$0xf]
  %v10740 = vld [vmem:[%s5 + $0x558] sm:$0xf]
  %v10741 = vld [vmem:[%s5 + $0x55c] sm:$0xf]
  %v10742 = vld [vmem:[%s5 + $0x560] sm:$0xf]
  %v10743 = vld [vmem:[%s5 + $0x564] sm:$0xf]
  %v10744 = vld [vmem:[%s5 + $0x568] sm:$0xf]
  %v10745 = vld [vmem:[%s5 + $0x56c] sm:$0xf]
  %v10746 = vld [vmem:[%s5 + $0x570] sm:$0xf]
  %v10747 = vld [vmem:[%s5 + $0x574] sm:$0xf]
  %v10748 = vld [vmem:[%s5 + $0x578] sm:$0xf]
  %v10749 = vld [vmem:[%s5 + $0x57c] sm:$0xf]
  %v10750 = vld [vmem:[%s5 + $0x580] sm:$0xf]
  %v10751 = vld [vmem:[%s5 + $0x584] sm:$0xf]
  %v10752 = vld [vmem:[%s5 + $0x588] sm:$0xf]
  %v10753 = vld [vmem:[%s5 + $0x58c] sm:$0xf]
  %v10754 = vld [vmem:[%s5 + $0x590] sm:$0xf]
  %v10755 = vld [vmem:[%s5 + $0x594] sm:$0xf]
  %v10756 = vld [vmem:[%s5 + $0x598] sm:$0xf]
  %v10757 = vld [vmem:[%s5 + $0x59c] sm:$0xf]
  %v10758 = vld [vmem:[%s5 + $0x5a0] sm:$0xf]
  %v10759 = vld [vmem:[%s5 + $0x5a4] sm:$0xf]
  %v10760 = vld [vmem:[%s5 + $0x5a8] sm:$0xf]
  %v10761 = vld [vmem:[%s5 + $0x5ac] sm:$0xf]
  %v10762 = vld [vmem:[%s5 + $0x5b0] sm:$0xf]
  %v10763 = vld [vmem:[%s5 + $0x5b4] sm:$0xf]
  %v10764 = vld [vmem:[%s5 + $0x5b8] sm:$0xf]
  %v10765 = vld [vmem:[%s5 + $0x5bc] sm:$0xf]
  %v10766 = vld [vmem:[%s5 + $0x5c0] sm:$0xf]
  %v10767 = vld [vmem:[%s5 + $0x5c4] sm:$0xf]
  %v10768 = vld [vmem:[%s5 + $0x5c8] sm:$0xf]
  %v10769 = vld [vmem:[%s5 + $0x5cc] sm:$0xf]
  %v10770 = vld [vmem:[%s5 + $0x5d0] sm:$0xf]
  %v10771 = vld [vmem:[%s5 + $0x5d4] sm:$0xf]
  %v10772 = vld [vmem:[%s5 + $0x5d8] sm:$0xf]
  %v10773 = vld [vmem:[%s5 + $0x5dc] sm:$0xf]
  %v10774 = vld [vmem:[%s5 + $0x5e0] sm:$0xf]
  %v10775 = vld [vmem:[%s5 + $0x5e4] sm:$0xf]
  %v10776 = vld [vmem:[%s5 + $0x5e8] sm:$0xf]
  %v10777 = vld [vmem:[%s5 + $0x5ec] sm:$0xf]
  %v10778 = vld [vmem:[%s5 + $0x5f0] sm:$0xf]
  %v10779 = vld [vmem:[%s5 + $0x5f4] sm:$0xf]
  %v10780 = vld [vmem:[%s5 + $0x5f8] sm:$0xf]
  %v10781 = vld [vmem:[%s5 + $0x5fc] sm:$0xf]
  %v10782 = vld [vmem:[%s5 + $0x600] sm:$0xf]
  %v10783 = vld [vmem:[%s5 + $0x604] sm:$0xf]
  %v10784 = vld [vmem:[%s5 + $0x608] sm:$0xf]
  %v10785 = vld [vmem:[%s5 + $0x60c] sm:$0xf]
  %v10786 = vld [vmem:[%s5 + $0x610] sm:$0xf]
  %v10787 = vld [vmem:[%s5 + $0x614] sm:$0xf]
  %v10788 = vld [vmem:[%s5 + $0x618] sm:$0xf]
  %v10789 = vld [vmem:[%s5 + $0x61c] sm:$0xf]
  %v10790 = vld [vmem:[%s5 + $0x620] sm:$0xf]
  %v10791 = vld [vmem:[%s5 + $0x624] sm:$0xf]
  %v10792 = vld [vmem:[%s5 + $0x628] sm:$0xf]
  %v10793 = vld [vmem:[%s5 + $0x62c] sm:$0xf]
  %v10794 = vld [vmem:[%s5 + $0x630] sm:$0xf]
  %v10795 = vld [vmem:[%s5 + $0x634] sm:$0xf]
  %v10796 = vld [vmem:[%s5 + $0x638] sm:$0xf]
  %v10797 = vld [vmem:[%s5 + $0x63c] sm:$0xf]
  %v10798 = vld [vmem:[%s6] sm:$0x1]
  %v10800 = vperm.slane %v10798, 0
  %v11202 = vunpack.c.l.b16 %v10398
  %v11203 = vunpack.c.l.b16 %v10399
  %v11204 = vunpack.c.l.b16 %v10400
  %v11205 = vunpack.c.l.b16 %v10401
  %v11206 = vunpack.c.l.b16 %v10402
  %v11207 = vunpack.c.l.b16 %v10403
  %v11208 = vunpack.c.l.b16 %v10404
  %v11209 = vunpack.c.l.b16 %v10405
  %v11210 = vunpack.c.l.b16 %v10406
  %v11211 = vunpack.c.l.b16 %v10407
  %v11212 = vunpack.c.l.b16 %v10408
  %v11213 = vunpack.c.l.b16 %v10409
  %v11214 = vunpack.c.l.b16 %v10410
  %v11215 = vunpack.c.l.b16 %v10411
  %v11216 = vunpack.c.l.b16 %v10412
  %v11217 = vunpack.c.l.b16 %v10413
  %v11218 = vunpack.c.l.b16 %v10414
  %v11219 = vunpack.c.l.b16 %v10415
  %v11220 = vunpack.c.l.b16 %v10416
  %v11221 = vunpack.c.l.b16 %v10417
  %v11222 = vunpack.c.l.b16 %v10418
  %v11223 = vunpack.c.l.b16 %v10419
  %v11224 = vunpack.c.l.b16 %v10420
  %v11225 = vunpack.c.l.b16 %v10421
  %v11226 = vunpack.c.l.b16 %v10422
  %v11227 = vunpack.c.l.b16 %v10423
  %v11228 = vunpack.c.l.b16 %v10424
  %v11229 = vunpack.c.l.b16 %v10425
  %v11230 = vunpack.c.l.b16 %v10426
  %v11231 = vunpack.c.l.b16 %v10427
  %v11232 = vunpack.c.l.b16 %v10428
  %v11233 = vunpack.c.l.b16 %v10429
  %v11234 = vunpack.c.l.b16 %v10430
  %v11235 = vunpack.c.l.b16 %v10431
  %v11236 = vunpack.c.l.b16 %v10432
  %v11237 = vunpack.c.l.b16 %v10433
  %v11238 = vunpack.c.l.b16 %v10434
  %v11239 = vunpack.c.l.b16 %v10435
  %v11240 = vunpack.c.l.b16 %v10436
  %v11241 = vunpack.c.l.b16 %v10437
  %v11242 = vunpack.c.l.b16 %v10438
  %v11243 = vunpack.c.l.b16 %v10439
  %v11244 = vunpack.c.l.b16 %v10440
  %v11245 = vunpack.c.l.b16 %v10441
  %v11246 = vunpack.c.l.b16 %v10442
  %v11247 = vunpack.c.l.b16 %v10443
  %v11248 = vunpack.c.l.b16 %v10444
  %v11249 = vunpack.c.l.b16 %v10445
  %v11250 = vunpack.c.l.b16 %v10446
  %v11251 = vunpack.c.l.b16 %v10447
  %v11252 = vunpack.c.l.b16 %v10448
  %v11253 = vunpack.c.l.b16 %v10449
  %v11254 = vunpack.c.l.b16 %v10450
  %v11255 = vunpack.c.l.b16 %v10451
  %v11256 = vunpack.c.l.b16 %v10452
  %v11257 = vunpack.c.l.b16 %v10453
  %v11258 = vunpack.c.l.b16 %v10454
  %v11259 = vunpack.c.l.b16 %v10455
  %v11260 = vunpack.c.l.b16 %v10456
  %v11261 = vunpack.c.l.b16 %v10457
  %v11262 = vunpack.c.l.b16 %v10458
  %v11263 = vunpack.c.l.b16 %v10459
  %v11264 = vunpack.c.l.b16 %v10460
  %v11265 = vunpack.c.l.b16 %v10461
  %v11266 = vunpack.c.l.b16 %v10462
  %v11267 = vunpack.c.l.b16 %v10463
  %v11268 = vunpack.c.l.b16 %v10464
  %v11269 = vunpack.c.l.b16 %v10465
  %v11270 = vunpack.c.l.b16 %v10466
  %v11271 = vunpack.c.l.b16 %v10467
  %v11272 = vunpack.c.l.b16 %v10468
  %v11273 = vunpack.c.l.b16 %v10469
  %v11274 = vunpack.c.l.b16 %v10470
  %v11275 = vunpack.c.l.b16 %v10471
  %v11276 = vunpack.c.l.b16 %v10472
  %v11277 = vunpack.c.l.b16 %v10473
  %v11278 = vunpack.c.l.b16 %v10474
  %v11279 = vunpack.c.l.b16 %v10475
  %v11280 = vunpack.c.l.b16 %v10476
  %v11281 = vunpack.c.l.b16 %v10477
  %v11282 = vunpack.c.l.b16 %v10478
  %v11283 = vunpack.c.l.b16 %v10479
  %v11284 = vunpack.c.l.b16 %v10480
  %v11285 = vunpack.c.l.b16 %v10481
  %v11286 = vunpack.c.l.b16 %v10482
  %v11287 = vunpack.c.l.b16 %v10483
  %v11288 = vunpack.c.l.b16 %v10484
  %v11289 = vunpack.c.l.b16 %v10485
  %v11290 = vunpack.c.l.b16 %v10486
  %v11291 = vunpack.c.l.b16 %v10487
  %v11292 = vunpack.c.l.b16 %v10488
  %v11293 = vunpack.c.l.b16 %v10489
  %v11294 = vunpack.c.l.b16 %v10490
  %v11295 = vunpack.c.l.b16 %v10491
  %v11296 = vunpack.c.l.b16 %v10492
  %v11297 = vunpack.c.l.b16 %v10493
  %v11298 = vunpack.c.l.b16 %v10494
  %v11299 = vunpack.c.l.b16 %v10495
  %v11300 = vunpack.c.l.b16 %v10496
  %v11301 = vunpack.c.l.b16 %v10497
  %v11302 = vunpack.c.l.b16 %v10498
  %v11303 = vunpack.c.l.b16 %v10499
  %v11304 = vunpack.c.l.b16 %v10500
  %v11305 = vunpack.c.l.b16 %v10501
  %v11306 = vunpack.c.l.b16 %v10502
  %v11307 = vunpack.c.l.b16 %v10503
  %v11308 = vunpack.c.l.b16 %v10504
  %v11309 = vunpack.c.l.b16 %v10505
  %v11310 = vunpack.c.l.b16 %v10506
  %v11311 = vunpack.c.l.b16 %v10507
  %v11312 = vunpack.c.l.b16 %v10508
  %v11313 = vunpack.c.l.b16 %v10509
  %v11314 = vunpack.c.l.b16 %v10510
  %v11315 = vunpack.c.l.b16 %v10511
  %v11316 = vunpack.c.l.b16 %v10512
  %v11317 = vunpack.c.l.b16 %v10513
  %v11318 = vunpack.c.l.b16 %v10514
  %v11319 = vunpack.c.l.b16 %v10515
  %v11320 = vunpack.c.l.b16 %v10516
  %v11321 = vunpack.c.l.b16 %v10517
  %v11322 = vunpack.c.l.b16 %v10518
  %v11323 = vunpack.c.l.b16 %v10519
  %v11324 = vunpack.c.l.b16 %v10520
  %v11325 = vunpack.c.l.b16 %v10521
  %v11326 = vunpack.c.l.b16 %v10522
  %v11327 = vunpack.c.l.b16 %v10523
  %v11328 = vunpack.c.l.b16 %v10524
  %v11329 = vunpack.c.l.b16 %v10525
  %v11330 = vunpack.c.l.b16 %v10526
  %v11331 = vunpack.c.l.b16 %v10527
  %v11332 = vunpack.c.l.b16 %v10528
  %v11333 = vunpack.c.l.b16 %v10529
  %v11334 = vunpack.c.l.b16 %v10530
  %v11335 = vunpack.c.l.b16 %v10531
  %v11336 = vunpack.c.l.b16 %v10532
  %v11337 = vunpack.c.l.b16 %v10533
  %v11338 = vunpack.c.l.b16 %v10534
  %v11339 = vunpack.c.l.b16 %v10535
  %v11340 = vunpack.c.l.b16 %v10536
  %v11341 = vunpack.c.l.b16 %v10537
  %v11342 = vunpack.c.l.b16 %v10538
  %v11343 = vunpack.c.l.b16 %v10539
  %v11344 = vunpack.c.l.b16 %v10540
  %v11345 = vunpack.c.l.b16 %v10541
  %v11346 = vunpack.c.l.b16 %v10542
  %v11347 = vunpack.c.l.b16 %v10543
  %v11348 = vunpack.c.l.b16 %v10544
  %v11349 = vunpack.c.l.b16 %v10545
  %v11350 = vunpack.c.l.b16 %v10546
  %v11351 = vunpack.c.l.b16 %v10547
  %v11352 = vunpack.c.l.b16 %v10548
  %v11353 = vunpack.c.l.b16 %v10549
  %v11354 = vunpack.c.l.b16 %v10550
  %v11355 = vunpack.c.l.b16 %v10551
  %v11356 = vunpack.c.l.b16 %v10552
  %v11357 = vunpack.c.l.b16 %v10553
  %v11358 = vunpack.c.l.b16 %v10554
  %v11359 = vunpack.c.l.b16 %v10555
  %v11360 = vunpack.c.l.b16 %v10556
  %v11361 = vunpack.c.l.b16 %v10557
  %v11362 = vunpack.c.l.b16 %v10558
  %v11363 = vunpack.c.l.b16 %v10559
  %v11364 = vunpack.c.l.b16 %v10560
  %v11365 = vunpack.c.l.b16 %v10561
  %v11366 = vunpack.c.l.b16 %v10562
  %v11367 = vunpack.c.l.b16 %v10563
  %v11368 = vunpack.c.l.b16 %v10564
  %v11369 = vunpack.c.l.b16 %v10565
  %v11370 = vunpack.c.l.b16 %v10566
  %v11371 = vunpack.c.l.b16 %v10567
  %v11372 = vunpack.c.l.b16 %v10568
  %v11373 = vunpack.c.l.b16 %v10569
  %v11374 = vunpack.c.l.b16 %v10570
  %v11375 = vunpack.c.l.b16 %v10571
  %v11376 = vunpack.c.l.b16 %v10572
  %v11377 = vunpack.c.l.b16 %v10573
  %v11378 = vunpack.c.l.b16 %v10574
  %v11379 = vunpack.c.l.b16 %v10575
  %v11380 = vunpack.c.l.b16 %v10576
  %v11381 = vunpack.c.l.b16 %v10577
  %v11382 = vunpack.c.l.b16 %v10578
  %v11383 = vunpack.c.l.b16 %v10579
  %v11384 = vunpack.c.l.b16 %v10580
  %v11385 = vunpack.c.l.b16 %v10581
  %v11386 = vunpack.c.l.b16 %v10582
  %v11387 = vunpack.c.l.b16 %v10583
  %v11388 = vunpack.c.l.b16 %v10584
  %v11389 = vunpack.c.l.b16 %v10585
  %v11390 = vunpack.c.l.b16 %v10586
  %v11391 = vunpack.c.l.b16 %v10587
  %v11392 = vunpack.c.l.b16 %v10588
  %v11393 = vunpack.c.l.b16 %v10589
  %v11394 = vunpack.c.l.b16 %v10590
  %v11395 = vunpack.c.l.b16 %v10591
  %v11396 = vunpack.c.l.b16 %v10592
  %v11397 = vunpack.c.l.b16 %v10593
  %v11398 = vunpack.c.l.b16 %v10594
  %v11399 = vunpack.c.l.b16 %v10595
  %v11400 = vunpack.c.l.b16 %v10596
  %v11401 = vunpack.c.l.b16 %v10597
  %v11402 = vunpack.c.l.b16 %v10598
  %v11403 = vunpack.c.l.b16 %v10599
  %v11404 = vunpack.c.l.b16 %v10600
  %v11405 = vunpack.c.l.b16 %v10601
  %v11406 = vunpack.c.l.b16 %v10602
  %v11407 = vunpack.c.l.b16 %v10603
  %v11408 = vunpack.c.l.b16 %v10604
  %v11409 = vunpack.c.l.b16 %v10605
  %v11410 = vunpack.c.l.b16 %v10606
  %v11411 = vunpack.c.l.b16 %v10607
  %v11412 = vunpack.c.l.b16 %v10608
  %v11413 = vunpack.c.l.b16 %v10609
  %v11414 = vunpack.c.l.b16 %v10610
  %v11415 = vunpack.c.l.b16 %v10611
  %v11416 = vunpack.c.l.b16 %v10612
  %v11417 = vunpack.c.l.b16 %v10613
  %v11418 = vunpack.c.l.b16 %v10614
  %v11419 = vunpack.c.l.b16 %v10615
  %v11420 = vunpack.c.l.b16 %v10616
  %v11421 = vunpack.c.l.b16 %v10617
  %v11422 = vunpack.c.l.b16 %v10618
  %v11423 = vunpack.c.l.b16 %v10619
  %v11424 = vunpack.c.l.b16 %v10620
  %v11425 = vunpack.c.l.b16 %v10621
  %v11426 = vunpack.c.l.b16 %v10622
  %v11427 = vunpack.c.l.b16 %v10623
  %v11428 = vunpack.c.l.b16 %v10624
  %v11429 = vunpack.c.l.b16 %v10625
  %v11430 = vunpack.c.l.b16 %v10626
  %v11431 = vunpack.c.l.b16 %v10627
  %v11432 = vunpack.c.l.b16 %v10628
  %v11433 = vunpack.c.l.b16 %v10629
  %v11434 = vunpack.c.l.b16 %v10630
  %v11435 = vunpack.c.l.b16 %v10631
  %v11436 = vunpack.c.l.b16 %v10632
  %v11437 = vunpack.c.l.b16 %v10633
  %v11438 = vunpack.c.l.b16 %v10634
  %v11439 = vunpack.c.l.b16 %v10635
  %v11440 = vunpack.c.l.b16 %v10636
  %v11441 = vunpack.c.l.b16 %v10637
  %v11442 = vunpack.c.l.b16 %v10638
  %v11443 = vunpack.c.l.b16 %v10639
  %v11444 = vunpack.c.l.b16 %v10640
  %v11445 = vunpack.c.l.b16 %v10641
  %v11446 = vunpack.c.l.b16 %v10642
  %v11447 = vunpack.c.l.b16 %v10643
  %v11448 = vunpack.c.l.b16 %v10644
  %v11449 = vunpack.c.l.b16 %v10645
  %v11450 = vunpack.c.l.b16 %v10646
  %v11451 = vunpack.c.l.b16 %v10647
  %v11452 = vunpack.c.l.b16 %v10648
  %v11453 = vunpack.c.l.b16 %v10649
  %v11454 = vunpack.c.l.b16 %v10650
  %v11455 = vunpack.c.l.b16 %v10651
  %v11456 = vunpack.c.l.b16 %v10652
  %v11457 = vunpack.c.l.b16 %v10653
  %v11458 = vunpack.c.l.b16 %v10654
  %v11459 = vunpack.c.l.b16 %v10655
  %v11460 = vunpack.c.l.b16 %v10656
  %v11461 = vunpack.c.l.b16 %v10657
  %v11462 = vunpack.c.l.b16 %v10658
  %v11463 = vunpack.c.l.b16 %v10659
  %v11464 = vunpack.c.l.b16 %v10660
  %v11465 = vunpack.c.l.b16 %v10661
  %v11466 = vunpack.c.l.b16 %v10662
  %v11467 = vunpack.c.l.b16 %v10663
  %v11468 = vunpack.c.l.b16 %v10664
  %v11469 = vunpack.c.l.b16 %v10665
  %v11470 = vunpack.c.l.b16 %v10666
  %v11471 = vunpack.c.l.b16 %v10667
  %v11472 = vunpack.c.l.b16 %v10668
  %v11473 = vunpack.c.l.b16 %v10669
  %v11474 = vunpack.c.l.b16 %v10670
  %v11475 = vunpack.c.l.b16 %v10671
  %v11476 = vunpack.c.l.b16 %v10672
  %v11477 = vunpack.c.l.b16 %v10673
  %v11478 = vunpack.c.l.b16 %v10674
  %v11479 = vunpack.c.l.b16 %v10675
  %v11480 = vunpack.c.l.b16 %v10676
  %v11481 = vunpack.c.l.b16 %v10677
  %v11482 = vunpack.c.l.b16 %v10678
  %v11483 = vunpack.c.l.b16 %v10679
  %v11484 = vunpack.c.l.b16 %v10680
  %v11485 = vunpack.c.l.b16 %v10681
  %v11486 = vunpack.c.l.b16 %v10682
  %v11487 = vunpack.c.l.b16 %v10683
  %v11488 = vunpack.c.l.b16 %v10684
  %v11489 = vunpack.c.l.b16 %v10685
  %v11490 = vunpack.c.l.b16 %v10686
  %v11491 = vunpack.c.l.b16 %v10687
  %v11492 = vunpack.c.l.b16 %v10688
  %v11493 = vunpack.c.l.b16 %v10689
  %v11494 = vunpack.c.l.b16 %v10690
  %v11495 = vunpack.c.l.b16 %v10691
  %v11496 = vunpack.c.l.b16 %v10692
  %v11497 = vunpack.c.l.b16 %v10693
  %v11498 = vunpack.c.l.b16 %v10694
  %v11499 = vunpack.c.l.b16 %v10695
  %v11500 = vunpack.c.l.b16 %v10696
  %v11501 = vunpack.c.l.b16 %v10697
  %v11502 = vunpack.c.l.b16 %v10698
  %v11503 = vunpack.c.l.b16 %v10699
  %v11504 = vunpack.c.l.b16 %v10700
  %v11505 = vunpack.c.l.b16 %v10701
  %v11506 = vunpack.c.l.b16 %v10702
  %v11507 = vunpack.c.l.b16 %v10703
  %v11508 = vunpack.c.l.b16 %v10704
  %v11509 = vunpack.c.l.b16 %v10705
  %v11510 = vunpack.c.l.b16 %v10706
  %v11511 = vunpack.c.l.b16 %v10707
  %v11512 = vunpack.c.l.b16 %v10708
  %v11513 = vunpack.c.l.b16 %v10709
  %v11514 = vunpack.c.l.b16 %v10710
  %v11515 = vunpack.c.l.b16 %v10711
  %v11516 = vunpack.c.l.b16 %v10712
  %v11517 = vunpack.c.l.b16 %v10713
  %v11518 = vunpack.c.l.b16 %v10714
  %v11519 = vunpack.c.l.b16 %v10715
  %v11520 = vunpack.c.l.b16 %v10716
  %v11521 = vunpack.c.l.b16 %v10717
  %v11522 = vunpack.c.l.b16 %v10718
  %v11523 = vunpack.c.l.b16 %v10719
  %v11524 = vunpack.c.l.b16 %v10720
  %v11525 = vunpack.c.l.b16 %v10721
  %v11526 = vunpack.c.l.b16 %v10722
  %v11527 = vunpack.c.l.b16 %v10723
  %v11528 = vunpack.c.l.b16 %v10724
  %v11529 = vunpack.c.l.b16 %v10725
  %v11530 = vunpack.c.l.b16 %v10726
  %v11531 = vunpack.c.l.b16 %v10727
  %v11532 = vunpack.c.l.b16 %v10728
  %v11533 = vunpack.c.l.b16 %v10729
  %v11534 = vunpack.c.l.b16 %v10730
  %v11535 = vunpack.c.l.b16 %v10731
  %v11536 = vunpack.c.l.b16 %v10732
  %v11537 = vunpack.c.l.b16 %v10733
  %v11538 = vunpack.c.l.b16 %v10734
  %v11539 = vunpack.c.l.b16 %v10735
  %v11540 = vunpack.c.l.b16 %v10736
  %v11541 = vunpack.c.l.b16 %v10737
  %v11542 = vunpack.c.l.b16 %v10738
  %v11543 = vunpack.c.l.b16 %v10739
  %v11544 = vunpack.c.l.b16 %v10740
  %v11545 = vunpack.c.l.b16 %v10741
  %v11546 = vunpack.c.l.b16 %v10742
  %v11547 = vunpack.c.l.b16 %v10743
  %v11548 = vunpack.c.l.b16 %v10744
  %v11549 = vunpack.c.l.b16 %v10745
  %v11550 = vunpack.c.l.b16 %v10746
  %v11551 = vunpack.c.l.b16 %v10747
  %v11552 = vunpack.c.l.b16 %v10748
  %v11553 = vunpack.c.l.b16 %v10749
  %v11554 = vunpack.c.l.b16 %v10750
  %v11555 = vunpack.c.l.b16 %v10751
  %v11556 = vunpack.c.l.b16 %v10752
  %v11557 = vunpack.c.l.b16 %v10753
  %v11558 = vunpack.c.l.b16 %v10754
  %v11559 = vunpack.c.l.b16 %v10755
  %v11560 = vunpack.c.l.b16 %v10756
  %v11561 = vunpack.c.l.b16 %v10757
  %v11562 = vunpack.c.l.b16 %v10758
  %v11563 = vunpack.c.l.b16 %v10759
  %v11564 = vunpack.c.l.b16 %v10760
  %v11565 = vunpack.c.l.b16 %v10761
  %v11566 = vunpack.c.l.b16 %v10762
  %v11567 = vunpack.c.l.b16 %v10763
  %v11568 = vunpack.c.l.b16 %v10764
  %v11569 = vunpack.c.l.b16 %v10765
  %v11570 = vunpack.c.l.b16 %v10766
  %v11571 = vunpack.c.l.b16 %v10767
  %v11572 = vunpack.c.l.b16 %v10768
  %v11573 = vunpack.c.l.b16 %v10769
  %v11574 = vunpack.c.l.b16 %v10770
  %v11575 = vunpack.c.l.b16 %v10771
  %v11576 = vunpack.c.l.b16 %v10772
  %v11577 = vunpack.c.l.b16 %v10773
  %v11578 = vunpack.c.l.b16 %v10774
  %v11579 = vunpack.c.l.b16 %v10775
  %v11580 = vunpack.c.l.b16 %v10776
  %v11581 = vunpack.c.l.b16 %v10777
  %v11582 = vunpack.c.l.b16 %v10778
  %v11583 = vunpack.c.l.b16 %v10779
  %v11584 = vunpack.c.l.b16 %v10780
  %v11585 = vunpack.c.l.b16 %v10781
  %v11586 = vunpack.c.l.b16 %v10782
  %v11587 = vunpack.c.l.b16 %v10783
  %v11588 = vunpack.c.l.b16 %v10784
  %v11589 = vunpack.c.l.b16 %v10785
  %v11590 = vunpack.c.l.b16 %v10786
  %v11591 = vunpack.c.l.b16 %v10787
  %v11592 = vunpack.c.l.b16 %v10788
  %v11593 = vunpack.c.l.b16 %v10789
  %v11594 = vunpack.c.l.b16 %v10790
  %v11595 = vunpack.c.l.b16 %v10791
  %v11596 = vunpack.c.l.b16 %v10792
  %v11597 = vunpack.c.l.b16 %v10793
  %v11598 = vunpack.c.l.b16 %v10794
  %v11599 = vunpack.c.l.b16 %v10795
  %v11600 = vunpack.c.l.b16 %v10796
  %v11601 = vunpack.c.l.b16 %v10797
  %v11602 = vpack.c.b16 %v11203, %v11202
  %v11603 = vpack.c.b16 %v11205, %v11204
  %v11604 = vpack.c.b16 %v11207, %v11206
  %v11605 = vpack.c.b16 %v11209, %v11208
  %v11606 = vpack.c.b16 %v11211, %v11210
  %v11607 = vpack.c.b16 %v11213, %v11212
  %v11608 = vpack.c.b16 %v11215, %v11214
  %v11609 = vpack.c.b16 %v11217, %v11216
  %v11610 = vpack.c.b16 %v11219, %v11218
  %v11611 = vpack.c.b16 %v11221, %v11220
  %v11612 = vpack.c.b16 %v11223, %v11222
  %v11613 = vpack.c.b16 %v11225, %v11224
  %v11614 = vpack.c.b16 %v11227, %v11226
  %v11615 = vpack.c.b16 %v11229, %v11228
  %v11616 = vpack.c.b16 %v11231, %v11230
  %v11617 = vpack.c.b16 %v11233, %v11232
  %v11618 = vpack.c.b16 %v11235, %v11234
  %v11619 = vpack.c.b16 %v11237, %v11236
  %v11620 = vpack.c.b16 %v11239, %v11238
  %v11621 = vpack.c.b16 %v11241, %v11240
  %v11622 = vpack.c.b16 %v11243, %v11242
  %v11623 = vpack.c.b16 %v11245, %v11244
  %v11624 = vpack.c.b16 %v11247, %v11246
  %v11625 = vpack.c.b16 %v11249, %v11248
  %v11626 = vpack.c.b16 %v11251, %v11250
  %v11627 = vpack.c.b16 %v11253, %v11252
  %v11628 = vpack.c.b16 %v11255, %v11254
  %v11629 = vpack.c.b16 %v11257, %v11256
  %v11630 = vpack.c.b16 %v11259, %v11258
  %v11631 = vpack.c.b16 %v11261, %v11260
  %v11632 = vpack.c.b16 %v11263, %v11262
  %v11633 = vpack.c.b16 %v11265, %v11264
  %v11634 = vpack.c.b16 %v11267, %v11266
  %v11635 = vpack.c.b16 %v11269, %v11268
  %v11636 = vpack.c.b16 %v11271, %v11270
  %v11637 = vpack.c.b16 %v11273, %v11272
  %v11638 = vpack.c.b16 %v11275, %v11274
  %v11639 = vpack.c.b16 %v11277, %v11276
  %v11640 = vpack.c.b16 %v11279, %v11278
  %v11641 = vpack.c.b16 %v11281, %v11280
  %v11642 = vpack.c.b16 %v11283, %v11282
  %v11643 = vpack.c.b16 %v11285, %v11284
  %v11644 = vpack.c.b16 %v11287, %v11286
  %v11645 = vpack.c.b16 %v11289, %v11288
  %v11646 = vpack.c.b16 %v11291, %v11290
  %v11647 = vpack.c.b16 %v11293, %v11292
  %v11648 = vpack.c.b16 %v11295, %v11294
  %v11649 = vpack.c.b16 %v11297, %v11296
  %v11650 = vpack.c.b16 %v11299, %v11298
  %v11651 = vpack.c.b16 %v11301, %v11300
  %v11652 = vpack.c.b16 %v11303, %v11302
  %v11653 = vpack.c.b16 %v11305, %v11304
  %v11654 = vpack.c.b16 %v11307, %v11306
  %v11655 = vpack.c.b16 %v11309, %v11308
  %v11656 = vpack.c.b16 %v11311, %v11310
  %v11657 = vpack.c.b16 %v11313, %v11312
  %v11658 = vpack.c.b16 %v11315, %v11314
  %v11659 = vpack.c.b16 %v11317, %v11316
  %v11660 = vpack.c.b16 %v11319, %v11318
  %v11661 = vpack.c.b16 %v11321, %v11320
  %v11662 = vpack.c.b16 %v11323, %v11322
  %v11663 = vpack.c.b16 %v11325, %v11324
  %v11664 = vpack.c.b16 %v11327, %v11326
  %v11665 = vpack.c.b16 %v11329, %v11328
  %v11666 = vpack.c.b16 %v11331, %v11330
  %v11667 = vpack.c.b16 %v11333, %v11332
  %v11668 = vpack.c.b16 %v11335, %v11334
  %v11669 = vpack.c.b16 %v11337, %v11336
  %v11670 = vpack.c.b16 %v11339, %v11338
  %v11671 = vpack.c.b16 %v11341, %v11340
  %v11672 = vpack.c.b16 %v11343, %v11342
  %v11673 = vpack.c.b16 %v11345, %v11344
  %v11674 = vpack.c.b16 %v11347, %v11346
  %v11675 = vpack.c.b16 %v11349, %v11348
  %v11676 = vpack.c.b16 %v11351, %v11350
  %v11677 = vpack.c.b16 %v11353, %v11352
  %v11678 = vpack.c.b16 %v11355, %v11354
  %v11679 = vpack.c.b16 %v11357, %v11356
  %v11680 = vpack.c.b16 %v11359, %v11358
  %v11681 = vpack.c.b16 %v11361, %v11360
  %v11682 = vpack.c.b16 %v11363, %v11362
  %v11683 = vpack.c.b16 %v11365, %v11364
  %v11684 = vpack.c.b16 %v11367, %v11366
  %v11685 = vpack.c.b16 %v11369, %v11368
  %v11686 = vpack.c.b16 %v11371, %v11370
  %v11687 = vpack.c.b16 %v11373, %v11372
  %v11688 = vpack.c.b16 %v11375, %v11374
  %v11689 = vpack.c.b16 %v11377, %v11376
  %v11690 = vpack.c.b16 %v11379, %v11378
  %v11691 = vpack.c.b16 %v11381, %v11380
  %v11692 = vpack.c.b16 %v11383, %v11382
  %v11693 = vpack.c.b16 %v11385, %v11384
  %v11694 = vpack.c.b16 %v11387, %v11386
  %v11695 = vpack.c.b16 %v11389, %v11388
  %v11696 = vpack.c.b16 %v11391, %v11390
  %v11697 = vpack.c.b16 %v11393, %v11392
  %v11698 = vpack.c.b16 %v11395, %v11394
  %v11699 = vpack.c.b16 %v11397, %v11396
  %v11700 = vpack.c.b16 %v11399, %v11398
  %v11701 = vpack.c.b16 %v11401, %v11400
  %v11702 = vpack.c.b16 %v11403, %v11402
  %v11703 = vpack.c.b16 %v11405, %v11404
  %v11704 = vpack.c.b16 %v11407, %v11406
  %v11705 = vpack.c.b16 %v11409, %v11408
  %v11706 = vpack.c.b16 %v11411, %v11410
  %v11707 = vpack.c.b16 %v11413, %v11412
  %v11708 = vpack.c.b16 %v11415, %v11414
  %v11709 = vpack.c.b16 %v11417, %v11416
  %v11710 = vpack.c.b16 %v11419, %v11418
  %v11711 = vpack.c.b16 %v11421, %v11420
  %v11712 = vpack.c.b16 %v11423, %v11422
  %v11713 = vpack.c.b16 %v11425, %v11424
  %v11714 = vpack.c.b16 %v11427, %v11426
  %v11715 = vpack.c.b16 %v11429, %v11428
  %v11716 = vpack.c.b16 %v11431, %v11430
  %v11717 = vpack.c.b16 %v11433, %v11432
  %v11718 = vpack.c.b16 %v11435, %v11434
  %v11719 = vpack.c.b16 %v11437, %v11436
  %v11720 = vpack.c.b16 %v11439, %v11438
  %v11721 = vpack.c.b16 %v11441, %v11440
  %v11722 = vpack.c.b16 %v11443, %v11442
  %v11723 = vpack.c.b16 %v11445, %v11444
  %v11724 = vpack.c.b16 %v11447, %v11446
  %v11725 = vpack.c.b16 %v11449, %v11448
  %v11726 = vpack.c.b16 %v11451, %v11450
  %v11727 = vpack.c.b16 %v11453, %v11452
  %v11728 = vpack.c.b16 %v11455, %v11454
  %v11729 = vpack.c.b16 %v11457, %v11456
  %v11730 = vpack.c.b16 %v11459, %v11458
  %v11731 = vpack.c.b16 %v11461, %v11460
  %v11732 = vpack.c.b16 %v11463, %v11462
  %v11733 = vpack.c.b16 %v11465, %v11464
  %v11734 = vpack.c.b16 %v11467, %v11466
  %v11735 = vpack.c.b16 %v11469, %v11468
  %v11736 = vpack.c.b16 %v11471, %v11470
  %v11737 = vpack.c.b16 %v11473, %v11472
  %v11738 = vpack.c.b16 %v11475, %v11474
  %v11739 = vpack.c.b16 %v11477, %v11476
  %v11740 = vpack.c.b16 %v11479, %v11478
  %v11741 = vpack.c.b16 %v11481, %v11480
  %v11742 = vpack.c.b16 %v11483, %v11482
  %v11743 = vpack.c.b16 %v11485, %v11484
  %v11744 = vpack.c.b16 %v11487, %v11486
  %v11745 = vpack.c.b16 %v11489, %v11488
  %v11746 = vpack.c.b16 %v11491, %v11490
  %v11747 = vpack.c.b16 %v11493, %v11492
  %v11748 = vpack.c.b16 %v11495, %v11494
  %v11749 = vpack.c.b16 %v11497, %v11496
  %v11750 = vpack.c.b16 %v11499, %v11498
  %v11751 = vpack.c.b16 %v11501, %v11500
  %v11752 = vpack.c.b16 %v11503, %v11502
  %v11753 = vpack.c.b16 %v11505, %v11504
  %v11754 = vpack.c.b16 %v11507, %v11506
  %v11755 = vpack.c.b16 %v11509, %v11508
  %v11756 = vpack.c.b16 %v11511, %v11510
  %v11757 = vpack.c.b16 %v11513, %v11512
  %v11758 = vpack.c.b16 %v11515, %v11514
  %v11759 = vpack.c.b16 %v11517, %v11516
  %v11760 = vpack.c.b16 %v11519, %v11518
  %v11761 = vpack.c.b16 %v11521, %v11520
  %v11762 = vpack.c.b16 %v11523, %v11522
  %v11763 = vpack.c.b16 %v11525, %v11524
  %v11764 = vpack.c.b16 %v11527, %v11526
  %v11765 = vpack.c.b16 %v11529, %v11528
  %v11766 = vpack.c.b16 %v11531, %v11530
  %v11767 = vpack.c.b16 %v11533, %v11532
  %v11768 = vpack.c.b16 %v11535, %v11534
  %v11769 = vpack.c.b16 %v11537, %v11536
  %v11770 = vpack.c.b16 %v11539, %v11538
  %v11771 = vpack.c.b16 %v11541, %v11540
  %v11772 = vpack.c.b16 %v11543, %v11542
  %v11773 = vpack.c.b16 %v11545, %v11544
  %v11774 = vpack.c.b16 %v11547, %v11546
  %v11775 = vpack.c.b16 %v11549, %v11548
  %v11776 = vpack.c.b16 %v11551, %v11550
  %v11777 = vpack.c.b16 %v11553, %v11552
  %v11778 = vpack.c.b16 %v11555, %v11554
  %v11779 = vpack.c.b16 %v11557, %v11556
  %v11780 = vpack.c.b16 %v11559, %v11558
  %v11781 = vpack.c.b16 %v11561, %v11560
  %v11782 = vpack.c.b16 %v11563, %v11562
  %v11783 = vpack.c.b16 %v11565, %v11564
  %v11784 = vpack.c.b16 %v11567, %v11566
  %v11785 = vpack.c.b16 %v11569, %v11568
  %v11786 = vpack.c.b16 %v11571, %v11570
  %v11787 = vpack.c.b16 %v11573, %v11572
  %v11788 = vpack.c.b16 %v11575, %v11574
  %v11789 = vpack.c.b16 %v11577, %v11576
  %v11790 = vpack.c.b16 %v11579, %v11578
  %v11791 = vpack.c.b16 %v11581, %v11580
  %v11792 = vpack.c.b16 %v11583, %v11582
  %v11793 = vpack.c.b16 %v11585, %v11584
  %v11794 = vpack.c.b16 %v11587, %v11586
  %v11795 = vpack.c.b16 %v11589, %v11588
  %v11796 = vpack.c.b16 %v11591, %v11590
  %v11797 = vpack.c.b16 %v11593, %v11592
  %v11798 = vpack.c.b16 %v11595, %v11594
  %v11799 = vpack.c.b16 %v11597, %v11596
  %v11800 = vpack.c.b16 %v11599, %v11598
  %v11801 = vpack.c.b16 %v11601, %v11600
  %12002 = vmatpush.bf16.msra.mxu0 %v11609
  %12003 = vmatpush.bf16.msra.mxu0 %v11608
  %12004 = vmatpush.bf16.msra.mxu0 %v11607
  %12005 = vmatpush.bf16.msra.mxu0 %v11606
  %12006 = vmatpush.bf16.msra.mxu0 %v11605
  %12007 = vmatpush.bf16.msra.mxu0 %v11604
  %12008 = vmatpush.bf16.msra.mxu0 %v11603
  %12009 = vmatpush.bf16.msra.mxu0 %v11602
  %12010 = vmatmul.bf16.gmra.mxu0 %v9884
  %v12011 = vpop.f32.mrf.mxu0
  %v12012 = vadd.f32 %v10800, %v12011
  %v12013 = vpop.f32.mrf.mxu0
  %12014 = vdwg.mxu0
  %12015 = vmatpush.bf16.msra.mxu0 %v11617
  %12016 = vmatpush.bf16.msra.mxu0 %v11616
  %12017 = vmatpush.bf16.msra.mxu0 %v11615
  %12018 = vmatpush.bf16.msra.mxu0 %v11614
  %12019 = vmatpush.bf16.msra.mxu0 %v11613
  %12020 = vmatpush.bf16.msra.mxu0 %v11612
  %12021 = vmatpush.bf16.msra.mxu0 %v11611
  %12022 = vmatpush.bf16.msra.mxu0 %v11610
  %12023 = vmatmul.bf16.gmra.mxu0 %v9932
  %v12024 = vpop.f32.mrf.mxu0
  %v12025 = vadd.f32 %v12012, %v12024
  %v12026 = vpop.f32.mrf.mxu0
  %12027 = vdwg.mxu0
  %12028 = vmatpush.bf16.msra.mxu0 %v11625
  %12029 = vmatpush.bf16.msra.mxu0 %v11624
  %12030 = vmatpush.bf16.msra.mxu0 %v11623
  %12031 = vmatpush.bf16.msra.mxu0 %v11622
  %12032 = vmatpush.bf16.msra.mxu0 %v11621
  %12033 = vmatpush.bf16.msra.mxu0 %v11620
  %12034 = vmatpush.bf16.msra.mxu0 %v11619
  %12035 = vmatpush.bf16.msra.mxu0 %v11618
  %12036 = vmatmul.bf16.gmra.mxu0 %v9980
  %v12037 = vpop.f32.mrf.mxu0
  %v12038 = vadd.f32 %v12025, %v12037
  %v12039 = vpop.f32.mrf.mxu0
  %12040 = vdwg.mxu0
  %12041 = vmatpush.bf16.msra.mxu0 %v11633
  %12042 = vmatpush.bf16.msra.mxu0 %v11632
  %12043 = vmatpush.bf16.msra.mxu0 %v11631
  %12044 = vmatpush.bf16.msra.mxu0 %v11630
  %12045 = vmatpush.bf16.msra.mxu0 %v11629
  %12046 = vmatpush.bf16.msra.mxu0 %v11628
  %12047 = vmatpush.bf16.msra.mxu0 %v11627
  %12048 = vmatpush.bf16.msra.mxu0 %v11626
  %12049 = vmatmul.bf16.gmra.mxu0 %v10028
  %v12050 = vpop.f32.mrf.mxu0
  %v12051 = vadd.f32 %v12038, %v12050
  %v12052 = vpop.f32.mrf.mxu0
  %12053 = vdwg.mxu0
  %12054 = vmatpush.bf16.msra.mxu0 %v11641
  %12055 = vmatpush.bf16.msra.mxu0 %v11640
  %12056 = vmatpush.bf16.msra.mxu0 %v11639
  %12057 = vmatpush.bf16.msra.mxu0 %v11638
  %12058 = vmatpush.bf16.msra.mxu0 %v11637
  %12059 = vmatpush.bf16.msra.mxu0 %v11636
  %12060 = vmatpush.bf16.msra.mxu0 %v11635
  %12061 = vmatpush.bf16.msra.mxu0 %v11634
  %12062 = vmatmul.bf16.gmra.mxu0 %v10076
  %v12063 = vpop.f32.mrf.mxu0
  %v12064 = vadd.f32 %v12051, %v12063
  %v12065 = vpop.f32.mrf.mxu0
  %12066 = vdwg.mxu0
  %12067 = vmatpush.bf16.msra.mxu0 %v11649
  %12068 = vmatpush.bf16.msra.mxu0 %v11648
  %12069 = vmatpush.bf16.msra.mxu0 %v11647
  %12070 = vmatpush.bf16.msra.mxu0 %v11646
  %12071 = vmatpush.bf16.msra.mxu0 %v11645
  %12072 = vmatpush.bf16.msra.mxu0 %v11644
  %12073 = vmatpush.bf16.msra.mxu0 %v11643
  %12074 = vmatpush.bf16.msra.mxu0 %v11642
  %12075 = vmatmul.bf16.gmra.mxu0 %v10092
  %v12076 = vpop.f32.mrf.mxu0
  %v12077 = vadd.f32 %v12064, %v12076
  %v12078 = vpop.f32.mrf.mxu0
  %12079 = vdwg.mxu0
  %12080 = vmatpush.bf16.msra.mxu0 %v11657
  %12081 = vmatpush.bf16.msra.mxu0 %v11656
  %12082 = vmatpush.bf16.msra.mxu0 %v11655
  %12083 = vmatpush.bf16.msra.mxu0 %v11654
  %12084 = vmatpush.bf16.msra.mxu0 %v11653
  %12085 = vmatpush.bf16.msra.mxu0 %v11652
  %12086 = vmatpush.bf16.msra.mxu0 %v11651
  %12087 = vmatpush.bf16.msra.mxu0 %v11650
  %12088 = vmatmul.bf16.gmra.mxu0 %v10108
  %v12089 = vpop.f32.mrf.mxu0
  %v12090 = vadd.f32 %v12077, %v12089
  %v12091 = vpop.f32.mrf.mxu0
  %12092 = vdwg.mxu0
  %12093 = vmatpush.bf16.msra.mxu0 %v11665
  %12094 = vmatpush.bf16.msra.mxu0 %v11664
  %12095 = vmatpush.bf16.msra.mxu0 %v11663
  %12096 = vmatpush.bf16.msra.mxu0 %v11662
  %12097 = vmatpush.bf16.msra.mxu0 %v11661
  %12098 = vmatpush.bf16.msra.mxu0 %v11660
  %12099 = vmatpush.bf16.msra.mxu0 %v11659
  %12100 = vmatpush.bf16.msra.mxu0 %v11658
  %12101 = vmatmul.bf16.gmra.mxu0 %v10124
  %v12102 = vpop.f32.mrf.mxu0
  %v12103 = vadd.f32 %v12090, %v12102
  %v12104 = vpop.f32.mrf.mxu0
  %12105 = vdwg.mxu0
  %12106 = vmatpush.bf16.msra.mxu0 %v11673
  %12107 = vmatpush.bf16.msra.mxu0 %v11672
  %12108 = vmatpush.bf16.msra.mxu0 %v11671
  %12109 = vmatpush.bf16.msra.mxu0 %v11670
  %12110 = vmatpush.bf16.msra.mxu0 %v11669
  %12111 = vmatpush.bf16.msra.mxu0 %v11668
  %12112 = vmatpush.bf16.msra.mxu0 %v11667
  %12113 = vmatpush.bf16.msra.mxu0 %v11666
  %12114 = vmatmul.bf16.gmra.mxu0 %v10140
  %v12115 = vpop.f32.mrf.mxu0
  %v12116 = vadd.f32 %v12103, %v12115
  %v12117 = vpop.f32.mrf.mxu0
  %12118 = vdwg.mxu0
  %12119 = vmatpush.bf16.msra.mxu0 %v11681
  %12120 = vmatpush.bf16.msra.mxu0 %v11680
  %12121 = vmatpush.bf16.msra.mxu0 %v11679
  %12122 = vmatpush.bf16.msra.mxu0 %v11678
  %12123 = vmatpush.bf16.msra.mxu0 %v11677
  %12124 = vmatpush.bf16.msra.mxu0 %v11676
  %12125 = vmatpush.bf16.msra.mxu0 %v11675
  %12126 = vmatpush.bf16.msra.mxu0 %v11674
  %12127 = vmatmul.bf16.gmra.mxu0 %v10156
  %v12128 = vpop.f32.mrf.mxu0
  %v12129 = vadd.f32 %v12116, %v12128
  %v12130 = vpop.f32.mrf.mxu0
  %12131 = vdwg.mxu0
  %12132 = vmatpush.bf16.msra.mxu0 %v11689
  %12133 = vmatpush.bf16.msra.mxu0 %v11688
  %12134 = vmatpush.bf16.msra.mxu0 %v11687
  %12135 = vmatpush.bf16.msra.mxu0 %v11686
  %12136 = vmatpush.bf16.msra.mxu0 %v11685
  %12137 = vmatpush.bf16.msra.mxu0 %v11684
  %12138 = vmatpush.bf16.msra.mxu0 %v11683
  %12139 = vmatpush.bf16.msra.mxu0 %v11682
  %12140 = vmatmul.bf16.gmra.mxu0 %v10172
  %v12141 = vpop.f32.mrf.mxu0
  %v12142 = vadd.f32 %v12129, %v12141
  %v12143 = vpop.f32.mrf.mxu0
  %12144 = vdwg.mxu0
  %12145 = vmatpush.bf16.msra.mxu0 %v11697
  %12146 = vmatpush.bf16.msra.mxu0 %v11696
  %12147 = vmatpush.bf16.msra.mxu0 %v11695
  %12148 = vmatpush.bf16.msra.mxu0 %v11694
  %12149 = vmatpush.bf16.msra.mxu0 %v11693
  %12150 = vmatpush.bf16.msra.mxu0 %v11692
  %12151 = vmatpush.bf16.msra.mxu0 %v11691
  %12152 = vmatpush.bf16.msra.mxu0 %v11690
  %12153 = vmatmul.bf16.gmra.mxu0 %v10188
  %v12154 = vpop.f32.mrf.mxu0
  %v12155 = vadd.f32 %v12142, %v12154
  %v12156 = vpop.f32.mrf.mxu0
  %12157 = vdwg.mxu0
  %12158 = vmatpush.bf16.msra.mxu0 %v11705
  %12159 = vmatpush.bf16.msra.mxu0 %v11704
  %12160 = vmatpush.bf16.msra.mxu0 %v11703
  %12161 = vmatpush.bf16.msra.mxu0 %v11702
  %12162 = vmatpush.bf16.msra.mxu0 %v11701
  %12163 = vmatpush.bf16.msra.mxu0 %v11700
  %12164 = vmatpush.bf16.msra.mxu0 %v11699
  %12165 = vmatpush.bf16.msra.mxu0 %v11698
  %12166 = vmatmul.bf16.gmra.mxu0 %v10204
  %v12167 = vpop.f32.mrf.mxu0
  %v12168 = vadd.f32 %v12155, %v12167
  %v12169 = vpop.f32.mrf.mxu0
  %12170 = vdwg.mxu0
  %12171 = vmatpush.bf16.msra.mxu0 %v11713
  %12172 = vmatpush.bf16.msra.mxu0 %v11712
  %12173 = vmatpush.bf16.msra.mxu0 %v11711
  %12174 = vmatpush.bf16.msra.mxu0 %v11710
  %12175 = vmatpush.bf16.msra.mxu0 %v11709
  %12176 = vmatpush.bf16.msra.mxu0 %v11708
  %12177 = vmatpush.bf16.msra.mxu0 %v11707
  %12178 = vmatpush.bf16.msra.mxu0 %v11706
  %12179 = vmatmul.bf16.gmra.mxu0 %v10220
  %v12180 = vpop.f32.mrf.mxu0
  %v12181 = vadd.f32 %v12168, %v12180
  %v12182 = vpop.f32.mrf.mxu0
  %12183 = vdwg.mxu0
  %12184 = vmatpush.bf16.msra.mxu0 %v11721
  %12185 = vmatpush.bf16.msra.mxu0 %v11720
  %12186 = vmatpush.bf16.msra.mxu0 %v11719
  %12187 = vmatpush.bf16.msra.mxu0 %v11718
  %12188 = vmatpush.bf16.msra.mxu0 %v11717
  %12189 = vmatpush.bf16.msra.mxu0 %v11716
  %12190 = vmatpush.bf16.msra.mxu0 %v11715
  %12191 = vmatpush.bf16.msra.mxu0 %v11714
  %12192 = vmatmul.bf16.gmra.mxu0 %v10236
  %v12193 = vpop.f32.mrf.mxu0
  %v12194 = vadd.f32 %v12181, %v12193
  %v12195 = vpop.f32.mrf.mxu0
  %12196 = vdwg.mxu0
  %12197 = vmatpush.bf16.msra.mxu0 %v11729
  %12198 = vmatpush.bf16.msra.mxu0 %v11728
  %12199 = vmatpush.bf16.msra.mxu0 %v11727
  %12200 = vmatpush.bf16.msra.mxu0 %v11726
  %12201 = vmatpush.bf16.msra.mxu0 %v11725
  %12202 = vmatpush.bf16.msra.mxu0 %v11724
  %12203 = vmatpush.bf16.msra.mxu0 %v11723
  %12204 = vmatpush.bf16.msra.mxu0 %v11722
  %12205 = vmatmul.bf16.gmra.mxu0 %v10252
  %v12206 = vpop.f32.mrf.mxu0
  %v12207 = vadd.f32 %v12194, %v12206
  %v12208 = vpop.f32.mrf.mxu0
  %12209 = vdwg.mxu0
  %12210 = vmatpush.bf16.msra.mxu0 %v11737
  %12211 = vmatpush.bf16.msra.mxu0 %v11736
  %12212 = vmatpush.bf16.msra.mxu0 %v11735
  %12213 = vmatpush.bf16.msra.mxu0 %v11734
  %12214 = vmatpush.bf16.msra.mxu0 %v11733
  %12215 = vmatpush.bf16.msra.mxu0 %v11732
  %12216 = vmatpush.bf16.msra.mxu0 %v11731
  %12217 = vmatpush.bf16.msra.mxu0 %v11730
  %12218 = vmatmul.bf16.gmra.mxu0 %v10324
  %v12219 = vpop.f32.mrf.mxu0
  %v12220 = vadd.f32 %v12207, %v12219
  %v12221 = vpop.f32.mrf.mxu0
  %12222 = vdwg.mxu0
  %12223 = vmatpush.bf16.msra.mxu0 %v11745
  %12224 = vmatpush.bf16.msra.mxu0 %v11744
  %12225 = vmatpush.bf16.msra.mxu0 %v11743
  %12226 = vmatpush.bf16.msra.mxu0 %v11742
  %12227 = vmatpush.bf16.msra.mxu0 %v11741
  %12228 = vmatpush.bf16.msra.mxu0 %v11740
  %12229 = vmatpush.bf16.msra.mxu0 %v11739
  %12230 = vmatpush.bf16.msra.mxu0 %v11738
  %12231 = vmatmul.bf16.gmra.mxu0 %v10332
  %v12232 = vpop.f32.mrf.mxu0
  %v12233 = vadd.f32 %v12220, %v12232
  %v12234 = vpop.f32.mrf.mxu0
  %12235 = vdwg.mxu0
  %12236 = vmatpush.bf16.msra.mxu0 %v11753
  %12237 = vmatpush.bf16.msra.mxu0 %v11752
  %12238 = vmatpush.bf16.msra.mxu0 %v11751
  %12239 = vmatpush.bf16.msra.mxu0 %v11750
  %12240 = vmatpush.bf16.msra.mxu0 %v11749
  %12241 = vmatpush.bf16.msra.mxu0 %v11748
  %12242 = vmatpush.bf16.msra.mxu0 %v11747
  %12243 = vmatpush.bf16.msra.mxu0 %v11746
  %12244 = vmatmul.bf16.gmra.mxu0 %v10340
  %v12245 = vpop.f32.mrf.mxu0
  %v12246 = vadd.f32 %v12233, %v12245
  %v12247 = vpop.f32.mrf.mxu0
  %12248 = vdwg.mxu0
  %12249 = vmatpush.bf16.msra.mxu0 %v11761
  %12250 = vmatpush.bf16.msra.mxu0 %v11760
  %12251 = vmatpush.bf16.msra.mxu0 %v11759
  %12252 = vmatpush.bf16.msra.mxu0 %v11758
  %12253 = vmatpush.bf16.msra.mxu0 %v11757
  %12254 = vmatpush.bf16.msra.mxu0 %v11756
  %12255 = vmatpush.bf16.msra.mxu0 %v11755
  %12256 = vmatpush.bf16.msra.mxu0 %v11754
  %12257 = vmatmul.bf16.gmra.mxu0 %v10348
  %v12258 = vpop.f32.mrf.mxu0
  %v12259 = vadd.f32 %v12246, %v12258
  %v12260 = vpop.f32.mrf.mxu0
  %12261 = vdwg.mxu0
  %12262 = vmatpush.bf16.msra.mxu0 %v11769
  %12263 = vmatpush.bf16.msra.mxu0 %v11768
  %12264 = vmatpush.bf16.msra.mxu0 %v11767
  %12265 = vmatpush.bf16.msra.mxu0 %v11766
  %12266 = vmatpush.bf16.msra.mxu0 %v11765
  %12267 = vmatpush.bf16.msra.mxu0 %v11764
  %12268 = vmatpush.bf16.msra.mxu0 %v11763
  %12269 = vmatpush.bf16.msra.mxu0 %v11762
  %12270 = vmatmul.bf16.gmra.mxu0 %v10356
  %v12271 = vpop.f32.mrf.mxu0
  %v12272 = vadd.f32 %v12259, %v12271
  %v12273 = vpop.f32.mrf.mxu0
  %12274 = vdwg.mxu0
  %12275 = vmatpush.bf16.msra.mxu0 %v11777
  %12276 = vmatpush.bf16.msra.mxu0 %v11776
  %12277 = vmatpush.bf16.msra.mxu0 %v11775
  %12278 = vmatpush.bf16.msra.mxu0 %v11774
  %12279 = vmatpush.bf16.msra.mxu0 %v11773
  %12280 = vmatpush.bf16.msra.mxu0 %v11772
  %12281 = vmatpush.bf16.msra.mxu0 %v11771
  %12282 = vmatpush.bf16.msra.mxu0 %v11770
  %12283 = vmatmul.bf16.gmra.mxu0 %v10364
  %v12284 = vpop.f32.mrf.mxu0
  %v12285 = vadd.f32 %v12272, %v12284
  %v12286 = vpop.f32.mrf.mxu0
  %12287 = vdwg.mxu0
  %12288 = vmatpush.bf16.msra.mxu0 %v11785
  %12289 = vmatpush.bf16.msra.mxu0 %v11784
  %12290 = vmatpush.bf16.msra.mxu0 %v11783
  %12291 = vmatpush.bf16.msra.mxu0 %v11782
  %12292 = vmatpush.bf16.msra.mxu0 %v11781
  %12293 = vmatpush.bf16.msra.mxu0 %v11780
  %12294 = vmatpush.bf16.msra.mxu0 %v11779
  %12295 = vmatpush.bf16.msra.mxu0 %v11778
  %12296 = vmatmul.bf16.gmra.mxu0 %v10372
  %v12297 = vpop.f32.mrf.mxu0
  %v12298 = vadd.f32 %v12285, %v12297
  %v12299 = vpop.f32.mrf.mxu0
  %12300 = vdwg.mxu0
  %12301 = vmatpush.bf16.msra.mxu0 %v11793
  %12302 = vmatpush.bf16.msra.mxu0 %v11792
  %12303 = vmatpush.bf16.msra.mxu0 %v11791
  %12304 = vmatpush.bf16.msra.mxu0 %v11790
  %12305 = vmatpush.bf16.msra.mxu0 %v11789
  %12306 = vmatpush.bf16.msra.mxu0 %v11788
  %12307 = vmatpush.bf16.msra.mxu0 %v11787
  %12308 = vmatpush.bf16.msra.mxu0 %v11786
  %12309 = vmatmul.bf16.gmra.mxu0 %v10380
  %v12310 = vpop.f32.mrf.mxu0
  %v12311 = vadd.f32 %v12298, %v12310
  %v12312 = vpop.f32.mrf.mxu0
  %12313 = vdwg.mxu0
  %12314 = vmatpush.bf16.msra.mxu0 %v11801
  %12315 = vmatpush.bf16.msra.mxu0 %v11800
  %12316 = vmatpush.bf16.msra.mxu0 %v11799
  %12317 = vmatpush.bf16.msra.mxu0 %v11798
  %12318 = vmatpush.bf16.msra.mxu0 %v11797
  %12319 = vmatpush.bf16.msra.mxu0 %v11796
  %12320 = vmatpush.bf16.msra.mxu0 %v11795
  %12321 = vmatpush.bf16.msra.mxu0 %v11794
  %12322 = vmatmul.bf16.gmra.mxu0 %v10388
  %v12323 = vpop.f32.mrf.mxu0
  %v12324 = vadd.f32 %v12311, %v12323
  %v12325 = vpop.f32.mrf.mxu0
  %12326 = vdwg.mxu0
  %v12327 = vmax.f32 %v12324, 0.0
  %v12328 = vpack.c.bf16 %v12327, %v12327
  %v12329 = vld [vmem:[%s7] sm:$0xf]
  %v12330 = vld [vmem:[%s7 + $0x4] sm:$0xf]
  %v12331 = vld [vmem:[%s7 + $0x8] sm:$0xf]
  %v12332 = vld [vmem:[%s7 + $0xc] sm:$0xf]
  %v12333 = vld [vmem:[%s7 + $0x10] sm:$0xf]
  %v12334 = vld [vmem:[%s7 + $0x14] sm:$0xf]
  %v12335 = vld [vmem:[%s7 + $0x18] sm:$0xf]
  %v12336 = vld [vmem:[%s7 + $0x1c] sm:$0xf]
  %v12337 = vld [vmem:[%s7 + $0x20] sm:$0xf]
  %v12338 = vld [vmem:[%s7 + $0x24] sm:$0xf]
  %v12339 = vld [vmem:[%s7 + $0x28] sm:$0xf]
  %v12340 = vld [vmem:[%s7 + $0x2c] sm:$0xf]
  %v12341 = vld [vmem:[%s7 + $0x30] sm:$0xf]
  %v12342 = vld [vmem:[%s7 + $0x34] sm:$0xf]
  %v12343 = vld [vmem:[%s7 + $0x38] sm:$0xf]
  %v12344 = vld [vmem:[%s7 + $0x3c] sm:$0xf]
  %v12345 = vld [vmem:[%s8] sm:$0x1]
  %v12347 = vperm.slane %v12345, 0
  %v12365 = vunpack.c.l.b16 %v12329
  %v12366 = vunpack.c.l.b16 %v12330
  %v12367 = vunpack.c.l.b16 %v12331
  %v12368 = vunpack.c.l.b16 %v12332
  %v12369 = vunpack.c.l.b16 %v12333
  %v12370 = vunpack.c.l.b16 %v12334
  %v12371 = vunpack.c.l.b16 %v12335
  %v12372 = vunpack.c.l.b16 %v12336
  %v12373 = vunpack.c.l.b16 %v12337
  %v12374 = vunpack.c.l.b16 %v12338
  %v12375 = vunpack.c.l.b16 %v12339
  %v12376 = vunpack.c.l.b16 %v12340
  %v12377 = vunpack.c.l.b16 %v12341
  %v12378 = vunpack.c.l.b16 %v12342
  %v12379 = vunpack.c.l.b16 %v12343
  %v12380 = vunpack.c.l.b16 %v12344
  %v12381 = vpack.c.b16 %v12366, %v12365
  %v12382 = vpack.c.b16 %v12368, %v12367
  %v12383 = vpack.c.b16 %v12370, %v12369
  %v12384 = vpack.c.b16 %v12372, %v12371
  %v12385 = vpack.c.b16 %v12374, %v12373
  %v12386 = vpack.c.b16 %v12376, %v12375
  %v12387 = vpack.c.b16 %v12378, %v12377
  %v12388 = vpack.c.b16 %v12380, %v12379
  %12397 = vmatpush.bf16.msra.mxu0 %v12388
  %12398 = vmatpush.bf16.msra.mxu0 %v12387
  %12399 = vmatpush.bf16.msra.mxu0 %v12386
  %12400 = vmatpush.bf16.msra.mxu0 %v12385
  %12401 = vmatpush.bf16.msra.mxu0 %v12384
  %12402 = vmatpush.bf16.msra.mxu0 %v12383
  %12403 = vmatpush.bf16.msra.mxu0 %v12382
  %12404 = vmatpush.bf16.msra.mxu0 %v12381
  %12405 = vmatmul.bf16.gmra.mxu0 %v12328
  %v12406 = vpop.f32.mrf.mxu0
  %v12407 = vadd.f32 %v12347, %v12406
  %v12408 = vpop.f32.mrf.mxu0
  %12409 = vdwg.mxu0
  %v12410 = vmax.f32 %v12407, 0.0
  %v12411 = vpack.c.bf16 %v12410, %v12410
  %v12412 = vld [vmem:[%s9] sm:$0xf]
  %v12413 = vld [vmem:[%s9 + $0x4] sm:$0xf]
  %v12414 = vld [vmem:[%s9 + $0x8] sm:$0xf]
  %v12415 = vld [vmem:[%s9 + $0xc] sm:$0xf]
  %v12416 = vld [vmem:[%s9 + $0x10] sm:$0xf]
  %v12417 = vld [vmem:[%s9 + $0x14] sm:$0xf]
  %v12418 = vld [vmem:[%s9 + $0x18] sm:$0xf]
  %v12419 = vld [vmem:[%s9 + $0x1c] sm:$0xf]
  %v12420 = vld [vmem:[%s9 + $0x20] sm:$0xf]
  %v12421 = vld [vmem:[%s9 + $0x24] sm:$0xf]
  %v12422 = vld [vmem:[%s9 + $0x28] sm:$0xf]
  %v12423 = vld [vmem:[%s9 + $0x2c] sm:$0xf]
  %v12424 = vld [vmem:[%s9 + $0x30] sm:$0xf]
  %v12425 = vld [vmem:[%s9 + $0x34] sm:$0xf]
  %v12426 = vld [vmem:[%s9 + $0x38] sm:$0xf]
  %v12427 = vld [vmem:[%s9 + $0x3c] sm:$0xf]
  %v12428 = vld [vmem:[%s10] sm:$0x1]
  %v12430 = vperm.slane %v12428, 0
  %v12448 = vunpack.c.l.b16 %v12412
  %v12449 = vunpack.c.l.b16 %v12413
  %v12450 = vunpack.c.l.b16 %v12414
  %v12451 = vunpack.c.l.b16 %v12415
  %v12452 = vunpack.c.l.b16 %v12416
  %v12453 = vunpack.c.l.b16 %v12417
  %v12454 = vunpack.c.l.b16 %v12418
  %v12455 = vunpack.c.l.b16 %v12419
  %v12456 = vunpack.c.l.b16 %v12420
  %v12457 = vunpack.c.l.b16 %v12421
  %v12458 = vunpack.c.l.b16 %v12422
  %v12459 = vunpack.c.l.b16 %v12423
  %v12460 = vunpack.c.l.b16 %v12424
  %v12461 = vunpack.c.l.b16 %v12425
  %v12462 = vunpack.c.l.b16 %v12426
  %v12463 = vunpack.c.l.b16 %v12427
  %v12464 = vpack.c.b16 %v12449, %v12448
  %v12465 = vpack.c.b16 %v12451, %v12450
  %v12466 = vpack.c.b16 %v12453, %v12452
  %v12467 = vpack.c.b16 %v12455, %v12454
  %v12468 = vpack.c.b16 %v12457, %v12456
  %v12469 = vpack.c.b16 %v12459, %v12458
  %v12470 = vpack.c.b16 %v12461, %v12460
  %v12471 = vpack.c.b16 %v12463, %v12462
  %12480 = vmatpush.bf16.msra.mxu0 %v12471
  %12481 = vmatpush.bf16.msra.mxu0 %v12470
  %12482 = vmatpush.bf16.msra.mxu0 %v12469
  %12483 = vmatpush.bf16.msra.mxu0 %v12468
  %12484 = vmatpush.bf16.msra.mxu0 %v12467
  %12485 = vmatpush.bf16.msra.mxu0 %v12466
  %12486 = vmatpush.bf16.msra.mxu0 %v12465
  %12487 = vmatpush.bf16.msra.mxu0 %v12464
  %12488 = vmatmul.bf16.gmra.mxu0 %v12411
  %v12489 = vpop.f32.mrf.mxu0
  %v12490 = vadd.f32 %v12430, %v12489
  %v12491 = vpop.f32.mrf.mxu0
  %12492 = vdwg.mxu0
  %12493 = vst [vmem:[%s11] sm:$0xff] %v12490
  // Predicated region
  $region46: #{_lambda_.1} parent=0 // pred_check
    _
  $region47: #{_lambda_.1} parent=0 // pred_check_branch
    %12495 = sbr.rel (0) target = $region49
  $region48: #{_lambda_.1} parent=0 // pred_region
    _
  $region49: #{_lambda_.1} parent=0 // pred_fallthru
    _
  // Predicated region
  $region50: #{_lambda_.1} parent=0 // pred_check
    _
  $region51: #{_lambda_.1} parent=0 // pred_check_branch
    %12497 = sbr.rel (0) target = $region53
  $region52: #{_lambda_.1} parent=0 // pred_region
    _
  $region53: #{_lambda_.1} parent=0 // pred_fallthru
    _

</llo_original>
